<compile_context>
chip_gen: v5e
topology: v5e:2x2
jax: 0.10.0
libtpu: 0.0.40
codegen_flags: <defaults>
</compile_context>

<pallas_src>
import math

import jax
import jax.numpy as jnp
from jax import lax
from jax.experimental import pallas as pl
from jax.experimental.pallas import tpu as pltpu

D_MODEL = 512
D_FF = 2048
FF_CHUNK = 512          # hidden-dim block; 4 chunks cover D_FF


# ----------------------------------------------------------------------------- kernel

def _ffn_kernel(x_ref, w1_ref, b1_ref, w2_ref, b2_ref, o_ref):
    """Fused position-wise FFN on one row tile, hidden dim blocked in FF_CHUNK pieces.

    x_ref : (TM, D_MODEL) f32      w1_ref: (D_MODEL, D_FF) bf16   b1_ref: (1, D_FF) f32
    w2_ref: (D_FF, D_MODEL) bf16   b2_ref: (1, D_MODEL) f32       o_ref : (TM, D_MODEL) f32
    """
    x = x_ref[...].astype(jnp.bfloat16)            # MXU-native operand; acc stays f32

    def body(c, acc):
        off = pl.multiple_of(c * FF_CHUNK, FF_CHUNK)
        # first linear chunk + bias + ReLU (f32 accumulate on the MXU)
        h = jnp.dot(x, w1_ref[:, pl.ds(off, FF_CHUNK)],
                    preferred_element_type=jnp.float32)
        h = jnp.maximum(h + b1_ref[:, pl.ds(off, FF_CHUNK)], 0.0)
        # dropout is identity under eval semantics (see TODO below)
        # second linear chunk, accumulated into the f32 output accumulator
        return acc + jnp.dot(h.astype(jnp.bfloat16),
                             w2_ref[pl.ds(off, FF_CHUNK), :],
                             preferred_element_type=jnp.float32)

    acc = lax.fori_loop(0, D_FF // FF_CHUNK, body,
                        jnp.zeros(o_ref.shape, jnp.float32), unroll=True)
    o_ref[...] = acc + b2_ref[...]


# TODO(synk): training-mode dropout (stochastic masking of the hidden) would need
# pltpu.prng_seed/prng_random_bits inside the kernel; eval semantics (identity) is used.


# ----------------------------------------------------------------------------- wrapper

def _choose_row_tile(rows, max_tile):
    """Pick a row tile: prefer exact divisors (no pad) giving an even grid >= 2 tiles
    (v7x megacore), then any grid >= 2, then any divisor; pad-fallback only if ragged."""
    candidates = tuple(t for t in (512, 256, 128, 64, 32, 16, 8) if t <= max_tile)
    for want_even in (True, False):
        for tm in candidates:
            if rows % tm == 0:
                n = rows // tm
                if n >= 2 and (n % 2 == 0 or not want_even):
                    return tm, False
    for tm in candidates:
        if rows % tm == 0:
            return tm, False
    # ragged row count: fall back to padding (rare)
    return min(max_tile, ((rows + 7) // 8) * 8), True


def position_wise_feed_forward(x, w1_bf16, b1, w2_bf16, b2, *, max_tile_rows=512):
    """x: (..., D_MODEL) float32 -> (..., D_MODEL) float32."""
    orig_shape = x.shape
    x2 = x.reshape(-1, orig_shape[-1])
    rows = x2.shape[0]

    tm, needs_pad = _choose_row_tile(rows, max_tile_rows)
    padded_rows = pl.cdiv(rows, tm) * tm
    if needs_pad and padded_rows != rows:
        # TODO(synk): only the final partial tile actually needs padding; the full
        # jnp.pad copy is a rare fallback when no candidate tile divides `rows`.
        x2 = jnp.pad(x2, ((0, padded_rows - rows), (0, 0)))

    flops = 4 * padded_rows * D_MODEL * D_FF               # two matmuls, 2 flops/MAC
    bytes_accessed = (padded_rows * D_MODEL * 4 * 2        # x in + y out (f32)
                      + 2 * D_MODEL * D_FF * 2             # bf16 weights (read once)
                      + (D_FF + D_MODEL) * 4)              # biases

    out = pl.pallas_call(
        _ffn_kernel,
        out_shape=jax.ShapeDtypeStruct((padded_rows, D_MODEL), jnp.float32),
        grid_spec=pltpu.PrefetchScalarGridSpec(
            num_scalar_prefetch=0,
            grid=(padded_rows // tm,),
            in_specs=[
                pl.BlockSpec((tm, D_MODEL), lambda i: (i, 0)),      # x row tile
                pl.BlockSpec((D_MODEL, D_FF), lambda i: (0, 0)),    # w1 (grid-resident)
                pl.BlockSpec((1, D_FF), lambda i: (0, 0)),          # b1
                pl.BlockSpec((D_FF, D_MODEL), lambda i: (0, 0)),    # w2 (grid-resident)
                pl.BlockSpec((1, D_MODEL), lambda i: (0, 0)),       # b2
            ],
            out_specs=pl.BlockSpec((tm, D_MODEL), lambda i: (i, 0)),
        ),
        compiler_params=pltpu.CompilerParams(
            dimension_semantics=("parallel",),       # row tiles split across v7x's 2 TCs
            vmem_limit_bytes=32 * 1024 * 1024,       # explicit budget (safe on v5e/v7x)
        ),
        cost_estimate=pl.CostEstimate(flops=flops, transcendentals=0,
                                      bytes_accessed=bytes_accessed),
    )(x2, w1_bf16, b1, w2_bf16, b2)

    if padded_rows != rows:
        out = out[:rows]
    return out.reshape(orig_shape)


# ----------------------------------------------------------------------------- params

def init_params(key):
    """torch.nn.Linear default init: U(-1/sqrt(fan_in), 1/sqrt(fan_in)); weights stored
    as (in, out) so forward is x @ w + b (same math as x @ W.T + b in torch)."""
    k1, k2, k3, k4 = jax.random.split(key, 4)
    lim1 = 1.0 / math.sqrt(D_MODEL)
    lim2 = 1.0 / math.sqrt(D_FF)
    w1 = jax.random.uniform(k1, (D_MODEL, D_FF), jnp.float32, -lim1, lim1)
    b1 = jax.random.uniform(k2, (1, D_FF), jnp.float32, -lim1, lim1)
    w2 = jax.random.uniform(k3, (D_FF, D_MODEL), jnp.float32, -lim2, lim2)
    b2 = jax.random.uniform(k4, (1, D_MODEL), jnp.float32, -lim2, lim2)
    return w1, b1, w2, b2


def reference_ffn(x, w1, b1, w2, b2):
    """Pure-JAX reference with the same bf16-operand / f32-accumulate math."""
    x2 = x.reshape(-1, D_MODEL)
    h = jnp.dot(x2.astype(jnp.bfloat16), w1.astype(jnp.bfloat16),
                preferred_element_type=jnp.float32) + b1
    h = jnp.maximum(h, 0.0)
    y = jnp.dot(h.astype(jnp.bfloat16), w2.astype(jnp.bfloat16),
                preferred_element_type=jnp.float32) + b2
    return y.reshape(x.shape)


# ----------------------------------------------------------------------------- main

if __name__ == "__main__":
    key = jax.random.PRNGKey(0)
    pk, xk = jax.random.split(key)
    w1, b1, w2, b2 = init_params(pk)

    # one-time bf16 conversion of the matmul weights (halves weight DMA bytes)
    w1_bf16 = w1.astype(jnp.bfloat16)
    w2_bf16 = w2.astype(jnp.bfloat16)

    B, S = 2, 8                                           # small (batch, seq)
    x = jax.random.normal(xk, (B, S, D_MODEL), jnp.float32)

    out = position_wise_feed_forward(x, w1_bf16, b1, w2_bf16, b2)
    out = jax.block_until_ready(out)

    assert out.shape == (B, S, D_MODEL) and out.dtype == jnp.float32
    assert bool(jnp.all(jnp.isfinite(out)))

    ref = jax.block_until_ready(reference_ffn(x, w1, b1, w2, b2))
    assert bool(jnp.allclose(out, ref, rtol=2e-2, atol=2e-2))

    print("KERNEL_OK")
</pallas_src>

<mosaic_0001>
module attributes {stable_mosaic.version = 11 : i64} {
  func.func @_ffn_kernel(%arg0: i32, %arg1: memref<8x512xf32, #tpu.memory_space<vmem>>, %arg2: memref<512x2048xbf16, #tpu.memory_space<vmem>>, %arg3: memref<1x2048xf32, #tpu.memory_space<vmem>>, %arg4: memref<2048x512xbf16, #tpu.memory_space<vmem>>, %arg5: memref<1x512xf32, #tpu.memory_space<vmem>>, %arg6: memref<8x512xf32, #tpu.memory_space<vmem>>) attributes {dimension_semantics = [#tpu.dimension_semantics<parallel>], iteration_bounds = array<i64: 2>, scalar_prefetch = 0 : i64, scratch_operands = 0 : i64, tpu.core_type = #tpu.core_type<tc>, window_params = [{transform_indices = @transform_0, window_bounds = array<i64: 8, 512>}, {pipeline_mode = #tpu.pipeline_mode<synchronous>, transform_indices = @transform_1, window_bounds = array<i64: 512, 2048>}, {pipeline_mode = #tpu.pipeline_mode<synchronous>, transform_indices = @transform_2, window_bounds = array<i64: 1, 2048>}, {pipeline_mode = #tpu.pipeline_mode<synchronous>, transform_indices = @transform_3, window_bounds = array<i64: 2048, 512>}, {pipeline_mode = #tpu.pipeline_mode<synchronous>, transform_indices = @transform_4, window_bounds = array<i64: 1, 512>}, {transform_indices = @transform_5, window_bounds = array<i64: 8, 512>}]} {
    %c0 = arith.constant 0 : index
    %c0_0 = arith.constant 0 : index
    %0 = vector.load %arg1[%c0, %c0_0] : memref<8x512xf32, #tpu.memory_space<vmem>>, vector<8x512xf32>
    %1 = arith.truncf %0 : vector<8x512xf32> to vector<8x512xbf16>
    %cst = arith.constant 0.000000e+00 : f32
    %2 = vector.broadcast %cst : f32 to vector<8x512xf32>
    %c0_i32 = arith.constant 0 : i32
    %c512_i32 = arith.constant 512 : i32
    %3 = arith.muli %c0_i32, %c512_i32 : i32
    %4 = tpu.assume_multiple %3, 512 : i32
    %c0_1 = arith.constant 0 : index
    %5 = arith.index_cast %4 : i32 to index
    %6 = vector.load %arg2[%c0_1, %5] : memref<512x2048xbf16, #tpu.memory_space<vmem>>, vector<512x512xbf16>
    %cst_2 = arith.constant dense<0.000000e+00> : vector<8x512xf32>
    %7 = tpu.matmul %1, %6, %cst_2 {dimension_numbers = #tpu.dot_dimension_numbers<[1], [0], [0], [1], [0, 0, 1, 1], [], []>} : vector<8x512xbf16>, vector<512x512xbf16>, vector<8x512xf32> -> vector<8x512xf32>
    %c0_3 = arith.constant 0 : index
    %8 = arith.index_cast %4 : i32 to index
    %9 = vector.load %arg3[%c0_3, %8] : memref<1x2048xf32, #tpu.memory_space<vmem>>, vector<1x512xf32>
    %10 = vector.broadcast %9 : vector<1x512xf32> to vector<8x512xf32>
    %11 = arith.addf %7, %10 : vector<8x512xf32>
    %cst_4 = arith.constant 0.000000e+00 : f32
    %12 = vector.broadcast %cst_4 : f32 to vector<8x512xf32>
    %13 = arith.maximumf %11, %12 : vector<8x512xf32>
    %14 = arith.truncf %13 : vector<8x512xf32> to vector<8x512xbf16>
    %15 = arith.index_cast %4 : i32 to index
    %c0_5 = arith.constant 0 : index
    %16 = vector.load %arg4[%15, %c0_5] : memref<2048x512xbf16, #tpu.memory_space<vmem>>, vector<512x512xbf16>
    %cst_6 = arith.constant dense<0.000000e+00> : vector<8x512xf32>
    %17 = tpu.matmul %14, %16, %cst_6 {dimension_numbers = #tpu.dot_dimension_numbers<[1], [0], [0], [1], [0, 0, 1, 1], [], []>} : vector<8x512xbf16>, vector<512x512xbf16>, vector<8x512xf32> -> vector<8x512xf32>
    %18 = arith.addf %2, %17 : vector<8x512xf32>
    %c1_i32 = arith.constant 1 : i32
    %c512_i32_7 = arith.constant 512 : i32
    %19 = arith.muli %c1_i32, %c512_i32_7 : i32
    %20 = tpu.assume_multiple %19, 512 : i32
    %c0_8 = arith.constant 0 : index
    %21 = arith.index_cast %20 : i32 to index
    %22 = vector.load %arg2[%c0_8, %21] : memref<512x2048xbf16, #tpu.memory_space<vmem>>, vector<512x512xbf16>
    %cst_9 = arith.constant dense<0.000000e+00> : vector<8x512xf32>
    %23 = tpu.matmul %1, %22, %cst_9 {dimension_numbers = #tpu.dot_dimension_numbers<[1], [0], [0], [1], [0, 0, 1, 1], [], []>} : vector<8x512xbf16>, vector<512x512xbf16>, vector<8x512xf32> -> vector<8x512xf32>
    %c0_10 = arith.constant 0 : index
    %24 = arith.index_cast %20 : i32 to index
    %25 = vector.load %arg3[%c0_10, %24] : memref<1x2048xf32, #tpu.memory_space<vmem>>, vector<1x512xf32>
    %26 = vector.broadcast %25 : vector<1x512xf32> to vector<8x512xf32>
    %27 = arith.addf %23, %26 : vector<8x512xf32>
    %cst_11 = arith.constant 0.000000e+00 : f32
    %28 = vector.broadcast %cst_11 : f32 to vector<8x512xf32>
    %29 = arith.maximumf %27, %28 : vector<8x512xf32>
    %30 = arith.truncf %29 : vector<8x512xf32> to vector<8x512xbf16>
    %31 = arith.index_cast %20 : i32 to index
    %c0_12 = arith.constant 0 : index
    %32 = vector.load %arg4[%31, %c0_12] : memref<2048x512xbf16, #tpu.memory_space<vmem>>, vector<512x512xbf16>
    %cst_13 = arith.constant dense<0.000000e+00> : vector<8x512xf32>
    %33 = tpu.matmul %30, %32, %cst_13 {dimension_numbers = #tpu.dot_dimension_numbers<[1], [0], [0], [1], [0, 0, 1, 1], [], []>} : vector<8x512xbf16>, vector<512x512xbf16>, vector<8x512xf32> -> vector<8x512xf32>
    %34 = arith.addf %18, %33 : vector<8x512xf32>
    %c2_i32 = arith.constant 2 : i32
    %c512_i32_14 = arith.constant 512 : i32
    %35 = arith.muli %c2_i32, %c512_i32_14 : i32
    %36 = tpu.assume_multiple %35, 512 : i32
    %c0_15 = arith.constant 0 : index
    %37 = arith.index_cast %36 : i32 to index
    %38 = vector.load %arg2[%c0_15, %37] : memref<512x2048xbf16, #tpu.memory_space<vmem>>, vector<512x512xbf16>
    %cst_16 = arith.constant dense<0.000000e+00> : vector<8x512xf32>
    %39 = tpu.matmul %1, %38, %cst_16 {dimension_numbers = #tpu.dot_dimension_numbers<[1], [0], [0], [1], [0, 0, 1, 1], [], []>} : vector<8x512xbf16>, vector<512x512xbf16>, vector<8x512xf32> -> vector<8x512xf32>
    %c0_17 = arith.constant 0 : index
    %40 = arith.index_cast %36 : i32 to index
    %41 = vector.load %arg3[%c0_17, %40] : memref<1x2048xf32, #tpu.memory_space<vmem>>, vector<1x512xf32>
    %42 = vector.broadcast %41 : vector<1x512xf32> to vector<8x512xf32>
    %43 = arith.addf %39, %42 : vector<8x512xf32>
    %cst_18 = arith.constant 0.000000e+00 : f32
    %44 = vector.broadcast %cst_18 : f32 to vector<8x512xf32>
    %45 = arith.maximumf %43, %44 : vector<8x512xf32>
    %46 = arith.truncf %45 : vector<8x512xf32> to vector<8x512xbf16>
    %47 = arith.index_cast %36 : i32 to index
    %c0_19 = arith.constant 0 : index
    %48 = vector.load %arg4[%47, %c0_19] : memref<2048x512xbf16, #tpu.memory_space<vmem>>, vector<512x512xbf16>
    %cst_20 = arith.constant dense<0.000000e+00> : vector<8x512xf32>
    %49 = tpu.matmul %46, %48, %cst_20 {dimension_numbers = #tpu.dot_dimension_numbers<[1], [0], [0], [1], [0, 0, 1, 1], [], []>} : vector<8x512xbf16>, vector<512x512xbf16>, vector<8x512xf32> -> vector<8x512xf32>
    %50 = arith.addf %34, %49 : vector<8x512xf32>
    %c3_i32 = arith.constant 3 : i32
    %c512_i32_21 = arith.constant 512 : i32
    %51 = arith.muli %c3_i32, %c512_i32_21 : i32
    %52 = tpu.assume_multiple %51, 512 : i32
    %c0_22 = arith.constant 0 : index
    %53 = arith.index_cast %52 : i32 to index
    %54 = vector.load %arg2[%c0_22, %53] : memref<512x2048xbf16, #tpu.memory_space<vmem>>, vector<512x512xbf16>
    %cst_23 = arith.constant dense<0.000000e+00> : vector<8x512xf32>
    %55 = tpu.matmul %1, %54, %cst_23 {dimension_numbers = #tpu.dot_dimension_numbers<[1], [0], [0], [1], [0, 0, 1, 1], [], []>} : vector<8x512xbf16>, vector<512x512xbf16>, vector<8x512xf32> -> vector<8x512xf32>
    %c0_24 = arith.constant 0 : index
    %56 = arith.index_cast %52 : i32 to index
    %57 = vector.load %arg3[%c0_24, %56] : memref<1x2048xf32, #tpu.memory_space<vmem>>, vector<1x512xf32>
    %58 = vector.broadcast %57 : vector<1x512xf32> to vector<8x512xf32>
    %59 = arith.addf %55, %58 : vector<8x512xf32>
    %cst_25 = arith.constant 0.000000e+00 : f32
    %60 = vector.broadcast %cst_25 : f32 to vector<8x512xf32>
    %61 = arith.maximumf %59, %60 : vector<8x512xf32>
    %62 = arith.truncf %61 : vector<8x512xf32> to vector<8x512xbf16>
    %63 = arith.index_cast %52 : i32 to index
    %c0_26 = arith.constant 0 : index
    %64 = vector.load %arg4[%63, %c0_26] : memref<2048x512xbf16, #tpu.memory_space<vmem>>, vector<512x512xbf16>
    %cst_27 = arith.constant dense<0.000000e+00> : vector<8x512xf32>
    %65 = tpu.matmul %62, %64, %cst_27 {dimension_numbers = #tpu.dot_dimension_numbers<[1], [0], [0], [1], [0, 0, 1, 1], [], []>} : vector<8x512xbf16>, vector<512x512xbf16>, vector<8x512xf32> -> vector<8x512xf32>
    %66 = arith.addf %50, %65 : vector<8x512xf32>
    %c4_i32 = arith.constant 4 : i32
    %c0_28 = arith.constant 0 : index
    %c0_29 = arith.constant 0 : index
    %67 = vector.load %arg5[%c0_28, %c0_29] : memref<1x512xf32, #tpu.memory_space<vmem>>, vector<1x512xf32>
    %68 = vector.broadcast %67 : vector<1x512xf32> to vector<8x512xf32>
    %69 = arith.addf %66, %68 : vector<8x512xf32>
    %c0_30 = arith.constant 0 : index
    %c0_31 = arith.constant 0 : index
    %70 = vector.load %arg6[%c0_30, %c0_31] : memref<8x512xf32, #tpu.memory_space<vmem>>, vector<8x512xf32>
    tpu.vector_store %arg6[%c0_30, %c0_31], %69 {strides = array<i32>} : memref<8x512xf32, #tpu.memory_space<vmem>>, vector<8x512xf32>,
    return
  }
  func.func @transform_0(%arg0: i32) -> (i32, i32) {
    %c0_i32 = arith.constant 0 : i32
    %c0_i32_0 = arith.constant 0 : i32
    return %arg0, %c0_i32 : i32, i32
  }
  func.func @transform_1(%arg0: i32) -> (i32, i32) {
    %c0_i32 = arith.constant 0 : i32
    %c0_i32_0 = arith.constant 0 : i32
    %c0_i32_1 = arith.constant 0 : i32
    return %c0_i32, %c0_i32_0 : i32, i32
  }
  func.func @transform_2(%arg0: i32) -> (i32, i32) {
    %c0_i32 = arith.constant 0 : i32
    %c0_i32_0 = arith.constant 0 : i32
    %c0_i32_1 = arith.constant 0 : i32
    return %c0_i32, %c0_i32_0 : i32, i32
  }
  func.func @transform_3(%arg0: i32) -> (i32, i32) {
    %c0_i32 = arith.constant 0 : i32
    %c0_i32_0 = arith.constant 0 : i32
    %c0_i32_1 = arith.constant 0 : i32
    return %c0_i32, %c0_i32_0 : i32, i32
  }
  func.func @transform_4(%arg0: i32) -> (i32, i32) {
    %c0_i32 = arith.constant 0 : i32
    %c0_i32_0 = arith.constant 0 : i32
    %c0_i32_1 = arith.constant 0 : i32
    return %c0_i32, %c0_i32_0 : i32, i32
  }
  func.func @transform_5(%arg0: i32) -> (i32, i32) {
    %c0_i32 = arith.constant 0 : i32
    %c0_i32_0 = arith.constant 0 : i32
    return %arg0, %c0_i32 : i32, i32
  }
}

</mosaic_0001>

<llo_original>
// kernel: tpu_custom_call.1
$region0: #{tpu_custom_call.1}
  #allocation0 [shape = 'u32[]', space=smem, size = 0x4, offset = 0x4, fixed_abs, tag = 'smem constant byte address 0x4 - core index']
  #allocation1 [shape = 'u32[72,128]{1,0:T(1,128)}', space=vmem, size = 0x9000, scoped, tag = 'internal scratch']
  %s0 = inlined_call_operand.hbm [shape: f32[16,512], index: 0, kind: input, shape index: {}]
  %s1 = inlined_call_operand.hbm [shape: bf16[512,2048], index: 1, kind: input, shape index: {}]
  %s2 = inlined_call_operand.hbm [shape: f32[1,2048], index: 2, kind: input, shape index: {}]
  %s3 = inlined_call_operand.hbm [shape: bf16[2048,512], index: 3, kind: input, shape index: {}]
  %s4 = inlined_call_operand.hbm [shape: f32[1,512], index: 4, kind: input, shape index: {}]
  %s5 = inlined_call_operand.hbm [shape: f32[16,512], index: 5, kind: output, shape index: {}]
  %s6 = sld [smem:[#allocation0]]
  $region73: #{tpu_custom_call.1} parent=0
    _
  %s8 = ssub.s32 1, %s6
  %s9 = scalar_select 0, %s8, %s6
  $region1: #{tpu_custom_call.1} parent=0
    #allocation2 [shape = 'u8[32768]{0}', space=vmem, size = 0x8000, scoped, tag = 'input window, operand 0']
    #allocation3 [shape = 's32[2]{0}', space=sflag, size = 0x8, scoped, tag = 'scoped memory for tpu_custom_call.1']
    #allocation4 [shape = 's32[2]{0}', space=sflag, size = 0x8, scoped, tag = 'scoped memory for tpu_custom_call.1']
    #allocation5 [shape = 'u8[2097152]{0}', space=vmem, size = 0x200000, scoped, tag = 'input window, operand 1, single buffered']
    #allocation6 [shape = 's32[1]{0}', space=sflag, size = 0x4, scoped, tag = 'scoped memory for tpu_custom_call.1']
    #allocation7 [shape = 'u8[8192]{0}', space=vmem, size = 0x2000, scoped, tag = 'input window, operand 2, single buffered']
    #allocation8 [shape = 'u8[2097152]{0}', space=vmem, size = 0x200000, scoped, tag = 'input window, operand 3, single buffered']
    #allocation9 [shape = 's32[1]{0}', space=sflag, size = 0x4, scoped, tag = 'scoped memory for tpu_custom_call.1']
    #allocation10 [shape = 'u8[2048]{0}', space=vmem, size = 0x800, scoped, tag = 'input window, operand 4, single buffered']
    #allocation11 [shape = 'u8[32768]{0}', space=vmem, size = 0x8000, scoped, tag = 'output window, operand 0']
    %10 = vsyncpa [#allocation3], 0
    %s11 = scalar_lea.sflag [#allocation3], 1
    %12 = vsyncpa %s11, 0
    %13 = vsyncpa [#allocation6], 0
    %14 = vsyncpa [#allocation9], 0
    %15 = vsyncpa [#allocation4], 0
    %s16 = scalar_lea.sflag [#allocation4], 1
    %17 = vsyncpa %s16, 0
    loop: start=0, step=1, limit=4
    $region2: #{tpu_custom_call.1} parent=1 // loop_pre_header
      _
    $region3: #{tpu_custom_call.1} parent=1 // loop_header
      %s19 = sphi 0, %s23
      %p20 = scmp.ge.s32.totalorder %s19, 4
      %s29 = sphi 0, %s31
      %s32 = sphi 0, %s29
      %s33 = sphi 0, %s32
      %s49 = sphi 0, %s33
      %s53 = sphi 0, %s53
      %s55 = sphi 0, %s53
      %s56 = sphi 0, %s55
      %s70 = sphi 0, %s56
      %s74 = sphi 0, %s74
      %s76 = sphi 0, %s74
      %s77 = sphi 0, %s76
      %s91 = sphi 0, %s77
      %s95 = sphi 0, %s95
      %s97 = sphi 0, %s95
      %s98 = sphi 0, %s97
      %s112 = sphi 0, %s98
      %s116 = sphi 0, %s116
      %s118 = sphi 0, %s116
      %s119 = sphi 0, %s118
      %s133 = sphi 0, %s119
      %s139 = sphi 0, %s141
      %s142 = sphi 0, %s139
      %s143 = sphi 0, %s142
      %s159 = sphi 0, %s143
    $region4: #{tpu_custom_call.1} parent=1 // loop_header_branch
      %22 = sbr.rel (%p20) target = $region8
    $region5: #{tpu_custom_call.1} parent=1 // loop_body
      %s24 = ssub.s32 %s19, 1
      %s25 = ssub.s32 %s19, 2
      %s26 = sadd.s32 %s19, 1
      %s27 = ssub.s32 %s19, %s26
      %p28 = scmp.eq.s32.totalorder %s27, 0
      %s30 = sadd.s32 %s29, 1
      %s31 = scalar_select %p28, %s29, %s30
      %p34 = pneg %p28
      %p35 = scmp.eq.s32.totalorder %s19, 1
      %p36 = por %p34, %p35
      %p37 = scmp.ne.s32.totalorder %s29, %s32
      %p38 = scmp.eq.s32.totalorder %s19, 0
      %p39 = por %p37, %p38
      %p40 = scmp.ne.s32.totalorder %s29, %s32
      %p41 = scmp.eq.s32.totalorder %s24, 1
      %p42 = por %p40, %p41
      %p43 = scmp.ne.s32.totalorder %s32, %s33
      %p44 = scmp.eq.s32.totalorder %s24, 0
      %p45 = por %p43, %p44
      %p46 = scmp.ne.s32.totalorder %s32, %s33
      %p47 = scmp.eq.s32.totalorder %s25, 1
      %p48 = por %p46, %p47
      %p50 = scmp.ne.s32.totalorder %s33, %s49
      %p51 = scmp.eq.s32.totalorder %s25, 0
      %p52 = por %p50, %p51
      %s54 = sadd.s32 %s53, 1
      %p57 = scmp.eq.s32.totalorder %s19, 1
      %p58 = scmp.ne.s32.totalorder %s53, %s55
      %p59 = scmp.eq.s32.totalorder %s19, 0
      %p60 = por %p58, %p59
      %p61 = scmp.ne.s32.totalorder %s53, %s55
      %p62 = scmp.eq.s32.totalorder %s24, 1
      %p63 = por %p61, %p62
      %p64 = scmp.ne.s32.totalorder %s55, %s56
      %p65 = scmp.eq.s32.totalorder %s24, 0
      %p66 = por %p64, %p65
      %p67 = scmp.ne.s32.totalorder %s55, %s56
      %p68 = scmp.eq.s32.totalorder %s25, 1
      %p69 = por %p67, %p68
      %p71 = scmp.ne.s32.totalorder %s56, %s70
      %p72 = scmp.eq.s32.totalorder %s25, 0
      %p73 = por %p71, %p72
      %s75 = sadd.s32 %s74, 1
      %p78 = scmp.eq.s32.totalorder %s19, 1
      %p79 = scmp.ne.s32.totalorder %s74, %s76
      %p80 = scmp.eq.s32.totalorder %s19, 0
      %p81 = por %p79, %p80
      %p82 = scmp.ne.s32.totalorder %s74, %s76
      %p83 = scmp.eq.s32.totalorder %s24, 1
      %p84 = por %p82, %p83
      %p85 = scmp.ne.s32.totalorder %s76, %s77
      %p86 = scmp.eq.s32.totalorder %s24, 0
      %p87 = por %p85, %p86
      %p88 = scmp.ne.s32.totalorder %s76, %s77
      %p89 = scmp.eq.s32.totalorder %s25, 1
      %p90 = por %p88, %p89
      %p92 = scmp.ne.s32.totalorder %s77, %s91
      %p93 = scmp.eq.s32.totalorder %s25, 0
      %p94 = por %p92, %p93
      %s96 = sadd.s32 %s95, 1
      %p99 = scmp.eq.s32.totalorder %s19, 1
      %p100 = scmp.ne.s32.totalorder %s95, %s97
      %p101 = scmp.eq.s32.totalorder %s19, 0
      %p102 = por %p100, %p101
      %p103 = scmp.ne.s32.totalorder %s95, %s97
      %p104 = scmp.eq.s32.totalorder %s24, 1
      %p105 = por %p103, %p104
      %p106 = scmp.ne.s32.totalorder %s97, %s98
      %p107 = scmp.eq.s32.totalorder %s24, 0
      %p108 = por %p106, %p107
      %p109 = scmp.ne.s32.totalorder %s97, %s98
      %p110 = scmp.eq.s32.totalorder %s25, 1
      %p111 = por %p109, %p110
      %p113 = scmp.ne.s32.totalorder %s98, %s112
      %p114 = scmp.eq.s32.totalorder %s25, 0
      %p115 = por %p113, %p114
      %s117 = sadd.s32 %s116, 1
      %p120 = scmp.eq.s32.totalorder %s19, 1
      %p121 = scmp.ne.s32.totalorder %s116, %s118
      %p122 = scmp.eq.s32.totalorder %s19, 0
      %p123 = por %p121, %p122
      %p124 = scmp.ne.s32.totalorder %s116, %s118
      %p125 = scmp.eq.s32.totalorder %s24, 1
      %p126 = por %p124, %p125
      %p127 = scmp.ne.s32.totalorder %s118, %s119
      %p128 = scmp.eq.s32.totalorder %s24, 0
      %p129 = por %p127, %p128
      %p130 = scmp.ne.s32.totalorder %s118, %s119
      %p131 = scmp.eq.s32.totalorder %s25, 1
      %p132 = por %p130, %p131
      %p134 = scmp.ne.s32.totalorder %s119, %s133
      %p135 = scmp.eq.s32.totalorder %s25, 0
      %p136 = por %p134, %p135
      %s137 = ssub.s32 %s19, %s26
      %p138 = scmp.eq.s32.totalorder %s137, 0
      %s140 = sadd.s32 %s139, 1
      %s141 = scalar_select %p138, %s139, %s140
      %p144 = pneg %p138
      %p145 = scmp.eq.s32.totalorder %s19, 1
      %p146 = por %p144, %p145
      %p147 = scmp.ne.s32.totalorder %s139, %s142
      %p148 = scmp.eq.s32.totalorder %s19, 0
      %p149 = por %p147, %p148
      %p150 = scmp.ne.s32.totalorder %s139, %s142
      %p151 = scmp.eq.s32.totalorder %s24, 1
      %p152 = por %p150, %p151
      %p153 = scmp.ne.s32.totalorder %s142, %s143
      %p154 = scmp.eq.s32.totalorder %s24, 0
      %p155 = por %p153, %p154
      %p156 = scmp.ne.s32.totalorder %s142, %s143
      %p157 = scmp.eq.s32.totalorder %s25, 1
      %p158 = por %p156, %p157
      %p160 = scmp.ne.s32.totalorder %s143, %s159
      %p161 = scmp.eq.s32.totalorder %s25, 0
      %p162 = por %p160, %p161
      %p163 = scmp.le.s32.totalorder 1, %s19
      %p164 = scmp.lt.s32.totalorder %s19, 3
      %p165 = pnand %p163, %p164
      %p166 = pneg %p165
      // Predicated region
      $region9: #{tpu_custom_call.1} parent=5 // pred_check
        _
      $region10: #{tpu_custom_call.1} parent=5 // pred_check_branch
        %168 = sbr.rel (%p165) target = $region12
      $region11: #{tpu_custom_call.1} parent=5 // pred_region
        %s169 = ssub.s32 %s19, 1
        // Predicated region
        $region13: #{tpu_custom_call.1} parent=11 // pred_check
          %p170 = pneg %p66
        $region14: #{tpu_custom_call.1} parent=11 // pred_check_branch
          %172 = sbr.rel (%p170) target = $region16
        $region15: #{tpu_custom_call.1} parent=11 // pred_region
          %174 = vsyncadd [#allocation6], 0
          %s175 = sshll.u32 %s1, 4
          %s176 = int_to_ptr.hbm [resolvable:$true] %s175
          %s177 = sshll.u32 [#allocation5], 4
          %s178 = int_to_ptr.vmem [resolvable:$true] %s177
          %183 = dma.hbm_to_vmem [thread:$0]  %s176, 65536, %s178, [#allocation6], 1024, 1024, 64
        $region16: #{tpu_custom_call.1} parent=11 // pred_fallthru
          _
        // Predicated region
        $region17: #{tpu_custom_call.1} parent=11 // pred_check
          %p184 = pneg %p87
        $region18: #{tpu_custom_call.1} parent=11 // pred_check_branch
          %186 = sbr.rel (%p184) target = $region20
        $region19: #{tpu_custom_call.1} parent=11 // pred_region
          %188 = vsyncadd [#allocation6], 0
          %s190 = sshll.u32 %s2, 4
          %s191 = int_to_ptr.hbm [resolvable:$true] %s190
          %s192 = sshll.u32 [#allocation7], 4
          %s193 = int_to_ptr.vmem [resolvable:$true] %s192
          %195 = dma.hbm_to_vmem [thread:$0]  %s191, 256, %s193, [#allocation6]
        $region20: #{tpu_custom_call.1} parent=11 // pred_fallthru
          _
        // Predicated region
        $region21: #{tpu_custom_call.1} parent=11 // pred_check
          %p196 = pneg %p108
        $region22: #{tpu_custom_call.1} parent=11 // pred_check_branch
          %198 = sbr.rel (%p196) target = $region24
        $region23: #{tpu_custom_call.1} parent=11 // pred_region
          %200 = vsyncadd [#allocation9], 0
          %s201 = sshll.u32 %s3, 4
          %s202 = int_to_ptr.hbm [resolvable:$true] %s201
          %s203 = sshll.u32 [#allocation8], 4
          %s204 = int_to_ptr.vmem [resolvable:$true] %s203
          %209 = dma.hbm_to_vmem [thread:$0]  %s202, 65536, %s204, [#allocation9], 256, 256, 16
        $region24: #{tpu_custom_call.1} parent=11 // pred_fallthru
          _
        // Predicated region
        $region25: #{tpu_custom_call.1} parent=11 // pred_check
          %p210 = pneg %p129
        $region26: #{tpu_custom_call.1} parent=11 // pred_check_branch
          %212 = sbr.rel (%p210) target = $region28
        $region27: #{tpu_custom_call.1} parent=11 // pred_region
          %214 = vsyncadd [#allocation9], 0
          %s216 = sshll.u32 %s4, 4
          %s217 = int_to_ptr.hbm [resolvable:$true] %s216
          %s218 = sshll.u32 [#allocation10], 4
          %s219 = int_to_ptr.vmem [resolvable:$true] %s218
          %221 = dma.hbm_to_vmem [thread:$0]  %s217, 64, %s219, [#allocation9]
        $region28: #{tpu_custom_call.1} parent=11 // pred_fallthru
          _
      $region12: #{tpu_custom_call.1} parent=5 // pred_fallthru
        _
      %p222 = scmp.lt.s32.totalorder %s19, 2
      // Predicated region
      $region29: #{tpu_custom_call.1} parent=5 // pred_check
        %p223 = pneg %p222
      $region30: #{tpu_custom_call.1} parent=5 // pred_check_branch
        %225 = sbr.rel (%p223) target = $region32
      $region31: #{tpu_custom_call.1} parent=5 // pred_region
        // Predicated region
        $region33: #{tpu_custom_call.1} parent=31 // pred_check
          %p226 = pneg %p39
        $region34: #{tpu_custom_call.1} parent=31 // pred_check_branch
          %228 = sbr.rel (%p226) target = $region36
        $region35: #{tpu_custom_call.1} parent=31 // pred_region
          %s229 = sand.u32 %s29, 1
          %s230 = scalar_lea.sflag [#allocation3], %s229
          %s231 = sand.u32 %s29, 1
          %s232 = smul.addr %s231, 32
          %s233 = scalar_lea.vmem [#allocation2], %s232
          %235 = vsyncadd %s230, 0
          %s236 = smul.addr %s19, 4
          %s237 = smul.addr %s236, 8
          %s238 = scalar_lea.hbm %s0, %s237
          %s240 = sshll.u32 %s238, 4
          %s241 = int_to_ptr.hbm [resolvable:$true] %s240
          %s242 = sshll.u32 %s233, 4
          %s243 = int_to_ptr.vmem [resolvable:$true] %s242
          %245 = dma.hbm_to_vmem [thread:$0]  %s241, 512, %s243, %s230
        $region36: #{tpu_custom_call.1} parent=31 // pred_fallthru
          _
      $region32: #{tpu_custom_call.1} parent=5 // pred_fallthru
        _
      %p246 = scmp.le.s32.totalorder 1, %s19
      %p247 = scmp.lt.s32.totalorder %s19, 3
      %p248 = pnand %p246, %p247
      %p249 = pneg %p248
      // Predicated region
      $region37: #{tpu_custom_call.1} parent=5 // pred_check
        _
      $region38: #{tpu_custom_call.1} parent=5 // pred_check_branch
        %251 = sbr.rel (%p248) target = $region40
      $region39: #{tpu_custom_call.1} parent=5 // pred_region
        %s252 = ssub.s32 %s19, 1
        %s253 = sand.u32 %s32, 1
        %s254 = scalar_lea.sflag [#allocation3], %s253
        %s255 = sand.u32 %s32, 1
        %s256 = smul.addr %s255, 32
        %s257 = scalar_lea.vmem [#allocation2], %s256
        // Predicated region
        $region41: #{tpu_custom_call.1} parent=39 // pred_check
          %p258 = pneg %p45
        $region42: #{tpu_custom_call.1} parent=39 // pred_check_branch
          %260 = sbr.rel (%p258) target = $region44
        $region43: #{tpu_custom_call.1} parent=39 // pred_region
          %262 = dma.done %s254, 512
        $region44: #{tpu_custom_call.1} parent=39 // pred_fallthru
          _
        // Predicated region
        $region45: #{tpu_custom_call.1} parent=39 // pred_check
          %p263 = pneg %p66
        $region46: #{tpu_custom_call.1} parent=39 // pred_check_branch
          %265 = sbr.rel (%p263) target = $region48
        $region47: #{tpu_custom_call.1} parent=39 // pred_region
          %267 = dma.done [#allocation6], 65536
        $region48: #{tpu_custom_call.1} parent=39 // pred_fallthru
          _
        // Predicated region
        $region49: #{tpu_custom_call.1} parent=39 // pred_check
          %p268 = pneg %p87
        $region50: #{tpu_custom_call.1} parent=39 // pred_check_branch
          %270 = sbr.rel (%p268) target = $region52
        $region51: #{tpu_custom_call.1} parent=39 // pred_region
          %272 = dma.done [#allocation6], 256
        $region52: #{tpu_custom_call.1} parent=39 // pred_fallthru
          _
        // Predicated region
        $region53: #{tpu_custom_call.1} parent=39 // pred_check
          %p273 = pneg %p108
        $region54: #{tpu_custom_call.1} parent=39 // pred_check_branch
          %275 = sbr.rel (%p273) target = $region56
        $region55: #{tpu_custom_call.1} parent=39 // pred_region
          %277 = dma.done [#allocation9], 65536
        $region56: #{tpu_custom_call.1} parent=39 // pred_fallthru
          _
        // Predicated region
        $region57: #{tpu_custom_call.1} parent=39 // pred_check
          %p278 = pneg %p129
        $region58: #{tpu_custom_call.1} parent=39 // pred_check_branch
          %280 = sbr.rel (%p278) target = $region60
        $region59: #{tpu_custom_call.1} parent=39 // pred_region
          %282 = dma.done [#allocation9], 64
        $region60: #{tpu_custom_call.1} parent=39 // pred_fallthru
          _
        %s283 = sand.u32 %s32, 1
        %s284 = scalar_lea.sflag [#allocation3], %s283
        %s285 = sand.u32 %s32, 1
        %s286 = smul.addr %s285, 32
        %s287 = scalar_lea.vmem [#allocation2], %s286
        %p288 = pneg %p45
        %p289 = pneg %p42
        %p290 = pneg %p66
        %p291 = pneg %p63
        %p292 = pneg %p87
        %p293 = pneg %p84
        %p294 = pneg %p108
        %p295 = pneg %p105
        %p296 = pneg %p129
        %p297 = pneg %p126
        %p298 = pneg %p155
        %p299 = pneg %p152
        %s300 = sand.u32 %s142, 1
        %s301 = scalar_lea.sflag [#allocation4], %s300
        %s302 = sand.u32 %s142, 1
        %s303 = smul.addr %s302, 32
        %s304 = scalar_lea.vmem [#allocation11], %s303
        %v305 = vld [vmem:[%s257] sm:$0xff]
        %v306 = vld [vmem:[%s257 + $0x8] sm:$0xff]
        %v307 = vld [vmem:[%s257 + $0x10] sm:$0xff]
        %v308 = vld [vmem:[%s257 + $0x18] sm:$0xff]
        %v309 = vpack.c.bf16 %v305, %v305
        %v310 = vpack.c.bf16 %v306, %v306
        %v311 = vpack.c.bf16 %v307, %v307
        %v312 = vpack.c.bf16 %v308, %v308
        %v313 = vld [vmem:[#allocation5] sm:$0xff]
        %v314 = vld [vmem:[#allocation5 + $0x8] sm:$0xff]
        %v315 = vld [vmem:[#allocation5 + $0x40] sm:$0xff]
        %v316 = vld [vmem:[#allocation5 + $0x48] sm:$0xff]
        %v317 = vld [vmem:[#allocation5 + $0x80] sm:$0xff]
        %v318 = vld [vmem:[#allocation5 + $0x88] sm:$0xff]
        %v319 = vld [vmem:[#allocation5 + $0xc0] sm:$0xff]
        %v320 = vld [vmem:[#allocation5 + $0xc8] sm:$0xff]
        %v321 = vld [vmem:[#allocation5 + $0x100] sm:$0xff]
        %v322 = vld [vmem:[#allocation5 + $0x108] sm:$0xff]
        %v323 = vld [vmem:[#allocation5 + $0x140] sm:$0xff]
        %v324 = vld [vmem:[#allocation5 + $0x148] sm:$0xff]
        %v325 = vld [vmem:[#allocation5 + $0x180] sm:$0xff]
        %v326 = vld [vmem:[#allocation5 + $0x188] sm:$0xff]
        %v327 = vld [vmem:[#allocation5 + $0x1c0] sm:$0xff]
        %v328 = vld [vmem:[#allocation5 + $0x1c8] sm:$0xff]
        %v329 = vld [vmem:[#allocation5 + $0x200] sm:$0xff]
        %v330 = vld [vmem:[#allocation5 + $0x208] sm:$0xff]
        %v331 = vld [vmem:[#allocation5 + $0x240] sm:$0xff]
        %v332 = vld [vmem:[#allocation5 + $0x248] sm:$0xff]
        %v333 = vld [vmem:[#allocation5 + $0x280] sm:$0xff]
        %v334 = vld [vmem:[#allocation5 + $0x288] sm:$0xff]
        %v335 = vld [vmem:[#allocation5 + $0x2c0] sm:$0xff]
        %v336 = vld [vmem:[#allocation5 + $0x2c8] sm:$0xff]
        %v337 = vld [vmem:[#allocation5 + $0x300] sm:$0xff]
        %v338 = vld [vmem:[#allocation5 + $0x308] sm:$0xff]
        %v339 = vld [vmem:[#allocation5 + $0x340] sm:$0xff]
        %v340 = vld [vmem:[#allocation5 + $0x348] sm:$0xff]
        %v341 = vld [vmem:[#allocation5 + $0x380] sm:$0xff]
        %v342 = vld [vmem:[#allocation5 + $0x388] sm:$0xff]
        %v343 = vld [vmem:[#allocation5 + $0x3c0] sm:$0xff]
        %v344 = vld [vmem:[#allocation5 + $0x3c8] sm:$0xff]
        %v345 = vld [vmem:[#allocation5 + $0x400] sm:$0xff]
        %v346 = vld [vmem:[#allocation5 + $0x408] sm:$0xff]
        %v347 = vld [vmem:[#allocation5 + $0x440] sm:$0xff]
        %v348 = vld [vmem:[#allocation5 + $0x448] sm:$0xff]
        %v349 = vld [vmem:[#allocation5 + $0x480] sm:$0xff]
        %v350 = vld [vmem:[#allocation5 + $0x488] sm:$0xff]
        %v351 = vld [vmem:[#allocation5 + $0x4c0] sm:$0xff]
        %v352 = vld [vmem:[#allocation5 + $0x4c8] sm:$0xff]
        %v353 = vld [vmem:[#allocation5 + $0x500] sm:$0xff]
        %v354 = vld [vmem:[#allocation5 + $0x508] sm:$0xff]
        %v355 = vld [vmem:[#allocation5 + $0x540] sm:$0xff]
        %v356 = vld [vmem:[#allocation5 + $0x548] sm:$0xff]
        %v357 = vld [vmem:[#allocation5 + $0x580] sm:$0xff]
        %v358 = vld [vmem:[#allocation5 + $0x588] sm:$0xff]
        %v359 = vld [vmem:[#allocation5 + $0x5c0] sm:$0xff]
        %v360 = vld [vmem:[#allocation5 + $0x5c8] sm:$0xff]
        %v361 = vld [vmem:[#allocation5 + $0x600] sm:$0xff]
        %v362 = vld [vmem:[#allocation5 + $0x608] sm:$0xff]
        %v363 = vld [vmem:[#allocation5 + $0x640] sm:$0xff]
        %v364 = vld [vmem:[#allocation5 + $0x648] sm:$0xff]
        %v365 = vld [vmem:[#allocation5 + $0x680] sm:$0xff]
        %v366 = vld [vmem:[#allocation5 + $0x688] sm:$0xff]
        %v367 = vld [vmem:[#allocation5 + $0x6c0] sm:$0xff]
        %v368 = vld [vmem:[#allocation5 + $0x6c8] sm:$0xff]
        %v369 = vld [vmem:[#allocation5 + $0x700] sm:$0xff]
        %v370 = vld [vmem:[#allocation5 + $0x708] sm:$0xff]
        %v371 = vld [vmem:[#allocation5 + $0x740] sm:$0xff]
        %v372 = vld [vmem:[#allocation5 + $0x748] sm:$0xff]
        %v373 = vld [vmem:[#allocation5 + $0x780] sm:$0xff]
        %v374 = vld [vmem:[#allocation5 + $0x788] sm:$0xff]
        %v375 = vld [vmem:[#allocation5 + $0x7c0] sm:$0xff]
        %v376 = vld [vmem:[#allocation5 + $0x7c8] sm:$0xff]
        %v377 = vld [vmem:[#allocation5 + $0x800] sm:$0xff]
        %v378 = vld [vmem:[#allocation5 + $0x808] sm:$0xff]
        %v379 = vld [vmem:[#allocation5 + $0x840] sm:$0xff]
        %v380 = vld [vmem:[#allocation5 + $0x848] sm:$0xff]
        %v381 = vld [vmem:[#allocation5 + $0x880] sm:$0xff]
        %v382 = vld [vmem:[#allocation5 + $0x888] sm:$0xff]
        %v383 = vld [vmem:[#allocation5 + $0x8c0] sm:$0xff]
        %v384 = vld [vmem:[#allocation5 + $0x8c8] sm:$0xff]
        %v385 = vld [vmem:[#allocation5 + $0x900] sm:$0xff]
        %v386 = vld [vmem:[#allocation5 + $0x908] sm:$0xff]
        %v387 = vld [vmem:[#allocation5 + $0x940] sm:$0xff]
        %v388 = vld [vmem:[#allocation5 + $0x948] sm:$0xff]
        %v389 = vld [vmem:[#allocation5 + $0x980] sm:$0xff]
        %v390 = vld [vmem:[#allocation5 + $0x988] sm:$0xff]
        %v391 = vld [vmem:[#allocation5 + $0x9c0] sm:$0xff]
        %v392 = vld [vmem:[#allocation5 + $0x9c8] sm:$0xff]
        %v393 = vld [vmem:[#allocation5 + $0xa00] sm:$0xff]
        %v394 = vld [vmem:[#allocation5 + $0xa08] sm:$0xff]
        %v395 = vld [vmem:[#allocation5 + $0xa40] sm:$0xff]
        %v396 = vld [vmem:[#allocation5 + $0xa48] sm:$0xff]
        %v397 = vld [vmem:[#allocation5 + $0xa80] sm:$0xff]
        %v398 = vld [vmem:[#allocation5 + $0xa88] sm:$0xff]
        %v399 = vld [vmem:[#allocation5 + $0xac0] sm:$0xff]
        %v400 = vld [vmem:[#allocation5 + $0xac8] sm:$0xff]
        %v401 = vld [vmem:[#allocation5 + $0xb00] sm:$0xff]
        %v402 = vld [vmem:[#allocation5 + $0xb08] sm:$0xff]
        %v403 = vld [vmem:[#allocation5 + $0xb40] sm:$0xff]
        %v404 = vld [vmem:[#allocation5 + $0xb48] sm:$0xff]
        %v405 = vld [vmem:[#allocation5 + $0xb80] sm:$0xff]
        %v406 = vld [vmem:[#allocation5 + $0xb88] sm:$0xff]
        %v407 = vld [vmem:[#allocation5 + $0xbc0] sm:$0xff]
        %v408 = vld [vmem:[#allocation5 + $0xbc8] sm:$0xff]
        %v409 = vld [vmem:[#allocation5 + $0xc00] sm:$0xff]
        %v410 = vld [vmem:[#allocation5 + $0xc08] sm:$0xff]
        %v411 = vld [vmem:[#allocation5 + $0xc40] sm:$0xff]
        %v412 = vld [vmem:[#allocation5 + $0xc48] sm:$0xff]
        %v413 = vld [vmem:[#allocation5 + $0xc80] sm:$0xff]
        %v414 = vld [vmem:[#allocation5 + $0xc88] sm:$0xff]
        %v415 = vld [vmem:[#allocation5 + $0xcc0] sm:$0xff]
        %v416 = vld [vmem:[#allocation5 + $0xcc8] sm:$0xff]
        %v417 = vld [vmem:[#allocation5 + $0xd00] sm:$0xff]
        %v418 = vld [vmem:[#allocation5 + $0xd08] sm:$0xff]
        %v419 = vld [vmem:[#allocation5 + $0xd40] sm:$0xff]
        %v420 = vld [vmem:[#allocation5 + $0xd48] sm:$0xff]
        %v421 = vld [vmem:[#allocation5 + $0xd80] sm:$0xff]
        %v422 = vld [vmem:[#allocation5 + $0xd88] sm:$0xff]
        %v423 = vld [vmem:[#allocation5 + $0xdc0] sm:$0xff]
        %v424 = vld [vmem:[#allocation5 + $0xdc8] sm:$0xff]
        %v425 = vld [vmem:[#allocation5 + $0xe00] sm:$0xff]
        %v426 = vld [vmem:[#allocation5 + $0xe08] sm:$0xff]
        %v427 = vld [vmem:[#allocation5 + $0xe40] sm:$0xff]
        %v428 = vld [vmem:[#allocation5 + $0xe48] sm:$0xff]
        %v429 = vld [vmem:[#allocation5 + $0xe80] sm:$0xff]
        %v430 = vld [vmem:[#allocation5 + $0xe88] sm:$0xff]
        %v431 = vld [vmem:[#allocation5 + $0xec0] sm:$0xff]
        %v432 = vld [vmem:[#allocation5 + $0xec8] sm:$0xff]
        %v433 = vld [vmem:[#allocation5 + $0xf00] sm:$0xff]
        %v434 = vld [vmem:[#allocation5 + $0xf08] sm:$0xff]
        %v435 = vld [vmem:[#allocation5 + $0xf40] sm:$0xff]
        %v436 = vld [vmem:[#allocation5 + $0xf48] sm:$0xff]
        %v437 = vld [vmem:[#allocation5 + $0xf80] sm:$0xff]
        %v438 = vld [vmem:[#allocation5 + $0xf88] sm:$0xff]
        %v439 = vld [vmem:[#allocation5 + $0xfc0] sm:$0xff]
        %v440 = vld [vmem:[#allocation5 + $0xfc8] sm:$0xff]
        %v441 = vld [vmem:[#allocation7] sm:$0xf]
        %v443 = vperm.slane %v441, 0
        %v444 = vperm.slane %v441, 1
        %v445 = vperm.slane %v441, 2
        %v446 = vperm.slane %v441, 3
        %v579 = vunpack.c.l.b16 %v313
        %v580 = vunpack.c.h.b16 %v313
        %v581 = vunpack.c.l.b16 %v314
        %v582 = vunpack.c.h.b16 %v314
        %v583 = vunpack.c.l.b16 %v315
        %v584 = vunpack.c.h.b16 %v315
        %v585 = vunpack.c.l.b16 %v316
        %v586 = vunpack.c.h.b16 %v316
        %v587 = vunpack.c.l.b16 %v317
        %v588 = vunpack.c.h.b16 %v317
        %v589 = vunpack.c.l.b16 %v318
        %v590 = vunpack.c.h.b16 %v318
        %v591 = vunpack.c.l.b16 %v319
        %v592 = vunpack.c.h.b16 %v319
        %v593 = vunpack.c.l.b16 %v320
        %v594 = vunpack.c.h.b16 %v320
        %v595 = vunpack.c.l.b16 %v321
        %v596 = vunpack.c.h.b16 %v321
        %v597 = vunpack.c.l.b16 %v322
        %v598 = vunpack.c.h.b16 %v322
        %v599 = vunpack.c.l.b16 %v323
        %v600 = vunpack.c.h.b16 %v323
        %v601 = vunpack.c.l.b16 %v324
        %v602 = vunpack.c.h.b16 %v324
        %v603 = vunpack.c.l.b16 %v325
        %v604 = vunpack.c.h.b16 %v325
        %v605 = vunpack.c.l.b16 %v326
        %v606 = vunpack.c.h.b16 %v326
        %v607 = vunpack.c.l.b16 %v327
        %v608 = vunpack.c.h.b16 %v327
        %v609 = vunpack.c.l.b16 %v328
        %v610 = vunpack.c.h.b16 %v328
        %v611 = vunpack.c.l.b16 %v329
        %v612 = vunpack.c.h.b16 %v329
        %v613 = vunpack.c.l.b16 %v330
        %v614 = vunpack.c.h.b16 %v330
        %v615 = vunpack.c.l.b16 %v331
        %v616 = vunpack.c.h.b16 %v331
        %v617 = vunpack.c.l.b16 %v332
        %v618 = vunpack.c.h.b16 %v332
        %v619 = vunpack.c.l.b16 %v333
        %v620 = vunpack.c.h.b16 %v333
        %v621 = vunpack.c.l.b16 %v334
        %v622 = vunpack.c.h.b16 %v334
        %v623 = vunpack.c.l.b16 %v335
        %v624 = vunpack.c.h.b16 %v335
        %v625 = vunpack.c.l.b16 %v336
        %v626 = vunpack.c.h.b16 %v336
        %v627 = vunpack.c.l.b16 %v337
        %v628 = vunpack.c.h.b16 %v337
        %v629 = vunpack.c.l.b16 %v338
        %v630 = vunpack.c.h.b16 %v338
        %v631 = vunpack.c.l.b16 %v339
        %v632 = vunpack.c.h.b16 %v339
        %v633 = vunpack.c.l.b16 %v340
        %v634 = vunpack.c.h.b16 %v340
        %v635 = vunpack.c.l.b16 %v341
        %v636 = vunpack.c.h.b16 %v341
        %v637 = vunpack.c.l.b16 %v342
        %v638 = vunpack.c.h.b16 %v342
        %v639 = vunpack.c.l.b16 %v343
        %v640 = vunpack.c.h.b16 %v343
        %v641 = vunpack.c.l.b16 %v344
        %v642 = vunpack.c.h.b16 %v344
        %v643 = vunpack.c.l.b16 %v345
        %v644 = vunpack.c.h.b16 %v345
        %v645 = vunpack.c.l.b16 %v346
        %v646 = vunpack.c.h.b16 %v346
        %v647 = vunpack.c.l.b16 %v347
        %v648 = vunpack.c.h.b16 %v347
        %v649 = vunpack.c.l.b16 %v348
        %v650 = vunpack.c.h.b16 %v348
        %v651 = vunpack.c.l.b16 %v349
        %v652 = vunpack.c.h.b16 %v349
        %v653 = vunpack.c.l.b16 %v350
        %v654 = vunpack.c.h.b16 %v350
        %v655 = vunpack.c.l.b16 %v351
        %v656 = vunpack.c.h.b16 %v351
        %v657 = vunpack.c.l.b16 %v352
        %v658 = vunpack.c.h.b16 %v352
        %v659 = vunpack.c.l.b16 %v353
        %v660 = vunpack.c.h.b16 %v353
        %v661 = vunpack.c.l.b16 %v354
        %v662 = vunpack.c.h.b16 %v354
        %v663 = vunpack.c.l.b16 %v355
        %v664 = vunpack.c.h.b16 %v355
        %v665 = vunpack.c.l.b16 %v356
        %v666 = vunpack.c.h.b16 %v356
        %v667 = vunpack.c.l.b16 %v357
        %v668 = vunpack.c.h.b16 %v357
        %v669 = vunpack.c.l.b16 %v358
        %v670 = vunpack.c.h.b16 %v358
        %v671 = vunpack.c.l.b16 %v359
        %v672 = vunpack.c.h.b16 %v359
        %v673 = vunpack.c.l.b16 %v360
        %v674 = vunpack.c.h.b16 %v360
        %v675 = vunpack.c.l.b16 %v361
        %v676 = vunpack.c.h.b16 %v361
        %v677 = vunpack.c.l.b16 %v362
        %v678 = vunpack.c.h.b16 %v362
        %v679 = vunpack.c.l.b16 %v363
        %v680 = vunpack.c.h.b16 %v363
        %v681 = vunpack.c.l.b16 %v364
        %v682 = vunpack.c.h.b16 %v364
        %v683 = vunpack.c.l.b16 %v365
        %v684 = vunpack.c.h.b16 %v365
        %v685 = vunpack.c.l.b16 %v366
        %v686 = vunpack.c.h.b16 %v366
        %v687 = vunpack.c.l.b16 %v367
        %v688 = vunpack.c.h.b16 %v367
        %v689 = vunpack.c.l.b16 %v368
        %v690 = vunpack.c.h.b16 %v368
        %v691 = vunpack.c.l.b16 %v369
        %v692 = vunpack.c.h.b16 %v369
        %v693 = vunpack.c.l.b16 %v370
        %v694 = vunpack.c.h.b16 %v370
        %v695 = vunpack.c.l.b16 %v371
        %v696 = vunpack.c.h.b16 %v371
        %v697 = vunpack.c.l.b16 %v372
        %v698 = vunpack.c.h.b16 %v372
        %v699 = vunpack.c.l.b16 %v373
        %v700 = vunpack.c.h.b16 %v373
        %v701 = vunpack.c.l.b16 %v374
        %v702 = vunpack.c.h.b16 %v374
        %v703 = vunpack.c.l.b16 %v375
        %v704 = vunpack.c.h.b16 %v375
        %v705 = vunpack.c.l.b16 %v376
        %v706 = vunpack.c.h.b16 %v376
        %v707 = vunpack.c.l.b16 %v377
        %v708 = vunpack.c.h.b16 %v377
        %v709 = vunpack.c.l.b16 %v378
        %v710 = vunpack.c.h.b16 %v378
        %v711 = vunpack.c.l.b16 %v379
        %v712 = vunpack.c.h.b16 %v379
        %v713 = vunpack.c.l.b16 %v380
        %v714 = vunpack.c.h.b16 %v380
        %v715 = vunpack.c.l.b16 %v381
        %v716 = vunpack.c.h.b16 %v381
        %v717 = vunpack.c.l.b16 %v382
        %v718 = vunpack.c.h.b16 %v382
        %v719 = vunpack.c.l.b16 %v383
        %v720 = vunpack.c.h.b16 %v383
        %v721 = vunpack.c.l.b16 %v384
        %v722 = vunpack.c.h.b16 %v384
        %v723 = vunpack.c.l.b16 %v385
        %v724 = vunpack.c.h.b16 %v385
        %v725 = vunpack.c.l.b16 %v386
        %v726 = vunpack.c.h.b16 %v386
        %v727 = vunpack.c.l.b16 %v387
        %v728 = vunpack.c.h.b16 %v387
        %v729 = vunpack.c.l.b16 %v388
        %v730 = vunpack.c.h.b16 %v388
        %v731 = vunpack.c.l.b16 %v389
        %v732 = vunpack.c.h.b16 %v389
        %v733 = vunpack.c.l.b16 %v390
        %v734 = vunpack.c.h.b16 %v390
        %v735 = vunpack.c.l.b16 %v391
        %v736 = vunpack.c.h.b16 %v391
        %v737 = vunpack.c.l.b16 %v392
        %v738 = vunpack.c.h.b16 %v392
        %v739 = vunpack.c.l.b16 %v393
        %v740 = vunpack.c.h.b16 %v393
        %v741 = vunpack.c.l.b16 %v394
        %v742 = vunpack.c.h.b16 %v394
        %v743 = vunpack.c.l.b16 %v395
        %v744 = vunpack.c.h.b16 %v395
        %v745 = vunpack.c.l.b16 %v396
        %v746 = vunpack.c.h.b16 %v396
        %v747 = vunpack.c.l.b16 %v397
        %v748 = vunpack.c.h.b16 %v397
        %v749 = vunpack.c.l.b16 %v398
        %v750 = vunpack.c.h.b16 %v398
        %v751 = vunpack.c.l.b16 %v399
        %v752 = vunpack.c.h.b16 %v399
        %v753 = vunpack.c.l.b16 %v400
        %v754 = vunpack.c.h.b16 %v400
        %v755 = vunpack.c.l.b16 %v401
        %v756 = vunpack.c.h.b16 %v401
        %v757 = vunpack.c.l.b16 %v402
        %v758 = vunpack.c.h.b16 %v402
        %v759 = vunpack.c.l.b16 %v403
        %v760 = vunpack.c.h.b16 %v403
        %v761 = vunpack.c.l.b16 %v404
        %v762 = vunpack.c.h.b16 %v404
        %v763 = vunpack.c.l.b16 %v405
        %v764 = vunpack.c.h.b16 %v405
        %v765 = vunpack.c.l.b16 %v406
        %v766 = vunpack.c.h.b16 %v406
        %v767 = vunpack.c.l.b16 %v407
        %v768 = vunpack.c.h.b16 %v407
        %v769 = vunpack.c.l.b16 %v408
        %v770 = vunpack.c.h.b16 %v408
        %v771 = vunpack.c.l.b16 %v409
        %v772 = vunpack.c.h.b16 %v409
        %v773 = vunpack.c.l.b16 %v410
        %v774 = vunpack.c.h.b16 %v410
        %v775 = vunpack.c.l.b16 %v411
        %v776 = vunpack.c.h.b16 %v411
        %v777 = vunpack.c.l.b16 %v412
        %v778 = vunpack.c.h.b16 %v412
        %v779 = vunpack.c.l.b16 %v413
        %v780 = vunpack.c.h.b16 %v413
        %v781 = vunpack.c.l.b16 %v414
        %v782 = vunpack.c.h.b16 %v414
        %v783 = vunpack.c.l.b16 %v415
        %v784 = vunpack.c.h.b16 %v415
        %v785 = vunpack.c.l.b16 %v416
        %v786 = vunpack.c.h.b16 %v416
        %v787 = vunpack.c.l.b16 %v417
        %v788 = vunpack.c.h.b16 %v417
        %v789 = vunpack.c.l.b16 %v418
        %v790 = vunpack.c.h.b16 %v418
        %v791 = vunpack.c.l.b16 %v419
        %v792 = vunpack.c.h.b16 %v419
        %v793 = vunpack.c.l.b16 %v420
        %v794 = vunpack.c.h.b16 %v420
        %v795 = vunpack.c.l.b16 %v421
        %v796 = vunpack.c.h.b16 %v421
        %v797 = vunpack.c.l.b16 %v422
        %v798 = vunpack.c.h.b16 %v422
        %v799 = vunpack.c.l.b16 %v423
        %v800 = vunpack.c.h.b16 %v423
        %v801 = vunpack.c.l.b16 %v424
        %v802 = vunpack.c.h.b16 %v424
        %v803 = vunpack.c.l.b16 %v425
        %v804 = vunpack.c.h.b16 %v425
        %v805 = vunpack.c.l.b16 %v426
        %v806 = vunpack.c.h.b16 %v426
        %v807 = vunpack.c.l.b16 %v427
        %v808 = vunpack.c.h.b16 %v427
        %v809 = vunpack.c.l.b16 %v428
        %v810 = vunpack.c.h.b16 %v428
        %v811 = vunpack.c.l.b16 %v429
        %v812 = vunpack.c.h.b16 %v429
        %v813 = vunpack.c.l.b16 %v430
        %v814 = vunpack.c.h.b16 %v430
        %v815 = vunpack.c.l.b16 %v431
        %v816 = vunpack.c.h.b16 %v431
        %v817 = vunpack.c.l.b16 %v432
        %v818 = vunpack.c.h.b16 %v432
        %v819 = vunpack.c.l.b16 %v433
        %v820 = vunpack.c.h.b16 %v433
        %v821 = vunpack.c.l.b16 %v434
        %v822 = vunpack.c.h.b16 %v434
        %v823 = vunpack.c.l.b16 %v435
        %v824 = vunpack.c.h.b16 %v435
        %v825 = vunpack.c.l.b16 %v436
        %v826 = vunpack.c.h.b16 %v436
        %v827 = vunpack.c.l.b16 %v437
        %v828 = vunpack.c.h.b16 %v437
        %v829 = vunpack.c.l.b16 %v438
        %v830 = vunpack.c.h.b16 %v438
        %v831 = vunpack.c.l.b16 %v439
        %v832 = vunpack.c.h.b16 %v439
        %v833 = vunpack.c.l.b16 %v440
        %v834 = vunpack.c.h.b16 %v440
        %v835 = vpack.c.b16 %v583, %v579
        %v836 = vpack.c.b16 %v584, %v580
        %v837 = vpack.c.b16 %v585, %v581
        %v838 = vpack.c.b16 %v586, %v582
        %v839 = vpack.c.b16 %v591, %v587
        %v840 = vpack.c.b16 %v592, %v588
        %v841 = vpack.c.b16 %v593, %v589
        %v842 = vpack.c.b16 %v594, %v590
        %v843 = vpack.c.b16 %v599, %v595
        %v844 = vpack.c.b16 %v600, %v596
        %v845 = vpack.c.b16 %v601, %v597
        %v846 = vpack.c.b16 %v602, %v598
        %v847 = vpack.c.b16 %v607, %v603
        %v848 = vpack.c.b16 %v608, %v604
        %v849 = vpack.c.b16 %v609, %v605
        %v850 = vpack.c.b16 %v610, %v606
        %v851 = vpack.c.b16 %v615, %v611
        %v852 = vpack.c.b16 %v616, %v612
        %v853 = vpack.c.b16 %v617, %v613
        %v854 = vpack.c.b16 %v618, %v614
        %v855 = vpack.c.b16 %v623, %v619
        %v856 = vpack.c.b16 %v624, %v620
        %v857 = vpack.c.b16 %v625, %v621
        %v858 = vpack.c.b16 %v626, %v622
        %v859 = vpack.c.b16 %v631, %v627
        %v860 = vpack.c.b16 %v632, %v628
        %v861 = vpack.c.b16 %v633, %v629
        %v862 = vpack.c.b16 %v634, %v630
        %v863 = vpack.c.b16 %v639, %v635
        %v864 = vpack.c.b16 %v640, %v636
        %v865 = vpack.c.b16 %v641, %v637
        %v866 = vpack.c.b16 %v642, %v638
        %v867 = vpack.c.b16 %v647, %v643
        %v868 = vpack.c.b16 %v648, %v644
        %v869 = vpack.c.b16 %v649, %v645
        %v870 = vpack.c.b16 %v650, %v646
        %v871 = vpack.c.b16 %v655, %v651
        %v872 = vpack.c.b16 %v656, %v652
        %v873 = vpack.c.b16 %v657, %v653
        %v874 = vpack.c.b16 %v658, %v654
        %v875 = vpack.c.b16 %v663, %v659
        %v876 = vpack.c.b16 %v664, %v660
        %v877 = vpack.c.b16 %v665, %v661
        %v878 = vpack.c.b16 %v666, %v662
        %v879 = vpack.c.b16 %v671, %v667
        %v880 = vpack.c.b16 %v672, %v668
        %v881 = vpack.c.b16 %v673, %v669
        %v882 = vpack.c.b16 %v674, %v670
        %v883 = vpack.c.b16 %v679, %v675
        %v884 = vpack.c.b16 %v680, %v676
        %v885 = vpack.c.b16 %v681, %v677
        %v886 = vpack.c.b16 %v682, %v678
        %v887 = vpack.c.b16 %v687, %v683
        %v888 = vpack.c.b16 %v688, %v684
        %v889 = vpack.c.b16 %v689, %v685
        %v890 = vpack.c.b16 %v690, %v686
        %v891 = vpack.c.b16 %v695, %v691
        %v892 = vpack.c.b16 %v696, %v692
        %v893 = vpack.c.b16 %v697, %v693
        %v894 = vpack.c.b16 %v698, %v694
        %v895 = vpack.c.b16 %v703, %v699
        %v896 = vpack.c.b16 %v704, %v700
        %v897 = vpack.c.b16 %v705, %v701
        %v898 = vpack.c.b16 %v706, %v702
        %v899 = vpack.c.b16 %v711, %v707
        %v900 = vpack.c.b16 %v712, %v708
        %v901 = vpack.c.b16 %v713, %v709
        %v902 = vpack.c.b16 %v714, %v710
        %v903 = vpack.c.b16 %v719, %v715
        %v904 = vpack.c.b16 %v720, %v716
        %v905 = vpack.c.b16 %v721, %v717
        %v906 = vpack.c.b16 %v722, %v718
        %v907 = vpack.c.b16 %v727, %v723
        %v908 = vpack.c.b16 %v728, %v724
        %v909 = vpack.c.b16 %v729, %v725
        %v910 = vpack.c.b16 %v730, %v726
        %v911 = vpack.c.b16 %v735, %v731
        %v912 = vpack.c.b16 %v736, %v732
        %v913 = vpack.c.b16 %v737, %v733
        %v914 = vpack.c.b16 %v738, %v734
        %v915 = vpack.c.b16 %v743, %v739
        %v916 = vpack.c.b16 %v744, %v740
        %v917 = vpack.c.b16 %v745, %v741
        %v918 = vpack.c.b16 %v746, %v742
        %v919 = vpack.c.b16 %v751, %v747
        %v920 = vpack.c.b16 %v752, %v748
        %v921 = vpack.c.b16 %v753, %v749
        %v922 = vpack.c.b16 %v754, %v750
        %v923 = vpack.c.b16 %v759, %v755
        %v924 = vpack.c.b16 %v760, %v756
        %v925 = vpack.c.b16 %v761, %v757
        %v926 = vpack.c.b16 %v762, %v758
        %v927 = vpack.c.b16 %v767, %v763
        %v928 = vpack.c.b16 %v768, %v764
        %v929 = vpack.c.b16 %v769, %v765
        %v930 = vpack.c.b16 %v770, %v766
        %v931 = vpack.c.b16 %v775, %v771
        %v932 = vpack.c.b16 %v776, %v772
        %v933 = vpack.c.b16 %v777, %v773
        %v934 = vpack.c.b16 %v778, %v774
        %v935 = vpack.c.b16 %v783, %v779
        %v936 = vpack.c.b16 %v784, %v780
        %v937 = vpack.c.b16 %v785, %v781
        %v938 = vpack.c.b16 %v786, %v782
        %v939 = vpack.c.b16 %v791, %v787
        %v940 = vpack.c.b16 %v792, %v788
        %v941 = vpack.c.b16 %v793, %v789
        %v942 = vpack.c.b16 %v794, %v790
        %v943 = vpack.c.b16 %v799, %v795
        %v944 = vpack.c.b16 %v800, %v796
        %v945 = vpack.c.b16 %v801, %v797
        %v946 = vpack.c.b16 %v802, %v798
        %v947 = vpack.c.b16 %v807, %v803
        %v948 = vpack.c.b16 %v808, %v804
        %v949 = vpack.c.b16 %v809, %v805
        %v950 = vpack.c.b16 %v810, %v806
        %v951 = vpack.c.b16 %v815, %v811
        %v952 = vpack.c.b16 %v816, %v812
        %v953 = vpack.c.b16 %v817, %v813
        %v954 = vpack.c.b16 %v818, %v814
        %v955 = vpack.c.b16 %v823, %v819
        %v956 = vpack.c.b16 %v824, %v820
        %v957 = vpack.c.b16 %v825, %v821
        %v958 = vpack.c.b16 %v826, %v822
        %v959 = vpack.c.b16 %v831, %v827
        %v960 = vpack.c.b16 %v832, %v828
        %v961 = vpack.c.b16 %v833, %v829
        %v962 = vpack.c.b16 %v834, %v830
        %1091 = vmatpush.bf16.msra.mxu0 %v863
        %1092 = vmatpush.bf16.msra.mxu0 %v859
        %1093 = vmatpush.bf16.msra.mxu0 %v855
        %1094 = vmatpush.bf16.msra.mxu0 %v851
        %1095 = vmatpush.bf16.msra.mxu0 %v847
        %1096 = vmatpush.bf16.msra.mxu0 %v843
        %1097 = vmatpush.bf16.msra.mxu0 %v839
        %1098 = vmatpush.bf16.msra.mxu0 %v835
        %1099 = vmatmul.bf16.gmra.mxu0 %v309
        %v1100 = vpop.f32.mrf.mxu0
        %v1101 = vadd.f32 %v443, %v1100
        %v1102 = vpop.f32.mrf.mxu0
        %1103 = vdwg.mxu0
        %1104 = vmatpush.bf16.msra.mxu0 %v895
        %1105 = vmatpush.bf16.msra.mxu0 %v891
        %1106 = vmatpush.bf16.msra.mxu0 %v887
        %1107 = vmatpush.bf16.msra.mxu0 %v883
        %1108 = vmatpush.bf16.msra.mxu0 %v879
        %1109 = vmatpush.bf16.msra.mxu0 %v875
        %1110 = vmatpush.bf16.msra.mxu0 %v871
        %1111 = vmatpush.bf16.msra.mxu0 %v867
        %1112 = vmatmul.bf16.gmra.mxu0 %v310
        %v1113 = vpop.f32.mrf.mxu0
        %v1114 = vadd.f32 %v1101, %v1113
        %v1115 = vpop.f32.mrf.mxu0
        %1116 = vdwg.mxu0
        %1117 = vmatpush.bf16.msra.mxu0 %v927
        %1118 = vmatpush.bf16.msra.mxu0 %v923
        %1119 = vmatpush.bf16.msra.mxu0 %v919
        %1120 = vmatpush.bf16.msra.mxu0 %v915
        %1121 = vmatpush.bf16.msra.mxu0 %v911
        %1122 = vmatpush.bf16.msra.mxu0 %v907
        %1123 = vmatpush.bf16.msra.mxu0 %v903
        %1124 = vmatpush.bf16.msra.mxu0 %v899
        %1125 = vmatmul.bf16.gmra.mxu0 %v311
        %v1126 = vpop.f32.mrf.mxu0
        %v1127 = vadd.f32 %v1114, %v1126
        %v1128 = vpop.f32.mrf.mxu0
        %1129 = vdwg.mxu0
        %1130 = vmatpush.bf16.msra.mxu0 %v959
        %1131 = vmatpush.bf16.msra.mxu0 %v955
        %1132 = vmatpush.bf16.msra.mxu0 %v951
        %1133 = vmatpush.bf16.msra.mxu0 %v947
        %1134 = vmatpush.bf16.msra.mxu0 %v943
        %1135 = vmatpush.bf16.msra.mxu0 %v939
        %1136 = vmatpush.bf16.msra.mxu0 %v935
        %1137 = vmatpush.bf16.msra.mxu0 %v931
        %1138 = vmatmul.bf16.gmra.mxu0 %v312
        %v1139 = vpop.f32.mrf.mxu0
        %v1140 = vadd.f32 %v1127, %v1139
        %v1141 = vpop.f32.mrf.mxu0
        %1142 = vdwg.mxu0
        %1143 = vmatpush.bf16.msra.mxu0 %v864
        %1144 = vmatpush.bf16.msra.mxu0 %v860
        %1145 = vmatpush.bf16.msra.mxu0 %v856
        %1146 = vmatpush.bf16.msra.mxu0 %v852
        %1147 = vmatpush.bf16.msra.mxu0 %v848
        %1148 = vmatpush.bf16.msra.mxu0 %v844
        %1149 = vmatpush.bf16.msra.mxu0 %v840
        %1150 = vmatpush.bf16.msra.mxu0 %v836
        %1151 = vmatmul.bf16.gmra.mxu0 %v309
        %v1152 = vpop.f32.mrf.mxu0
        %v1153 = vadd.f32 %v444, %v1152
        %v1154 = vpop.f32.mrf.mxu0
        %1155 = vdwg.mxu0
        %1156 = vmatpush.bf16.msra.mxu0 %v896
        %1157 = vmatpush.bf16.msra.mxu0 %v892
        %1158 = vmatpush.bf16.msra.mxu0 %v888
        %1159 = vmatpush.bf16.msra.mxu0 %v884
        %1160 = vmatpush.bf16.msra.mxu0 %v880
        %1161 = vmatpush.bf16.msra.mxu0 %v876
        %1162 = vmatpush.bf16.msra.mxu0 %v872
        %1163 = vmatpush.bf16.msra.mxu0 %v868
        %1164 = vmatmul.bf16.gmra.mxu0 %v310
        %v1165 = vpop.f32.mrf.mxu0
        %v1166 = vadd.f32 %v1153, %v1165
        %v1167 = vpop.f32.mrf.mxu0
        %1168 = vdwg.mxu0
        %1169 = vmatpush.bf16.msra.mxu0 %v928
        %1170 = vmatpush.bf16.msra.mxu0 %v924
        %1171 = vmatpush.bf16.msra.mxu0 %v920
        %1172 = vmatpush.bf16.msra.mxu0 %v916
        %1173 = vmatpush.bf16.msra.mxu0 %v912
        %1174 = vmatpush.bf16.msra.mxu0 %v908
        %1175 = vmatpush.bf16.msra.mxu0 %v904
        %1176 = vmatpush.bf16.msra.mxu0 %v900
        %1177 = vmatmul.bf16.gmra.mxu0 %v311
        %v1178 = vpop.f32.mrf.mxu0
        %v1179 = vadd.f32 %v1166, %v1178
        %v1180 = vpop.f32.mrf.mxu0
        %1181 = vdwg.mxu0
        %1182 = vmatpush.bf16.msra.mxu0 %v960
        %1183 = vmatpush.bf16.msra.mxu0 %v956
        %1184 = vmatpush.bf16.msra.mxu0 %v952
        %1185 = vmatpush.bf16.msra.mxu0 %v948
        %1186 = vmatpush.bf16.msra.mxu0 %v944
        %1187 = vmatpush.bf16.msra.mxu0 %v940
        %1188 = vmatpush.bf16.msra.mxu0 %v936
        %1189 = vmatpush.bf16.msra.mxu0 %v932
        %1190 = vmatmul.bf16.gmra.mxu0 %v312
        %v1191 = vpop.f32.mrf.mxu0
        %v1192 = vadd.f32 %v1179, %v1191
        %v1193 = vpop.f32.mrf.mxu0
        %1194 = vdwg.mxu0
        %1195 = vmatpush.bf16.msra.mxu0 %v865
        %1196 = vmatpush.bf16.msra.mxu0 %v861
        %1197 = vmatpush.bf16.msra.mxu0 %v857
        %1198 = vmatpush.bf16.msra.mxu0 %v853
        %1199 = vmatpush.bf16.msra.mxu0 %v849
        %1200 = vmatpush.bf16.msra.mxu0 %v845
        %1201 = vmatpush.bf16.msra.mxu0 %v841
        %1202 = vmatpush.bf16.msra.mxu0 %v837
        %1203 = vmatmul.bf16.gmra.mxu0 %v309
        %v1204 = vpop.f32.mrf.mxu0
        %v1205 = vadd.f32 %v445, %v1204
        %v1206 = vpop.f32.mrf.mxu0
        %1207 = vdwg.mxu0
        %1208 = vmatpush.bf16.msra.mxu0 %v897
        %1209 = vmatpush.bf16.msra.mxu0 %v893
        %1210 = vmatpush.bf16.msra.mxu0 %v889
        %1211 = vmatpush.bf16.msra.mxu0 %v885
        %1212 = vmatpush.bf16.msra.mxu0 %v881
        %1213 = vmatpush.bf16.msra.mxu0 %v877
        %1214 = vmatpush.bf16.msra.mxu0 %v873
        %1215 = vmatpush.bf16.msra.mxu0 %v869
        %1216 = vmatmul.bf16.gmra.mxu0 %v310
        %v1217 = vpop.f32.mrf.mxu0
        %v1218 = vadd.f32 %v1205, %v1217
        %v1219 = vpop.f32.mrf.mxu0
        %1220 = vdwg.mxu0
        %1221 = vmatpush.bf16.msra.mxu0 %v929
        %1222 = vmatpush.bf16.msra.mxu0 %v925
        %1223 = vmatpush.bf16.msra.mxu0 %v921
        %1224 = vmatpush.bf16.msra.mxu0 %v917
        %1225 = vmatpush.bf16.msra.mxu0 %v913
        %1226 = vmatpush.bf16.msra.mxu0 %v909
        %1227 = vmatpush.bf16.msra.mxu0 %v905
        %1228 = vmatpush.bf16.msra.mxu0 %v901
        %1229 = vmatmul.bf16.gmra.mxu0 %v311
        %v1230 = vpop.f32.mrf.mxu0
        %v1231 = vadd.f32 %v1218, %v1230
        %v1232 = vpop.f32.mrf.mxu0
        %1233 = vdwg.mxu0
        %1234 = vmatpush.bf16.msra.mxu0 %v961
        %1235 = vmatpush.bf16.msra.mxu0 %v957
        %1236 = vmatpush.bf16.msra.mxu0 %v953
        %1237 = vmatpush.bf16.msra.mxu0 %v949
        %1238 = vmatpush.bf16.msra.mxu0 %v945
        %1239 = vmatpush.bf16.msra.mxu0 %v941
        %1240 = vmatpush.bf16.msra.mxu0 %v937
        %1241 = vmatpush.bf16.msra.mxu0 %v933
        %1242 = vmatmul.bf16.gmra.mxu0 %v312
        %v1243 = vpop.f32.mrf.mxu0
        %v1244 = vadd.f32 %v1231, %v1243
        %v1245 = vpop.f32.mrf.mxu0
        %1246 = vdwg.mxu0
        %1247 = vmatpush.bf16.msra.mxu0 %v866
        %1248 = vmatpush.bf16.msra.mxu0 %v862
        %1249 = vmatpush.bf16.msra.mxu0 %v858
        %1250 = vmatpush.bf16.msra.mxu0 %v854
        %1251 = vmatpush.bf16.msra.mxu0 %v850
        %1252 = vmatpush.bf16.msra.mxu0 %v846
        %1253 = vmatpush.bf16.msra.mxu0 %v842
        %1254 = vmatpush.bf16.msra.mxu0 %v838
        %1255 = vmatmul.bf16.gmra.mxu0 %v309
        %v1256 = vpop.f32.mrf.mxu0
        %v1257 = vadd.f32 %v446, %v1256
        %v1258 = vpop.f32.mrf.mxu0
        %1259 = vdwg.mxu0
        %1260 = vmatpush.bf16.msra.mxu0 %v898
        %1261 = vmatpush.bf16.msra.mxu0 %v894
        %1262 = vmatpush.bf16.msra.mxu0 %v890
        %1263 = vmatpush.bf16.msra.mxu0 %v886
        %1264 = vmatpush.bf16.msra.mxu0 %v882
        %1265 = vmatpush.bf16.msra.mxu0 %v878
        %1266 = vmatpush.bf16.msra.mxu0 %v874
        %1267 = vmatpush.bf16.msra.mxu0 %v870
        %1268 = vmatmul.bf16.gmra.mxu0 %v310
        %v1269 = vpop.f32.mrf.mxu0
        %v1270 = vadd.f32 %v1257, %v1269
        %v1271 = vpop.f32.mrf.mxu0
        %1272 = vdwg.mxu0
        %1273 = vmatpush.bf16.msra.mxu0 %v930
        %1274 = vmatpush.bf16.msra.mxu0 %v926
        %1275 = vmatpush.bf16.msra.mxu0 %v922
        %1276 = vmatpush.bf16.msra.mxu0 %v918
        %1277 = vmatpush.bf16.msra.mxu0 %v914
        %1278 = vmatpush.bf16.msra.mxu0 %v910
        %1279 = vmatpush.bf16.msra.mxu0 %v906
        %1280 = vmatpush.bf16.msra.mxu0 %v902
        %1281 = vmatmul.bf16.gmra.mxu0 %v311
        %v1282 = vpop.f32.mrf.mxu0
        %v1283 = vadd.f32 %v1270, %v1282
        %v1284 = vpop.f32.mrf.mxu0
        %1285 = vdwg.mxu0
        %1286 = vmatpush.bf16.msra.mxu0 %v962
        %1287 = vmatpush.bf16.msra.mxu0 %v958
        %1288 = vmatpush.bf16.msra.mxu0 %v954
        %1289 = vmatpush.bf16.msra.mxu0 %v950
        %1290 = vmatpush.bf16.msra.mxu0 %v946
        %1291 = vmatpush.bf16.msra.mxu0 %v942
        %1292 = vmatpush.bf16.msra.mxu0 %v938
        %1293 = vmatpush.bf16.msra.mxu0 %v934
        %1294 = vmatmul.bf16.gmra.mxu0 %v312
        %v1295 = vpop.f32.mrf.mxu0
        %v1296 = vadd.f32 %v1283, %v1295
        %v1297 = vpop.f32.mrf.mxu0
        %1298 = vdwg.mxu0
        %v1299 = vmax.f32 %v1140, 0.0
        %v1300 = vmax.f32 %v1192, 0.0
        %v1301 = vmax.f32 %v1244, 0.0
        %v1302 = vmax.f32 %v1296, 0.0
        %v1303 = vpack.c.bf16 %v1299, %v1299
        %v1304 = vpack.c.bf16 %v1300, %v1300
        %v1305 = vpack.c.bf16 %v1301, %v1301
        %v1306 = vpack.c.bf16 %v1302, %v1302
        %s1307 = smul.u32 0, 4
        %s1308 = smul.addr %s1307, 4
        %s1309 = scalar_lea.vmem [#allocation8], %s1308
        %v1310 = vld [vmem:[%s1309] sm:$0xff]
        %v1311 = vld [vmem:[%s1309 + $0x8] sm:$0xff]
        %v1312 = vld [vmem:[%s1309 + $0x10] sm:$0xff]
        %v1313 = vld [vmem:[%s1309 + $0x18] sm:$0xff]
        %v1314 = vld [vmem:[%s1309 + $0x20] sm:$0xff]
        %v1315 = vld [vmem:[%s1309 + $0x28] sm:$0xff]
        %v1316 = vld [vmem:[%s1309 + $0x30] sm:$0xff]
        %v1317 = vld [vmem:[%s1309 + $0x38] sm:$0xff]
        %v1318 = vld [vmem:[%s1309 + $0x40] sm:$0xff]
        %v1319 = vld [vmem:[%s1309 + $0x48] sm:$0xff]
        %v1320 = vld [vmem:[%s1309 + $0x50] sm:$0xff]
        %v1321 = vld [vmem:[%s1309 + $0x58] sm:$0xff]
        %v1322 = vld [vmem:[%s1309 + $0x60] sm:$0xff]
        %v1323 = vld [vmem:[%s1309 + $0x68] sm:$0xff]
        %v1324 = vld [vmem:[%s1309 + $0x70] sm:$0xff]
        %v1325 = vld [vmem:[%s1309 + $0x78] sm:$0xff]
        %v1326 = vld [vmem:[%s1309 + $0x80] sm:$0xff]
        %v1327 = vld [vmem:[%s1309 + $0x88] sm:$0xff]
        %v1328 = vld [vmem:[%s1309 + $0x90] sm:$0xff]
        %v1329 = vld [vmem:[%s1309 + $0x98] sm:$0xff]
        %v1330 = vld [vmem:[%s1309 + $0xa0] sm:$0xff]
        %v1331 = vld [vmem:[%s1309 + $0xa8] sm:$0xff]
        %v1332 = vld [vmem:[%s1309 + $0xb0] sm:$0xff]
        %v1333 = vld [vmem:[%s1309 + $0xb8] sm:$0xff]
        %v1334 = vld [vmem:[%s1309 + $0xc0] sm:$0xff]
        %v1335 = vld [vmem:[%s1309 + $0xc8] sm:$0xff]
        %v1336 = vld [vmem:[%s1309 + $0xd0] sm:$0xff]
        %v1337 = vld [vmem:[%s1309 + $0xd8] sm:$0xff]
        %v1338 = vld [vmem:[%s1309 + $0xe0] sm:$0xff]
        %v1339 = vld [vmem:[%s1309 + $0xe8] sm:$0xff]
        %v1340 = vld [vmem:[%s1309 + $0xf0] sm:$0xff]
        %v1341 = vld [vmem:[%s1309 + $0xf8] sm:$0xff]
        %v1342 = vld [vmem:[%s1309 + $0x100] sm:$0xff]
        %v1343 = vld [vmem:[%s1309 + $0x108] sm:$0xff]
        %v1344 = vld [vmem:[%s1309 + $0x110] sm:$0xff]
        %v1345 = vld [vmem:[%s1309 + $0x118] sm:$0xff]
        %v1346 = vld [vmem:[%s1309 + $0x120] sm:$0xff]
        %v1347 = vld [vmem:[%s1309 + $0x128] sm:$0xff]
        %v1348 = vld [vmem:[%s1309 + $0x130] sm:$0xff]
        %v1349 = vld [vmem:[%s1309 + $0x138] sm:$0xff]
        %v1350 = vld [vmem:[%s1309 + $0x140] sm:$0xff]
        %v1351 = vld [vmem:[%s1309 + $0x148] sm:$0xff]
        %v1352 = vld [vmem:[%s1309 + $0x150] sm:$0xff]
        %v1353 = vld [vmem:[%s1309 + $0x158] sm:$0xff]
        %v1354 = vld [vmem:[%s1309 + $0x160] sm:$0xff]
        %v1355 = vld [vmem:[%s1309 + $0x168] sm:$0xff]
        %v1356 = vld [vmem:[%s1309 + $0x170] sm:$0xff]
        %v1357 = vld [vmem:[%s1309 + $0x178] sm:$0xff]
        %v1358 = vld [vmem:[%s1309 + $0x180] sm:$0xff]
        %v1359 = vld [vmem:[%s1309 + $0x188] sm:$0xff]
        %v1360 = vld [vmem:[%s1309 + $0x190] sm:$0xff]
        %v1361 = vld [vmem:[%s1309 + $0x198] sm:$0xff]
        %v1362 = vld [vmem:[%s1309 + $0x1a0] sm:$0xff]
        %v1363 = vld [vmem:[%s1309 + $0x1a8] sm:$0xff]
        %v1364 = vld [vmem:[%s1309 + $0x1b0] sm:$0xff]
        %v1365 = vld [vmem:[%s1309 + $0x1b8] sm:$0xff]
        %v1366 = vld [vmem:[%s1309 + $0x1c0] sm:$0xff]
        %v1367 = vld [vmem:[%s1309 + $0x1c8] sm:$0xff]
        %v1368 = vld [vmem:[%s1309 + $0x1d0] sm:$0xff]
        %v1369 = vld [vmem:[%s1309 + $0x1d8] sm:$0xff]
        %v1370 = vld [vmem:[%s1309 + $0x1e0] sm:$0xff]
        %v1371 = vld [vmem:[%s1309 + $0x1e8] sm:$0xff]
        %v1372 = vld [vmem:[%s1309 + $0x1f0] sm:$0xff]
        %v1373 = vld [vmem:[%s1309 + $0x1f8] sm:$0xff]
        %v1374 = vld [vmem:[%s1309 + $0x200] sm:$0xff]
        %v1375 = vld [vmem:[%s1309 + $0x208] sm:$0xff]
        %v1376 = vld [vmem:[%s1309 + $0x210] sm:$0xff]
        %v1377 = vld [vmem:[%s1309 + $0x218] sm:$0xff]
        %v1378 = vld [vmem:[%s1309 + $0x220] sm:$0xff]
        %v1379 = vld [vmem:[%s1309 + $0x228] sm:$0xff]
        %v1380 = vld [vmem:[%s1309 + $0x230] sm:$0xff]
        %v1381 = vld [vmem:[%s1309 + $0x238] sm:$0xff]
        %v1382 = vld [vmem:[%s1309 + $0x240] sm:$0xff]
        %v1383 = vld [vmem:[%s1309 + $0x248] sm:$0xff]
        %v1384 = vld [vmem:[%s1309 + $0x250] sm:$0xff]
        %v1385 = vld [vmem:[%s1309 + $0x258] sm:$0xff]
        %v1386 = vld [vmem:[%s1309 + $0x260] sm:$0xff]
        %v1387 = vld [vmem:[%s1309 + $0x268] sm:$0xff]
        %v1388 = vld [vmem:[%s1309 + $0x270] sm:$0xff]
        %v1389 = vld [vmem:[%s1309 + $0x278] sm:$0xff]
        %v1390 = vld [vmem:[%s1309 + $0x280] sm:$0xff]
        %v1391 = vld [vmem:[%s1309 + $0x288] sm:$0xff]
        %v1392 = vld [vmem:[%s1309 + $0x290] sm:$0xff]
        %v1393 = vld [vmem:[%s1309 + $0x298] sm:$0xff]
        %v1394 = vld [vmem:[%s1309 + $0x2a0] sm:$0xff]
        %v1395 = vld [vmem:[%s1309 + $0x2a8] sm:$0xff]
        %v1396 = vld [vmem:[%s1309 + $0x2b0] sm:$0xff]
        %v1397 = vld [vmem:[%s1309 + $0x2b8] sm:$0xff]
        %v1398 = vld [vmem:[%s1309 + $0x2c0] sm:$0xff]
        %v1399 = vld [vmem:[%s1309 + $0x2c8] sm:$0xff]
        %v1400 = vld [vmem:[%s1309 + $0x2d0] sm:$0xff]
        %v1401 = vld [vmem:[%s1309 + $0x2d8] sm:$0xff]
        %v1402 = vld [vmem:[%s1309 + $0x2e0] sm:$0xff]
        %v1403 = vld [vmem:[%s1309 + $0x2e8] sm:$0xff]
        %v1404 = vld [vmem:[%s1309 + $0x2f0] sm:$0xff]
        %v1405 = vld [vmem:[%s1309 + $0x2f8] sm:$0xff]
        %v1406 = vld [vmem:[%s1309 + $0x300] sm:$0xff]
        %v1407 = vld [vmem:[%s1309 + $0x308] sm:$0xff]
        %v1408 = vld [vmem:[%s1309 + $0x310] sm:$0xff]
        %v1409 = vld [vmem:[%s1309 + $0x318] sm:$0xff]
        %v1410 = vld [vmem:[%s1309 + $0x320] sm:$0xff]
        %v1411 = vld [vmem:[%s1309 + $0x328] sm:$0xff]
        %v1412 = vld [vmem:[%s1309 + $0x330] sm:$0xff]
        %v1413 = vld [vmem:[%s1309 + $0x338] sm:$0xff]
        %v1414 = vld [vmem:[%s1309 + $0x340] sm:$0xff]
        %v1415 = vld [vmem:[%s1309 + $0x348] sm:$0xff]
        %v1416 = vld [vmem:[%s1309 + $0x350] sm:$0xff]
        %v1417 = vld [vmem:[%s1309 + $0x358] sm:$0xff]
        %v1418 = vld [vmem:[%s1309 + $0x360] sm:$0xff]
        %v1419 = vld [vmem:[%s1309 + $0x368] sm:$0xff]
        %v1420 = vld [vmem:[%s1309 + $0x370] sm:$0xff]
        %v1421 = vld [vmem:[%s1309 + $0x378] sm:$0xff]
        %v1422 = vld [vmem:[%s1309 + $0x380] sm:$0xff]
        %v1423 = vld [vmem:[%s1309 + $0x388] sm:$0xff]
        %v1424 = vld [vmem:[%s1309 + $0x390] sm:$0xff]
        %v1425 = vld [vmem:[%s1309 + $0x398] sm:$0xff]
        %v1426 = vld [vmem:[%s1309 + $0x3a0] sm:$0xff]
        %v1427 = vld [vmem:[%s1309 + $0x3a8] sm:$0xff]
        %v1428 = vld [vmem:[%s1309 + $0x3b0] sm:$0xff]
        %v1429 = vld [vmem:[%s1309 + $0x3b8] sm:$0xff]
        %v1430 = vld [vmem:[%s1309 + $0x3c0] sm:$0xff]
        %v1431 = vld [vmem:[%s1309 + $0x3c8] sm:$0xff]
        %v1432 = vld [vmem:[%s1309 + $0x3d0] sm:$0xff]
        %v1433 = vld [vmem:[%s1309 + $0x3d8] sm:$0xff]
        %v1434 = vld [vmem:[%s1309 + $0x3e0] sm:$0xff]
        %v1435 = vld [vmem:[%s1309 + $0x3e8] sm:$0xff]
        %v1436 = vld [vmem:[%s1309 + $0x3f0] sm:$0xff]
        %v1437 = vld [vmem:[%s1309 + $0x3f8] sm:$0xff]
        %s1438 = scalar_lea.vmem [#allocation5], 16
        %v1439 = vld [vmem:[%s1438] sm:$0xff]
        %v1440 = vld [vmem:[%s1438 + $0x8] sm:$0xff]
        %v1441 = vld [vmem:[%s1438 + $0x40] sm:$0xff]
        %v1442 = vld [vmem:[%s1438 + $0x48] sm:$0xff]
        %v1443 = vld [vmem:[%s1438 + $0x80] sm:$0xff]
        %v1444 = vld [vmem:[%s1438 + $0x88] sm:$0xff]
        %v1445 = vld [vmem:[%s1438 + $0xc0] sm:$0xff]
        %v1446 = vld [vmem:[%s1438 + $0xc8] sm:$0xff]
        %v1447 = vld [vmem:[%s1438 + $0x100] sm:$0xff]
        %v1448 = vld [vmem:[%s1438 + $0x108] sm:$0xff]
        %v1449 = vld [vmem:[%s1438 + $0x140] sm:$0xff]
        %v1450 = vld [vmem:[%s1438 + $0x148] sm:$0xff]
        %v1451 = vld [vmem:[%s1438 + $0x180] sm:$0xff]
        %v1452 = vld [vmem:[%s1438 + $0x188] sm:$0xff]
        %v1453 = vld [vmem:[%s1438 + $0x1c0] sm:$0xff]
        %v1454 = vld [vmem:[%s1438 + $0x1c8] sm:$0xff]
        %v1455 = vld [vmem:[%s1438 + $0x200] sm:$0xff]
        %v1456 = vld [vmem:[%s1438 + $0x208] sm:$0xff]
        %v1457 = vld [vmem:[%s1438 + $0x240] sm:$0xff]
        %v1458 = vld [vmem:[%s1438 + $0x248] sm:$0xff]
        %v1459 = vld [vmem:[%s1438 + $0x280] sm:$0xff]
        %v1460 = vld [vmem:[%s1438 + $0x288] sm:$0xff]
        %v1461 = vld [vmem:[%s1438 + $0x2c0] sm:$0xff]
        %v1462 = vld [vmem:[%s1438 + $0x2c8] sm:$0xff]
        %v1463 = vld [vmem:[%s1438 + $0x300] sm:$0xff]
        %v1464 = vld [vmem:[%s1438 + $0x308] sm:$0xff]
        %v1465 = vld [vmem:[%s1438 + $0x340] sm:$0xff]
        %v1466 = vld [vmem:[%s1438 + $0x348] sm:$0xff]
        %v1467 = vld [vmem:[%s1438 + $0x380] sm:$0xff]
        %v1468 = vld [vmem:[%s1438 + $0x388] sm:$0xff]
        %v1469 = vld [vmem:[%s1438 + $0x3c0] sm:$0xff]
        %v1470 = vld [vmem:[%s1438 + $0x3c8] sm:$0xff]
        %v1471 = vld [vmem:[%s1438 + $0x400] sm:$0xff]
        %v1472 = vld [vmem:[%s1438 + $0x408] sm:$0xff]
        %v1473 = vld [vmem:[%s1438 + $0x440] sm:$0xff]
        %v1474 = vld [vmem:[%s1438 + $0x448] sm:$0xff]
        %v1475 = vld [vmem:[%s1438 + $0x480] sm:$0xff]
        %v1476 = vld [vmem:[%s1438 + $0x488] sm:$0xff]
        %v1477 = vld [vmem:[%s1438 + $0x4c0] sm:$0xff]
        %v1478 = vld [vmem:[%s1438 + $0x4c8] sm:$0xff]
        %v1479 = vld [vmem:[%s1438 + $0x500] sm:$0xff]
        %v1480 = vld [vmem:[%s1438 + $0x508] sm:$0xff]
        %v1481 = vld [vmem:[%s1438 + $0x540] sm:$0xff]
        %v1482 = vld [vmem:[%s1438 + $0x548] sm:$0xff]
        %v1483 = vld [vmem:[%s1438 + $0x580] sm:$0xff]
        %v1484 = vld [vmem:[%s1438 + $0x588] sm:$0xff]
        %v1485 = vld [vmem:[%s1438 + $0x5c0] sm:$0xff]
        %v1486 = vld [vmem:[%s1438 + $0x5c8] sm:$0xff]
        %v1487 = vld [vmem:[%s1438 + $0x600] sm:$0xff]
        %v1488 = vld [vmem:[%s1438 + $0x608] sm:$0xff]
        %v1489 = vld [vmem:[%s1438 + $0x640] sm:$0xff]
        %v1490 = vld [vmem:[%s1438 + $0x648] sm:$0xff]
        %v1491 = vld [vmem:[%s1438 + $0x680] sm:$0xff]
        %v1492 = vld [vmem:[%s1438 + $0x688] sm:$0xff]
        %v1493 = vld [vmem:[%s1438 + $0x6c0] sm:$0xff]
        %v1494 = vld [vmem:[%s1438 + $0x6c8] sm:$0xff]
        %v1495 = vld [vmem:[%s1438 + $0x700] sm:$0xff]
        %v1496 = vld [vmem:[%s1438 + $0x708] sm:$0xff]
        %v1497 = vld [vmem:[%s1438 + $0x740] sm:$0xff]
        %v1498 = vld [vmem:[%s1438 + $0x748] sm:$0xff]
        %v1499 = vld [vmem:[%s1438 + $0x780] sm:$0xff]
        %v1500 = vld [vmem:[%s1438 + $0x788] sm:$0xff]
        %v1501 = vld [vmem:[%s1438 + $0x7c0] sm:$0xff]
        %v1502 = vld [vmem:[%s1438 + $0x7c8] sm:$0xff]
        %v1503 = vld [vmem:[%s1438 + $0x800] sm:$0xff]
        %v1504 = vld [vmem:[%s1438 + $0x808] sm:$0xff]
        %v1505 = vld [vmem:[%s1438 + $0x840] sm:$0xff]
        %v1506 = vld [vmem:[%s1438 + $0x848] sm:$0xff]
        %v1507 = vld [vmem:[%s1438 + $0x880] sm:$0xff]
        %v1508 = vld [vmem:[%s1438 + $0x888] sm:$0xff]
        %v1509 = vld [vmem:[%s1438 + $0x8c0] sm:$0xff]
        %v1510 = vld [vmem:[%s1438 + $0x8c8] sm:$0xff]
        %v1511 = vld [vmem:[%s1438 + $0x900] sm:$0xff]
        %v1512 = vld [vmem:[%s1438 + $0x908] sm:$0xff]
        %v1513 = vld [vmem:[%s1438 + $0x940] sm:$0xff]
        %v1514 = vld [vmem:[%s1438 + $0x948] sm:$0xff]
        %v1515 = vld [vmem:[%s1438 + $0x980] sm:$0xff]
        %v1516 = vld [vmem:[%s1438 + $0x988] sm:$0xff]
        %v1517 = vld [vmem:[%s1438 + $0x9c0] sm:$0xff]
        %v1518 = vld [vmem:[%s1438 + $0x9c8] sm:$0xff]
        %v1519 = vld [vmem:[%s1438 + $0xa00] sm:$0xff]
        %v1520 = vld [vmem:[%s1438 + $0xa08] sm:$0xff]
        %v1521 = vld [vmem:[%s1438 + $0xa40] sm:$0xff]
        %v1522 = vld [vmem:[%s1438 + $0xa48] sm:$0xff]
        %v1523 = vld [vmem:[%s1438 + $0xa80] sm:$0xff]
        %v1524 = vld [vmem:[%s1438 + $0xa88] sm:$0xff]
        %v1525 = vld [vmem:[%s1438 + $0xac0] sm:$0xff]
        %v1526 = vld [vmem:[%s1438 + $0xac8] sm:$0xff]
        %v1527 = vld [vmem:[%s1438 + $0xb00] sm:$0xff]
        %v1528 = vld [vmem:[%s1438 + $0xb08] sm:$0xff]
        %v1529 = vld [vmem:[%s1438 + $0xb40] sm:$0xff]
        %v1530 = vld [vmem:[%s1438 + $0xb48] sm:$0xff]
        %v1531 = vld [vmem:[%s1438 + $0xb80] sm:$0xff]
        %v1532 = vld [vmem:[%s1438 + $0xb88] sm:$0xff]
        %v1533 = vld [vmem:[%s1438 + $0xbc0] sm:$0xff]
        %v1534 = vld [vmem:[%s1438 + $0xbc8] sm:$0xff]
        %v1535 = vld [vmem:[%s1438 + $0xc00] sm:$0xff]
        %v1536 = vld [vmem:[%s1438 + $0xc08] sm:$0xff]
        %v1537 = vld [vmem:[%s1438 + $0xc40] sm:$0xff]
        %v1538 = vld [vmem:[%s1438 + $0xc48] sm:$0xff]
        %v1539 = vld [vmem:[%s1438 + $0xc80] sm:$0xff]
        %v1540 = vld [vmem:[%s1438 + $0xc88] sm:$0xff]
        %v1541 = vld [vmem:[%s1438 + $0xcc0] sm:$0xff]
        %v1542 = vld [vmem:[%s1438 + $0xcc8] sm:$0xff]
        %v1543 = vld [vmem:[%s1438 + $0xd00] sm:$0xff]
        %v1544 = vld [vmem:[%s1438 + $0xd08] sm:$0xff]
        %v1545 = vld [vmem:[%s1438 + $0xd40] sm:$0xff]
        %v1546 = vld [vmem:[%s1438 + $0xd48] sm:$0xff]
        %v1547 = vld [vmem:[%s1438 + $0xd80] sm:$0xff]
        %v1548 = vld [vmem:[%s1438 + $0xd88] sm:$0xff]
        %v1549 = vld [vmem:[%s1438 + $0xdc0] sm:$0xff]
        %v1550 = vld [vmem:[%s1438 + $0xdc8] sm:$0xff]
        %v1551 = vld [vmem:[%s1438 + $0xe00] sm:$0xff]
        %v1552 = vld [vmem:[%s1438 + $0xe08] sm:$0xff]
        %v1553 = vld [vmem:[%s1438 + $0xe40] sm:$0xff]
        %v1554 = vld [vmem:[%s1438 + $0xe48] sm:$0xff]
        %v1555 = vld [vmem:[%s1438 + $0xe80] sm:$0xff]
        %v1556 = vld [vmem:[%s1438 + $0xe88] sm:$0xff]
        %v1557 = vld [vmem:[%s1438 + $0xec0] sm:$0xff]
        %v1558 = vld [vmem:[%s1438 + $0xec8] sm:$0xff]
        %v1559 = vld [vmem:[%s1438 + $0xf00] sm:$0xff]
        %v1560 = vld [vmem:[%s1438 + $0xf08] sm:$0xff]
        %v1561 = vld [vmem:[%s1438 + $0xf40] sm:$0xff]
        %v1562 = vld [vmem:[%s1438 + $0xf48] sm:$0xff]
        %v1563 = vld [vmem:[%s1438 + $0xf80] sm:$0xff]
        %v1564 = vld [vmem:[%s1438 + $0xf88] sm:$0xff]
        %v1565 = vld [vmem:[%s1438 + $0xfc0] sm:$0xff]
        %v1566 = vld [vmem:[%s1438 + $0xfc8] sm:$0xff]
        %s1567 = scalar_lea.vmem [#allocation7], 4
        %v1568 = vld [vmem:[%s1567] sm:$0xf]
        %v1570 = vperm.slane %v1568, 0
        %v1571 = vperm.slane %v1568, 1
        %v1572 = vperm.slane %v1568, 2
        %v1573 = vperm.slane %v1568, 3
        %v1706 = vunpack.c.l.b16 %v1439
        %v1707 = vunpack.c.h.b16 %v1439
        %v1708 = vunpack.c.l.b16 %v1440
        %v1709 = vunpack.c.h.b16 %v1440
        %v1710 = vunpack.c.l.b16 %v1441
        %v1711 = vunpack.c.h.b16 %v1441
        %v1712 = vunpack.c.l.b16 %v1442
        %v1713 = vunpack.c.h.b16 %v1442
        %v1714 = vunpack.c.l.b16 %v1443
        %v1715 = vunpack.c.h.b16 %v1443
        %v1716 = vunpack.c.l.b16 %v1444
        %v1717 = vunpack.c.h.b16 %v1444
        %v1718 = vunpack.c.l.b16 %v1445
        %v1719 = vunpack.c.h.b16 %v1445
        %v1720 = vunpack.c.l.b16 %v1446
        %v1721 = vunpack.c.h.b16 %v1446
        %v1722 = vunpack.c.l.b16 %v1447
        %v1723 = vunpack.c.h.b16 %v1447
        %v1724 = vunpack.c.l.b16 %v1448
        %v1725 = vunpack.c.h.b16 %v1448
        %v1726 = vunpack.c.l.b16 %v1449
        %v1727 = vunpack.c.h.b16 %v1449
        %v1728 = vunpack.c.l.b16 %v1450
        %v1729 = vunpack.c.h.b16 %v1450
        %v1730 = vunpack.c.l.b16 %v1451
        %v1731 = vunpack.c.h.b16 %v1451
        %v1732 = vunpack.c.l.b16 %v1452
        %v1733 = vunpack.c.h.b16 %v1452
        %v1734 = vunpack.c.l.b16 %v1453
        %v1735 = vunpack.c.h.b16 %v1453
        %v1736 = vunpack.c.l.b16 %v1454
        %v1737 = vunpack.c.h.b16 %v1454
        %v1738 = vunpack.c.l.b16 %v1455
        %v1739 = vunpack.c.h.b16 %v1455
        %v1740 = vunpack.c.l.b16 %v1456
        %v1741 = vunpack.c.h.b16 %v1456
        %v1742 = vunpack.c.l.b16 %v1457
        %v1743 = vunpack.c.h.b16 %v1457
        %v1744 = vunpack.c.l.b16 %v1458
        %v1745 = vunpack.c.h.b16 %v1458
        %v1746 = vunpack.c.l.b16 %v1459
        %v1747 = vunpack.c.h.b16 %v1459
        %v1748 = vunpack.c.l.b16 %v1460
        %v1749 = vunpack.c.h.b16 %v1460
        %v1750 = vunpack.c.l.b16 %v1461
        %v1751 = vunpack.c.h.b16 %v1461
        %v1752 = vunpack.c.l.b16 %v1462
        %v1753 = vunpack.c.h.b16 %v1462
        %v1754 = vunpack.c.l.b16 %v1463
        %v1755 = vunpack.c.h.b16 %v1463
        %v1756 = vunpack.c.l.b16 %v1464
        %v1757 = vunpack.c.h.b16 %v1464
        %v1758 = vunpack.c.l.b16 %v1465
        %v1759 = vunpack.c.h.b16 %v1465
        %v1760 = vunpack.c.l.b16 %v1466
        %v1761 = vunpack.c.h.b16 %v1466
        %v1762 = vunpack.c.l.b16 %v1467
        %v1763 = vunpack.c.h.b16 %v1467
        %v1764 = vunpack.c.l.b16 %v1468
        %v1765 = vunpack.c.h.b16 %v1468
        %v1766 = vunpack.c.l.b16 %v1469
        %v1767 = vunpack.c.h.b16 %v1469
        %v1768 = vunpack.c.l.b16 %v1470
        %v1769 = vunpack.c.h.b16 %v1470
        %v1770 = vunpack.c.l.b16 %v1471
        %v1771 = vunpack.c.h.b16 %v1471
        %v1772 = vunpack.c.l.b16 %v1472
        %v1773 = vunpack.c.h.b16 %v1472
        %v1774 = vunpack.c.l.b16 %v1473
        %v1775 = vunpack.c.h.b16 %v1473
        %v1776 = vunpack.c.l.b16 %v1474
        %v1777 = vunpack.c.h.b16 %v1474
        %v1778 = vunpack.c.l.b16 %v1475
        %v1779 = vunpack.c.h.b16 %v1475
        %v1780 = vunpack.c.l.b16 %v1476
        %v1781 = vunpack.c.h.b16 %v1476
        %v1782 = vunpack.c.l.b16 %v1477
        %v1783 = vunpack.c.h.b16 %v1477
        %v1784 = vunpack.c.l.b16 %v1478
        %v1785 = vunpack.c.h.b16 %v1478
        %v1786 = vunpack.c.l.b16 %v1479
        %v1787 = vunpack.c.h.b16 %v1479
        %v1788 = vunpack.c.l.b16 %v1480
        %v1789 = vunpack.c.h.b16 %v1480
        %v1790 = vunpack.c.l.b16 %v1481
        %v1791 = vunpack.c.h.b16 %v1481
        %v1792 = vunpack.c.l.b16 %v1482
        %v1793 = vunpack.c.h.b16 %v1482
        %v1794 = vunpack.c.l.b16 %v1483
        %v1795 = vunpack.c.h.b16 %v1483
        %v1796 = vunpack.c.l.b16 %v1484
        %v1797 = vunpack.c.h.b16 %v1484
        %v1798 = vunpack.c.l.b16 %v1485
        %v1799 = vunpack.c.h.b16 %v1485
        %v1800 = vunpack.c.l.b16 %v1486
        %v1801 = vunpack.c.h.b16 %v1486
        %v1802 = vunpack.c.l.b16 %v1487
        %v1803 = vunpack.c.h.b16 %v1487
        %v1804 = vunpack.c.l.b16 %v1488
        %v1805 = vunpack.c.h.b16 %v1488
        %v1806 = vunpack.c.l.b16 %v1489
        %v1807 = vunpack.c.h.b16 %v1489
        %v1808 = vunpack.c.l.b16 %v1490
        %v1809 = vunpack.c.h.b16 %v1490
        %v1810 = vunpack.c.l.b16 %v1491
        %v1811 = vunpack.c.h.b16 %v1491
        %v1812 = vunpack.c.l.b16 %v1492
        %v1813 = vunpack.c.h.b16 %v1492
        %v1814 = vunpack.c.l.b16 %v1493
        %v1815 = vunpack.c.h.b16 %v1493
        %v1816 = vunpack.c.l.b16 %v1494
        %v1817 = vunpack.c.h.b16 %v1494
        %v1818 = vunpack.c.l.b16 %v1495
        %v1819 = vunpack.c.h.b16 %v1495
        %v1820 = vunpack.c.l.b16 %v1496
        %v1821 = vunpack.c.h.b16 %v1496
        %v1822 = vunpack.c.l.b16 %v1497
        %v1823 = vunpack.c.h.b16 %v1497
        %v1824 = vunpack.c.l.b16 %v1498
        %v1825 = vunpack.c.h.b16 %v1498
        %v1826 = vunpack.c.l.b16 %v1499
        %v1827 = vunpack.c.h.b16 %v1499
        %v1828 = vunpack.c.l.b16 %v1500
        %v1829 = vunpack.c.h.b16 %v1500
        %v1830 = vunpack.c.l.b16 %v1501
        %v1831 = vunpack.c.h.b16 %v1501
        %v1832 = vunpack.c.l.b16 %v1502
        %v1833 = vunpack.c.h.b16 %v1502
        %v1834 = vunpack.c.l.b16 %v1503
        %v1835 = vunpack.c.h.b16 %v1503
        %v1836 = vunpack.c.l.b16 %v1504
        %v1837 = vunpack.c.h.b16 %v1504
        %v1838 = vunpack.c.l.b16 %v1505
        %v1839 = vunpack.c.h.b16 %v1505
        %v1840 = vunpack.c.l.b16 %v1506
        %v1841 = vunpack.c.h.b16 %v1506
        %v1842 = vunpack.c.l.b16 %v1507
        %v1843 = vunpack.c.h.b16 %v1507
        %v1844 = vunpack.c.l.b16 %v1508
        %v1845 = vunpack.c.h.b16 %v1508
        %v1846 = vunpack.c.l.b16 %v1509
        %v1847 = vunpack.c.h.b16 %v1509
        %v1848 = vunpack.c.l.b16 %v1510
        %v1849 = vunpack.c.h.b16 %v1510
        %v1850 = vunpack.c.l.b16 %v1511
        %v1851 = vunpack.c.h.b16 %v1511
        %v1852 = vunpack.c.l.b16 %v1512
        %v1853 = vunpack.c.h.b16 %v1512
        %v1854 = vunpack.c.l.b16 %v1513
        %v1855 = vunpack.c.h.b16 %v1513
        %v1856 = vunpack.c.l.b16 %v1514
        %v1857 = vunpack.c.h.b16 %v1514
        %v1858 = vunpack.c.l.b16 %v1515
        %v1859 = vunpack.c.h.b16 %v1515
        %v1860 = vunpack.c.l.b16 %v1516
        %v1861 = vunpack.c.h.b16 %v1516
        %v1862 = vunpack.c.l.b16 %v1517
        %v1863 = vunpack.c.h.b16 %v1517
        %v1864 = vunpack.c.l.b16 %v1518
        %v1865 = vunpack.c.h.b16 %v1518
        %v1866 = vunpack.c.l.b16 %v1519
        %v1867 = vunpack.c.h.b16 %v1519
        %v1868 = vunpack.c.l.b16 %v1520
        %v1869 = vunpack.c.h.b16 %v1520
        %v1870 = vunpack.c.l.b16 %v1521
        %v1871 = vunpack.c.h.b16 %v1521
        %v1872 = vunpack.c.l.b16 %v1522
        %v1873 = vunpack.c.h.b16 %v1522
        %v1874 = vunpack.c.l.b16 %v1523
        %v1875 = vunpack.c.h.b16 %v1523
        %v1876 = vunpack.c.l.b16 %v1524
        %v1877 = vunpack.c.h.b16 %v1524
        %v1878 = vunpack.c.l.b16 %v1525
        %v1879 = vunpack.c.h.b16 %v1525
        %v1880 = vunpack.c.l.b16 %v1526
        %v1881 = vunpack.c.h.b16 %v1526
        %v1882 = vunpack.c.l.b16 %v1527
        %v1883 = vunpack.c.h.b16 %v1527
        %v1884 = vunpack.c.l.b16 %v1528
        %v1885 = vunpack.c.h.b16 %v1528
        %v1886 = vunpack.c.l.b16 %v1529
        %v1887 = vunpack.c.h.b16 %v1529
        %v1888 = vunpack.c.l.b16 %v1530
        %v1889 = vunpack.c.h.b16 %v1530
        %v1890 = vunpack.c.l.b16 %v1531
        %v1891 = vunpack.c.h.b16 %v1531
        %v1892 = vunpack.c.l.b16 %v1532
        %v1893 = vunpack.c.h.b16 %v1532
        %v1894 = vunpack.c.l.b16 %v1533
        %v1895 = vunpack.c.h.b16 %v1533
        %v1896 = vunpack.c.l.b16 %v1534
        %v1897 = vunpack.c.h.b16 %v1534
        %v1898 = vunpack.c.l.b16 %v1535
        %v1899 = vunpack.c.h.b16 %v1535
        %v1900 = vunpack.c.l.b16 %v1536
        %v1901 = vunpack.c.h.b16 %v1536
        %v1902 = vunpack.c.l.b16 %v1537
        %v1903 = vunpack.c.h.b16 %v1537
        %v1904 = vunpack.c.l.b16 %v1538
        %v1905 = vunpack.c.h.b16 %v1538
        %v1906 = vunpack.c.l.b16 %v1539
        %v1907 = vunpack.c.h.b16 %v1539
        %v1908 = vunpack.c.l.b16 %v1540
        %v1909 = vunpack.c.h.b16 %v1540
        %v1910 = vunpack.c.l.b16 %v1541
        %v1911 = vunpack.c.h.b16 %v1541
        %v1912 = vunpack.c.l.b16 %v1542
        %v1913 = vunpack.c.h.b16 %v1542
        %v1914 = vunpack.c.l.b16 %v1543
        %v1915 = vunpack.c.h.b16 %v1543
        %v1916 = vunpack.c.l.b16 %v1544
        %v1917 = vunpack.c.h.b16 %v1544
        %v1918 = vunpack.c.l.b16 %v1545
        %v1919 = vunpack.c.h.b16 %v1545
        %v1920 = vunpack.c.l.b16 %v1546
        %v1921 = vunpack.c.h.b16 %v1546
        %v1922 = vunpack.c.l.b16 %v1547
        %v1923 = vunpack.c.h.b16 %v1547
        %v1924 = vunpack.c.l.b16 %v1548
        %v1925 = vunpack.c.h.b16 %v1548
        %v1926 = vunpack.c.l.b16 %v1549
        %v1927 = vunpack.c.h.b16 %v1549
        %v1928 = vunpack.c.l.b16 %v1550
        %v1929 = vunpack.c.h.b16 %v1550
        %v1930 = vunpack.c.l.b16 %v1551
        %v1931 = vunpack.c.h.b16 %v1551
        %v1932 = vunpack.c.l.b16 %v1552
        %v1933 = vunpack.c.h.b16 %v1552
        %v1934 = vunpack.c.l.b16 %v1553
        %v1935 = vunpack.c.h.b16 %v1553
        %v1936 = vunpack.c.l.b16 %v1554
        %v1937 = vunpack.c.h.b16 %v1554
        %v1938 = vunpack.c.l.b16 %v1555
        %v1939 = vunpack.c.h.b16 %v1555
        %v1940 = vunpack.c.l.b16 %v1556
        %v1941 = vunpack.c.h.b16 %v1556
        %v1942 = vunpack.c.l.b16 %v1557
        %v1943 = vunpack.c.h.b16 %v1557
        %v1944 = vunpack.c.l.b16 %v1558
        %v1945 = vunpack.c.h.b16 %v1558
        %v1946 = vunpack.c.l.b16 %v1559
        %v1947 = vunpack.c.h.b16 %v1559
        %v1948 = vunpack.c.l.b16 %v1560
        %v1949 = vunpack.c.h.b16 %v1560
        %v1950 = vunpack.c.l.b16 %v1561
        %v1951 = vunpack.c.h.b16 %v1561
        %v1952 = vunpack.c.l.b16 %v1562
        %v1953 = vunpack.c.h.b16 %v1562
        %v1954 = vunpack.c.l.b16 %v1563
        %v1955 = vunpack.c.h.b16 %v1563
        %v1956 = vunpack.c.l.b16 %v1564
        %v1957 = vunpack.c.h.b16 %v1564
        %v1958 = vunpack.c.l.b16 %v1565
        %v1959 = vunpack.c.h.b16 %v1565
        %v1960 = vunpack.c.l.b16 %v1566
        %v1961 = vunpack.c.h.b16 %v1566
        %v1962 = vpack.c.b16 %v1710, %v1706
        %v1963 = vpack.c.b16 %v1711, %v1707
        %v1964 = vpack.c.b16 %v1712, %v1708
        %v1965 = vpack.c.b16 %v1713, %v1709
        %v1966 = vpack.c.b16 %v1718, %v1714
        %v1967 = vpack.c.b16 %v1719, %v1715
        %v1968 = vpack.c.b16 %v1720, %v1716
        %v1969 = vpack.c.b16 %v1721, %v1717
        %v1970 = vpack.c.b16 %v1726, %v1722
        %v1971 = vpack.c.b16 %v1727, %v1723
        %v1972 = vpack.c.b16 %v1728, %v1724
        %v1973 = vpack.c.b16 %v1729, %v1725
        %v1974 = vpack.c.b16 %v1734, %v1730
        %v1975 = vpack.c.b16 %v1735, %v1731
        %v1976 = vpack.c.b16 %v1736, %v1732
        %v1977 = vpack.c.b16 %v1737, %v1733
        %v1978 = vpack.c.b16 %v1742, %v1738
        %v1979 = vpack.c.b16 %v1743, %v1739
        %v1980 = vpack.c.b16 %v1744, %v1740
        %v1981 = vpack.c.b16 %v1745, %v1741
        %v1982 = vpack.c.b16 %v1750, %v1746
        %v1983 = vpack.c.b16 %v1751, %v1747
        %v1984 = vpack.c.b16 %v1752, %v1748
        %v1985 = vpack.c.b16 %v1753, %v1749
        %v1986 = vpack.c.b16 %v1758, %v1754
        %v1987 = vpack.c.b16 %v1759, %v1755
        %v1988 = vpack.c.b16 %v1760, %v1756
        %v1989 = vpack.c.b16 %v1761, %v1757
        %v1990 = vpack.c.b16 %v1766, %v1762
        %v1991 = vpack.c.b16 %v1767, %v1763
        %v1992 = vpack.c.b16 %v1768, %v1764
        %v1993 = vpack.c.b16 %v1769, %v1765
        %v1994 = vpack.c.b16 %v1774, %v1770
        %v1995 = vpack.c.b16 %v1775, %v1771
        %v1996 = vpack.c.b16 %v1776, %v1772
        %v1997 = vpack.c.b16 %v1777, %v1773
        %v1998 = vpack.c.b16 %v1782, %v1778
        %v1999 = vpack.c.b16 %v1783, %v1779
        %v2000 = vpack.c.b16 %v1784, %v1780
        %v2001 = vpack.c.b16 %v1785, %v1781
        %v2002 = vpack.c.b16 %v1790, %v1786
        %v2003 = vpack.c.b16 %v1791, %v1787
        %v2004 = vpack.c.b16 %v1792, %v1788
        %v2005 = vpack.c.b16 %v1793, %v1789
        %v2006 = vpack.c.b16 %v1798, %v1794
        %v2007 = vpack.c.b16 %v1799, %v1795
        %v2008 = vpack.c.b16 %v1800, %v1796
        %v2009 = vpack.c.b16 %v1801, %v1797
        %v2010 = vpack.c.b16 %v1806, %v1802
        %v2011 = vpack.c.b16 %v1807, %v1803
        %v2012 = vpack.c.b16 %v1808, %v1804
        %v2013 = vpack.c.b16 %v1809, %v1805
        %v2014 = vpack.c.b16 %v1814, %v1810
        %v2015 = vpack.c.b16 %v1815, %v1811
        %v2016 = vpack.c.b16 %v1816, %v1812
        %v2017 = vpack.c.b16 %v1817, %v1813
        %v2018 = vpack.c.b16 %v1822, %v1818
        %v2019 = vpack.c.b16 %v1823, %v1819
        %v2020 = vpack.c.b16 %v1824, %v1820
        %v2021 = vpack.c.b16 %v1825, %v1821
        %v2022 = vpack.c.b16 %v1830, %v1826
        %v2023 = vpack.c.b16 %v1831, %v1827
        %v2024 = vpack.c.b16 %v1832, %v1828
        %v2025 = vpack.c.b16 %v1833, %v1829
        %v2026 = vpack.c.b16 %v1838, %v1834
        %v2027 = vpack.c.b16 %v1839, %v1835
        %v2028 = vpack.c.b16 %v1840, %v1836
        %v2029 = vpack.c.b16 %v1841, %v1837
        %v2030 = vpack.c.b16 %v1846, %v1842
        %v2031 = vpack.c.b16 %v1847, %v1843
        %v2032 = vpack.c.b16 %v1848, %v1844
        %v2033 = vpack.c.b16 %v1849, %v1845
        %v2034 = vpack.c.b16 %v1854, %v1850
        %v2035 = vpack.c.b16 %v1855, %v1851
        %v2036 = vpack.c.b16 %v1856, %v1852
        %v2037 = vpack.c.b16 %v1857, %v1853
        %v2038 = vpack.c.b16 %v1862, %v1858
        %v2039 = vpack.c.b16 %v1863, %v1859
        %v2040 = vpack.c.b16 %v1864, %v1860
        %v2041 = vpack.c.b16 %v1865, %v1861
        %v2042 = vpack.c.b16 %v1870, %v1866
        %v2043 = vpack.c.b16 %v1871, %v1867
        %v2044 = vpack.c.b16 %v1872, %v1868
        %v2045 = vpack.c.b16 %v1873, %v1869
        %v2046 = vpack.c.b16 %v1878, %v1874
        %v2047 = vpack.c.b16 %v1879, %v1875
        %v2048 = vpack.c.b16 %v1880, %v1876
        %v2049 = vpack.c.b16 %v1881, %v1877
        %v2050 = vpack.c.b16 %v1886, %v1882
        %v2051 = vpack.c.b16 %v1887, %v1883
        %v2052 = vpack.c.b16 %v1888, %v1884
        %v2053 = vpack.c.b16 %v1889, %v1885
        %v2054 = vpack.c.b16 %v1894, %v1890
        %v2055 = vpack.c.b16 %v1895, %v1891
        %v2056 = vpack.c.b16 %v1896, %v1892
        %v2057 = vpack.c.b16 %v1897, %v1893
        %v2058 = vpack.c.b16 %v1902, %v1898
        %v2059 = vpack.c.b16 %v1903, %v1899
        %v2060 = vpack.c.b16 %v1904, %v1900
        %v2061 = vpack.c.b16 %v1905, %v1901
        %v2062 = vpack.c.b16 %v1910, %v1906
        %v2063 = vpack.c.b16 %v1911, %v1907
        %v2064 = vpack.c.b16 %v1912, %v1908
        %v2065 = vpack.c.b16 %v1913, %v1909
        %v2066 = vpack.c.b16 %v1918, %v1914
        %v2067 = vpack.c.b16 %v1919, %v1915
        %v2068 = vpack.c.b16 %v1920, %v1916
        %v2069 = vpack.c.b16 %v1921, %v1917
        %v2070 = vpack.c.b16 %v1926, %v1922
        %v2071 = vpack.c.b16 %v1927, %v1923
        %v2072 = vpack.c.b16 %v1928, %v1924
        %v2073 = vpack.c.b16 %v1929, %v1925
        %v2074 = vpack.c.b16 %v1934, %v1930
        %v2075 = vpack.c.b16 %v1935, %v1931
        %v2076 = vpack.c.b16 %v1936, %v1932
        %v2077 = vpack.c.b16 %v1937, %v1933
        %v2078 = vpack.c.b16 %v1942, %v1938
        %v2079 = vpack.c.b16 %v1943, %v1939
        %v2080 = vpack.c.b16 %v1944, %v1940
        %v2081 = vpack.c.b16 %v1945, %v1941
        %v2082 = vpack.c.b16 %v1950, %v1946
        %v2083 = vpack.c.b16 %v1951, %v1947
        %v2084 = vpack.c.b16 %v1952, %v1948
        %v2085 = vpack.c.b16 %v1953, %v1949
        %v2086 = vpack.c.b16 %v1958, %v1954
        %v2087 = vpack.c.b16 %v1959, %v1955
        %v2088 = vpack.c.b16 %v1960, %v1956
        %v2089 = vpack.c.b16 %v1961, %v1957
        %2218 = vmatpush.bf16.msra.mxu0 %v1990
        %2219 = vmatpush.bf16.msra.mxu0 %v1986
        %2220 = vmatpush.bf16.msra.mxu0 %v1982
        %2221 = vmatpush.bf16.msra.mxu0 %v1978
        %2222 = vmatpush.bf16.msra.mxu0 %v1974
        %2223 = vmatpush.bf16.msra.mxu0 %v1970
        %2224 = vmatpush.bf16.msra.mxu0 %v1966
        %2225 = vmatpush.bf16.msra.mxu0 %v1962
        %2226 = vmatmul.bf16.gmra.mxu0 %v309
        %v2227 = vpop.f32.mrf.mxu0
        %v2228 = vadd.f32 %v1570, %v2227
        %v2229 = vpop.f32.mrf.mxu0
        %2230 = vdwg.mxu0
        %2231 = vmatpush.bf16.msra.mxu0 %v2022
        %2232 = vmatpush.bf16.msra.mxu0 %v2018
        %2233 = vmatpush.bf16.msra.mxu0 %v2014
        %2234 = vmatpush.bf16.msra.mxu0 %v2010
        %2235 = vmatpush.bf16.msra.mxu0 %v2006
        %2236 = vmatpush.bf16.msra.mxu0 %v2002
        %2237 = vmatpush.bf16.msra.mxu0 %v1998
        %2238 = vmatpush.bf16.msra.mxu0 %v1994
        %2239 = vmatmul.bf16.gmra.mxu0 %v310
        %v2240 = vpop.f32.mrf.mxu0
        %v2241 = vadd.f32 %v2228, %v2240
        %v2242 = vpop.f32.mrf.mxu0
        %2243 = vdwg.mxu0
        %2244 = vmatpush.bf16.msra.mxu0 %v2054
        %2245 = vmatpush.bf16.msra.mxu0 %v2050
        %2246 = vmatpush.bf16.msra.mxu0 %v2046
        %2247 = vmatpush.bf16.msra.mxu0 %v2042
        %2248 = vmatpush.bf16.msra.mxu0 %v2038
        %2249 = vmatpush.bf16.msra.mxu0 %v2034
        %2250 = vmatpush.bf16.msra.mxu0 %v2030
        %2251 = vmatpush.bf16.msra.mxu0 %v2026
        %2252 = vmatmul.bf16.gmra.mxu0 %v311
        %v2253 = vpop.f32.mrf.mxu0
        %v2254 = vadd.f32 %v2241, %v2253
        %v2255 = vpop.f32.mrf.mxu0
        %2256 = vdwg.mxu0
        %2257 = vmatpush.bf16.msra.mxu0 %v2086
        %2258 = vmatpush.bf16.msra.mxu0 %v2082
        %2259 = vmatpush.bf16.msra.mxu0 %v2078
        %2260 = vmatpush.bf16.msra.mxu0 %v2074
        %2261 = vmatpush.bf16.msra.mxu0 %v2070
        %2262 = vmatpush.bf16.msra.mxu0 %v2066
        %2263 = vmatpush.bf16.msra.mxu0 %v2062
        %2264 = vmatpush.bf16.msra.mxu0 %v2058
        %2265 = vmatmul.bf16.gmra.mxu0 %v312
        %v2266 = vpop.f32.mrf.mxu0
        %v2267 = vadd.f32 %v2254, %v2266
        %v2268 = vpop.f32.mrf.mxu0
        %2269 = vdwg.mxu0
        %2270 = vmatpush.bf16.msra.mxu0 %v1991
        %2271 = vmatpush.bf16.msra.mxu0 %v1987
        %2272 = vmatpush.bf16.msra.mxu0 %v1983
        %2273 = vmatpush.bf16.msra.mxu0 %v1979
        %2274 = vmatpush.bf16.msra.mxu0 %v1975
        %2275 = vmatpush.bf16.msra.mxu0 %v1971
        %2276 = vmatpush.bf16.msra.mxu0 %v1967
        %2277 = vmatpush.bf16.msra.mxu0 %v1963
        %2278 = vmatmul.bf16.gmra.mxu0 %v309
        %v2279 = vpop.f32.mrf.mxu0
        %v2280 = vadd.f32 %v1571, %v2279
        %v2281 = vpop.f32.mrf.mxu0
        %2282 = vdwg.mxu0
        %2283 = vmatpush.bf16.msra.mxu0 %v2023
        %2284 = vmatpush.bf16.msra.mxu0 %v2019
        %2285 = vmatpush.bf16.msra.mxu0 %v2015
        %2286 = vmatpush.bf16.msra.mxu0 %v2011
        %2287 = vmatpush.bf16.msra.mxu0 %v2007
        %2288 = vmatpush.bf16.msra.mxu0 %v2003
        %2289 = vmatpush.bf16.msra.mxu0 %v1999
        %2290 = vmatpush.bf16.msra.mxu0 %v1995
        %2291 = vmatmul.bf16.gmra.mxu0 %v310
        %v2292 = vpop.f32.mrf.mxu0
        %v2293 = vadd.f32 %v2280, %v2292
        %v2294 = vpop.f32.mrf.mxu0
        %2295 = vdwg.mxu0
        %2296 = vmatpush.bf16.msra.mxu0 %v2055
        %2297 = vmatpush.bf16.msra.mxu0 %v2051
        %2298 = vmatpush.bf16.msra.mxu0 %v2047
        %2299 = vmatpush.bf16.msra.mxu0 %v2043
        %2300 = vmatpush.bf16.msra.mxu0 %v2039
        %2301 = vmatpush.bf16.msra.mxu0 %v2035
        %2302 = vmatpush.bf16.msra.mxu0 %v2031
        %2303 = vmatpush.bf16.msra.mxu0 %v2027
        %2304 = vmatmul.bf16.gmra.mxu0 %v311
        %v2305 = vpop.f32.mrf.mxu0
        %v2306 = vadd.f32 %v2293, %v2305
        %v2307 = vpop.f32.mrf.mxu0
        %2308 = vdwg.mxu0
        %2309 = vmatpush.bf16.msra.mxu0 %v2087
        %2310 = vmatpush.bf16.msra.mxu0 %v2083
        %2311 = vmatpush.bf16.msra.mxu0 %v2079
        %2312 = vmatpush.bf16.msra.mxu0 %v2075
        %2313 = vmatpush.bf16.msra.mxu0 %v2071
        %2314 = vmatpush.bf16.msra.mxu0 %v2067
        %2315 = vmatpush.bf16.msra.mxu0 %v2063
        %2316 = vmatpush.bf16.msra.mxu0 %v2059
        %2317 = vmatmul.bf16.gmra.mxu0 %v312
        %v2318 = vpop.f32.mrf.mxu0
        %v2319 = vadd.f32 %v2306, %v2318
        %v2320 = vpop.f32.mrf.mxu0
        %2321 = vdwg.mxu0
        %2322 = vmatpush.bf16.msra.mxu0 %v1992
        %2323 = vmatpush.bf16.msra.mxu0 %v1988
        %2324 = vmatpush.bf16.msra.mxu0 %v1984
        %2325 = vmatpush.bf16.msra.mxu0 %v1980
        %2326 = vmatpush.bf16.msra.mxu0 %v1976
        %2327 = vmatpush.bf16.msra.mxu0 %v1972
        %2328 = vmatpush.bf16.msra.mxu0 %v1968
        %2329 = vmatpush.bf16.msra.mxu0 %v1964
        %2330 = vmatmul.bf16.gmra.mxu0 %v309
        %v2331 = vpop.f32.mrf.mxu0
        %v2332 = vadd.f32 %v1572, %v2331
        %v2333 = vpop.f32.mrf.mxu0
        %2334 = vdwg.mxu0
        %2335 = vmatpush.bf16.msra.mxu0 %v2024
        %2336 = vmatpush.bf16.msra.mxu0 %v2020
        %2337 = vmatpush.bf16.msra.mxu0 %v2016
        %2338 = vmatpush.bf16.msra.mxu0 %v2012
        %2339 = vmatpush.bf16.msra.mxu0 %v2008
        %2340 = vmatpush.bf16.msra.mxu0 %v2004
        %2341 = vmatpush.bf16.msra.mxu0 %v2000
        %2342 = vmatpush.bf16.msra.mxu0 %v1996
        %2343 = vmatmul.bf16.gmra.mxu0 %v310
        %v2344 = vpop.f32.mrf.mxu0
        %v2345 = vadd.f32 %v2332, %v2344
        %v2346 = vpop.f32.mrf.mxu0
        %2347 = vdwg.mxu0
        %2348 = vmatpush.bf16.msra.mxu0 %v2056
        %2349 = vmatpush.bf16.msra.mxu0 %v2052
        %2350 = vmatpush.bf16.msra.mxu0 %v2048
        %2351 = vmatpush.bf16.msra.mxu0 %v2044
        %2352 = vmatpush.bf16.msra.mxu0 %v2040
        %2353 = vmatpush.bf16.msra.mxu0 %v2036
        %2354 = vmatpush.bf16.msra.mxu0 %v2032
        %2355 = vmatpush.bf16.msra.mxu0 %v2028
        %2356 = vmatmul.bf16.gmra.mxu0 %v311
        %v2357 = vpop.f32.mrf.mxu0
        %v2358 = vadd.f32 %v2345, %v2357
        %v2359 = vpop.f32.mrf.mxu0
        %2360 = vdwg.mxu0
        %2361 = vmatpush.bf16.msra.mxu0 %v2088
        %2362 = vmatpush.bf16.msra.mxu0 %v2084
        %2363 = vmatpush.bf16.msra.mxu0 %v2080
        %2364 = vmatpush.bf16.msra.mxu0 %v2076
        %2365 = vmatpush.bf16.msra.mxu0 %v2072
        %2366 = vmatpush.bf16.msra.mxu0 %v2068
        %2367 = vmatpush.bf16.msra.mxu0 %v2064
        %2368 = vmatpush.bf16.msra.mxu0 %v2060
        %2369 = vmatmul.bf16.gmra.mxu0 %v312
        %v2370 = vpop.f32.mrf.mxu0
        %v2371 = vadd.f32 %v2358, %v2370
        %v2372 = vpop.f32.mrf.mxu0
        %2373 = vdwg.mxu0
        %2374 = vmatpush.bf16.msra.mxu0 %v1993
        %2375 = vmatpush.bf16.msra.mxu0 %v1989
        %2376 = vmatpush.bf16.msra.mxu0 %v1985
        %2377 = vmatpush.bf16.msra.mxu0 %v1981
        %2378 = vmatpush.bf16.msra.mxu0 %v1977
        %2379 = vmatpush.bf16.msra.mxu0 %v1973
        %2380 = vmatpush.bf16.msra.mxu0 %v1969
        %2381 = vmatpush.bf16.msra.mxu0 %v1965
        %2382 = vmatmul.bf16.gmra.mxu0 %v309
        %v2383 = vpop.f32.mrf.mxu0
        %v2384 = vadd.f32 %v1573, %v2383
        %v2385 = vpop.f32.mrf.mxu0
        %2386 = vdwg.mxu0
        %2387 = vmatpush.bf16.msra.mxu0 %v2025
        %2388 = vmatpush.bf16.msra.mxu0 %v2021
        %2389 = vmatpush.bf16.msra.mxu0 %v2017
        %2390 = vmatpush.bf16.msra.mxu0 %v2013
        %2391 = vmatpush.bf16.msra.mxu0 %v2009
        %2392 = vmatpush.bf16.msra.mxu0 %v2005
        %2393 = vmatpush.bf16.msra.mxu0 %v2001
        %2394 = vmatpush.bf16.msra.mxu0 %v1997
        %2395 = vmatmul.bf16.gmra.mxu0 %v310
        %v2396 = vpop.f32.mrf.mxu0
        %v2397 = vadd.f32 %v2384, %v2396
        %v2398 = vpop.f32.mrf.mxu0
        %2399 = vdwg.mxu0
        %2400 = vmatpush.bf16.msra.mxu0 %v2057
        %2401 = vmatpush.bf16.msra.mxu0 %v2053
        %2402 = vmatpush.bf16.msra.mxu0 %v2049
        %2403 = vmatpush.bf16.msra.mxu0 %v2045
        %2404 = vmatpush.bf16.msra.mxu0 %v2041
        %2405 = vmatpush.bf16.msra.mxu0 %v2037
        %2406 = vmatpush.bf16.msra.mxu0 %v2033
        %2407 = vmatpush.bf16.msra.mxu0 %v2029
        %2408 = vmatmul.bf16.gmra.mxu0 %v311
        %v2409 = vpop.f32.mrf.mxu0
        %v2410 = vadd.f32 %v2397, %v2409
        %v2411 = vpop.f32.mrf.mxu0
        %2412 = vdwg.mxu0
        %2413 = vmatpush.bf16.msra.mxu0 %v2089
        %2414 = vmatpush.bf16.msra.mxu0 %v2085
        %2415 = vmatpush.bf16.msra.mxu0 %v2081
        %2416 = vmatpush.bf16.msra.mxu0 %v2077
        %2417 = vmatpush.bf16.msra.mxu0 %v2073
        %2418 = vmatpush.bf16.msra.mxu0 %v2069
        %2419 = vmatpush.bf16.msra.mxu0 %v2065
        %2420 = vmatpush.bf16.msra.mxu0 %v2061
        %2421 = vmatmul.bf16.gmra.mxu0 %v312
        %v2422 = vpop.f32.mrf.mxu0
        %v2423 = vadd.f32 %v2410, %v2422
        %v2424 = vpop.f32.mrf.mxu0
        %2425 = vdwg.mxu0
        %v2426 = vmax.f32 %v2267, 0.0
        %v2427 = vmax.f32 %v2319, 0.0
        %v2428 = vmax.f32 %v2371, 0.0
        %v2429 = vmax.f32 %v2423, 0.0
        %v2430 = vpack.c.bf16 %v2426, %v2426
        %v2431 = vpack.c.bf16 %v2427, %v2427
        %v2432 = vpack.c.bf16 %v2428, %v2428
        %v2433 = vpack.c.bf16 %v2429, %v2429
        %s2434 = smul.u32 64, 4
        %s2435 = smul.addr %s2434, 4
        %s2436 = scalar_lea.vmem [#allocation8], %s2435
        %v2437 = vld [vmem:[%s2436] sm:$0xff]
        %v2438 = vld [vmem:[%s2436 + $0x8] sm:$0xff]
        %v2439 = vld [vmem:[%s2436 + $0x10] sm:$0xff]
        %v2440 = vld [vmem:[%s2436 + $0x18] sm:$0xff]
        %v2441 = vld [vmem:[%s2436 + $0x20] sm:$0xff]
        %v2442 = vld [vmem:[%s2436 + $0x28] sm:$0xff]
        %v2443 = vld [vmem:[%s2436 + $0x30] sm:$0xff]
        %v2444 = vld [vmem:[%s2436 + $0x38] sm:$0xff]
        %v2445 = vld [vmem:[%s2436 + $0x40] sm:$0xff]
        %v2446 = vld [vmem:[%s2436 + $0x48] sm:$0xff]
        %v2447 = vld [vmem:[%s2436 + $0x50] sm:$0xff]
        %v2448 = vld [vmem:[%s2436 + $0x58] sm:$0xff]
        %v2449 = vld [vmem:[%s2436 + $0x60] sm:$0xff]
        %v2450 = vld [vmem:[%s2436 + $0x68] sm:$0xff]
        %v2451 = vld [vmem:[%s2436 + $0x70] sm:$0xff]
        %v2452 = vld [vmem:[%s2436 + $0x78] sm:$0xff]
        %v2453 = vld [vmem:[%s2436 + $0x80] sm:$0xff]
        %v2454 = vld [vmem:[%s2436 + $0x88] sm:$0xff]
        %v2455 = vld [vmem:[%s2436 + $0x90] sm:$0xff]
        %v2456 = vld [vmem:[%s2436 + $0x98] sm:$0xff]
        %v2457 = vld [vmem:[%s2436 + $0xa0] sm:$0xff]
        %v2458 = vld [vmem:[%s2436 + $0xa8] sm:$0xff]
        %v2459 = vld [vmem:[%s2436 + $0xb0] sm:$0xff]
        %v2460 = vld [vmem:[%s2436 + $0xb8] sm:$0xff]
        %v2461 = vld [vmem:[%s2436 + $0xc0] sm:$0xff]
        %v2462 = vld [vmem:[%s2436 + $0xc8] sm:$0xff]
        %v2463 = vld [vmem:[%s2436 + $0xd0] sm:$0xff]
        %v2464 = vld [vmem:[%s2436 + $0xd8] sm:$0xff]
        %v2465 = vld [vmem:[%s2436 + $0xe0] sm:$0xff]
        %v2466 = vld [vmem:[%s2436 + $0xe8] sm:$0xff]
        %v2467 = vld [vmem:[%s2436 + $0xf0] sm:$0xff]
        %v2468 = vld [vmem:[%s2436 + $0xf8] sm:$0xff]
        %v2469 = vld [vmem:[%s2436 + $0x100] sm:$0xff]
        %v2470 = vld [vmem:[%s2436 + $0x108] sm:$0xff]
        %v2471 = vld [vmem:[%s2436 + $0x110] sm:$0xff]
        %v2472 = vld [vmem:[%s2436 + $0x118] sm:$0xff]
        %v2473 = vld [vmem:[%s2436 + $0x120] sm:$0xff]
        %v2474 = vld [vmem:[%s2436 + $0x128] sm:$0xff]
        %v2475 = vld [vmem:[%s2436 + $0x130] sm:$0xff]
        %v2476 = vld [vmem:[%s2436 + $0x138] sm:$0xff]
        %v2477 = vld [vmem:[%s2436 + $0x140] sm:$0xff]
        %v2478 = vld [vmem:[%s2436 + $0x148] sm:$0xff]
        %v2479 = vld [vmem:[%s2436 + $0x150] sm:$0xff]
        %v2480 = vld [vmem:[%s2436 + $0x158] sm:$0xff]
        %v2481 = vld [vmem:[%s2436 + $0x160] sm:$0xff]
        %v2482 = vld [vmem:[%s2436 + $0x168] sm:$0xff]
        %v2483 = vld [vmem:[%s2436 + $0x170] sm:$0xff]
        %v2484 = vld [vmem:[%s2436 + $0x178] sm:$0xff]
        %v2485 = vld [vmem:[%s2436 + $0x180] sm:$0xff]
        %v2486 = vld [vmem:[%s2436 + $0x188] sm:$0xff]
        %v2487 = vld [vmem:[%s2436 + $0x190] sm:$0xff]
        %v2488 = vld [vmem:[%s2436 + $0x198] sm:$0xff]
        %v2489 = vld [vmem:[%s2436 + $0x1a0] sm:$0xff]
        %v2490 = vld [vmem:[%s2436 + $0x1a8] sm:$0xff]
        %v2491 = vld [vmem:[%s2436 + $0x1b0] sm:$0xff]
        %v2492 = vld [vmem:[%s2436 + $0x1b8] sm:$0xff]
        %v2493 = vld [vmem:[%s2436 + $0x1c0] sm:$0xff]
        %v2494 = vld [vmem:[%s2436 + $0x1c8] sm:$0xff]
        %v2495 = vld [vmem:[%s2436 + $0x1d0] sm:$0xff]
        %v2496 = vld [vmem:[%s2436 + $0x1d8] sm:$0xff]
        %v2497 = vld [vmem:[%s2436 + $0x1e0] sm:$0xff]
        %v2498 = vld [vmem:[%s2436 + $0x1e8] sm:$0xff]
        %v2499 = vld [vmem:[%s2436 + $0x1f0] sm:$0xff]
        %v2500 = vld [vmem:[%s2436 + $0x1f8] sm:$0xff]
        %v2501 = vld [vmem:[%s2436 + $0x200] sm:$0xff]
        %v2502 = vld [vmem:[%s2436 + $0x208] sm:$0xff]
        %v2503 = vld [vmem:[%s2436 + $0x210] sm:$0xff]
        %v2504 = vld [vmem:[%s2436 + $0x218] sm:$0xff]
        %v2505 = vld [vmem:[%s2436 + $0x220] sm:$0xff]
        %v2506 = vld [vmem:[%s2436 + $0x228] sm:$0xff]
        %v2507 = vld [vmem:[%s2436 + $0x230] sm:$0xff]
        %v2508 = vld [vmem:[%s2436 + $0x238] sm:$0xff]
        %v2509 = vld [vmem:[%s2436 + $0x240] sm:$0xff]
        %v2510 = vld [vmem:[%s2436 + $0x248] sm:$0xff]
        %v2511 = vld [vmem:[%s2436 + $0x250] sm:$0xff]
        %v2512 = vld [vmem:[%s2436 + $0x258] sm:$0xff]
        %v2513 = vld [vmem:[%s2436 + $0x260] sm:$0xff]
        %v2514 = vld [vmem:[%s2436 + $0x268] sm:$0xff]
        %v2515 = vld [vmem:[%s2436 + $0x270] sm:$0xff]
        %v2516 = vld [vmem:[%s2436 + $0x278] sm:$0xff]
        %v2517 = vld [vmem:[%s2436 + $0x280] sm:$0xff]
        %v2518 = vld [vmem:[%s2436 + $0x288] sm:$0xff]
        %v2519 = vld [vmem:[%s2436 + $0x290] sm:$0xff]
        %v2520 = vld [vmem:[%s2436 + $0x298] sm:$0xff]
        %v2521 = vld [vmem:[%s2436 + $0x2a0] sm:$0xff]
        %v2522 = vld [vmem:[%s2436 + $0x2a8] sm:$0xff]
        %v2523 = vld [vmem:[%s2436 + $0x2b0] sm:$0xff]
        %v2524 = vld [vmem:[%s2436 + $0x2b8] sm:$0xff]
        %v2525 = vld [vmem:[%s2436 + $0x2c0] sm:$0xff]
        %v2526 = vld [vmem:[%s2436 + $0x2c8] sm:$0xff]
        %v2527 = vld [vmem:[%s2436 + $0x2d0] sm:$0xff]
        %v2528 = vld [vmem:[%s2436 + $0x2d8] sm:$0xff]
        %v2529 = vld [vmem:[%s2436 + $0x2e0] sm:$0xff]
        %v2530 = vld [vmem:[%s2436 + $0x2e8] sm:$0xff]
        %v2531 = vld [vmem:[%s2436 + $0x2f0] sm:$0xff]
        %v2532 = vld [vmem:[%s2436 + $0x2f8] sm:$0xff]
        %v2533 = vld [vmem:[%s2436 + $0x300] sm:$0xff]
        %v2534 = vld [vmem:[%s2436 + $0x308] sm:$0xff]
        %v2535 = vld [vmem:[%s2436 + $0x310] sm:$0xff]
        %v2536 = vld [vmem:[%s2436 + $0x318] sm:$0xff]
        %v2537 = vld [vmem:[%s2436 + $0x320] sm:$0xff]
        %v2538 = vld [vmem:[%s2436 + $0x328] sm:$0xff]
        %v2539 = vld [vmem:[%s2436 + $0x330] sm:$0xff]
        %v2540 = vld [vmem:[%s2436 + $0x338] sm:$0xff]
        %v2541 = vld [vmem:[%s2436 + $0x340] sm:$0xff]
        %v2542 = vld [vmem:[%s2436 + $0x348] sm:$0xff]
        %v2543 = vld [vmem:[%s2436 + $0x350] sm:$0xff]
        %v2544 = vld [vmem:[%s2436 + $0x358] sm:$0xff]
        %v2545 = vld [vmem:[%s2436 + $0x360] sm:$0xff]
        %v2546 = vld [vmem:[%s2436 + $0x368] sm:$0xff]
        %v2547 = vld [vmem:[%s2436 + $0x370] sm:$0xff]
        %v2548 = vld [vmem:[%s2436 + $0x378] sm:$0xff]
        %v2549 = vld [vmem:[%s2436 + $0x380] sm:$0xff]
        %v2550 = vld [vmem:[%s2436 + $0x388] sm:$0xff]
        %v2551 = vld [vmem:[%s2436 + $0x390] sm:$0xff]
        %v2552 = vld [vmem:[%s2436 + $0x398] sm:$0xff]
        %v2553 = vld [vmem:[%s2436 + $0x3a0] sm:$0xff]
        %v2554 = vld [vmem:[%s2436 + $0x3a8] sm:$0xff]
        %v2555 = vld [vmem:[%s2436 + $0x3b0] sm:$0xff]
        %v2556 = vld [vmem:[%s2436 + $0x3b8] sm:$0xff]
        %v2557 = vld [vmem:[%s2436 + $0x3c0] sm:$0xff]
        %v2558 = vld [vmem:[%s2436 + $0x3c8] sm:$0xff]
        %v2559 = vld [vmem:[%s2436 + $0x3d0] sm:$0xff]
        %v2560 = vld [vmem:[%s2436 + $0x3d8] sm:$0xff]
        %v2561 = vld [vmem:[%s2436 + $0x3e0] sm:$0xff]
        %v2562 = vld [vmem:[%s2436 + $0x3e8] sm:$0xff]
        %v2563 = vld [vmem:[%s2436 + $0x3f0] sm:$0xff]
        %v2564 = vld [vmem:[%s2436 + $0x3f8] sm:$0xff]
        %v2693 = vunpack.c.l.b16 %v2437
        %v2694 = vunpack.c.h.b16 %v2437
        %v2695 = vunpack.c.l.b16 %v2438
        %v2696 = vunpack.c.h.b16 %v2438
        %v2697 = vunpack.c.l.b16 %v2439
        %v2698 = vunpack.c.h.b16 %v2439
        %v2699 = vunpack.c.l.b16 %v2440
        %v2700 = vunpack.c.h.b16 %v2440
        %v2701 = vunpack.c.l.b16 %v2441
        %v2702 = vunpack.c.h.b16 %v2441
        %v2703 = vunpack.c.l.b16 %v2442
        %v2704 = vunpack.c.h.b16 %v2442
        %v2705 = vunpack.c.l.b16 %v2443
        %v2706 = vunpack.c.h.b16 %v2443
        %v2707 = vunpack.c.l.b16 %v2444
        %v2708 = vunpack.c.h.b16 %v2444
        %v2709 = vunpack.c.l.b16 %v2445
        %v2710 = vunpack.c.h.b16 %v2445
        %v2711 = vunpack.c.l.b16 %v2446
        %v2712 = vunpack.c.h.b16 %v2446
        %v2713 = vunpack.c.l.b16 %v2447
        %v2714 = vunpack.c.h.b16 %v2447
        %v2715 = vunpack.c.l.b16 %v2448
        %v2716 = vunpack.c.h.b16 %v2448
        %v2717 = vunpack.c.l.b16 %v2449
        %v2718 = vunpack.c.h.b16 %v2449
        %v2719 = vunpack.c.l.b16 %v2450
        %v2720 = vunpack.c.h.b16 %v2450
        %v2721 = vunpack.c.l.b16 %v2451
        %v2722 = vunpack.c.h.b16 %v2451
        %v2723 = vunpack.c.l.b16 %v2452
        %v2724 = vunpack.c.h.b16 %v2452
        %v2725 = vunpack.c.l.b16 %v2453
        %v2726 = vunpack.c.h.b16 %v2453
        %v2727 = vunpack.c.l.b16 %v2454
        %v2728 = vunpack.c.h.b16 %v2454
        %v2729 = vunpack.c.l.b16 %v2455
        %v2730 = vunpack.c.h.b16 %v2455
        %v2731 = vunpack.c.l.b16 %v2456
        %v2732 = vunpack.c.h.b16 %v2456
        %v2733 = vunpack.c.l.b16 %v2457
        %v2734 = vunpack.c.h.b16 %v2457
        %v2735 = vunpack.c.l.b16 %v2458
        %v2736 = vunpack.c.h.b16 %v2458
        %v2737 = vunpack.c.l.b16 %v2459
        %v2738 = vunpack.c.h.b16 %v2459
        %v2739 = vunpack.c.l.b16 %v2460
        %v2740 = vunpack.c.h.b16 %v2460
        %v2741 = vunpack.c.l.b16 %v2461
        %v2742 = vunpack.c.h.b16 %v2461
        %v2743 = vunpack.c.l.b16 %v2462
        %v2744 = vunpack.c.h.b16 %v2462
        %v2745 = vunpack.c.l.b16 %v2463
        %v2746 = vunpack.c.h.b16 %v2463
        %v2747 = vunpack.c.l.b16 %v2464
        %v2748 = vunpack.c.h.b16 %v2464
        %v2749 = vunpack.c.l.b16 %v2465
        %v2750 = vunpack.c.h.b16 %v2465
        %v2751 = vunpack.c.l.b16 %v2466
        %v2752 = vunpack.c.h.b16 %v2466
        %v2753 = vunpack.c.l.b16 %v2467
        %v2754 = vunpack.c.h.b16 %v2467
        %v2755 = vunpack.c.l.b16 %v2468
        %v2756 = vunpack.c.h.b16 %v2468
        %v2757 = vunpack.c.l.b16 %v2469
        %v2758 = vunpack.c.h.b16 %v2469
        %v2759 = vunpack.c.l.b16 %v2470
        %v2760 = vunpack.c.h.b16 %v2470
        %v2761 = vunpack.c.l.b16 %v2471
        %v2762 = vunpack.c.h.b16 %v2471
        %v2763 = vunpack.c.l.b16 %v2472
        %v2764 = vunpack.c.h.b16 %v2472
        %v2765 = vunpack.c.l.b16 %v2473
        %v2766 = vunpack.c.h.b16 %v2473
        %v2767 = vunpack.c.l.b16 %v2474
        %v2768 = vunpack.c.h.b16 %v2474
        %v2769 = vunpack.c.l.b16 %v2475
        %v2770 = vunpack.c.h.b16 %v2475
        %v2771 = vunpack.c.l.b16 %v2476
        %v2772 = vunpack.c.h.b16 %v2476
        %v2773 = vunpack.c.l.b16 %v2477
        %v2774 = vunpack.c.h.b16 %v2477
        %v2775 = vunpack.c.l.b16 %v2478
        %v2776 = vunpack.c.h.b16 %v2478
        %v2777 = vunpack.c.l.b16 %v2479
        %v2778 = vunpack.c.h.b16 %v2479
        %v2779 = vunpack.c.l.b16 %v2480
        %v2780 = vunpack.c.h.b16 %v2480
        %v2781 = vunpack.c.l.b16 %v2481
        %v2782 = vunpack.c.h.b16 %v2481
        %v2783 = vunpack.c.l.b16 %v2482
        %v2784 = vunpack.c.h.b16 %v2482
        %v2785 = vunpack.c.l.b16 %v2483
        %v2786 = vunpack.c.h.b16 %v2483
        %v2787 = vunpack.c.l.b16 %v2484
        %v2788 = vunpack.c.h.b16 %v2484
        %v2789 = vunpack.c.l.b16 %v2485
        %v2790 = vunpack.c.h.b16 %v2485
        %v2791 = vunpack.c.l.b16 %v2486
        %v2792 = vunpack.c.h.b16 %v2486
        %v2793 = vunpack.c.l.b16 %v2487
        %v2794 = vunpack.c.h.b16 %v2487
        %v2795 = vunpack.c.l.b16 %v2488
        %v2796 = vunpack.c.h.b16 %v2488
        %v2797 = vunpack.c.l.b16 %v2489
        %v2798 = vunpack.c.h.b16 %v2489
        %v2799 = vunpack.c.l.b16 %v2490
        %v2800 = vunpack.c.h.b16 %v2490
        %v2801 = vunpack.c.l.b16 %v2491
        %v2802 = vunpack.c.h.b16 %v2491
        %v2803 = vunpack.c.l.b16 %v2492
        %v2804 = vunpack.c.h.b16 %v2492
        %v2805 = vunpack.c.l.b16 %v2493
        %v2806 = vunpack.c.h.b16 %v2493
        %v2807 = vunpack.c.l.b16 %v2494
        %v2808 = vunpack.c.h.b16 %v2494
        %v2809 = vunpack.c.l.b16 %v2495
        %v2810 = vunpack.c.h.b16 %v2495
        %v2811 = vunpack.c.l.b16 %v2496
        %v2812 = vunpack.c.h.b16 %v2496
        %v2813 = vunpack.c.l.b16 %v2497
        %v2814 = vunpack.c.h.b16 %v2497
        %v2815 = vunpack.c.l.b16 %v2498
        %v2816 = vunpack.c.h.b16 %v2498
        %v2817 = vunpack.c.l.b16 %v2499
        %v2818 = vunpack.c.h.b16 %v2499
        %v2819 = vunpack.c.l.b16 %v2500
        %v2820 = vunpack.c.h.b16 %v2500
        %v2821 = vunpack.c.l.b16 %v2501
        %v2822 = vunpack.c.h.b16 %v2501
        %v2823 = vunpack.c.l.b16 %v2502
        %v2824 = vunpack.c.h.b16 %v2502
        %v2825 = vunpack.c.l.b16 %v2503
        %v2826 = vunpack.c.h.b16 %v2503
        %v2827 = vunpack.c.l.b16 %v2504
        %v2828 = vunpack.c.h.b16 %v2504
        %v2829 = vunpack.c.l.b16 %v2505
        %v2830 = vunpack.c.h.b16 %v2505
        %v2831 = vunpack.c.l.b16 %v2506
        %v2832 = vunpack.c.h.b16 %v2506
        %v2833 = vunpack.c.l.b16 %v2507
        %v2834 = vunpack.c.h.b16 %v2507
        %v2835 = vunpack.c.l.b16 %v2508
        %v2836 = vunpack.c.h.b16 %v2508
        %v2837 = vunpack.c.l.b16 %v2509
        %v2838 = vunpack.c.h.b16 %v2509
        %v2839 = vunpack.c.l.b16 %v2510
        %v2840 = vunpack.c.h.b16 %v2510
        %v2841 = vunpack.c.l.b16 %v2511
        %v2842 = vunpack.c.h.b16 %v2511
        %v2843 = vunpack.c.l.b16 %v2512
        %v2844 = vunpack.c.h.b16 %v2512
        %v2845 = vunpack.c.l.b16 %v2513
        %v2846 = vunpack.c.h.b16 %v2513
        %v2847 = vunpack.c.l.b16 %v2514
        %v2848 = vunpack.c.h.b16 %v2514
        %v2849 = vunpack.c.l.b16 %v2515
        %v2850 = vunpack.c.h.b16 %v2515
        %v2851 = vunpack.c.l.b16 %v2516
        %v2852 = vunpack.c.h.b16 %v2516
        %v2853 = vunpack.c.l.b16 %v2517
        %v2854 = vunpack.c.h.b16 %v2517
        %v2855 = vunpack.c.l.b16 %v2518
        %v2856 = vunpack.c.h.b16 %v2518
        %v2857 = vunpack.c.l.b16 %v2519
        %v2858 = vunpack.c.h.b16 %v2519
        %v2859 = vunpack.c.l.b16 %v2520
        %v2860 = vunpack.c.h.b16 %v2520
        %v2861 = vunpack.c.l.b16 %v2521
        %v2862 = vunpack.c.h.b16 %v2521
        %v2863 = vunpack.c.l.b16 %v2522
        %v2864 = vunpack.c.h.b16 %v2522
        %v2865 = vunpack.c.l.b16 %v2523
        %v2866 = vunpack.c.h.b16 %v2523
        %v2867 = vunpack.c.l.b16 %v2524
        %v2868 = vunpack.c.h.b16 %v2524
        %v2869 = vunpack.c.l.b16 %v2525
        %v2870 = vunpack.c.h.b16 %v2525
        %v2871 = vunpack.c.l.b16 %v2526
        %v2872 = vunpack.c.h.b16 %v2526
        %v2873 = vunpack.c.l.b16 %v2527
        %v2874 = vunpack.c.h.b16 %v2527
        %v2875 = vunpack.c.l.b16 %v2528
        %v2876 = vunpack.c.h.b16 %v2528
        %v2877 = vunpack.c.l.b16 %v2529
        %v2878 = vunpack.c.h.b16 %v2529
        %v2879 = vunpack.c.l.b16 %v2530
        %v2880 = vunpack.c.h.b16 %v2530
        %v2881 = vunpack.c.l.b16 %v2531
        %v2882 = vunpack.c.h.b16 %v2531
        %v2883 = vunpack.c.l.b16 %v2532
        %v2884 = vunpack.c.h.b16 %v2532
        %v2885 = vunpack.c.l.b16 %v2533
        %v2886 = vunpack.c.h.b16 %v2533
        %v2887 = vunpack.c.l.b16 %v2534
        %v2888 = vunpack.c.h.b16 %v2534
        %v2889 = vunpack.c.l.b16 %v2535
        %v2890 = vunpack.c.h.b16 %v2535
        %v2891 = vunpack.c.l.b16 %v2536
        %v2892 = vunpack.c.h.b16 %v2536
        %v2893 = vunpack.c.l.b16 %v2537
        %v2894 = vunpack.c.h.b16 %v2537
        %v2895 = vunpack.c.l.b16 %v2538
        %v2896 = vunpack.c.h.b16 %v2538
        %v2897 = vunpack.c.l.b16 %v2539
        %v2898 = vunpack.c.h.b16 %v2539
        %v2899 = vunpack.c.l.b16 %v2540
        %v2900 = vunpack.c.h.b16 %v2540
        %v2901 = vunpack.c.l.b16 %v2541
        %v2902 = vunpack.c.h.b16 %v2541
        %v2903 = vunpack.c.l.b16 %v2542
        %v2904 = vunpack.c.h.b16 %v2542
        %v2905 = vunpack.c.l.b16 %v2543
        %v2906 = vunpack.c.h.b16 %v2543
        %v2907 = vunpack.c.l.b16 %v2544
        %v2908 = vunpack.c.h.b16 %v2544
        %v2909 = vunpack.c.l.b16 %v2545
        %v2910 = vunpack.c.h.b16 %v2545
        %v2911 = vunpack.c.l.b16 %v2546
        %v2912 = vunpack.c.h.b16 %v2546
        %v2913 = vunpack.c.l.b16 %v2547
        %v2914 = vunpack.c.h.b16 %v2547
        %v2915 = vunpack.c.l.b16 %v2548
        %v2916 = vunpack.c.h.b16 %v2548
        %v2917 = vunpack.c.l.b16 %v2549
        %v2918 = vunpack.c.h.b16 %v2549
        %v2919 = vunpack.c.l.b16 %v2550
        %v2920 = vunpack.c.h.b16 %v2550
        %v2921 = vunpack.c.l.b16 %v2551
        %v2922 = vunpack.c.h.b16 %v2551
        %v2923 = vunpack.c.l.b16 %v2552
        %v2924 = vunpack.c.h.b16 %v2552
        %v2925 = vunpack.c.l.b16 %v2553
        %v2926 = vunpack.c.h.b16 %v2553
        %v2927 = vunpack.c.l.b16 %v2554
        %v2928 = vunpack.c.h.b16 %v2554
        %v2929 = vunpack.c.l.b16 %v2555
        %v2930 = vunpack.c.h.b16 %v2555
        %v2931 = vunpack.c.l.b16 %v2556
        %v2932 = vunpack.c.h.b16 %v2556
        %v2933 = vunpack.c.l.b16 %v2557
        %v2934 = vunpack.c.h.b16 %v2557
        %v2935 = vunpack.c.l.b16 %v2558
        %v2936 = vunpack.c.h.b16 %v2558
        %v2937 = vunpack.c.l.b16 %v2559
        %v2938 = vunpack.c.h.b16 %v2559
        %v2939 = vunpack.c.l.b16 %v2560
        %v2940 = vunpack.c.h.b16 %v2560
        %v2941 = vunpack.c.l.b16 %v2561
        %v2942 = vunpack.c.h.b16 %v2561
        %v2943 = vunpack.c.l.b16 %v2562
        %v2944 = vunpack.c.h.b16 %v2562
        %v2945 = vunpack.c.l.b16 %v2563
        %v2946 = vunpack.c.h.b16 %v2563
        %v2947 = vunpack.c.l.b16 %v2564
        %v2948 = vunpack.c.h.b16 %v2564
        %v2949 = vpack.c.b16 %v2697, %v2693
        %v2950 = vpack.c.b16 %v2698, %v2694
        %v2951 = vpack.c.b16 %v2699, %v2695
        %v2952 = vpack.c.b16 %v2700, %v2696
        %v2953 = vpack.c.b16 %v2705, %v2701
        %v2954 = vpack.c.b16 %v2706, %v2702
        %v2955 = vpack.c.b16 %v2707, %v2703
        %v2956 = vpack.c.b16 %v2708, %v2704
        %v2957 = vpack.c.b16 %v2713, %v2709
        %v2958 = vpack.c.b16 %v2714, %v2710
        %v2959 = vpack.c.b16 %v2715, %v2711
        %v2960 = vpack.c.b16 %v2716, %v2712
        %v2961 = vpack.c.b16 %v2721, %v2717
        %v2962 = vpack.c.b16 %v2722, %v2718
        %v2963 = vpack.c.b16 %v2723, %v2719
        %v2964 = vpack.c.b16 %v2724, %v2720
        %v2965 = vpack.c.b16 %v2729, %v2725
        %v2966 = vpack.c.b16 %v2730, %v2726
        %v2967 = vpack.c.b16 %v2731, %v2727
        %v2968 = vpack.c.b16 %v2732, %v2728
        %v2969 = vpack.c.b16 %v2737, %v2733
        %v2970 = vpack.c.b16 %v2738, %v2734
        %v2971 = vpack.c.b16 %v2739, %v2735
        %v2972 = vpack.c.b16 %v2740, %v2736
        %v2973 = vpack.c.b16 %v2745, %v2741
        %v2974 = vpack.c.b16 %v2746, %v2742
        %v2975 = vpack.c.b16 %v2747, %v2743
        %v2976 = vpack.c.b16 %v2748, %v2744
        %v2977 = vpack.c.b16 %v2753, %v2749
        %v2978 = vpack.c.b16 %v2754, %v2750
        %v2979 = vpack.c.b16 %v2755, %v2751
        %v2980 = vpack.c.b16 %v2756, %v2752
        %v2981 = vpack.c.b16 %v2761, %v2757
        %v2982 = vpack.c.b16 %v2762, %v2758
        %v2983 = vpack.c.b16 %v2763, %v2759
        %v2984 = vpack.c.b16 %v2764, %v2760
        %v2985 = vpack.c.b16 %v2769, %v2765
        %v2986 = vpack.c.b16 %v2770, %v2766
        %v2987 = vpack.c.b16 %v2771, %v2767
        %v2988 = vpack.c.b16 %v2772, %v2768
        %v2989 = vpack.c.b16 %v2777, %v2773
        %v2990 = vpack.c.b16 %v2778, %v2774
        %v2991 = vpack.c.b16 %v2779, %v2775
        %v2992 = vpack.c.b16 %v2780, %v2776
        %v2993 = vpack.c.b16 %v2785, %v2781
        %v2994 = vpack.c.b16 %v2786, %v2782
        %v2995 = vpack.c.b16 %v2787, %v2783
        %v2996 = vpack.c.b16 %v2788, %v2784
        %v2997 = vpack.c.b16 %v2793, %v2789
        %v2998 = vpack.c.b16 %v2794, %v2790
        %v2999 = vpack.c.b16 %v2795, %v2791
        %v3000 = vpack.c.b16 %v2796, %v2792
        %v3001 = vpack.c.b16 %v2801, %v2797
        %v3002 = vpack.c.b16 %v2802, %v2798
        %v3003 = vpack.c.b16 %v2803, %v2799
        %v3004 = vpack.c.b16 %v2804, %v2800
        %v3005 = vpack.c.b16 %v2809, %v2805
        %v3006 = vpack.c.b16 %v2810, %v2806
        %v3007 = vpack.c.b16 %v2811, %v2807
        %v3008 = vpack.c.b16 %v2812, %v2808
        %v3009 = vpack.c.b16 %v2817, %v2813
        %v3010 = vpack.c.b16 %v2818, %v2814
        %v3011 = vpack.c.b16 %v2819, %v2815
        %v3012 = vpack.c.b16 %v2820, %v2816
        %v3013 = vpack.c.b16 %v2825, %v2821
        %v3014 = vpack.c.b16 %v2826, %v2822
        %v3015 = vpack.c.b16 %v2827, %v2823
        %v3016 = vpack.c.b16 %v2828, %v2824
        %v3017 = vpack.c.b16 %v2833, %v2829
        %v3018 = vpack.c.b16 %v2834, %v2830
        %v3019 = vpack.c.b16 %v2835, %v2831
        %v3020 = vpack.c.b16 %v2836, %v2832
        %v3021 = vpack.c.b16 %v2841, %v2837
        %v3022 = vpack.c.b16 %v2842, %v2838
        %v3023 = vpack.c.b16 %v2843, %v2839
        %v3024 = vpack.c.b16 %v2844, %v2840
        %v3025 = vpack.c.b16 %v2849, %v2845
        %v3026 = vpack.c.b16 %v2850, %v2846
        %v3027 = vpack.c.b16 %v2851, %v2847
        %v3028 = vpack.c.b16 %v2852, %v2848
        %v3029 = vpack.c.b16 %v2857, %v2853
        %v3030 = vpack.c.b16 %v2858, %v2854
        %v3031 = vpack.c.b16 %v2859, %v2855
        %v3032 = vpack.c.b16 %v2860, %v2856
        %v3033 = vpack.c.b16 %v2865, %v2861
        %v3034 = vpack.c.b16 %v2866, %v2862
        %v3035 = vpack.c.b16 %v2867, %v2863
        %v3036 = vpack.c.b16 %v2868, %v2864
        %v3037 = vpack.c.b16 %v2873, %v2869
        %v3038 = vpack.c.b16 %v2874, %v2870
        %v3039 = vpack.c.b16 %v2875, %v2871
        %v3040 = vpack.c.b16 %v2876, %v2872
        %v3041 = vpack.c.b16 %v2881, %v2877
        %v3042 = vpack.c.b16 %v2882, %v2878
        %v3043 = vpack.c.b16 %v2883, %v2879
        %v3044 = vpack.c.b16 %v2884, %v2880
        %v3045 = vpack.c.b16 %v2889, %v2885
        %v3046 = vpack.c.b16 %v2890, %v2886
        %v3047 = vpack.c.b16 %v2891, %v2887
        %v3048 = vpack.c.b16 %v2892, %v2888
        %v3049 = vpack.c.b16 %v2897, %v2893
        %v3050 = vpack.c.b16 %v2898, %v2894
        %v3051 = vpack.c.b16 %v2899, %v2895
        %v3052 = vpack.c.b16 %v2900, %v2896
        %v3053 = vpack.c.b16 %v2905, %v2901
        %v3054 = vpack.c.b16 %v2906, %v2902
        %v3055 = vpack.c.b16 %v2907, %v2903
        %v3056 = vpack.c.b16 %v2908, %v2904
        %v3057 = vpack.c.b16 %v2913, %v2909
        %v3058 = vpack.c.b16 %v2914, %v2910
        %v3059 = vpack.c.b16 %v2915, %v2911
        %v3060 = vpack.c.b16 %v2916, %v2912
        %v3061 = vpack.c.b16 %v2921, %v2917
        %v3062 = vpack.c.b16 %v2922, %v2918
        %v3063 = vpack.c.b16 %v2923, %v2919
        %v3064 = vpack.c.b16 %v2924, %v2920
        %v3065 = vpack.c.b16 %v2929, %v2925
        %v3066 = vpack.c.b16 %v2930, %v2926
        %v3067 = vpack.c.b16 %v2931, %v2927
        %v3068 = vpack.c.b16 %v2932, %v2928
        %v3069 = vpack.c.b16 %v2937, %v2933
        %v3070 = vpack.c.b16 %v2938, %v2934
        %v3071 = vpack.c.b16 %v2939, %v2935
        %v3072 = vpack.c.b16 %v2940, %v2936
        %v3073 = vpack.c.b16 %v2945, %v2941
        %v3074 = vpack.c.b16 %v2946, %v2942
        %v3075 = vpack.c.b16 %v2947, %v2943
        %v3076 = vpack.c.b16 %v2948, %v2944
        %3205 = vmatpush.bf16.msra.mxu0 %v2977
        %3206 = vmatpush.bf16.msra.mxu0 %v2973
        %3207 = vmatpush.bf16.msra.mxu0 %v2969
        %3208 = vmatpush.bf16.msra.mxu0 %v2965
        %3209 = vmatpush.bf16.msra.mxu0 %v2961
        %3210 = vmatpush.bf16.msra.mxu0 %v2957
        %3211 = vmatpush.bf16.msra.mxu0 %v2953
        %3212 = vmatpush.bf16.msra.mxu0 %v2949
        %3213 = vmatmul.bf16.gmra.mxu0 %v2430
        %v3214 = vpop.f32.mrf.mxu0
        %v3215 = vadd.f32 0.0, %v3214
        %v3216 = vpop.f32.mrf.mxu0
        %3217 = vdwg.mxu0
        %3218 = vmatpush.bf16.msra.mxu0 %v3009
        %3219 = vmatpush.bf16.msra.mxu0 %v3005
        %3220 = vmatpush.bf16.msra.mxu0 %v3001
        %3221 = vmatpush.bf16.msra.mxu0 %v2997
        %3222 = vmatpush.bf16.msra.mxu0 %v2993
        %3223 = vmatpush.bf16.msra.mxu0 %v2989
        %3224 = vmatpush.bf16.msra.mxu0 %v2985
        %3225 = vmatpush.bf16.msra.mxu0 %v2981
        %3226 = vmatmul.bf16.gmra.mxu0 %v2431
        %v3227 = vpop.f32.mrf.mxu0
        %v3228 = vadd.f32 %v3215, %v3227
        %v3229 = vpop.f32.mrf.mxu0
        %3230 = vdwg.mxu0
        %3231 = vmatpush.bf16.msra.mxu0 %v3041
        %3232 = vmatpush.bf16.msra.mxu0 %v3037
        %3233 = vmatpush.bf16.msra.mxu0 %v3033
        %3234 = vmatpush.bf16.msra.mxu0 %v3029
        %3235 = vmatpush.bf16.msra.mxu0 %v3025
        %3236 = vmatpush.bf16.msra.mxu0 %v3021
        %3237 = vmatpush.bf16.msra.mxu0 %v3017
        %3238 = vmatpush.bf16.msra.mxu0 %v3013
        %3239 = vmatmul.bf16.gmra.mxu0 %v2432
        %v3240 = vpop.f32.mrf.mxu0
        %v3241 = vadd.f32 %v3228, %v3240
        %v3242 = vpop.f32.mrf.mxu0
        %3243 = vdwg.mxu0
        %3244 = vmatpush.bf16.msra.mxu0 %v3073
        %3245 = vmatpush.bf16.msra.mxu0 %v3069
        %3246 = vmatpush.bf16.msra.mxu0 %v3065
        %3247 = vmatpush.bf16.msra.mxu0 %v3061
        %3248 = vmatpush.bf16.msra.mxu0 %v3057
        %3249 = vmatpush.bf16.msra.mxu0 %v3053
        %3250 = vmatpush.bf16.msra.mxu0 %v3049
        %3251 = vmatpush.bf16.msra.mxu0 %v3045
        %3252 = vmatmul.bf16.gmra.mxu0 %v2433
        %v3253 = vpop.f32.mrf.mxu0
        %v3254 = vadd.f32 %v3241, %v3253
        %v3255 = vpop.f32.mrf.mxu0
        %3256 = vdwg.mxu0
        %3257 = vmatpush.bf16.msra.mxu0 %v2978
        %3258 = vmatpush.bf16.msra.mxu0 %v2974
        %3259 = vmatpush.bf16.msra.mxu0 %v2970
        %3260 = vmatpush.bf16.msra.mxu0 %v2966
        %3261 = vmatpush.bf16.msra.mxu0 %v2962
        %3262 = vmatpush.bf16.msra.mxu0 %v2958
        %3263 = vmatpush.bf16.msra.mxu0 %v2954
        %3264 = vmatpush.bf16.msra.mxu0 %v2950
        %3265 = vmatmul.bf16.gmra.mxu0 %v2430
        %v3266 = vpop.f32.mrf.mxu0
        %v3267 = vadd.f32 0.0, %v3266
        %v3268 = vpop.f32.mrf.mxu0
        %3269 = vdwg.mxu0
        %3270 = vmatpush.bf16.msra.mxu0 %v3010
        %3271 = vmatpush.bf16.msra.mxu0 %v3006
        %3272 = vmatpush.bf16.msra.mxu0 %v3002
        %3273 = vmatpush.bf16.msra.mxu0 %v2998
        %3274 = vmatpush.bf16.msra.mxu0 %v2994
        %3275 = vmatpush.bf16.msra.mxu0 %v2990
        %3276 = vmatpush.bf16.msra.mxu0 %v2986
        %3277 = vmatpush.bf16.msra.mxu0 %v2982
        %3278 = vmatmul.bf16.gmra.mxu0 %v2431
        %v3279 = vpop.f32.mrf.mxu0
        %v3280 = vadd.f32 %v3267, %v3279
        %v3281 = vpop.f32.mrf.mxu0
        %3282 = vdwg.mxu0
        %3283 = vmatpush.bf16.msra.mxu0 %v3042
        %3284 = vmatpush.bf16.msra.mxu0 %v3038
        %3285 = vmatpush.bf16.msra.mxu0 %v3034
        %3286 = vmatpush.bf16.msra.mxu0 %v3030
        %3287 = vmatpush.bf16.msra.mxu0 %v3026
        %3288 = vmatpush.bf16.msra.mxu0 %v3022
        %3289 = vmatpush.bf16.msra.mxu0 %v3018
        %3290 = vmatpush.bf16.msra.mxu0 %v3014
        %3291 = vmatmul.bf16.gmra.mxu0 %v2432
        %v3292 = vpop.f32.mrf.mxu0
        %v3293 = vadd.f32 %v3280, %v3292
        %v3294 = vpop.f32.mrf.mxu0
        %3295 = vdwg.mxu0
        %3296 = vmatpush.bf16.msra.mxu0 %v3074
        %3297 = vmatpush.bf16.msra.mxu0 %v3070
        %3298 = vmatpush.bf16.msra.mxu0 %v3066
        %3299 = vmatpush.bf16.msra.mxu0 %v3062
        %3300 = vmatpush.bf16.msra.mxu0 %v3058
        %3301 = vmatpush.bf16.msra.mxu0 %v3054
        %3302 = vmatpush.bf16.msra.mxu0 %v3050
        %3303 = vmatpush.bf16.msra.mxu0 %v3046
        %3304 = vmatmul.bf16.gmra.mxu0 %v2433
        %v3305 = vpop.f32.mrf.mxu0
        %v3306 = vadd.f32 %v3293, %v3305
        %v3307 = vpop.f32.mrf.mxu0
        %3308 = vdwg.mxu0
        %3309 = vmatpush.bf16.msra.mxu0 %v2979
        %3310 = vmatpush.bf16.msra.mxu0 %v2975
        %3311 = vmatpush.bf16.msra.mxu0 %v2971
        %3312 = vmatpush.bf16.msra.mxu0 %v2967
        %3313 = vmatpush.bf16.msra.mxu0 %v2963
        %3314 = vmatpush.bf16.msra.mxu0 %v2959
        %3315 = vmatpush.bf16.msra.mxu0 %v2955
        %3316 = vmatpush.bf16.msra.mxu0 %v2951
        %3317 = vmatmul.bf16.gmra.mxu0 %v2430
        %v3318 = vpop.f32.mrf.mxu0
        %v3319 = vadd.f32 0.0, %v3318
        %v3320 = vpop.f32.mrf.mxu0
        %3321 = vdwg.mxu0
        %3322 = vmatpush.bf16.msra.mxu0 %v3011
        %3323 = vmatpush.bf16.msra.mxu0 %v3007
        %3324 = vmatpush.bf16.msra.mxu0 %v3003
        %3325 = vmatpush.bf16.msra.mxu0 %v2999
        %3326 = vmatpush.bf16.msra.mxu0 %v2995
        %3327 = vmatpush.bf16.msra.mxu0 %v2991
        %3328 = vmatpush.bf16.msra.mxu0 %v2987
        %3329 = vmatpush.bf16.msra.mxu0 %v2983
        %3330 = vmatmul.bf16.gmra.mxu0 %v2431
        %v3331 = vpop.f32.mrf.mxu0
        %v3332 = vadd.f32 %v3319, %v3331
        %v3333 = vpop.f32.mrf.mxu0
        %3334 = vdwg.mxu0
        %3335 = vmatpush.bf16.msra.mxu0 %v3043
        %3336 = vmatpush.bf16.msra.mxu0 %v3039
        %3337 = vmatpush.bf16.msra.mxu0 %v3035
        %3338 = vmatpush.bf16.msra.mxu0 %v3031
        %3339 = vmatpush.bf16.msra.mxu0 %v3027
        %3340 = vmatpush.bf16.msra.mxu0 %v3023
        %3341 = vmatpush.bf16.msra.mxu0 %v3019
        %3342 = vmatpush.bf16.msra.mxu0 %v3015
        %3343 = vmatmul.bf16.gmra.mxu0 %v2432
        %v3344 = vpop.f32.mrf.mxu0
        %v3345 = vadd.f32 %v3332, %v3344
        %v3346 = vpop.f32.mrf.mxu0
        %3347 = vdwg.mxu0
        %3348 = vmatpush.bf16.msra.mxu0 %v3075
        %3349 = vmatpush.bf16.msra.mxu0 %v3071
        %3350 = vmatpush.bf16.msra.mxu0 %v3067
        %3351 = vmatpush.bf16.msra.mxu0 %v3063
        %3352 = vmatpush.bf16.msra.mxu0 %v3059
        %3353 = vmatpush.bf16.msra.mxu0 %v3055
        %3354 = vmatpush.bf16.msra.mxu0 %v3051
        %3355 = vmatpush.bf16.msra.mxu0 %v3047
        %3356 = vmatmul.bf16.gmra.mxu0 %v2433
        %v3357 = vpop.f32.mrf.mxu0
        %v3358 = vadd.f32 %v3345, %v3357
        %v3359 = vpop.f32.mrf.mxu0
        %3360 = vdwg.mxu0
        %3361 = vmatpush.bf16.msra.mxu0 %v2980
        %3362 = vmatpush.bf16.msra.mxu0 %v2976
        %3363 = vmatpush.bf16.msra.mxu0 %v2972
        %3364 = vmatpush.bf16.msra.mxu0 %v2968
        %3365 = vmatpush.bf16.msra.mxu0 %v2964
        %3366 = vmatpush.bf16.msra.mxu0 %v2960
        %3367 = vmatpush.bf16.msra.mxu0 %v2956
        %3368 = vmatpush.bf16.msra.mxu0 %v2952
        %3369 = vmatmul.bf16.gmra.mxu0 %v2430
        %v3370 = vpop.f32.mrf.mxu0
        %v3371 = vadd.f32 0.0, %v3370
        %v3372 = vpop.f32.mrf.mxu0
        %3373 = vdwg.mxu0
        %3374 = vmatpush.bf16.msra.mxu0 %v3012
        %3375 = vmatpush.bf16.msra.mxu0 %v3008
        %3376 = vmatpush.bf16.msra.mxu0 %v3004
        %3377 = vmatpush.bf16.msra.mxu0 %v3000
        %3378 = vmatpush.bf16.msra.mxu0 %v2996
        %3379 = vmatpush.bf16.msra.mxu0 %v2992
        %3380 = vmatpush.bf16.msra.mxu0 %v2988
        %3381 = vmatpush.bf16.msra.mxu0 %v2984
        %3382 = vmatmul.bf16.gmra.mxu0 %v2431
        %v3383 = vpop.f32.mrf.mxu0
        %v3384 = vadd.f32 %v3371, %v3383
        %v3385 = vpop.f32.mrf.mxu0
        %3386 = vdwg.mxu0
        %3387 = vmatpush.bf16.msra.mxu0 %v3044
        %3388 = vmatpush.bf16.msra.mxu0 %v3040
        %3389 = vmatpush.bf16.msra.mxu0 %v3036
        %3390 = vmatpush.bf16.msra.mxu0 %v3032
        %3391 = vmatpush.bf16.msra.mxu0 %v3028
        %3392 = vmatpush.bf16.msra.mxu0 %v3024
        %3393 = vmatpush.bf16.msra.mxu0 %v3020
        %3394 = vmatpush.bf16.msra.mxu0 %v3016
        %3395 = vmatmul.bf16.gmra.mxu0 %v2432
        %v3396 = vpop.f32.mrf.mxu0
        %v3397 = vadd.f32 %v3384, %v3396
        %v3398 = vpop.f32.mrf.mxu0
        %3399 = vdwg.mxu0
        %3400 = vmatpush.bf16.msra.mxu0 %v3076
        %3401 = vmatpush.bf16.msra.mxu0 %v3072
        %3402 = vmatpush.bf16.msra.mxu0 %v3068
        %3403 = vmatpush.bf16.msra.mxu0 %v3064
        %3404 = vmatpush.bf16.msra.mxu0 %v3060
        %3405 = vmatpush.bf16.msra.mxu0 %v3056
        %3406 = vmatpush.bf16.msra.mxu0 %v3052
        %3407 = vmatpush.bf16.msra.mxu0 %v3048
        %3408 = vmatmul.bf16.gmra.mxu0 %v2433
        %v3409 = vpop.f32.mrf.mxu0
        %v3410 = vadd.f32 %v3397, %v3409
        %v3411 = vpop.f32.mrf.mxu0
        %3412 = vdwg.mxu0
        %v3541 = vunpack.c.l.b16 %v1310
        %v3542 = vunpack.c.h.b16 %v1310
        %v3543 = vunpack.c.l.b16 %v1311
        %v3544 = vunpack.c.h.b16 %v1311
        %v3545 = vunpack.c.l.b16 %v1312
        %v3546 = vunpack.c.h.b16 %v1312
        %v3547 = vunpack.c.l.b16 %v1313
        %v3548 = vunpack.c.h.b16 %v1313
        %v3549 = vunpack.c.l.b16 %v1314
        %v3550 = vunpack.c.h.b16 %v1314
        %v3551 = vunpack.c.l.b16 %v1315
        %v3552 = vunpack.c.h.b16 %v1315
        %v3553 = vunpack.c.l.b16 %v1316
        %v3554 = vunpack.c.h.b16 %v1316
        %v3555 = vunpack.c.l.b16 %v1317
        %v3556 = vunpack.c.h.b16 %v1317
        %v3557 = vunpack.c.l.b16 %v1318
        %v3558 = vunpack.c.h.b16 %v1318
        %v3559 = vunpack.c.l.b16 %v1319
        %v3560 = vunpack.c.h.b16 %v1319
        %v3561 = vunpack.c.l.b16 %v1320
        %v3562 = vunpack.c.h.b16 %v1320
        %v3563 = vunpack.c.l.b16 %v1321
        %v3564 = vunpack.c.h.b16 %v1321
        %v3565 = vunpack.c.l.b16 %v1322
        %v3566 = vunpack.c.h.b16 %v1322
        %v3567 = vunpack.c.l.b16 %v1323
        %v3568 = vunpack.c.h.b16 %v1323
        %v3569 = vunpack.c.l.b16 %v1324
        %v3570 = vunpack.c.h.b16 %v1324
        %v3571 = vunpack.c.l.b16 %v1325
        %v3572 = vunpack.c.h.b16 %v1325
        %v3573 = vunpack.c.l.b16 %v1326
        %v3574 = vunpack.c.h.b16 %v1326
        %v3575 = vunpack.c.l.b16 %v1327
        %v3576 = vunpack.c.h.b16 %v1327
        %v3577 = vunpack.c.l.b16 %v1328
        %v3578 = vunpack.c.h.b16 %v1328
        %v3579 = vunpack.c.l.b16 %v1329
        %v3580 = vunpack.c.h.b16 %v1329
        %v3581 = vunpack.c.l.b16 %v1330
        %v3582 = vunpack.c.h.b16 %v1330
        %v3583 = vunpack.c.l.b16 %v1331
        %v3584 = vunpack.c.h.b16 %v1331
        %v3585 = vunpack.c.l.b16 %v1332
        %v3586 = vunpack.c.h.b16 %v1332
        %v3587 = vunpack.c.l.b16 %v1333
        %v3588 = vunpack.c.h.b16 %v1333
        %v3589 = vunpack.c.l.b16 %v1334
        %v3590 = vunpack.c.h.b16 %v1334
        %v3591 = vunpack.c.l.b16 %v1335
        %v3592 = vunpack.c.h.b16 %v1335
        %v3593 = vunpack.c.l.b16 %v1336
        %v3594 = vunpack.c.h.b16 %v1336
        %v3595 = vunpack.c.l.b16 %v1337
        %v3596 = vunpack.c.h.b16 %v1337
        %v3597 = vunpack.c.l.b16 %v1338
        %v3598 = vunpack.c.h.b16 %v1338
        %v3599 = vunpack.c.l.b16 %v1339
        %v3600 = vunpack.c.h.b16 %v1339
        %v3601 = vunpack.c.l.b16 %v1340
        %v3602 = vunpack.c.h.b16 %v1340
        %v3603 = vunpack.c.l.b16 %v1341
        %v3604 = vunpack.c.h.b16 %v1341
        %v3605 = vunpack.c.l.b16 %v1342
        %v3606 = vunpack.c.h.b16 %v1342
        %v3607 = vunpack.c.l.b16 %v1343
        %v3608 = vunpack.c.h.b16 %v1343
        %v3609 = vunpack.c.l.b16 %v1344
        %v3610 = vunpack.c.h.b16 %v1344
        %v3611 = vunpack.c.l.b16 %v1345
        %v3612 = vunpack.c.h.b16 %v1345
        %v3613 = vunpack.c.l.b16 %v1346
        %v3614 = vunpack.c.h.b16 %v1346
        %v3615 = vunpack.c.l.b16 %v1347
        %v3616 = vunpack.c.h.b16 %v1347
        %v3617 = vunpack.c.l.b16 %v1348
        %v3618 = vunpack.c.h.b16 %v1348
        %v3619 = vunpack.c.l.b16 %v1349
        %v3620 = vunpack.c.h.b16 %v1349
        %v3621 = vunpack.c.l.b16 %v1350
        %v3622 = vunpack.c.h.b16 %v1350
        %v3623 = vunpack.c.l.b16 %v1351
        %v3624 = vunpack.c.h.b16 %v1351
        %v3625 = vunpack.c.l.b16 %v1352
        %v3626 = vunpack.c.h.b16 %v1352
        %v3627 = vunpack.c.l.b16 %v1353
        %v3628 = vunpack.c.h.b16 %v1353
        %v3629 = vunpack.c.l.b16 %v1354
        %v3630 = vunpack.c.h.b16 %v1354
        %v3631 = vunpack.c.l.b16 %v1355
        %v3632 = vunpack.c.h.b16 %v1355
        %v3633 = vunpack.c.l.b16 %v1356
        %v3634 = vunpack.c.h.b16 %v1356
        %v3635 = vunpack.c.l.b16 %v1357
        %v3636 = vunpack.c.h.b16 %v1357
        %v3637 = vunpack.c.l.b16 %v1358
        %v3638 = vunpack.c.h.b16 %v1358
        %v3639 = vunpack.c.l.b16 %v1359
        %v3640 = vunpack.c.h.b16 %v1359
        %v3641 = vunpack.c.l.b16 %v1360
        %v3642 = vunpack.c.h.b16 %v1360
        %v3643 = vunpack.c.l.b16 %v1361
        %v3644 = vunpack.c.h.b16 %v1361
        %v3645 = vunpack.c.l.b16 %v1362
        %v3646 = vunpack.c.h.b16 %v1362
        %v3647 = vunpack.c.l.b16 %v1363
        %v3648 = vunpack.c.h.b16 %v1363
        %v3649 = vunpack.c.l.b16 %v1364
        %v3650 = vunpack.c.h.b16 %v1364
        %v3651 = vunpack.c.l.b16 %v1365
        %v3652 = vunpack.c.h.b16 %v1365
        %v3653 = vunpack.c.l.b16 %v1366
        %v3654 = vunpack.c.h.b16 %v1366
        %v3655 = vunpack.c.l.b16 %v1367
        %v3656 = vunpack.c.h.b16 %v1367
        %v3657 = vunpack.c.l.b16 %v1368
        %v3658 = vunpack.c.h.b16 %v1368
        %v3659 = vunpack.c.l.b16 %v1369
        %v3660 = vunpack.c.h.b16 %v1369
        %v3661 = vunpack.c.l.b16 %v1370
        %v3662 = vunpack.c.h.b16 %v1370
        %v3663 = vunpack.c.l.b16 %v1371
        %v3664 = vunpack.c.h.b16 %v1371
        %v3665 = vunpack.c.l.b16 %v1372
        %v3666 = vunpack.c.h.b16 %v1372
        %v3667 = vunpack.c.l.b16 %v1373
        %v3668 = vunpack.c.h.b16 %v1373
        %v3669 = vunpack.c.l.b16 %v1374
        %v3670 = vunpack.c.h.b16 %v1374
        %v3671 = vunpack.c.l.b16 %v1375
        %v3672 = vunpack.c.h.b16 %v1375
        %v3673 = vunpack.c.l.b16 %v1376
        %v3674 = vunpack.c.h.b16 %v1376
        %v3675 = vunpack.c.l.b16 %v1377
        %v3676 = vunpack.c.h.b16 %v1377
        %v3677 = vunpack.c.l.b16 %v1378
        %v3678 = vunpack.c.h.b16 %v1378
        %v3679 = vunpack.c.l.b16 %v1379
        %v3680 = vunpack.c.h.b16 %v1379
        %v3681 = vunpack.c.l.b16 %v1380
        %v3682 = vunpack.c.h.b16 %v1380
        %v3683 = vunpack.c.l.b16 %v1381
        %v3684 = vunpack.c.h.b16 %v1381
        %v3685 = vunpack.c.l.b16 %v1382
        %v3686 = vunpack.c.h.b16 %v1382
        %v3687 = vunpack.c.l.b16 %v1383
        %v3688 = vunpack.c.h.b16 %v1383
        %v3689 = vunpack.c.l.b16 %v1384
        %v3690 = vunpack.c.h.b16 %v1384
        %v3691 = vunpack.c.l.b16 %v1385
        %v3692 = vunpack.c.h.b16 %v1385
        %v3693 = vunpack.c.l.b16 %v1386
        %v3694 = vunpack.c.h.b16 %v1386
        %v3695 = vunpack.c.l.b16 %v1387
        %v3696 = vunpack.c.h.b16 %v1387
        %v3697 = vunpack.c.l.b16 %v1388
        %v3698 = vunpack.c.h.b16 %v1388
        %v3699 = vunpack.c.l.b16 %v1389
        %v3700 = vunpack.c.h.b16 %v1389
        %v3701 = vunpack.c.l.b16 %v1390
        %v3702 = vunpack.c.h.b16 %v1390
        %v3703 = vunpack.c.l.b16 %v1391
        %v3704 = vunpack.c.h.b16 %v1391
        %v3705 = vunpack.c.l.b16 %v1392
        %v3706 = vunpack.c.h.b16 %v1392
        %v3707 = vunpack.c.l.b16 %v1393
        %v3708 = vunpack.c.h.b16 %v1393
        %v3709 = vunpack.c.l.b16 %v1394
        %v3710 = vunpack.c.h.b16 %v1394
        %v3711 = vunpack.c.l.b16 %v1395
        %v3712 = vunpack.c.h.b16 %v1395
        %v3713 = vunpack.c.l.b16 %v1396
        %v3714 = vunpack.c.h.b16 %v1396
        %v3715 = vunpack.c.l.b16 %v1397
        %v3716 = vunpack.c.h.b16 %v1397
        %v3717 = vunpack.c.l.b16 %v1398
        %v3718 = vunpack.c.h.b16 %v1398
        %v3719 = vunpack.c.l.b16 %v1399
        %v3720 = vunpack.c.h.b16 %v1399
        %v3721 = vunpack.c.l.b16 %v1400
        %v3722 = vunpack.c.h.b16 %v1400
        %v3723 = vunpack.c.l.b16 %v1401
        %v3724 = vunpack.c.h.b16 %v1401
        %v3725 = vunpack.c.l.b16 %v1402
        %v3726 = vunpack.c.h.b16 %v1402
        %v3727 = vunpack.c.l.b16 %v1403
        %v3728 = vunpack.c.h.b16 %v1403
        %v3729 = vunpack.c.l.b16 %v1404
        %v3730 = vunpack.c.h.b16 %v1404
        %v3731 = vunpack.c.l.b16 %v1405
        %v3732 = vunpack.c.h.b16 %v1405
        %v3733 = vunpack.c.l.b16 %v1406
        %v3734 = vunpack.c.h.b16 %v1406
        %v3735 = vunpack.c.l.b16 %v1407
        %v3736 = vunpack.c.h.b16 %v1407
        %v3737 = vunpack.c.l.b16 %v1408
        %v3738 = vunpack.c.h.b16 %v1408
        %v3739 = vunpack.c.l.b16 %v1409
        %v3740 = vunpack.c.h.b16 %v1409
        %v3741 = vunpack.c.l.b16 %v1410
        %v3742 = vunpack.c.h.b16 %v1410
        %v3743 = vunpack.c.l.b16 %v1411
        %v3744 = vunpack.c.h.b16 %v1411
        %v3745 = vunpack.c.l.b16 %v1412
        %v3746 = vunpack.c.h.b16 %v1412
        %v3747 = vunpack.c.l.b16 %v1413
        %v3748 = vunpack.c.h.b16 %v1413
        %v3749 = vunpack.c.l.b16 %v1414
        %v3750 = vunpack.c.h.b16 %v1414
        %v3751 = vunpack.c.l.b16 %v1415
        %v3752 = vunpack.c.h.b16 %v1415
        %v3753 = vunpack.c.l.b16 %v1416
        %v3754 = vunpack.c.h.b16 %v1416
        %v3755 = vunpack.c.l.b16 %v1417
        %v3756 = vunpack.c.h.b16 %v1417
        %v3757 = vunpack.c.l.b16 %v1418
        %v3758 = vunpack.c.h.b16 %v1418
        %v3759 = vunpack.c.l.b16 %v1419
        %v3760 = vunpack.c.h.b16 %v1419
        %v3761 = vunpack.c.l.b16 %v1420
        %v3762 = vunpack.c.h.b16 %v1420
        %v3763 = vunpack.c.l.b16 %v1421
        %v3764 = vunpack.c.h.b16 %v1421
        %v3765 = vunpack.c.l.b16 %v1422
        %v3766 = vunpack.c.h.b16 %v1422
        %v3767 = vunpack.c.l.b16 %v1423
        %v3768 = vunpack.c.h.b16 %v1423
        %v3769 = vunpack.c.l.b16 %v1424
        %v3770 = vunpack.c.h.b16 %v1424
        %v3771 = vunpack.c.l.b16 %v1425
        %v3772 = vunpack.c.h.b16 %v1425
        %v3773 = vunpack.c.l.b16 %v1426
        %v3774 = vunpack.c.h.b16 %v1426
        %v3775 = vunpack.c.l.b16 %v1427
        %v3776 = vunpack.c.h.b16 %v1427
        %v3777 = vunpack.c.l.b16 %v1428
        %v3778 = vunpack.c.h.b16 %v1428
        %v3779 = vunpack.c.l.b16 %v1429
        %v3780 = vunpack.c.h.b16 %v1429
        %v3781 = vunpack.c.l.b16 %v1430
        %v3782 = vunpack.c.h.b16 %v1430
        %v3783 = vunpack.c.l.b16 %v1431
        %v3784 = vunpack.c.h.b16 %v1431
        %v3785 = vunpack.c.l.b16 %v1432
        %v3786 = vunpack.c.h.b16 %v1432
        %v3787 = vunpack.c.l.b16 %v1433
        %v3788 = vunpack.c.h.b16 %v1433
        %v3789 = vunpack.c.l.b16 %v1434
        %v3790 = vunpack.c.h.b16 %v1434
        %v3791 = vunpack.c.l.b16 %v1435
        %v3792 = vunpack.c.h.b16 %v1435
        %v3793 = vunpack.c.l.b16 %v1436
        %v3794 = vunpack.c.h.b16 %v1436
        %v3795 = vunpack.c.l.b16 %v1437
        %v3796 = vunpack.c.h.b16 %v1437
        %v3797 = vpack.c.b16 %v3545, %v3541
        %v3798 = vpack.c.b16 %v3546, %v3542
        %v3799 = vpack.c.b16 %v3547, %v3543
        %v3800 = vpack.c.b16 %v3548, %v3544
        %v3801 = vpack.c.b16 %v3553, %v3549
        %v3802 = vpack.c.b16 %v3554, %v3550
        %v3803 = vpack.c.b16 %v3555, %v3551
        %v3804 = vpack.c.b16 %v3556, %v3552
        %v3805 = vpack.c.b16 %v3561, %v3557
        %v3806 = vpack.c.b16 %v3562, %v3558
        %v3807 = vpack.c.b16 %v3563, %v3559
        %v3808 = vpack.c.b16 %v3564, %v3560
        %v3809 = vpack.c.b16 %v3569, %v3565
        %v3810 = vpack.c.b16 %v3570, %v3566
        %v3811 = vpack.c.b16 %v3571, %v3567
        %v3812 = vpack.c.b16 %v3572, %v3568
        %v3813 = vpack.c.b16 %v3577, %v3573
        %v3814 = vpack.c.b16 %v3578, %v3574
        %v3815 = vpack.c.b16 %v3579, %v3575
        %v3816 = vpack.c.b16 %v3580, %v3576
        %v3817 = vpack.c.b16 %v3585, %v3581
        %v3818 = vpack.c.b16 %v3586, %v3582
        %v3819 = vpack.c.b16 %v3587, %v3583
        %v3820 = vpack.c.b16 %v3588, %v3584
        %v3821 = vpack.c.b16 %v3593, %v3589
        %v3822 = vpack.c.b16 %v3594, %v3590
        %v3823 = vpack.c.b16 %v3595, %v3591
        %v3824 = vpack.c.b16 %v3596, %v3592
        %v3825 = vpack.c.b16 %v3601, %v3597
        %v3826 = vpack.c.b16 %v3602, %v3598
        %v3827 = vpack.c.b16 %v3603, %v3599
        %v3828 = vpack.c.b16 %v3604, %v3600
        %v3829 = vpack.c.b16 %v3609, %v3605
        %v3830 = vpack.c.b16 %v3610, %v3606
        %v3831 = vpack.c.b16 %v3611, %v3607
        %v3832 = vpack.c.b16 %v3612, %v3608
        %v3833 = vpack.c.b16 %v3617, %v3613
        %v3834 = vpack.c.b16 %v3618, %v3614
        %v3835 = vpack.c.b16 %v3619, %v3615
        %v3836 = vpack.c.b16 %v3620, %v3616
        %v3837 = vpack.c.b16 %v3625, %v3621
        %v3838 = vpack.c.b16 %v3626, %v3622
        %v3839 = vpack.c.b16 %v3627, %v3623
        %v3840 = vpack.c.b16 %v3628, %v3624
        %v3841 = vpack.c.b16 %v3633, %v3629
        %v3842 = vpack.c.b16 %v3634, %v3630
        %v3843 = vpack.c.b16 %v3635, %v3631
        %v3844 = vpack.c.b16 %v3636, %v3632
        %v3845 = vpack.c.b16 %v3641, %v3637
        %v3846 = vpack.c.b16 %v3642, %v3638
        %v3847 = vpack.c.b16 %v3643, %v3639
        %v3848 = vpack.c.b16 %v3644, %v3640
        %v3849 = vpack.c.b16 %v3649, %v3645
        %v3850 = vpack.c.b16 %v3650, %v3646
        %v3851 = vpack.c.b16 %v3651, %v3647
        %v3852 = vpack.c.b16 %v3652, %v3648
        %v3853 = vpack.c.b16 %v3657, %v3653
        %v3854 = vpack.c.b16 %v3658, %v3654
        %v3855 = vpack.c.b16 %v3659, %v3655
        %v3856 = vpack.c.b16 %v3660, %v3656
        %v3857 = vpack.c.b16 %v3665, %v3661
        %v3858 = vpack.c.b16 %v3666, %v3662
        %v3859 = vpack.c.b16 %v3667, %v3663
        %v3860 = vpack.c.b16 %v3668, %v3664
        %v3861 = vpack.c.b16 %v3673, %v3669
        %v3862 = vpack.c.b16 %v3674, %v3670
        %v3863 = vpack.c.b16 %v3675, %v3671
        %v3864 = vpack.c.b16 %v3676, %v3672
        %v3865 = vpack.c.b16 %v3681, %v3677
        %v3866 = vpack.c.b16 %v3682, %v3678
        %v3867 = vpack.c.b16 %v3683, %v3679
        %v3868 = vpack.c.b16 %v3684, %v3680
        %v3869 = vpack.c.b16 %v3689, %v3685
        %v3870 = vpack.c.b16 %v3690, %v3686
        %v3871 = vpack.c.b16 %v3691, %v3687
        %v3872 = vpack.c.b16 %v3692, %v3688
        %v3873 = vpack.c.b16 %v3697, %v3693
        %v3874 = vpack.c.b16 %v3698, %v3694
        %v3875 = vpack.c.b16 %v3699, %v3695
        %v3876 = vpack.c.b16 %v3700, %v3696
        %v3877 = vpack.c.b16 %v3705, %v3701
        %v3878 = vpack.c.b16 %v3706, %v3702
        %v3879 = vpack.c.b16 %v3707, %v3703
        %v3880 = vpack.c.b16 %v3708, %v3704
        %v3881 = vpack.c.b16 %v3713, %v3709
        %v3882 = vpack.c.b16 %v3714, %v3710
        %v3883 = vpack.c.b16 %v3715, %v3711
        %v3884 = vpack.c.b16 %v3716, %v3712
        %v3885 = vpack.c.b16 %v3721, %v3717
        %v3886 = vpack.c.b16 %v3722, %v3718
        %v3887 = vpack.c.b16 %v3723, %v3719
        %v3888 = vpack.c.b16 %v3724, %v3720
        %v3889 = vpack.c.b16 %v3729, %v3725
        %v3890 = vpack.c.b16 %v3730, %v3726
        %v3891 = vpack.c.b16 %v3731, %v3727
        %v3892 = vpack.c.b16 %v3732, %v3728
        %v3893 = vpack.c.b16 %v3737, %v3733
        %v3894 = vpack.c.b16 %v3738, %v3734
        %v3895 = vpack.c.b16 %v3739, %v3735
        %v3896 = vpack.c.b16 %v3740, %v3736
        %v3897 = vpack.c.b16 %v3745, %v3741
        %v3898 = vpack.c.b16 %v3746, %v3742
        %v3899 = vpack.c.b16 %v3747, %v3743
        %v3900 = vpack.c.b16 %v3748, %v3744
        %v3901 = vpack.c.b16 %v3753, %v3749
        %v3902 = vpack.c.b16 %v3754, %v3750
        %v3903 = vpack.c.b16 %v3755, %v3751
        %v3904 = vpack.c.b16 %v3756, %v3752
        %v3905 = vpack.c.b16 %v3761, %v3757
        %v3906 = vpack.c.b16 %v3762, %v3758
        %v3907 = vpack.c.b16 %v3763, %v3759
        %v3908 = vpack.c.b16 %v3764, %v3760
        %v3909 = vpack.c.b16 %v3769, %v3765
        %v3910 = vpack.c.b16 %v3770, %v3766
        %v3911 = vpack.c.b16 %v3771, %v3767
        %v3912 = vpack.c.b16 %v3772, %v3768
        %v3913 = vpack.c.b16 %v3777, %v3773
        %v3914 = vpack.c.b16 %v3778, %v3774
        %v3915 = vpack.c.b16 %v3779, %v3775
        %v3916 = vpack.c.b16 %v3780, %v3776
        %v3917 = vpack.c.b16 %v3785, %v3781
        %v3918 = vpack.c.b16 %v3786, %v3782
        %v3919 = vpack.c.b16 %v3787, %v3783
        %v3920 = vpack.c.b16 %v3788, %v3784
        %v3921 = vpack.c.b16 %v3793, %v3789
        %v3922 = vpack.c.b16 %v3794, %v3790
        %v3923 = vpack.c.b16 %v3795, %v3791
        %v3924 = vpack.c.b16 %v3796, %v3792
        %4053 = vmatpush.bf16.msra.mxu0 %v3825
        %4054 = vmatpush.bf16.msra.mxu0 %v3821
        %4055 = vmatpush.bf16.msra.mxu0 %v3817
        %4056 = vmatpush.bf16.msra.mxu0 %v3813
        %4057 = vmatpush.bf16.msra.mxu0 %v3809
        %4058 = vmatpush.bf16.msra.mxu0 %v3805
        %4059 = vmatpush.bf16.msra.mxu0 %v3801
        %4060 = vmatpush.bf16.msra.mxu0 %v3797
        %4061 = vmatmul.bf16.gmra.mxu0 %v1303
        %v4062 = vpop.f32.mrf.mxu0
        %v4063 = vadd.f32 %v3254, %v4062
        %v4064 = vpop.f32.mrf.mxu0
        %4065 = vdwg.mxu0
        %4066 = vmatpush.bf16.msra.mxu0 %v3857
        %4067 = vmatpush.bf16.msra.mxu0 %v3853
        %4068 = vmatpush.bf16.msra.mxu0 %v3849
        %4069 = vmatpush.bf16.msra.mxu0 %v3845
        %4070 = vmatpush.bf16.msra.mxu0 %v3841
        %4071 = vmatpush.bf16.msra.mxu0 %v3837
        %4072 = vmatpush.bf16.msra.mxu0 %v3833
        %4073 = vmatpush.bf16.msra.mxu0 %v3829
        %4074 = vmatmul.bf16.gmra.mxu0 %v1304
        %v4075 = vpop.f32.mrf.mxu0
        %v4076 = vadd.f32 %v4063, %v4075
        %v4077 = vpop.f32.mrf.mxu0
        %4078 = vdwg.mxu0
        %4079 = vmatpush.bf16.msra.mxu0 %v3889
        %4080 = vmatpush.bf16.msra.mxu0 %v3885
        %4081 = vmatpush.bf16.msra.mxu0 %v3881
        %4082 = vmatpush.bf16.msra.mxu0 %v3877
        %4083 = vmatpush.bf16.msra.mxu0 %v3873
        %4084 = vmatpush.bf16.msra.mxu0 %v3869
        %4085 = vmatpush.bf16.msra.mxu0 %v3865
        %4086 = vmatpush.bf16.msra.mxu0 %v3861
        %4087 = vmatmul.bf16.gmra.mxu0 %v1305
        %v4088 = vpop.f32.mrf.mxu0
        %v4089 = vadd.f32 %v4076, %v4088
        %v4090 = vpop.f32.mrf.mxu0
        %4091 = vdwg.mxu0
        %4092 = vmatpush.bf16.msra.mxu0 %v3921
        %4093 = vmatpush.bf16.msra.mxu0 %v3917
        %4094 = vmatpush.bf16.msra.mxu0 %v3913
        %4095 = vmatpush.bf16.msra.mxu0 %v3909
        %4096 = vmatpush.bf16.msra.mxu0 %v3905
        %4097 = vmatpush.bf16.msra.mxu0 %v3901
        %4098 = vmatpush.bf16.msra.mxu0 %v3897
        %4099 = vmatpush.bf16.msra.mxu0 %v3893
        %4100 = vmatmul.bf16.gmra.mxu0 %v1306
        %v4101 = vpop.f32.mrf.mxu0
        %v4102 = vadd.f32 %v4089, %v4101
        %v4103 = vpop.f32.mrf.mxu0
        %4104 = vdwg.mxu0
        %4105 = vmatpush.bf16.msra.mxu0 %v3826
        %4106 = vmatpush.bf16.msra.mxu0 %v3822
        %4107 = vmatpush.bf16.msra.mxu0 %v3818
        %4108 = vmatpush.bf16.msra.mxu0 %v3814
        %4109 = vmatpush.bf16.msra.mxu0 %v3810
        %4110 = vmatpush.bf16.msra.mxu0 %v3806
        %4111 = vmatpush.bf16.msra.mxu0 %v3802
        %4112 = vmatpush.bf16.msra.mxu0 %v3798
        %4113 = vmatmul.bf16.gmra.mxu0 %v1303
        %v4114 = vpop.f32.mrf.mxu0
        %v4115 = vadd.f32 %v3306, %v4114
        %v4116 = vpop.f32.mrf.mxu0
        %4117 = vdwg.mxu0
        %4118 = vmatpush.bf16.msra.mxu0 %v3858
        %4119 = vmatpush.bf16.msra.mxu0 %v3854
        %4120 = vmatpush.bf16.msra.mxu0 %v3850
        %4121 = vmatpush.bf16.msra.mxu0 %v3846
        %4122 = vmatpush.bf16.msra.mxu0 %v3842
        %4123 = vmatpush.bf16.msra.mxu0 %v3838
        %4124 = vmatpush.bf16.msra.mxu0 %v3834
        %4125 = vmatpush.bf16.msra.mxu0 %v3830
        %4126 = vmatmul.bf16.gmra.mxu0 %v1304
        %v4127 = vpop.f32.mrf.mxu0
        %v4128 = vadd.f32 %v4115, %v4127
        %v4129 = vpop.f32.mrf.mxu0
        %4130 = vdwg.mxu0
        %4131 = vmatpush.bf16.msra.mxu0 %v3890
        %4132 = vmatpush.bf16.msra.mxu0 %v3886
        %4133 = vmatpush.bf16.msra.mxu0 %v3882
        %4134 = vmatpush.bf16.msra.mxu0 %v3878
        %4135 = vmatpush.bf16.msra.mxu0 %v3874
        %4136 = vmatpush.bf16.msra.mxu0 %v3870
        %4137 = vmatpush.bf16.msra.mxu0 %v3866
        %4138 = vmatpush.bf16.msra.mxu0 %v3862
        %4139 = vmatmul.bf16.gmra.mxu0 %v1305
        %v4140 = vpop.f32.mrf.mxu0
        %v4141 = vadd.f32 %v4128, %v4140
        %v4142 = vpop.f32.mrf.mxu0
        %4143 = vdwg.mxu0
        %4144 = vmatpush.bf16.msra.mxu0 %v3922
        %4145 = vmatpush.bf16.msra.mxu0 %v3918
        %4146 = vmatpush.bf16.msra.mxu0 %v3914
        %4147 = vmatpush.bf16.msra.mxu0 %v3910
        %4148 = vmatpush.bf16.msra.mxu0 %v3906
        %4149 = vmatpush.bf16.msra.mxu0 %v3902
        %4150 = vmatpush.bf16.msra.mxu0 %v3898
        %4151 = vmatpush.bf16.msra.mxu0 %v3894
        %4152 = vmatmul.bf16.gmra.mxu0 %v1306
        %v4153 = vpop.f32.mrf.mxu0
        %v4154 = vadd.f32 %v4141, %v4153
        %v4155 = vpop.f32.mrf.mxu0
        %4156 = vdwg.mxu0
        %4157 = vmatpush.bf16.msra.mxu0 %v3827
        %4158 = vmatpush.bf16.msra.mxu0 %v3823
        %4159 = vmatpush.bf16.msra.mxu0 %v3819
        %4160 = vmatpush.bf16.msra.mxu0 %v3815
        %4161 = vmatpush.bf16.msra.mxu0 %v3811
        %4162 = vmatpush.bf16.msra.mxu0 %v3807
        %4163 = vmatpush.bf16.msra.mxu0 %v3803
        %4164 = vmatpush.bf16.msra.mxu0 %v3799
        %4165 = vmatmul.bf16.gmra.mxu0 %v1303
        %v4166 = vpop.f32.mrf.mxu0
        %v4167 = vadd.f32 %v3358, %v4166
        %v4168 = vpop.f32.mrf.mxu0
        %4169 = vdwg.mxu0
        %4170 = vmatpush.bf16.msra.mxu0 %v3859
        %4171 = vmatpush.bf16.msra.mxu0 %v3855
        %4172 = vmatpush.bf16.msra.mxu0 %v3851
        %4173 = vmatpush.bf16.msra.mxu0 %v3847
        %4174 = vmatpush.bf16.msra.mxu0 %v3843
        %4175 = vmatpush.bf16.msra.mxu0 %v3839
        %4176 = vmatpush.bf16.msra.mxu0 %v3835
        %4177 = vmatpush.bf16.msra.mxu0 %v3831
        %4178 = vmatmul.bf16.gmra.mxu0 %v1304
        %v4179 = vpop.f32.mrf.mxu0
        %v4180 = vadd.f32 %v4167, %v4179
        %v4181 = vpop.f32.mrf.mxu0
        %4182 = vdwg.mxu0
        %4183 = vmatpush.bf16.msra.mxu0 %v3891
        %4184 = vmatpush.bf16.msra.mxu0 %v3887
        %4185 = vmatpush.bf16.msra.mxu0 %v3883
        %4186 = vmatpush.bf16.msra.mxu0 %v3879
        %4187 = vmatpush.bf16.msra.mxu0 %v3875
        %4188 = vmatpush.bf16.msra.mxu0 %v3871
        %4189 = vmatpush.bf16.msra.mxu0 %v3867
        %4190 = vmatpush.bf16.msra.mxu0 %v3863
        %4191 = vmatmul.bf16.gmra.mxu0 %v1305
        %v4192 = vpop.f32.mrf.mxu0
        %v4193 = vadd.f32 %v4180, %v4192
        %v4194 = vpop.f32.mrf.mxu0
        %4195 = vdwg.mxu0
        %4196 = vmatpush.bf16.msra.mxu0 %v3923
        %4197 = vmatpush.bf16.msra.mxu0 %v3919
        %4198 = vmatpush.bf16.msra.mxu0 %v3915
        %4199 = vmatpush.bf16.msra.mxu0 %v3911
        %4200 = vmatpush.bf16.msra.mxu0 %v3907
        %4201 = vmatpush.bf16.msra.mxu0 %v3903
        %4202 = vmatpush.bf16.msra.mxu0 %v3899
        %4203 = vmatpush.bf16.msra.mxu0 %v3895
        %4204 = vmatmul.bf16.gmra.mxu0 %v1306
        %v4205 = vpop.f32.mrf.mxu0
        %v4206 = vadd.f32 %v4193, %v4205
        %v4207 = vpop.f32.mrf.mxu0
        %4208 = vdwg.mxu0
        %4209 = vmatpush.bf16.msra.mxu0 %v3828
        %4210 = vmatpush.bf16.msra.mxu0 %v3824
        %4211 = vmatpush.bf16.msra.mxu0 %v3820
        %4212 = vmatpush.bf16.msra.mxu0 %v3816
        %4213 = vmatpush.bf16.msra.mxu0 %v3812
        %4214 = vmatpush.bf16.msra.mxu0 %v3808
        %4215 = vmatpush.bf16.msra.mxu0 %v3804
        %4216 = vmatpush.bf16.msra.mxu0 %v3800
        %4217 = vmatmul.bf16.gmra.mxu0 %v1303
        %v4218 = vpop.f32.mrf.mxu0
        %v4219 = vadd.f32 %v3410, %v4218
        %v4220 = vpop.f32.mrf.mxu0
        %4221 = vdwg.mxu0
        %4222 = vmatpush.bf16.msra.mxu0 %v3860
        %4223 = vmatpush.bf16.msra.mxu0 %v3856
        %4224 = vmatpush.bf16.msra.mxu0 %v3852
        %4225 = vmatpush.bf16.msra.mxu0 %v3848
        %4226 = vmatpush.bf16.msra.mxu0 %v3844
        %4227 = vmatpush.bf16.msra.mxu0 %v3840
        %4228 = vmatpush.bf16.msra.mxu0 %v3836
        %4229 = vmatpush.bf16.msra.mxu0 %v3832
        %4230 = vmatmul.bf16.gmra.mxu0 %v1304
        %v4231 = vpop.f32.mrf.mxu0
        %v4232 = vadd.f32 %v4219, %v4231
        %v4233 = vpop.f32.mrf.mxu0
        %4234 = vdwg.mxu0
        %4235 = vmatpush.bf16.msra.mxu0 %v3892
        %4236 = vmatpush.bf16.msra.mxu0 %v3888
        %4237 = vmatpush.bf16.msra.mxu0 %v3884
        %4238 = vmatpush.bf16.msra.mxu0 %v3880
        %4239 = vmatpush.bf16.msra.mxu0 %v3876
        %4240 = vmatpush.bf16.msra.mxu0 %v3872
        %4241 = vmatpush.bf16.msra.mxu0 %v3868
        %4242 = vmatpush.bf16.msra.mxu0 %v3864
        %4243 = vmatmul.bf16.gmra.mxu0 %v1305
        %v4244 = vpop.f32.mrf.mxu0
        %v4245 = vadd.f32 %v4232, %v4244
        %v4246 = vpop.f32.mrf.mxu0
        %4247 = vdwg.mxu0
        %4248 = vmatpush.bf16.msra.mxu0 %v3924
        %4249 = vmatpush.bf16.msra.mxu0 %v3920
        %4250 = vmatpush.bf16.msra.mxu0 %v3916
        %4251 = vmatpush.bf16.msra.mxu0 %v3912
        %4252 = vmatpush.bf16.msra.mxu0 %v3908
        %4253 = vmatpush.bf16.msra.mxu0 %v3904
        %4254 = vmatpush.bf16.msra.mxu0 %v3900
        %4255 = vmatpush.bf16.msra.mxu0 %v3896
        %4256 = vmatmul.bf16.gmra.mxu0 %v1306
        %v4257 = vpop.f32.mrf.mxu0
        %v4258 = vadd.f32 %v4245, %v4257
        %v4259 = vpop.f32.mrf.mxu0
        %4260 = vdwg.mxu0
        %s4261 = scalar_lea.vmem [#allocation5], 32
        %v4262 = vld [vmem:[%s4261] sm:$0xff]
        %v4263 = vld [vmem:[%s4261 + $0x8] sm:$0xff]
        %v4264 = vld [vmem:[%s4261 + $0x40] sm:$0xff]
        %v4265 = vld [vmem:[%s4261 + $0x48] sm:$0xff]
        %v4266 = vld [vmem:[%s4261 + $0x80] sm:$0xff]
        %v4267 = vld [vmem:[%s4261 + $0x88] sm:$0xff]
        %v4268 = vld [vmem:[%s4261 + $0xc0] sm:$0xff]
        %v4269 = vld [vmem:[%s4261 + $0xc8] sm:$0xff]
        %v4270 = vld [vmem:[%s4261 + $0x100] sm:$0xff]
        %v4271 = vld [vmem:[%s4261 + $0x108] sm:$0xff]
        %v4272 = vld [vmem:[%s4261 + $0x140] sm:$0xff]
        %v4273 = vld [vmem:[%s4261 + $0x148] sm:$0xff]
        %v4274 = vld [vmem:[%s4261 + $0x180] sm:$0xff]
        %v4275 = vld [vmem:[%s4261 + $0x188] sm:$0xff]
        %v4276 = vld [vmem:[%s4261 + $0x1c0] sm:$0xff]
        %v4277 = vld [vmem:[%s4261 + $0x1c8] sm:$0xff]
        %v4278 = vld [vmem:[%s4261 + $0x200] sm:$0xff]
        %v4279 = vld [vmem:[%s4261 + $0x208] sm:$0xff]
        %v4280 = vld [vmem:[%s4261 + $0x240] sm:$0xff]
        %v4281 = vld [vmem:[%s4261 + $0x248] sm:$0xff]
        %v4282 = vld [vmem:[%s4261 + $0x280] sm:$0xff]
        %v4283 = vld [vmem:[%s4261 + $0x288] sm:$0xff]
        %v4284 = vld [vmem:[%s4261 + $0x2c0] sm:$0xff]
        %v4285 = vld [vmem:[%s4261 + $0x2c8] sm:$0xff]
        %v4286 = vld [vmem:[%s4261 + $0x300] sm:$0xff]
        %v4287 = vld [vmem:[%s4261 + $0x308] sm:$0xff]
        %v4288 = vld [vmem:[%s4261 + $0x340] sm:$0xff]
        %v4289 = vld [vmem:[%s4261 + $0x348] sm:$0xff]
        %v4290 = vld [vmem:[%s4261 + $0x380] sm:$0xff]
        %v4291 = vld [vmem:[%s4261 + $0x388] sm:$0xff]
        %v4292 = vld [vmem:[%s4261 + $0x3c0] sm:$0xff]
        %v4293 = vld [vmem:[%s4261 + $0x3c8] sm:$0xff]
        %v4294 = vld [vmem:[%s4261 + $0x400] sm:$0xff]
        %v4295 = vld [vmem:[%s4261 + $0x408] sm:$0xff]
        %v4296 = vld [vmem:[%s4261 + $0x440] sm:$0xff]
        %v4297 = vld [vmem:[%s4261 + $0x448] sm:$0xff]
        %v4298 = vld [vmem:[%s4261 + $0x480] sm:$0xff]
        %v4299 = vld [vmem:[%s4261 + $0x488] sm:$0xff]
        %v4300 = vld [vmem:[%s4261 + $0x4c0] sm:$0xff]
        %v4301 = vld [vmem:[%s4261 + $0x4c8] sm:$0xff]
        %v4302 = vld [vmem:[%s4261 + $0x500] sm:$0xff]
        %v4303 = vld [vmem:[%s4261 + $0x508] sm:$0xff]
        %v4304 = vld [vmem:[%s4261 + $0x540] sm:$0xff]
        %v4305 = vld [vmem:[%s4261 + $0x548] sm:$0xff]
        %v4306 = vld [vmem:[%s4261 + $0x580] sm:$0xff]
        %v4307 = vld [vmem:[%s4261 + $0x588] sm:$0xff]
        %v4308 = vld [vmem:[%s4261 + $0x5c0] sm:$0xff]
        %v4309 = vld [vmem:[%s4261 + $0x5c8] sm:$0xff]
        %v4310 = vld [vmem:[%s4261 + $0x600] sm:$0xff]
        %v4311 = vld [vmem:[%s4261 + $0x608] sm:$0xff]
        %v4312 = vld [vmem:[%s4261 + $0x640] sm:$0xff]
        %v4313 = vld [vmem:[%s4261 + $0x648] sm:$0xff]
        %v4314 = vld [vmem:[%s4261 + $0x680] sm:$0xff]
        %v4315 = vld [vmem:[%s4261 + $0x688] sm:$0xff]
        %v4316 = vld [vmem:[%s4261 + $0x6c0] sm:$0xff]
        %v4317 = vld [vmem:[%s4261 + $0x6c8] sm:$0xff]
        %v4318 = vld [vmem:[%s4261 + $0x700] sm:$0xff]
        %v4319 = vld [vmem:[%s4261 + $0x708] sm:$0xff]
        %v4320 = vld [vmem:[%s4261 + $0x740] sm:$0xff]
        %v4321 = vld [vmem:[%s4261 + $0x748] sm:$0xff]
        %v4322 = vld [vmem:[%s4261 + $0x780] sm:$0xff]
        %v4323 = vld [vmem:[%s4261 + $0x788] sm:$0xff]
        %v4324 = vld [vmem:[%s4261 + $0x7c0] sm:$0xff]
        %v4325 = vld [vmem:[%s4261 + $0x7c8] sm:$0xff]
        %v4326 = vld [vmem:[%s4261 + $0x800] sm:$0xff]
        %v4327 = vld [vmem:[%s4261 + $0x808] sm:$0xff]
        %v4328 = vld [vmem:[%s4261 + $0x840] sm:$0xff]
        %v4329 = vld [vmem:[%s4261 + $0x848] sm:$0xff]
        %v4330 = vld [vmem:[%s4261 + $0x880] sm:$0xff]
        %v4331 = vld [vmem:[%s4261 + $0x888] sm:$0xff]
        %v4332 = vld [vmem:[%s4261 + $0x8c0] sm:$0xff]
        %v4333 = vld [vmem:[%s4261 + $0x8c8] sm:$0xff]
        %v4334 = vld [vmem:[%s4261 + $0x900] sm:$0xff]
        %v4335 = vld [vmem:[%s4261 + $0x908] sm:$0xff]
        %v4336 = vld [vmem:[%s4261 + $0x940] sm:$0xff]
        %v4337 = vld [vmem:[%s4261 + $0x948] sm:$0xff]
        %v4338 = vld [vmem:[%s4261 + $0x980] sm:$0xff]
        %v4339 = vld [vmem:[%s4261 + $0x988] sm:$0xff]
        %v4340 = vld [vmem:[%s4261 + $0x9c0] sm:$0xff]
        %v4341 = vld [vmem:[%s4261 + $0x9c8] sm:$0xff]
        %v4342 = vld [vmem:[%s4261 + $0xa00] sm:$0xff]
        %v4343 = vld [vmem:[%s4261 + $0xa08] sm:$0xff]
        %v4344 = vld [vmem:[%s4261 + $0xa40] sm:$0xff]
        %v4345 = vld [vmem:[%s4261 + $0xa48] sm:$0xff]
        %v4346 = vld [vmem:[%s4261 + $0xa80] sm:$0xff]
        %v4347 = vld [vmem:[%s4261 + $0xa88] sm:$0xff]
        %v4348 = vld [vmem:[%s4261 + $0xac0] sm:$0xff]
        %v4349 = vld [vmem:[%s4261 + $0xac8] sm:$0xff]
        %v4350 = vld [vmem:[%s4261 + $0xb00] sm:$0xff]
        %v4351 = vld [vmem:[%s4261 + $0xb08] sm:$0xff]
        %v4352 = vld [vmem:[%s4261 + $0xb40] sm:$0xff]
        %v4353 = vld [vmem:[%s4261 + $0xb48] sm:$0xff]
        %v4354 = vld [vmem:[%s4261 + $0xb80] sm:$0xff]
        %v4355 = vld [vmem:[%s4261 + $0xb88] sm:$0xff]
        %v4356 = vld [vmem:[%s4261 + $0xbc0] sm:$0xff]
        %v4357 = vld [vmem:[%s4261 + $0xbc8] sm:$0xff]
        %v4358 = vld [vmem:[%s4261 + $0xc00] sm:$0xff]
        %v4359 = vld [vmem:[%s4261 + $0xc08] sm:$0xff]
        %v4360 = vld [vmem:[%s4261 + $0xc40] sm:$0xff]
        %v4361 = vld [vmem:[%s4261 + $0xc48] sm:$0xff]
        %v4362 = vld [vmem:[%s4261 + $0xc80] sm:$0xff]
        %v4363 = vld [vmem:[%s4261 + $0xc88] sm:$0xff]
        %v4364 = vld [vmem:[%s4261 + $0xcc0] sm:$0xff]
        %v4365 = vld [vmem:[%s4261 + $0xcc8] sm:$0xff]
        %v4366 = vld [vmem:[%s4261 + $0xd00] sm:$0xff]
        %v4367 = vld [vmem:[%s4261 + $0xd08] sm:$0xff]
        %v4368 = vld [vmem:[%s4261 + $0xd40] sm:$0xff]
        %v4369 = vld [vmem:[%s4261 + $0xd48] sm:$0xff]
        %v4370 = vld [vmem:[%s4261 + $0xd80] sm:$0xff]
        %v4371 = vld [vmem:[%s4261 + $0xd88] sm:$0xff]
        %v4372 = vld [vmem:[%s4261 + $0xdc0] sm:$0xff]
        %v4373 = vld [vmem:[%s4261 + $0xdc8] sm:$0xff]
        %v4374 = vld [vmem:[%s4261 + $0xe00] sm:$0xff]
        %v4375 = vld [vmem:[%s4261 + $0xe08] sm:$0xff]
        %v4376 = vld [vmem:[%s4261 + $0xe40] sm:$0xff]
        %v4377 = vld [vmem:[%s4261 + $0xe48] sm:$0xff]
        %v4378 = vld [vmem:[%s4261 + $0xe80] sm:$0xff]
        %v4379 = vld [vmem:[%s4261 + $0xe88] sm:$0xff]
        %v4380 = vld [vmem:[%s4261 + $0xec0] sm:$0xff]
        %v4381 = vld [vmem:[%s4261 + $0xec8] sm:$0xff]
        %v4382 = vld [vmem:[%s4261 + $0xf00] sm:$0xff]
        %v4383 = vld [vmem:[%s4261 + $0xf08] sm:$0xff]
        %v4384 = vld [vmem:[%s4261 + $0xf40] sm:$0xff]
        %v4385 = vld [vmem:[%s4261 + $0xf48] sm:$0xff]
        %v4386 = vld [vmem:[%s4261 + $0xf80] sm:$0xff]
        %v4387 = vld [vmem:[%s4261 + $0xf88] sm:$0xff]
        %v4388 = vld [vmem:[%s4261 + $0xfc0] sm:$0xff]
        %v4389 = vld [vmem:[%s4261 + $0xfc8] sm:$0xff]
        %s4390 = scalar_lea.vmem [#allocation7], 8
        %v4391 = vld [vmem:[%s4390] sm:$0xf]
        %v4393 = vperm.slane %v4391, 0
        %v4394 = vperm.slane %v4391, 1
        %v4395 = vperm.slane %v4391, 2
        %v4396 = vperm.slane %v4391, 3
        %v4529 = vunpack.c.l.b16 %v4262
        %v4530 = vunpack.c.h.b16 %v4262
        %v4531 = vunpack.c.l.b16 %v4263
        %v4532 = vunpack.c.h.b16 %v4263
        %v4533 = vunpack.c.l.b16 %v4264
        %v4534 = vunpack.c.h.b16 %v4264
        %v4535 = vunpack.c.l.b16 %v4265
        %v4536 = vunpack.c.h.b16 %v4265
        %v4537 = vunpack.c.l.b16 %v4266
        %v4538 = vunpack.c.h.b16 %v4266
        %v4539 = vunpack.c.l.b16 %v4267
        %v4540 = vunpack.c.h.b16 %v4267
        %v4541 = vunpack.c.l.b16 %v4268
        %v4542 = vunpack.c.h.b16 %v4268
        %v4543 = vunpack.c.l.b16 %v4269
        %v4544 = vunpack.c.h.b16 %v4269
        %v4545 = vunpack.c.l.b16 %v4270
        %v4546 = vunpack.c.h.b16 %v4270
        %v4547 = vunpack.c.l.b16 %v4271
        %v4548 = vunpack.c.h.b16 %v4271
        %v4549 = vunpack.c.l.b16 %v4272
        %v4550 = vunpack.c.h.b16 %v4272
        %v4551 = vunpack.c.l.b16 %v4273
        %v4552 = vunpack.c.h.b16 %v4273
        %v4553 = vunpack.c.l.b16 %v4274
        %v4554 = vunpack.c.h.b16 %v4274
        %v4555 = vunpack.c.l.b16 %v4275
        %v4556 = vunpack.c.h.b16 %v4275
        %v4557 = vunpack.c.l.b16 %v4276
        %v4558 = vunpack.c.h.b16 %v4276
        %v4559 = vunpack.c.l.b16 %v4277
        %v4560 = vunpack.c.h.b16 %v4277
        %v4561 = vunpack.c.l.b16 %v4278
        %v4562 = vunpack.c.h.b16 %v4278
        %v4563 = vunpack.c.l.b16 %v4279
        %v4564 = vunpack.c.h.b16 %v4279
        %v4565 = vunpack.c.l.b16 %v4280
        %v4566 = vunpack.c.h.b16 %v4280
        %v4567 = vunpack.c.l.b16 %v4281
        %v4568 = vunpack.c.h.b16 %v4281
        %v4569 = vunpack.c.l.b16 %v4282
        %v4570 = vunpack.c.h.b16 %v4282
        %v4571 = vunpack.c.l.b16 %v4283
        %v4572 = vunpack.c.h.b16 %v4283
        %v4573 = vunpack.c.l.b16 %v4284
        %v4574 = vunpack.c.h.b16 %v4284
        %v4575 = vunpack.c.l.b16 %v4285
        %v4576 = vunpack.c.h.b16 %v4285
        %v4577 = vunpack.c.l.b16 %v4286
        %v4578 = vunpack.c.h.b16 %v4286
        %v4579 = vunpack.c.l.b16 %v4287
        %v4580 = vunpack.c.h.b16 %v4287
        %v4581 = vunpack.c.l.b16 %v4288
        %v4582 = vunpack.c.h.b16 %v4288
        %v4583 = vunpack.c.l.b16 %v4289
        %v4584 = vunpack.c.h.b16 %v4289
        %v4585 = vunpack.c.l.b16 %v4290
        %v4586 = vunpack.c.h.b16 %v4290
        %v4587 = vunpack.c.l.b16 %v4291
        %v4588 = vunpack.c.h.b16 %v4291
        %v4589 = vunpack.c.l.b16 %v4292
        %v4590 = vunpack.c.h.b16 %v4292
        %v4591 = vunpack.c.l.b16 %v4293
        %v4592 = vunpack.c.h.b16 %v4293
        %v4593 = vunpack.c.l.b16 %v4294
        %v4594 = vunpack.c.h.b16 %v4294
        %v4595 = vunpack.c.l.b16 %v4295
        %v4596 = vunpack.c.h.b16 %v4295
        %v4597 = vunpack.c.l.b16 %v4296
        %v4598 = vunpack.c.h.b16 %v4296
        %v4599 = vunpack.c.l.b16 %v4297
        %v4600 = vunpack.c.h.b16 %v4297
        %v4601 = vunpack.c.l.b16 %v4298
        %v4602 = vunpack.c.h.b16 %v4298
        %v4603 = vunpack.c.l.b16 %v4299
        %v4604 = vunpack.c.h.b16 %v4299
        %v4605 = vunpack.c.l.b16 %v4300
        %v4606 = vunpack.c.h.b16 %v4300
        %v4607 = vunpack.c.l.b16 %v4301
        %v4608 = vunpack.c.h.b16 %v4301
        %v4609 = vunpack.c.l.b16 %v4302
        %v4610 = vunpack.c.h.b16 %v4302
        %v4611 = vunpack.c.l.b16 %v4303
        %v4612 = vunpack.c.h.b16 %v4303
        %v4613 = vunpack.c.l.b16 %v4304
        %v4614 = vunpack.c.h.b16 %v4304
        %v4615 = vunpack.c.l.b16 %v4305
        %v4616 = vunpack.c.h.b16 %v4305
        %v4617 = vunpack.c.l.b16 %v4306
        %v4618 = vunpack.c.h.b16 %v4306
        %v4619 = vunpack.c.l.b16 %v4307
        %v4620 = vunpack.c.h.b16 %v4307
        %v4621 = vunpack.c.l.b16 %v4308
        %v4622 = vunpack.c.h.b16 %v4308
        %v4623 = vunpack.c.l.b16 %v4309
        %v4624 = vunpack.c.h.b16 %v4309
        %v4625 = vunpack.c.l.b16 %v4310
        %v4626 = vunpack.c.h.b16 %v4310
        %v4627 = vunpack.c.l.b16 %v4311
        %v4628 = vunpack.c.h.b16 %v4311
        %v4629 = vunpack.c.l.b16 %v4312
        %v4630 = vunpack.c.h.b16 %v4312
        %v4631 = vunpack.c.l.b16 %v4313
        %v4632 = vunpack.c.h.b16 %v4313
        %v4633 = vunpack.c.l.b16 %v4314
        %v4634 = vunpack.c.h.b16 %v4314
        %v4635 = vunpack.c.l.b16 %v4315
        %v4636 = vunpack.c.h.b16 %v4315
        %v4637 = vunpack.c.l.b16 %v4316
        %v4638 = vunpack.c.h.b16 %v4316
        %v4639 = vunpack.c.l.b16 %v4317
        %v4640 = vunpack.c.h.b16 %v4317
        %v4641 = vunpack.c.l.b16 %v4318
        %v4642 = vunpack.c.h.b16 %v4318
        %v4643 = vunpack.c.l.b16 %v4319
        %v4644 = vunpack.c.h.b16 %v4319
        %v4645 = vunpack.c.l.b16 %v4320
        %v4646 = vunpack.c.h.b16 %v4320
        %v4647 = vunpack.c.l.b16 %v4321
        %v4648 = vunpack.c.h.b16 %v4321
        %v4649 = vunpack.c.l.b16 %v4322
        %v4650 = vunpack.c.h.b16 %v4322
        %v4651 = vunpack.c.l.b16 %v4323
        %v4652 = vunpack.c.h.b16 %v4323
        %v4653 = vunpack.c.l.b16 %v4324
        %v4654 = vunpack.c.h.b16 %v4324
        %v4655 = vunpack.c.l.b16 %v4325
        %v4656 = vunpack.c.h.b16 %v4325
        %v4657 = vunpack.c.l.b16 %v4326
        %v4658 = vunpack.c.h.b16 %v4326
        %v4659 = vunpack.c.l.b16 %v4327
        %v4660 = vunpack.c.h.b16 %v4327
        %v4661 = vunpack.c.l.b16 %v4328
        %v4662 = vunpack.c.h.b16 %v4328
        %v4663 = vunpack.c.l.b16 %v4329
        %v4664 = vunpack.c.h.b16 %v4329
        %v4665 = vunpack.c.l.b16 %v4330
        %v4666 = vunpack.c.h.b16 %v4330
        %v4667 = vunpack.c.l.b16 %v4331
        %v4668 = vunpack.c.h.b16 %v4331
        %v4669 = vunpack.c.l.b16 %v4332
        %v4670 = vunpack.c.h.b16 %v4332
        %v4671 = vunpack.c.l.b16 %v4333
        %v4672 = vunpack.c.h.b16 %v4333
        %v4673 = vunpack.c.l.b16 %v4334
        %v4674 = vunpack.c.h.b16 %v4334
        %v4675 = vunpack.c.l.b16 %v4335
        %v4676 = vunpack.c.h.b16 %v4335
        %v4677 = vunpack.c.l.b16 %v4336
        %v4678 = vunpack.c.h.b16 %v4336
        %v4679 = vunpack.c.l.b16 %v4337
        %v4680 = vunpack.c.h.b16 %v4337
        %v4681 = vunpack.c.l.b16 %v4338
        %v4682 = vunpack.c.h.b16 %v4338
        %v4683 = vunpack.c.l.b16 %v4339
        %v4684 = vunpack.c.h.b16 %v4339
        %v4685 = vunpack.c.l.b16 %v4340
        %v4686 = vunpack.c.h.b16 %v4340
        %v4687 = vunpack.c.l.b16 %v4341
        %v4688 = vunpack.c.h.b16 %v4341
        %v4689 = vunpack.c.l.b16 %v4342
        %v4690 = vunpack.c.h.b16 %v4342
        %v4691 = vunpack.c.l.b16 %v4343
        %v4692 = vunpack.c.h.b16 %v4343
        %v4693 = vunpack.c.l.b16 %v4344
        %v4694 = vunpack.c.h.b16 %v4344
        %v4695 = vunpack.c.l.b16 %v4345
        %v4696 = vunpack.c.h.b16 %v4345
        %v4697 = vunpack.c.l.b16 %v4346
        %v4698 = vunpack.c.h.b16 %v4346
        %v4699 = vunpack.c.l.b16 %v4347
        %v4700 = vunpack.c.h.b16 %v4347
        %v4701 = vunpack.c.l.b16 %v4348
        %v4702 = vunpack.c.h.b16 %v4348
        %v4703 = vunpack.c.l.b16 %v4349
        %v4704 = vunpack.c.h.b16 %v4349
        %v4705 = vunpack.c.l.b16 %v4350
        %v4706 = vunpack.c.h.b16 %v4350
        %v4707 = vunpack.c.l.b16 %v4351
        %v4708 = vunpack.c.h.b16 %v4351
        %v4709 = vunpack.c.l.b16 %v4352
        %v4710 = vunpack.c.h.b16 %v4352
        %v4711 = vunpack.c.l.b16 %v4353
        %v4712 = vunpack.c.h.b16 %v4353
        %v4713 = vunpack.c.l.b16 %v4354
        %v4714 = vunpack.c.h.b16 %v4354
        %v4715 = vunpack.c.l.b16 %v4355
        %v4716 = vunpack.c.h.b16 %v4355
        %v4717 = vunpack.c.l.b16 %v4356
        %v4718 = vunpack.c.h.b16 %v4356
        %v4719 = vunpack.c.l.b16 %v4357
        %v4720 = vunpack.c.h.b16 %v4357
        %v4721 = vunpack.c.l.b16 %v4358
        %v4722 = vunpack.c.h.b16 %v4358
        %v4723 = vunpack.c.l.b16 %v4359
        %v4724 = vunpack.c.h.b16 %v4359
        %v4725 = vunpack.c.l.b16 %v4360
        %v4726 = vunpack.c.h.b16 %v4360
        %v4727 = vunpack.c.l.b16 %v4361
        %v4728 = vunpack.c.h.b16 %v4361
        %v4729 = vunpack.c.l.b16 %v4362
        %v4730 = vunpack.c.h.b16 %v4362
        %v4731 = vunpack.c.l.b16 %v4363
        %v4732 = vunpack.c.h.b16 %v4363
        %v4733 = vunpack.c.l.b16 %v4364
        %v4734 = vunpack.c.h.b16 %v4364
        %v4735 = vunpack.c.l.b16 %v4365
        %v4736 = vunpack.c.h.b16 %v4365
        %v4737 = vunpack.c.l.b16 %v4366
        %v4738 = vunpack.c.h.b16 %v4366
        %v4739 = vunpack.c.l.b16 %v4367
        %v4740 = vunpack.c.h.b16 %v4367
        %v4741 = vunpack.c.l.b16 %v4368
        %v4742 = vunpack.c.h.b16 %v4368
        %v4743 = vunpack.c.l.b16 %v4369
        %v4744 = vunpack.c.h.b16 %v4369
        %v4745 = vunpack.c.l.b16 %v4370
        %v4746 = vunpack.c.h.b16 %v4370
        %v4747 = vunpack.c.l.b16 %v4371
        %v4748 = vunpack.c.h.b16 %v4371
        %v4749 = vunpack.c.l.b16 %v4372
        %v4750 = vunpack.c.h.b16 %v4372
        %v4751 = vunpack.c.l.b16 %v4373
        %v4752 = vunpack.c.h.b16 %v4373
        %v4753 = vunpack.c.l.b16 %v4374
        %v4754 = vunpack.c.h.b16 %v4374
        %v4755 = vunpack.c.l.b16 %v4375
        %v4756 = vunpack.c.h.b16 %v4375
        %v4757 = vunpack.c.l.b16 %v4376
        %v4758 = vunpack.c.h.b16 %v4376
        %v4759 = vunpack.c.l.b16 %v4377
        %v4760 = vunpack.c.h.b16 %v4377
        %v4761 = vunpack.c.l.b16 %v4378
        %v4762 = vunpack.c.h.b16 %v4378
        %v4763 = vunpack.c.l.b16 %v4379
        %v4764 = vunpack.c.h.b16 %v4379
        %v4765 = vunpack.c.l.b16 %v4380
        %v4766 = vunpack.c.h.b16 %v4380
        %v4767 = vunpack.c.l.b16 %v4381
        %v4768 = vunpack.c.h.b16 %v4381
        %v4769 = vunpack.c.l.b16 %v4382
        %v4770 = vunpack.c.h.b16 %v4382
        %v4771 = vunpack.c.l.b16 %v4383
        %v4772 = vunpack.c.h.b16 %v4383
        %v4773 = vunpack.c.l.b16 %v4384
        %v4774 = vunpack.c.h.b16 %v4384
        %v4775 = vunpack.c.l.b16 %v4385
        %v4776 = vunpack.c.h.b16 %v4385
        %v4777 = vunpack.c.l.b16 %v4386
        %v4778 = vunpack.c.h.b16 %v4386
        %v4779 = vunpack.c.l.b16 %v4387
        %v4780 = vunpack.c.h.b16 %v4387
        %v4781 = vunpack.c.l.b16 %v4388
        %v4782 = vunpack.c.h.b16 %v4388
        %v4783 = vunpack.c.l.b16 %v4389
        %v4784 = vunpack.c.h.b16 %v4389
        %v4785 = vpack.c.b16 %v4533, %v4529
        %v4786 = vpack.c.b16 %v4534, %v4530
        %v4787 = vpack.c.b16 %v4535, %v4531
        %v4788 = vpack.c.b16 %v4536, %v4532
        %v4789 = vpack.c.b16 %v4541, %v4537
        %v4790 = vpack.c.b16 %v4542, %v4538
        %v4791 = vpack.c.b16 %v4543, %v4539
        %v4792 = vpack.c.b16 %v4544, %v4540
        %v4793 = vpack.c.b16 %v4549, %v4545
        %v4794 = vpack.c.b16 %v4550, %v4546
        %v4795 = vpack.c.b16 %v4551, %v4547
        %v4796 = vpack.c.b16 %v4552, %v4548
        %v4797 = vpack.c.b16 %v4557, %v4553
        %v4798 = vpack.c.b16 %v4558, %v4554
        %v4799 = vpack.c.b16 %v4559, %v4555
        %v4800 = vpack.c.b16 %v4560, %v4556
        %v4801 = vpack.c.b16 %v4565, %v4561
        %v4802 = vpack.c.b16 %v4566, %v4562
        %v4803 = vpack.c.b16 %v4567, %v4563
        %v4804 = vpack.c.b16 %v4568, %v4564
        %v4805 = vpack.c.b16 %v4573, %v4569
        %v4806 = vpack.c.b16 %v4574, %v4570
        %v4807 = vpack.c.b16 %v4575, %v4571
        %v4808 = vpack.c.b16 %v4576, %v4572
        %v4809 = vpack.c.b16 %v4581, %v4577
        %v4810 = vpack.c.b16 %v4582, %v4578
        %v4811 = vpack.c.b16 %v4583, %v4579
        %v4812 = vpack.c.b16 %v4584, %v4580
        %v4813 = vpack.c.b16 %v4589, %v4585
        %v4814 = vpack.c.b16 %v4590, %v4586
        %v4815 = vpack.c.b16 %v4591, %v4587
        %v4816 = vpack.c.b16 %v4592, %v4588
        %v4817 = vpack.c.b16 %v4597, %v4593
        %v4818 = vpack.c.b16 %v4598, %v4594
        %v4819 = vpack.c.b16 %v4599, %v4595
        %v4820 = vpack.c.b16 %v4600, %v4596
        %v4821 = vpack.c.b16 %v4605, %v4601
        %v4822 = vpack.c.b16 %v4606, %v4602
        %v4823 = vpack.c.b16 %v4607, %v4603
        %v4824 = vpack.c.b16 %v4608, %v4604
        %v4825 = vpack.c.b16 %v4613, %v4609
        %v4826 = vpack.c.b16 %v4614, %v4610
        %v4827 = vpack.c.b16 %v4615, %v4611
        %v4828 = vpack.c.b16 %v4616, %v4612
        %v4829 = vpack.c.b16 %v4621, %v4617
        %v4830 = vpack.c.b16 %v4622, %v4618
        %v4831 = vpack.c.b16 %v4623, %v4619
        %v4832 = vpack.c.b16 %v4624, %v4620
        %v4833 = vpack.c.b16 %v4629, %v4625
        %v4834 = vpack.c.b16 %v4630, %v4626
        %v4835 = vpack.c.b16 %v4631, %v4627
        %v4836 = vpack.c.b16 %v4632, %v4628
        %v4837 = vpack.c.b16 %v4637, %v4633
        %v4838 = vpack.c.b16 %v4638, %v4634
        %v4839 = vpack.c.b16 %v4639, %v4635
        %v4840 = vpack.c.b16 %v4640, %v4636
        %v4841 = vpack.c.b16 %v4645, %v4641
        %v4842 = vpack.c.b16 %v4646, %v4642
        %v4843 = vpack.c.b16 %v4647, %v4643
        %v4844 = vpack.c.b16 %v4648, %v4644
        %v4845 = vpack.c.b16 %v4653, %v4649
        %v4846 = vpack.c.b16 %v4654, %v4650
        %v4847 = vpack.c.b16 %v4655, %v4651
        %v4848 = vpack.c.b16 %v4656, %v4652
        %v4849 = vpack.c.b16 %v4661, %v4657
        %v4850 = vpack.c.b16 %v4662, %v4658
        %v4851 = vpack.c.b16 %v4663, %v4659
        %v4852 = vpack.c.b16 %v4664, %v4660
        %v4853 = vpack.c.b16 %v4669, %v4665
        %v4854 = vpack.c.b16 %v4670, %v4666
        %v4855 = vpack.c.b16 %v4671, %v4667
        %v4856 = vpack.c.b16 %v4672, %v4668
        %v4857 = vpack.c.b16 %v4677, %v4673
        %v4858 = vpack.c.b16 %v4678, %v4674
        %v4859 = vpack.c.b16 %v4679, %v4675
        %v4860 = vpack.c.b16 %v4680, %v4676
        %v4861 = vpack.c.b16 %v4685, %v4681
        %v4862 = vpack.c.b16 %v4686, %v4682
        %v4863 = vpack.c.b16 %v4687, %v4683
        %v4864 = vpack.c.b16 %v4688, %v4684
        %v4865 = vpack.c.b16 %v4693, %v4689
        %v4866 = vpack.c.b16 %v4694, %v4690
        %v4867 = vpack.c.b16 %v4695, %v4691
        %v4868 = vpack.c.b16 %v4696, %v4692
        %v4869 = vpack.c.b16 %v4701, %v4697
        %v4870 = vpack.c.b16 %v4702, %v4698
        %v4871 = vpack.c.b16 %v4703, %v4699
        %v4872 = vpack.c.b16 %v4704, %v4700
        %v4873 = vpack.c.b16 %v4709, %v4705
        %v4874 = vpack.c.b16 %v4710, %v4706
        %v4875 = vpack.c.b16 %v4711, %v4707
        %v4876 = vpack.c.b16 %v4712, %v4708
        %v4877 = vpack.c.b16 %v4717, %v4713
        %v4878 = vpack.c.b16 %v4718, %v4714
        %v4879 = vpack.c.b16 %v4719, %v4715
        %v4880 = vpack.c.b16 %v4720, %v4716
        %v4881 = vpack.c.b16 %v4725, %v4721
        %v4882 = vpack.c.b16 %v4726, %v4722
        %v4883 = vpack.c.b16 %v4727, %v4723
        %v4884 = vpack.c.b16 %v4728, %v4724
        %v4885 = vpack.c.b16 %v4733, %v4729
        %v4886 = vpack.c.b16 %v4734, %v4730
        %v4887 = vpack.c.b16 %v4735, %v4731
        %v4888 = vpack.c.b16 %v4736, %v4732
        %v4889 = vpack.c.b16 %v4741, %v4737
        %v4890 = vpack.c.b16 %v4742, %v4738
        %v4891 = vpack.c.b16 %v4743, %v4739
        %v4892 = vpack.c.b16 %v4744, %v4740
        %v4893 = vpack.c.b16 %v4749, %v4745
        %v4894 = vpack.c.b16 %v4750, %v4746
        %v4895 = vpack.c.b16 %v4751, %v4747
        %v4896 = vpack.c.b16 %v4752, %v4748
        %v4897 = vpack.c.b16 %v4757, %v4753
        %v4898 = vpack.c.b16 %v4758, %v4754
        %v4899 = vpack.c.b16 %v4759, %v4755
        %v4900 = vpack.c.b16 %v4760, %v4756
        %v4901 = vpack.c.b16 %v4765, %v4761
        %v4902 = vpack.c.b16 %v4766, %v4762
        %v4903 = vpack.c.b16 %v4767, %v4763
        %v4904 = vpack.c.b16 %v4768, %v4764
        %v4905 = vpack.c.b16 %v4773, %v4769
        %v4906 = vpack.c.b16 %v4774, %v4770
        %v4907 = vpack.c.b16 %v4775, %v4771
        %v4908 = vpack.c.b16 %v4776, %v4772
        %v4909 = vpack.c.b16 %v4781, %v4777
        %v4910 = vpack.c.b16 %v4782, %v4778
        %v4911 = vpack.c.b16 %v4783, %v4779
        %v4912 = vpack.c.b16 %v4784, %v4780
        %5041 = vmatpush.bf16.msra.mxu0 %v4813
        %5042 = vmatpush.bf16.msra.mxu0 %v4809
        %5043 = vmatpush.bf16.msra.mxu0 %v4805
        %5044 = vmatpush.bf16.msra.mxu0 %v4801
        %5045 = vmatpush.bf16.msra.mxu0 %v4797
        %5046 = vmatpush.bf16.msra.mxu0 %v4793
        %5047 = vmatpush.bf16.msra.mxu0 %v4789
        %5048 = vmatpush.bf16.msra.mxu0 %v4785
        %5049 = vmatmul.bf16.gmra.mxu0 %v309
        %v5050 = vpop.f32.mrf.mxu0
        %v5051 = vadd.f32 %v4393, %v5050
        %v5052 = vpop.f32.mrf.mxu0
        %5053 = vdwg.mxu0
        %5054 = vmatpush.bf16.msra.mxu0 %v4845
        %5055 = vmatpush.bf16.msra.mxu0 %v4841
        %5056 = vmatpush.bf16.msra.mxu0 %v4837
        %5057 = vmatpush.bf16.msra.mxu0 %v4833
        %5058 = vmatpush.bf16.msra.mxu0 %v4829
        %5059 = vmatpush.bf16.msra.mxu0 %v4825
        %5060 = vmatpush.bf16.msra.mxu0 %v4821
        %5061 = vmatpush.bf16.msra.mxu0 %v4817
        %5062 = vmatmul.bf16.gmra.mxu0 %v310
        %v5063 = vpop.f32.mrf.mxu0
        %v5064 = vadd.f32 %v5051, %v5063
        %v5065 = vpop.f32.mrf.mxu0
        %5066 = vdwg.mxu0
        %5067 = vmatpush.bf16.msra.mxu0 %v4877
        %5068 = vmatpush.bf16.msra.mxu0 %v4873
        %5069 = vmatpush.bf16.msra.mxu0 %v4869
        %5070 = vmatpush.bf16.msra.mxu0 %v4865
        %5071 = vmatpush.bf16.msra.mxu0 %v4861
        %5072 = vmatpush.bf16.msra.mxu0 %v4857
        %5073 = vmatpush.bf16.msra.mxu0 %v4853
        %5074 = vmatpush.bf16.msra.mxu0 %v4849
        %5075 = vmatmul.bf16.gmra.mxu0 %v311
        %v5076 = vpop.f32.mrf.mxu0
        %v5077 = vadd.f32 %v5064, %v5076
        %v5078 = vpop.f32.mrf.mxu0
        %5079 = vdwg.mxu0
        %5080 = vmatpush.bf16.msra.mxu0 %v4909
        %5081 = vmatpush.bf16.msra.mxu0 %v4905
        %5082 = vmatpush.bf16.msra.mxu0 %v4901
        %5083 = vmatpush.bf16.msra.mxu0 %v4897
        %5084 = vmatpush.bf16.msra.mxu0 %v4893
        %5085 = vmatpush.bf16.msra.mxu0 %v4889
        %5086 = vmatpush.bf16.msra.mxu0 %v4885
        %5087 = vmatpush.bf16.msra.mxu0 %v4881
        %5088 = vmatmul.bf16.gmra.mxu0 %v312
        %v5089 = vpop.f32.mrf.mxu0
        %v5090 = vadd.f32 %v5077, %v5089
        %v5091 = vpop.f32.mrf.mxu0
        %5092 = vdwg.mxu0
        %5093 = vmatpush.bf16.msra.mxu0 %v4814
        %5094 = vmatpush.bf16.msra.mxu0 %v4810
        %5095 = vmatpush.bf16.msra.mxu0 %v4806
        %5096 = vmatpush.bf16.msra.mxu0 %v4802
        %5097 = vmatpush.bf16.msra.mxu0 %v4798
        %5098 = vmatpush.bf16.msra.mxu0 %v4794
        %5099 = vmatpush.bf16.msra.mxu0 %v4790
        %5100 = vmatpush.bf16.msra.mxu0 %v4786
        %5101 = vmatmul.bf16.gmra.mxu0 %v309
        %v5102 = vpop.f32.mrf.mxu0
        %v5103 = vadd.f32 %v4394, %v5102
        %v5104 = vpop.f32.mrf.mxu0
        %5105 = vdwg.mxu0
        %5106 = vmatpush.bf16.msra.mxu0 %v4846
        %5107 = vmatpush.bf16.msra.mxu0 %v4842
        %5108 = vmatpush.bf16.msra.mxu0 %v4838
        %5109 = vmatpush.bf16.msra.mxu0 %v4834
        %5110 = vmatpush.bf16.msra.mxu0 %v4830
        %5111 = vmatpush.bf16.msra.mxu0 %v4826
        %5112 = vmatpush.bf16.msra.mxu0 %v4822
        %5113 = vmatpush.bf16.msra.mxu0 %v4818
        %5114 = vmatmul.bf16.gmra.mxu0 %v310
        %v5115 = vpop.f32.mrf.mxu0
        %v5116 = vadd.f32 %v5103, %v5115
        %v5117 = vpop.f32.mrf.mxu0
        %5118 = vdwg.mxu0
        %5119 = vmatpush.bf16.msra.mxu0 %v4878
        %5120 = vmatpush.bf16.msra.mxu0 %v4874
        %5121 = vmatpush.bf16.msra.mxu0 %v4870
        %5122 = vmatpush.bf16.msra.mxu0 %v4866
        %5123 = vmatpush.bf16.msra.mxu0 %v4862
        %5124 = vmatpush.bf16.msra.mxu0 %v4858
        %5125 = vmatpush.bf16.msra.mxu0 %v4854
        %5126 = vmatpush.bf16.msra.mxu0 %v4850
        %5127 = vmatmul.bf16.gmra.mxu0 %v311
        %v5128 = vpop.f32.mrf.mxu0
        %v5129 = vadd.f32 %v5116, %v5128
        %v5130 = vpop.f32.mrf.mxu0
        %5131 = vdwg.mxu0
        %5132 = vmatpush.bf16.msra.mxu0 %v4910
        %5133 = vmatpush.bf16.msra.mxu0 %v4906
        %5134 = vmatpush.bf16.msra.mxu0 %v4902
        %5135 = vmatpush.bf16.msra.mxu0 %v4898
        %5136 = vmatpush.bf16.msra.mxu0 %v4894
        %5137 = vmatpush.bf16.msra.mxu0 %v4890
        %5138 = vmatpush.bf16.msra.mxu0 %v4886
        %5139 = vmatpush.bf16.msra.mxu0 %v4882
        %5140 = vmatmul.bf16.gmra.mxu0 %v312
        %v5141 = vpop.f32.mrf.mxu0
        %v5142 = vadd.f32 %v5129, %v5141
        %v5143 = vpop.f32.mrf.mxu0
        %5144 = vdwg.mxu0
        %5145 = vmatpush.bf16.msra.mxu0 %v4815
        %5146 = vmatpush.bf16.msra.mxu0 %v4811
        %5147 = vmatpush.bf16.msra.mxu0 %v4807
        %5148 = vmatpush.bf16.msra.mxu0 %v4803
        %5149 = vmatpush.bf16.msra.mxu0 %v4799
        %5150 = vmatpush.bf16.msra.mxu0 %v4795
        %5151 = vmatpush.bf16.msra.mxu0 %v4791
        %5152 = vmatpush.bf16.msra.mxu0 %v4787
        %5153 = vmatmul.bf16.gmra.mxu0 %v309
        %v5154 = vpop.f32.mrf.mxu0
        %v5155 = vadd.f32 %v4395, %v5154
        %v5156 = vpop.f32.mrf.mxu0
        %5157 = vdwg.mxu0
        %5158 = vmatpush.bf16.msra.mxu0 %v4847
        %5159 = vmatpush.bf16.msra.mxu0 %v4843
        %5160 = vmatpush.bf16.msra.mxu0 %v4839
        %5161 = vmatpush.bf16.msra.mxu0 %v4835
        %5162 = vmatpush.bf16.msra.mxu0 %v4831
        %5163 = vmatpush.bf16.msra.mxu0 %v4827
        %5164 = vmatpush.bf16.msra.mxu0 %v4823
        %5165 = vmatpush.bf16.msra.mxu0 %v4819
        %5166 = vmatmul.bf16.gmra.mxu0 %v310
        %v5167 = vpop.f32.mrf.mxu0
        %v5168 = vadd.f32 %v5155, %v5167
        %v5169 = vpop.f32.mrf.mxu0
        %5170 = vdwg.mxu0
        %5171 = vmatpush.bf16.msra.mxu0 %v4879
        %5172 = vmatpush.bf16.msra.mxu0 %v4875
        %5173 = vmatpush.bf16.msra.mxu0 %v4871
        %5174 = vmatpush.bf16.msra.mxu0 %v4867
        %5175 = vmatpush.bf16.msra.mxu0 %v4863
        %5176 = vmatpush.bf16.msra.mxu0 %v4859
        %5177 = vmatpush.bf16.msra.mxu0 %v4855
        %5178 = vmatpush.bf16.msra.mxu0 %v4851
        %5179 = vmatmul.bf16.gmra.mxu0 %v311
        %v5180 = vpop.f32.mrf.mxu0
        %v5181 = vadd.f32 %v5168, %v5180
        %v5182 = vpop.f32.mrf.mxu0
        %5183 = vdwg.mxu0
        %5184 = vmatpush.bf16.msra.mxu0 %v4911
        %5185 = vmatpush.bf16.msra.mxu0 %v4907
        %5186 = vmatpush.bf16.msra.mxu0 %v4903
        %5187 = vmatpush.bf16.msra.mxu0 %v4899
        %5188 = vmatpush.bf16.msra.mxu0 %v4895
        %5189 = vmatpush.bf16.msra.mxu0 %v4891
        %5190 = vmatpush.bf16.msra.mxu0 %v4887
        %5191 = vmatpush.bf16.msra.mxu0 %v4883
        %5192 = vmatmul.bf16.gmra.mxu0 %v312
        %v5193 = vpop.f32.mrf.mxu0
        %v5194 = vadd.f32 %v5181, %v5193
        %v5195 = vpop.f32.mrf.mxu0
        %5196 = vdwg.mxu0
        %5197 = vmatpush.bf16.msra.mxu0 %v4816
        %5198 = vmatpush.bf16.msra.mxu0 %v4812
        %5199 = vmatpush.bf16.msra.mxu0 %v4808
        %5200 = vmatpush.bf16.msra.mxu0 %v4804
        %5201 = vmatpush.bf16.msra.mxu0 %v4800
        %5202 = vmatpush.bf16.msra.mxu0 %v4796
        %5203 = vmatpush.bf16.msra.mxu0 %v4792
        %5204 = vmatpush.bf16.msra.mxu0 %v4788
        %5205 = vmatmul.bf16.gmra.mxu0 %v309
        %v5206 = vpop.f32.mrf.mxu0
        %v5207 = vadd.f32 %v4396, %v5206
        %v5208 = vpop.f32.mrf.mxu0
        %5209 = vdwg.mxu0
        %5210 = vmatpush.bf16.msra.mxu0 %v4848
        %5211 = vmatpush.bf16.msra.mxu0 %v4844
        %5212 = vmatpush.bf16.msra.mxu0 %v4840
        %5213 = vmatpush.bf16.msra.mxu0 %v4836
        %5214 = vmatpush.bf16.msra.mxu0 %v4832
        %5215 = vmatpush.bf16.msra.mxu0 %v4828
        %5216 = vmatpush.bf16.msra.mxu0 %v4824
        %5217 = vmatpush.bf16.msra.mxu0 %v4820
        %5218 = vmatmul.bf16.gmra.mxu0 %v310
        %v5219 = vpop.f32.mrf.mxu0
        %v5220 = vadd.f32 %v5207, %v5219
        %v5221 = vpop.f32.mrf.mxu0
        %5222 = vdwg.mxu0
        %5223 = vmatpush.bf16.msra.mxu0 %v4880
        %5224 = vmatpush.bf16.msra.mxu0 %v4876
        %5225 = vmatpush.bf16.msra.mxu0 %v4872
        %5226 = vmatpush.bf16.msra.mxu0 %v4868
        %5227 = vmatpush.bf16.msra.mxu0 %v4864
        %5228 = vmatpush.bf16.msra.mxu0 %v4860
        %5229 = vmatpush.bf16.msra.mxu0 %v4856
        %5230 = vmatpush.bf16.msra.mxu0 %v4852
        %5231 = vmatmul.bf16.gmra.mxu0 %v311
        %v5232 = vpop.f32.mrf.mxu0
        %v5233 = vadd.f32 %v5220, %v5232
        %v5234 = vpop.f32.mrf.mxu0
        %5235 = vdwg.mxu0
        %5236 = vmatpush.bf16.msra.mxu0 %v4912
        %5237 = vmatpush.bf16.msra.mxu0 %v4908
        %5238 = vmatpush.bf16.msra.mxu0 %v4904
        %5239 = vmatpush.bf16.msra.mxu0 %v4900
        %5240 = vmatpush.bf16.msra.mxu0 %v4896
        %5241 = vmatpush.bf16.msra.mxu0 %v4892
        %5242 = vmatpush.bf16.msra.mxu0 %v4888
        %5243 = vmatpush.bf16.msra.mxu0 %v4884
        %5244 = vmatmul.bf16.gmra.mxu0 %v312
        %v5245 = vpop.f32.mrf.mxu0
        %v5246 = vadd.f32 %v5233, %v5245
        %v5247 = vpop.f32.mrf.mxu0
        %5248 = vdwg.mxu0
        %v5249 = vmax.f32 %v5090, 0.0
        %v5250 = vmax.f32 %v5142, 0.0
        %v5251 = vmax.f32 %v5194, 0.0
        %v5252 = vmax.f32 %v5246, 0.0
        %v5253 = vpack.c.bf16 %v5249, %v5249
        %v5254 = vpack.c.bf16 %v5250, %v5250
        %v5255 = vpack.c.bf16 %v5251, %v5251
        %v5256 = vpack.c.bf16 %v5252, %v5252
        %s5257 = smul.u32 128, 4
        %s5258 = smul.addr %s5257, 4
        %s5259 = scalar_lea.vmem [#allocation8], %s5258
        %v5260 = vld [vmem:[%s5259] sm:$0xff]
        %v5261 = vld [vmem:[%s5259 + $0x8] sm:$0xff]
        %v5262 = vld [vmem:[%s5259 + $0x10] sm:$0xff]
        %v5263 = vld [vmem:[%s5259 + $0x18] sm:$0xff]
        %v5264 = vld [vmem:[%s5259 + $0x20] sm:$0xff]
        %v5265 = vld [vmem:[%s5259 + $0x28] sm:$0xff]
        %v5266 = vld [vmem:[%s5259 + $0x30] sm:$0xff]
        %v5267 = vld [vmem:[%s5259 + $0x38] sm:$0xff]
        %v5268 = vld [vmem:[%s5259 + $0x40] sm:$0xff]
        %v5269 = vld [vmem:[%s5259 + $0x48] sm:$0xff]
        %v5270 = vld [vmem:[%s5259 + $0x50] sm:$0xff]
        %v5271 = vld [vmem:[%s5259 + $0x58] sm:$0xff]
        %v5272 = vld [vmem:[%s5259 + $0x60] sm:$0xff]
        %v5273 = vld [vmem:[%s5259 + $0x68] sm:$0xff]
        %v5274 = vld [vmem:[%s5259 + $0x70] sm:$0xff]
        %v5275 = vld [vmem:[%s5259 + $0x78] sm:$0xff]
        %v5276 = vld [vmem:[%s5259 + $0x80] sm:$0xff]
        %v5277 = vld [vmem:[%s5259 + $0x88] sm:$0xff]
        %v5278 = vld [vmem:[%s5259 + $0x90] sm:$0xff]
        %v5279 = vld [vmem:[%s5259 + $0x98] sm:$0xff]
        %v5280 = vld [vmem:[%s5259 + $0xa0] sm:$0xff]
        %v5281 = vld [vmem:[%s5259 + $0xa8] sm:$0xff]
        %v5282 = vld [vmem:[%s5259 + $0xb0] sm:$0xff]
        %v5283 = vld [vmem:[%s5259 + $0xb8] sm:$0xff]
        %v5284 = vld [vmem:[%s5259 + $0xc0] sm:$0xff]
        %v5285 = vld [vmem:[%s5259 + $0xc8] sm:$0xff]
        %v5286 = vld [vmem:[%s5259 + $0xd0] sm:$0xff]
        %v5287 = vld [vmem:[%s5259 + $0xd8] sm:$0xff]
        %v5288 = vld [vmem:[%s5259 + $0xe0] sm:$0xff]
        %v5289 = vld [vmem:[%s5259 + $0xe8] sm:$0xff]
        %v5290 = vld [vmem:[%s5259 + $0xf0] sm:$0xff]
        %v5291 = vld [vmem:[%s5259 + $0xf8] sm:$0xff]
        %v5292 = vld [vmem:[%s5259 + $0x100] sm:$0xff]
        %v5293 = vld [vmem:[%s5259 + $0x108] sm:$0xff]
        %v5294 = vld [vmem:[%s5259 + $0x110] sm:$0xff]
        %v5295 = vld [vmem:[%s5259 + $0x118] sm:$0xff]
        %v5296 = vld [vmem:[%s5259 + $0x120] sm:$0xff]
        %v5297 = vld [vmem:[%s5259 + $0x128] sm:$0xff]
        %v5298 = vld [vmem:[%s5259 + $0x130] sm:$0xff]
        %v5299 = vld [vmem:[%s5259 + $0x138] sm:$0xff]
        %v5300 = vld [vmem:[%s5259 + $0x140] sm:$0xff]
        %v5301 = vld [vmem:[%s5259 + $0x148] sm:$0xff]
        %v5302 = vld [vmem:[%s5259 + $0x150] sm:$0xff]
        %v5303 = vld [vmem:[%s5259 + $0x158] sm:$0xff]
        %v5304 = vld [vmem:[%s5259 + $0x160] sm:$0xff]
        %v5305 = vld [vmem:[%s5259 + $0x168] sm:$0xff]
        %v5306 = vld [vmem:[%s5259 + $0x170] sm:$0xff]
        %v5307 = vld [vmem:[%s5259 + $0x178] sm:$0xff]
        %v5308 = vld [vmem:[%s5259 + $0x180] sm:$0xff]
        %v5309 = vld [vmem:[%s5259 + $0x188] sm:$0xff]
        %v5310 = vld [vmem:[%s5259 + $0x190] sm:$0xff]
        %v5311 = vld [vmem:[%s5259 + $0x198] sm:$0xff]
        %v5312 = vld [vmem:[%s5259 + $0x1a0] sm:$0xff]
        %v5313 = vld [vmem:[%s5259 + $0x1a8] sm:$0xff]
        %v5314 = vld [vmem:[%s5259 + $0x1b0] sm:$0xff]
        %v5315 = vld [vmem:[%s5259 + $0x1b8] sm:$0xff]
        %v5316 = vld [vmem:[%s5259 + $0x1c0] sm:$0xff]
        %v5317 = vld [vmem:[%s5259 + $0x1c8] sm:$0xff]
        %v5318 = vld [vmem:[%s5259 + $0x1d0] sm:$0xff]
        %v5319 = vld [vmem:[%s5259 + $0x1d8] sm:$0xff]
        %v5320 = vld [vmem:[%s5259 + $0x1e0] sm:$0xff]
        %v5321 = vld [vmem:[%s5259 + $0x1e8] sm:$0xff]
        %v5322 = vld [vmem:[%s5259 + $0x1f0] sm:$0xff]
        %v5323 = vld [vmem:[%s5259 + $0x1f8] sm:$0xff]
        %v5324 = vld [vmem:[%s5259 + $0x200] sm:$0xff]
        %v5325 = vld [vmem:[%s5259 + $0x208] sm:$0xff]
        %v5326 = vld [vmem:[%s5259 + $0x210] sm:$0xff]
        %v5327 = vld [vmem:[%s5259 + $0x218] sm:$0xff]
        %v5328 = vld [vmem:[%s5259 + $0x220] sm:$0xff]
        %v5329 = vld [vmem:[%s5259 + $0x228] sm:$0xff]
        %v5330 = vld [vmem:[%s5259 + $0x230] sm:$0xff]
        %v5331 = vld [vmem:[%s5259 + $0x238] sm:$0xff]
        %v5332 = vld [vmem:[%s5259 + $0x240] sm:$0xff]
        %v5333 = vld [vmem:[%s5259 + $0x248] sm:$0xff]
        %v5334 = vld [vmem:[%s5259 + $0x250] sm:$0xff]
        %v5335 = vld [vmem:[%s5259 + $0x258] sm:$0xff]
        %v5336 = vld [vmem:[%s5259 + $0x260] sm:$0xff]
        %v5337 = vld [vmem:[%s5259 + $0x268] sm:$0xff]
        %v5338 = vld [vmem:[%s5259 + $0x270] sm:$0xff]
        %v5339 = vld [vmem:[%s5259 + $0x278] sm:$0xff]
        %v5340 = vld [vmem:[%s5259 + $0x280] sm:$0xff]
        %v5341 = vld [vmem:[%s5259 + $0x288] sm:$0xff]
        %v5342 = vld [vmem:[%s5259 + $0x290] sm:$0xff]
        %v5343 = vld [vmem:[%s5259 + $0x298] sm:$0xff]
        %v5344 = vld [vmem:[%s5259 + $0x2a0] sm:$0xff]
        %v5345 = vld [vmem:[%s5259 + $0x2a8] sm:$0xff]
        %v5346 = vld [vmem:[%s5259 + $0x2b0] sm:$0xff]
        %v5347 = vld [vmem:[%s5259 + $0x2b8] sm:$0xff]
        %v5348 = vld [vmem:[%s5259 + $0x2c0] sm:$0xff]
        %v5349 = vld [vmem:[%s5259 + $0x2c8] sm:$0xff]
        %v5350 = vld [vmem:[%s5259 + $0x2d0] sm:$0xff]
        %v5351 = vld [vmem:[%s5259 + $0x2d8] sm:$0xff]
        %v5352 = vld [vmem:[%s5259 + $0x2e0] sm:$0xff]
        %v5353 = vld [vmem:[%s5259 + $0x2e8] sm:$0xff]
        %v5354 = vld [vmem:[%s5259 + $0x2f0] sm:$0xff]
        %v5355 = vld [vmem:[%s5259 + $0x2f8] sm:$0xff]
        %v5356 = vld [vmem:[%s5259 + $0x300] sm:$0xff]
        %v5357 = vld [vmem:[%s5259 + $0x308] sm:$0xff]
        %v5358 = vld [vmem:[%s5259 + $0x310] sm:$0xff]
        %v5359 = vld [vmem:[%s5259 + $0x318] sm:$0xff]
        %v5360 = vld [vmem:[%s5259 + $0x320] sm:$0xff]
        %v5361 = vld [vmem:[%s5259 + $0x328] sm:$0xff]
        %v5362 = vld [vmem:[%s5259 + $0x330] sm:$0xff]
        %v5363 = vld [vmem:[%s5259 + $0x338] sm:$0xff]
        %v5364 = vld [vmem:[%s5259 + $0x340] sm:$0xff]
        %v5365 = vld [vmem:[%s5259 + $0x348] sm:$0xff]
        %v5366 = vld [vmem:[%s5259 + $0x350] sm:$0xff]
        %v5367 = vld [vmem:[%s5259 + $0x358] sm:$0xff]
        %v5368 = vld [vmem:[%s5259 + $0x360] sm:$0xff]
        %v5369 = vld [vmem:[%s5259 + $0x368] sm:$0xff]
        %v5370 = vld [vmem:[%s5259 + $0x370] sm:$0xff]
        %v5371 = vld [vmem:[%s5259 + $0x378] sm:$0xff]
        %v5372 = vld [vmem:[%s5259 + $0x380] sm:$0xff]
        %v5373 = vld [vmem:[%s5259 + $0x388] sm:$0xff]
        %v5374 = vld [vmem:[%s5259 + $0x390] sm:$0xff]
        %v5375 = vld [vmem:[%s5259 + $0x398] sm:$0xff]
        %v5376 = vld [vmem:[%s5259 + $0x3a0] sm:$0xff]
        %v5377 = vld [vmem:[%s5259 + $0x3a8] sm:$0xff]
        %v5378 = vld [vmem:[%s5259 + $0x3b0] sm:$0xff]
        %v5379 = vld [vmem:[%s5259 + $0x3b8] sm:$0xff]
        %v5380 = vld [vmem:[%s5259 + $0x3c0] sm:$0xff]
        %v5381 = vld [vmem:[%s5259 + $0x3c8] sm:$0xff]
        %v5382 = vld [vmem:[%s5259 + $0x3d0] sm:$0xff]
        %v5383 = vld [vmem:[%s5259 + $0x3d8] sm:$0xff]
        %v5384 = vld [vmem:[%s5259 + $0x3e0] sm:$0xff]
        %v5385 = vld [vmem:[%s5259 + $0x3e8] sm:$0xff]
        %v5386 = vld [vmem:[%s5259 + $0x3f0] sm:$0xff]
        %v5387 = vld [vmem:[%s5259 + $0x3f8] sm:$0xff]
        %v5516 = vunpack.c.l.b16 %v5260
        %v5517 = vunpack.c.h.b16 %v5260
        %v5518 = vunpack.c.l.b16 %v5261
        %v5519 = vunpack.c.h.b16 %v5261
        %v5520 = vunpack.c.l.b16 %v5262
        %v5521 = vunpack.c.h.b16 %v5262
        %v5522 = vunpack.c.l.b16 %v5263
        %v5523 = vunpack.c.h.b16 %v5263
        %v5524 = vunpack.c.l.b16 %v5264
        %v5525 = vunpack.c.h.b16 %v5264
        %v5526 = vunpack.c.l.b16 %v5265
        %v5527 = vunpack.c.h.b16 %v5265
        %v5528 = vunpack.c.l.b16 %v5266
        %v5529 = vunpack.c.h.b16 %v5266
        %v5530 = vunpack.c.l.b16 %v5267
        %v5531 = vunpack.c.h.b16 %v5267
        %v5532 = vunpack.c.l.b16 %v5268
        %v5533 = vunpack.c.h.b16 %v5268
        %v5534 = vunpack.c.l.b16 %v5269
        %v5535 = vunpack.c.h.b16 %v5269
        %v5536 = vunpack.c.l.b16 %v5270
        %v5537 = vunpack.c.h.b16 %v5270
        %v5538 = vunpack.c.l.b16 %v5271
        %v5539 = vunpack.c.h.b16 %v5271
        %v5540 = vunpack.c.l.b16 %v5272
        %v5541 = vunpack.c.h.b16 %v5272
        %v5542 = vunpack.c.l.b16 %v5273
        %v5543 = vunpack.c.h.b16 %v5273
        %v5544 = vunpack.c.l.b16 %v5274
        %v5545 = vunpack.c.h.b16 %v5274
        %v5546 = vunpack.c.l.b16 %v5275
        %v5547 = vunpack.c.h.b16 %v5275
        %v5548 = vunpack.c.l.b16 %v5276
        %v5549 = vunpack.c.h.b16 %v5276
        %v5550 = vunpack.c.l.b16 %v5277
        %v5551 = vunpack.c.h.b16 %v5277
        %v5552 = vunpack.c.l.b16 %v5278
        %v5553 = vunpack.c.h.b16 %v5278
        %v5554 = vunpack.c.l.b16 %v5279
        %v5555 = vunpack.c.h.b16 %v5279
        %v5556 = vunpack.c.l.b16 %v5280
        %v5557 = vunpack.c.h.b16 %v5280
        %v5558 = vunpack.c.l.b16 %v5281
        %v5559 = vunpack.c.h.b16 %v5281
        %v5560 = vunpack.c.l.b16 %v5282
        %v5561 = vunpack.c.h.b16 %v5282
        %v5562 = vunpack.c.l.b16 %v5283
        %v5563 = vunpack.c.h.b16 %v5283
        %v5564 = vunpack.c.l.b16 %v5284
        %v5565 = vunpack.c.h.b16 %v5284
        %v5566 = vunpack.c.l.b16 %v5285
        %v5567 = vunpack.c.h.b16 %v5285
        %v5568 = vunpack.c.l.b16 %v5286
        %v5569 = vunpack.c.h.b16 %v5286
        %v5570 = vunpack.c.l.b16 %v5287
        %v5571 = vunpack.c.h.b16 %v5287
        %v5572 = vunpack.c.l.b16 %v5288
        %v5573 = vunpack.c.h.b16 %v5288
        %v5574 = vunpack.c.l.b16 %v5289
        %v5575 = vunpack.c.h.b16 %v5289
        %v5576 = vunpack.c.l.b16 %v5290
        %v5577 = vunpack.c.h.b16 %v5290
        %v5578 = vunpack.c.l.b16 %v5291
        %v5579 = vunpack.c.h.b16 %v5291
        %v5580 = vunpack.c.l.b16 %v5292
        %v5581 = vunpack.c.h.b16 %v5292
        %v5582 = vunpack.c.l.b16 %v5293
        %v5583 = vunpack.c.h.b16 %v5293
        %v5584 = vunpack.c.l.b16 %v5294
        %v5585 = vunpack.c.h.b16 %v5294
        %v5586 = vunpack.c.l.b16 %v5295
        %v5587 = vunpack.c.h.b16 %v5295
        %v5588 = vunpack.c.l.b16 %v5296
        %v5589 = vunpack.c.h.b16 %v5296
        %v5590 = vunpack.c.l.b16 %v5297
        %v5591 = vunpack.c.h.b16 %v5297
        %v5592 = vunpack.c.l.b16 %v5298
        %v5593 = vunpack.c.h.b16 %v5298
        %v5594 = vunpack.c.l.b16 %v5299
        %v5595 = vunpack.c.h.b16 %v5299
        %v5596 = vunpack.c.l.b16 %v5300
        %v5597 = vunpack.c.h.b16 %v5300
        %v5598 = vunpack.c.l.b16 %v5301
        %v5599 = vunpack.c.h.b16 %v5301
        %v5600 = vunpack.c.l.b16 %v5302
        %v5601 = vunpack.c.h.b16 %v5302
        %v5602 = vunpack.c.l.b16 %v5303
        %v5603 = vunpack.c.h.b16 %v5303
        %v5604 = vunpack.c.l.b16 %v5304
        %v5605 = vunpack.c.h.b16 %v5304
        %v5606 = vunpack.c.l.b16 %v5305
        %v5607 = vunpack.c.h.b16 %v5305
        %v5608 = vunpack.c.l.b16 %v5306
        %v5609 = vunpack.c.h.b16 %v5306
        %v5610 = vunpack.c.l.b16 %v5307
        %v5611 = vunpack.c.h.b16 %v5307
        %v5612 = vunpack.c.l.b16 %v5308
        %v5613 = vunpack.c.h.b16 %v5308
        %v5614 = vunpack.c.l.b16 %v5309
        %v5615 = vunpack.c.h.b16 %v5309
        %v5616 = vunpack.c.l.b16 %v5310
        %v5617 = vunpack.c.h.b16 %v5310
        %v5618 = vunpack.c.l.b16 %v5311
        %v5619 = vunpack.c.h.b16 %v5311
        %v5620 = vunpack.c.l.b16 %v5312
        %v5621 = vunpack.c.h.b16 %v5312
        %v5622 = vunpack.c.l.b16 %v5313
        %v5623 = vunpack.c.h.b16 %v5313
        %v5624 = vunpack.c.l.b16 %v5314
        %v5625 = vunpack.c.h.b16 %v5314
        %v5626 = vunpack.c.l.b16 %v5315
        %v5627 = vunpack.c.h.b16 %v5315
        %v5628 = vunpack.c.l.b16 %v5316
        %v5629 = vunpack.c.h.b16 %v5316
        %v5630 = vunpack.c.l.b16 %v5317
        %v5631 = vunpack.c.h.b16 %v5317
        %v5632 = vunpack.c.l.b16 %v5318
        %v5633 = vunpack.c.h.b16 %v5318
        %v5634 = vunpack.c.l.b16 %v5319
        %v5635 = vunpack.c.h.b16 %v5319
        %v5636 = vunpack.c.l.b16 %v5320
        %v5637 = vunpack.c.h.b16 %v5320
        %v5638 = vunpack.c.l.b16 %v5321
        %v5639 = vunpack.c.h.b16 %v5321
        %v5640 = vunpack.c.l.b16 %v5322
        %v5641 = vunpack.c.h.b16 %v5322
        %v5642 = vunpack.c.l.b16 %v5323
        %v5643 = vunpack.c.h.b16 %v5323
        %v5644 = vunpack.c.l.b16 %v5324
        %v5645 = vunpack.c.h.b16 %v5324
        %v5646 = vunpack.c.l.b16 %v5325
        %v5647 = vunpack.c.h.b16 %v5325
        %v5648 = vunpack.c.l.b16 %v5326
        %v5649 = vunpack.c.h.b16 %v5326
        %v5650 = vunpack.c.l.b16 %v5327
        %v5651 = vunpack.c.h.b16 %v5327
        %v5652 = vunpack.c.l.b16 %v5328
        %v5653 = vunpack.c.h.b16 %v5328
        %v5654 = vunpack.c.l.b16 %v5329
        %v5655 = vunpack.c.h.b16 %v5329
        %v5656 = vunpack.c.l.b16 %v5330
        %v5657 = vunpack.c.h.b16 %v5330
        %v5658 = vunpack.c.l.b16 %v5331
        %v5659 = vunpack.c.h.b16 %v5331
        %v5660 = vunpack.c.l.b16 %v5332
        %v5661 = vunpack.c.h.b16 %v5332
        %v5662 = vunpack.c.l.b16 %v5333
        %v5663 = vunpack.c.h.b16 %v5333
        %v5664 = vunpack.c.l.b16 %v5334
        %v5665 = vunpack.c.h.b16 %v5334
        %v5666 = vunpack.c.l.b16 %v5335
        %v5667 = vunpack.c.h.b16 %v5335
        %v5668 = vunpack.c.l.b16 %v5336
        %v5669 = vunpack.c.h.b16 %v5336
        %v5670 = vunpack.c.l.b16 %v5337
        %v5671 = vunpack.c.h.b16 %v5337
        %v5672 = vunpack.c.l.b16 %v5338
        %v5673 = vunpack.c.h.b16 %v5338
        %v5674 = vunpack.c.l.b16 %v5339
        %v5675 = vunpack.c.h.b16 %v5339
        %v5676 = vunpack.c.l.b16 %v5340
        %v5677 = vunpack.c.h.b16 %v5340
        %v5678 = vunpack.c.l.b16 %v5341
        %v5679 = vunpack.c.h.b16 %v5341
        %v5680 = vunpack.c.l.b16 %v5342
        %v5681 = vunpack.c.h.b16 %v5342
        %v5682 = vunpack.c.l.b16 %v5343
        %v5683 = vunpack.c.h.b16 %v5343
        %v5684 = vunpack.c.l.b16 %v5344
        %v5685 = vunpack.c.h.b16 %v5344
        %v5686 = vunpack.c.l.b16 %v5345
        %v5687 = vunpack.c.h.b16 %v5345
        %v5688 = vunpack.c.l.b16 %v5346
        %v5689 = vunpack.c.h.b16 %v5346
        %v5690 = vunpack.c.l.b16 %v5347
        %v5691 = vunpack.c.h.b16 %v5347
        %v5692 = vunpack.c.l.b16 %v5348
        %v5693 = vunpack.c.h.b16 %v5348
        %v5694 = vunpack.c.l.b16 %v5349
        %v5695 = vunpack.c.h.b16 %v5349
        %v5696 = vunpack.c.l.b16 %v5350
        %v5697 = vunpack.c.h.b16 %v5350
        %v5698 = vunpack.c.l.b16 %v5351
        %v5699 = vunpack.c.h.b16 %v5351
        %v5700 = vunpack.c.l.b16 %v5352
        %v5701 = vunpack.c.h.b16 %v5352
        %v5702 = vunpack.c.l.b16 %v5353
        %v5703 = vunpack.c.h.b16 %v5353
        %v5704 = vunpack.c.l.b16 %v5354
        %v5705 = vunpack.c.h.b16 %v5354
        %v5706 = vunpack.c.l.b16 %v5355
        %v5707 = vunpack.c.h.b16 %v5355
        %v5708 = vunpack.c.l.b16 %v5356
        %v5709 = vunpack.c.h.b16 %v5356
        %v5710 = vunpack.c.l.b16 %v5357
        %v5711 = vunpack.c.h.b16 %v5357
        %v5712 = vunpack.c.l.b16 %v5358
        %v5713 = vunpack.c.h.b16 %v5358
        %v5714 = vunpack.c.l.b16 %v5359
        %v5715 = vunpack.c.h.b16 %v5359
        %v5716 = vunpack.c.l.b16 %v5360
        %v5717 = vunpack.c.h.b16 %v5360
        %v5718 = vunpack.c.l.b16 %v5361
        %v5719 = vunpack.c.h.b16 %v5361
        %v5720 = vunpack.c.l.b16 %v5362
        %v5721 = vunpack.c.h.b16 %v5362
        %v5722 = vunpack.c.l.b16 %v5363
        %v5723 = vunpack.c.h.b16 %v5363
        %v5724 = vunpack.c.l.b16 %v5364
        %v5725 = vunpack.c.h.b16 %v5364
        %v5726 = vunpack.c.l.b16 %v5365
        %v5727 = vunpack.c.h.b16 %v5365
        %v5728 = vunpack.c.l.b16 %v5366
        %v5729 = vunpack.c.h.b16 %v5366
        %v5730 = vunpack.c.l.b16 %v5367
        %v5731 = vunpack.c.h.b16 %v5367
        %v5732 = vunpack.c.l.b16 %v5368
        %v5733 = vunpack.c.h.b16 %v5368
        %v5734 = vunpack.c.l.b16 %v5369
        %v5735 = vunpack.c.h.b16 %v5369
        %v5736 = vunpack.c.l.b16 %v5370
        %v5737 = vunpack.c.h.b16 %v5370
        %v5738 = vunpack.c.l.b16 %v5371
        %v5739 = vunpack.c.h.b16 %v5371
        %v5740 = vunpack.c.l.b16 %v5372
        %v5741 = vunpack.c.h.b16 %v5372
        %v5742 = vunpack.c.l.b16 %v5373
        %v5743 = vunpack.c.h.b16 %v5373
        %v5744 = vunpack.c.l.b16 %v5374
        %v5745 = vunpack.c.h.b16 %v5374
        %v5746 = vunpack.c.l.b16 %v5375
        %v5747 = vunpack.c.h.b16 %v5375
        %v5748 = vunpack.c.l.b16 %v5376
        %v5749 = vunpack.c.h.b16 %v5376
        %v5750 = vunpack.c.l.b16 %v5377
        %v5751 = vunpack.c.h.b16 %v5377
        %v5752 = vunpack.c.l.b16 %v5378
        %v5753 = vunpack.c.h.b16 %v5378
        %v5754 = vunpack.c.l.b16 %v5379
        %v5755 = vunpack.c.h.b16 %v5379
        %v5756 = vunpack.c.l.b16 %v5380
        %v5757 = vunpack.c.h.b16 %v5380
        %v5758 = vunpack.c.l.b16 %v5381
        %v5759 = vunpack.c.h.b16 %v5381
        %v5760 = vunpack.c.l.b16 %v5382
        %v5761 = vunpack.c.h.b16 %v5382
        %v5762 = vunpack.c.l.b16 %v5383
        %v5763 = vunpack.c.h.b16 %v5383
        %v5764 = vunpack.c.l.b16 %v5384
        %v5765 = vunpack.c.h.b16 %v5384
        %v5766 = vunpack.c.l.b16 %v5385
        %v5767 = vunpack.c.h.b16 %v5385
        %v5768 = vunpack.c.l.b16 %v5386
        %v5769 = vunpack.c.h.b16 %v5386
        %v5770 = vunpack.c.l.b16 %v5387
        %v5771 = vunpack.c.h.b16 %v5387
        %v5772 = vpack.c.b16 %v5520, %v5516
        %v5773 = vpack.c.b16 %v5521, %v5517
        %v5774 = vpack.c.b16 %v5522, %v5518
        %v5775 = vpack.c.b16 %v5523, %v5519
        %v5776 = vpack.c.b16 %v5528, %v5524
        %v5777 = vpack.c.b16 %v5529, %v5525
        %v5778 = vpack.c.b16 %v5530, %v5526
        %v5779 = vpack.c.b16 %v5531, %v5527
        %v5780 = vpack.c.b16 %v5536, %v5532
        %v5781 = vpack.c.b16 %v5537, %v5533
        %v5782 = vpack.c.b16 %v5538, %v5534
        %v5783 = vpack.c.b16 %v5539, %v5535
        %v5784 = vpack.c.b16 %v5544, %v5540
        %v5785 = vpack.c.b16 %v5545, %v5541
        %v5786 = vpack.c.b16 %v5546, %v5542
        %v5787 = vpack.c.b16 %v5547, %v5543
        %v5788 = vpack.c.b16 %v5552, %v5548
        %v5789 = vpack.c.b16 %v5553, %v5549
        %v5790 = vpack.c.b16 %v5554, %v5550
        %v5791 = vpack.c.b16 %v5555, %v5551
        %v5792 = vpack.c.b16 %v5560, %v5556
        %v5793 = vpack.c.b16 %v5561, %v5557
        %v5794 = vpack.c.b16 %v5562, %v5558
        %v5795 = vpack.c.b16 %v5563, %v5559
        %v5796 = vpack.c.b16 %v5568, %v5564
        %v5797 = vpack.c.b16 %v5569, %v5565
        %v5798 = vpack.c.b16 %v5570, %v5566
        %v5799 = vpack.c.b16 %v5571, %v5567
        %v5800 = vpack.c.b16 %v5576, %v5572
        %v5801 = vpack.c.b16 %v5577, %v5573
        %v5802 = vpack.c.b16 %v5578, %v5574
        %v5803 = vpack.c.b16 %v5579, %v5575
        %v5804 = vpack.c.b16 %v5584, %v5580
        %v5805 = vpack.c.b16 %v5585, %v5581
        %v5806 = vpack.c.b16 %v5586, %v5582
        %v5807 = vpack.c.b16 %v5587, %v5583
        %v5808 = vpack.c.b16 %v5592, %v5588
        %v5809 = vpack.c.b16 %v5593, %v5589
        %v5810 = vpack.c.b16 %v5594, %v5590
        %v5811 = vpack.c.b16 %v5595, %v5591
        %v5812 = vpack.c.b16 %v5600, %v5596
        %v5813 = vpack.c.b16 %v5601, %v5597
        %v5814 = vpack.c.b16 %v5602, %v5598
        %v5815 = vpack.c.b16 %v5603, %v5599
        %v5816 = vpack.c.b16 %v5608, %v5604
        %v5817 = vpack.c.b16 %v5609, %v5605
        %v5818 = vpack.c.b16 %v5610, %v5606
        %v5819 = vpack.c.b16 %v5611, %v5607
        %v5820 = vpack.c.b16 %v5616, %v5612
        %v5821 = vpack.c.b16 %v5617, %v5613
        %v5822 = vpack.c.b16 %v5618, %v5614
        %v5823 = vpack.c.b16 %v5619, %v5615
        %v5824 = vpack.c.b16 %v5624, %v5620
        %v5825 = vpack.c.b16 %v5625, %v5621
        %v5826 = vpack.c.b16 %v5626, %v5622
        %v5827 = vpack.c.b16 %v5627, %v5623
        %v5828 = vpack.c.b16 %v5632, %v5628
        %v5829 = vpack.c.b16 %v5633, %v5629
        %v5830 = vpack.c.b16 %v5634, %v5630
        %v5831 = vpack.c.b16 %v5635, %v5631
        %v5832 = vpack.c.b16 %v5640, %v5636
        %v5833 = vpack.c.b16 %v5641, %v5637
        %v5834 = vpack.c.b16 %v5642, %v5638
        %v5835 = vpack.c.b16 %v5643, %v5639
        %v5836 = vpack.c.b16 %v5648, %v5644
        %v5837 = vpack.c.b16 %v5649, %v5645
        %v5838 = vpack.c.b16 %v5650, %v5646
        %v5839 = vpack.c.b16 %v5651, %v5647
        %v5840 = vpack.c.b16 %v5656, %v5652
        %v5841 = vpack.c.b16 %v5657, %v5653
        %v5842 = vpack.c.b16 %v5658, %v5654
        %v5843 = vpack.c.b16 %v5659, %v5655
        %v5844 = vpack.c.b16 %v5664, %v5660
        %v5845 = vpack.c.b16 %v5665, %v5661
        %v5846 = vpack.c.b16 %v5666, %v5662
        %v5847 = vpack.c.b16 %v5667, %v5663
        %v5848 = vpack.c.b16 %v5672, %v5668
        %v5849 = vpack.c.b16 %v5673, %v5669
        %v5850 = vpack.c.b16 %v5674, %v5670
        %v5851 = vpack.c.b16 %v5675, %v5671
        %v5852 = vpack.c.b16 %v5680, %v5676
        %v5853 = vpack.c.b16 %v5681, %v5677
        %v5854 = vpack.c.b16 %v5682, %v5678
        %v5855 = vpack.c.b16 %v5683, %v5679
        %v5856 = vpack.c.b16 %v5688, %v5684
        %v5857 = vpack.c.b16 %v5689, %v5685
        %v5858 = vpack.c.b16 %v5690, %v5686
        %v5859 = vpack.c.b16 %v5691, %v5687
        %v5860 = vpack.c.b16 %v5696, %v5692
        %v5861 = vpack.c.b16 %v5697, %v5693
        %v5862 = vpack.c.b16 %v5698, %v5694
        %v5863 = vpack.c.b16 %v5699, %v5695
        %v5864 = vpack.c.b16 %v5704, %v5700
        %v5865 = vpack.c.b16 %v5705, %v5701
        %v5866 = vpack.c.b16 %v5706, %v5702
        %v5867 = vpack.c.b16 %v5707, %v5703
        %v5868 = vpack.c.b16 %v5712, %v5708
        %v5869 = vpack.c.b16 %v5713, %v5709
        %v5870 = vpack.c.b16 %v5714, %v5710
        %v5871 = vpack.c.b16 %v5715, %v5711
        %v5872 = vpack.c.b16 %v5720, %v5716
        %v5873 = vpack.c.b16 %v5721, %v5717
        %v5874 = vpack.c.b16 %v5722, %v5718
        %v5875 = vpack.c.b16 %v5723, %v5719
        %v5876 = vpack.c.b16 %v5728, %v5724
        %v5877 = vpack.c.b16 %v5729, %v5725
        %v5878 = vpack.c.b16 %v5730, %v5726
        %v5879 = vpack.c.b16 %v5731, %v5727
        %v5880 = vpack.c.b16 %v5736, %v5732
        %v5881 = vpack.c.b16 %v5737, %v5733
        %v5882 = vpack.c.b16 %v5738, %v5734
        %v5883 = vpack.c.b16 %v5739, %v5735
        %v5884 = vpack.c.b16 %v5744, %v5740
        %v5885 = vpack.c.b16 %v5745, %v5741
        %v5886 = vpack.c.b16 %v5746, %v5742
        %v5887 = vpack.c.b16 %v5747, %v5743
        %v5888 = vpack.c.b16 %v5752, %v5748
        %v5889 = vpack.c.b16 %v5753, %v5749
        %v5890 = vpack.c.b16 %v5754, %v5750
        %v5891 = vpack.c.b16 %v5755, %v5751
        %v5892 = vpack.c.b16 %v5760, %v5756
        %v5893 = vpack.c.b16 %v5761, %v5757
        %v5894 = vpack.c.b16 %v5762, %v5758
        %v5895 = vpack.c.b16 %v5763, %v5759
        %v5896 = vpack.c.b16 %v5768, %v5764
        %v5897 = vpack.c.b16 %v5769, %v5765
        %v5898 = vpack.c.b16 %v5770, %v5766
        %v5899 = vpack.c.b16 %v5771, %v5767
        %6028 = vmatpush.bf16.msra.mxu0 %v5800
        %6029 = vmatpush.bf16.msra.mxu0 %v5796
        %6030 = vmatpush.bf16.msra.mxu0 %v5792
        %6031 = vmatpush.bf16.msra.mxu0 %v5788
        %6032 = vmatpush.bf16.msra.mxu0 %v5784
        %6033 = vmatpush.bf16.msra.mxu0 %v5780
        %6034 = vmatpush.bf16.msra.mxu0 %v5776
        %6035 = vmatpush.bf16.msra.mxu0 %v5772
        %6036 = vmatmul.bf16.gmra.mxu0 %v5253
        %v6037 = vpop.f32.mrf.mxu0
        %v6038 = vadd.f32 0.0, %v6037
        %v6039 = vpop.f32.mrf.mxu0
        %6040 = vdwg.mxu0
        %6041 = vmatpush.bf16.msra.mxu0 %v5832
        %6042 = vmatpush.bf16.msra.mxu0 %v5828
        %6043 = vmatpush.bf16.msra.mxu0 %v5824
        %6044 = vmatpush.bf16.msra.mxu0 %v5820
        %6045 = vmatpush.bf16.msra.mxu0 %v5816
        %6046 = vmatpush.bf16.msra.mxu0 %v5812
        %6047 = vmatpush.bf16.msra.mxu0 %v5808
        %6048 = vmatpush.bf16.msra.mxu0 %v5804
        %6049 = vmatmul.bf16.gmra.mxu0 %v5254
        %v6050 = vpop.f32.mrf.mxu0
        %v6051 = vadd.f32 %v6038, %v6050
        %v6052 = vpop.f32.mrf.mxu0
        %6053 = vdwg.mxu0
        %6054 = vmatpush.bf16.msra.mxu0 %v5864
        %6055 = vmatpush.bf16.msra.mxu0 %v5860
        %6056 = vmatpush.bf16.msra.mxu0 %v5856
        %6057 = vmatpush.bf16.msra.mxu0 %v5852
        %6058 = vmatpush.bf16.msra.mxu0 %v5848
        %6059 = vmatpush.bf16.msra.mxu0 %v5844
        %6060 = vmatpush.bf16.msra.mxu0 %v5840
        %6061 = vmatpush.bf16.msra.mxu0 %v5836
        %6062 = vmatmul.bf16.gmra.mxu0 %v5255
        %v6063 = vpop.f32.mrf.mxu0
        %v6064 = vadd.f32 %v6051, %v6063
        %v6065 = vpop.f32.mrf.mxu0
        %6066 = vdwg.mxu0
        %6067 = vmatpush.bf16.msra.mxu0 %v5896
        %6068 = vmatpush.bf16.msra.mxu0 %v5892
        %6069 = vmatpush.bf16.msra.mxu0 %v5888
        %6070 = vmatpush.bf16.msra.mxu0 %v5884
        %6071 = vmatpush.bf16.msra.mxu0 %v5880
        %6072 = vmatpush.bf16.msra.mxu0 %v5876
        %6073 = vmatpush.bf16.msra.mxu0 %v5872
        %6074 = vmatpush.bf16.msra.mxu0 %v5868
        %6075 = vmatmul.bf16.gmra.mxu0 %v5256
        %v6076 = vpop.f32.mrf.mxu0
        %v6077 = vadd.f32 %v6064, %v6076
        %v6078 = vpop.f32.mrf.mxu0
        %6079 = vdwg.mxu0
        %6080 = vmatpush.bf16.msra.mxu0 %v5801
        %6081 = vmatpush.bf16.msra.mxu0 %v5797
        %6082 = vmatpush.bf16.msra.mxu0 %v5793
        %6083 = vmatpush.bf16.msra.mxu0 %v5789
        %6084 = vmatpush.bf16.msra.mxu0 %v5785
        %6085 = vmatpush.bf16.msra.mxu0 %v5781
        %6086 = vmatpush.bf16.msra.mxu0 %v5777
        %6087 = vmatpush.bf16.msra.mxu0 %v5773
        %6088 = vmatmul.bf16.gmra.mxu0 %v5253
        %v6089 = vpop.f32.mrf.mxu0
        %v6090 = vadd.f32 0.0, %v6089
        %v6091 = vpop.f32.mrf.mxu0
        %6092 = vdwg.mxu0
        %6093 = vmatpush.bf16.msra.mxu0 %v5833
        %6094 = vmatpush.bf16.msra.mxu0 %v5829
        %6095 = vmatpush.bf16.msra.mxu0 %v5825
        %6096 = vmatpush.bf16.msra.mxu0 %v5821
        %6097 = vmatpush.bf16.msra.mxu0 %v5817
        %6098 = vmatpush.bf16.msra.mxu0 %v5813
        %6099 = vmatpush.bf16.msra.mxu0 %v5809
        %6100 = vmatpush.bf16.msra.mxu0 %v5805
        %6101 = vmatmul.bf16.gmra.mxu0 %v5254
        %v6102 = vpop.f32.mrf.mxu0
        %v6103 = vadd.f32 %v6090, %v6102
        %v6104 = vpop.f32.mrf.mxu0
        %6105 = vdwg.mxu0
        %6106 = vmatpush.bf16.msra.mxu0 %v5865
        %6107 = vmatpush.bf16.msra.mxu0 %v5861
        %6108 = vmatpush.bf16.msra.mxu0 %v5857
        %6109 = vmatpush.bf16.msra.mxu0 %v5853
        %6110 = vmatpush.bf16.msra.mxu0 %v5849
        %6111 = vmatpush.bf16.msra.mxu0 %v5845
        %6112 = vmatpush.bf16.msra.mxu0 %v5841
        %6113 = vmatpush.bf16.msra.mxu0 %v5837
        %6114 = vmatmul.bf16.gmra.mxu0 %v5255
        %v6115 = vpop.f32.mrf.mxu0
        %v6116 = vadd.f32 %v6103, %v6115
        %v6117 = vpop.f32.mrf.mxu0
        %6118 = vdwg.mxu0
        %6119 = vmatpush.bf16.msra.mxu0 %v5897
        %6120 = vmatpush.bf16.msra.mxu0 %v5893
        %6121 = vmatpush.bf16.msra.mxu0 %v5889
        %6122 = vmatpush.bf16.msra.mxu0 %v5885
        %6123 = vmatpush.bf16.msra.mxu0 %v5881
        %6124 = vmatpush.bf16.msra.mxu0 %v5877
        %6125 = vmatpush.bf16.msra.mxu0 %v5873
        %6126 = vmatpush.bf16.msra.mxu0 %v5869
        %6127 = vmatmul.bf16.gmra.mxu0 %v5256
        %v6128 = vpop.f32.mrf.mxu0
        %v6129 = vadd.f32 %v6116, %v6128
        %v6130 = vpop.f32.mrf.mxu0
        %6131 = vdwg.mxu0
        %6132 = vmatpush.bf16.msra.mxu0 %v5802
        %6133 = vmatpush.bf16.msra.mxu0 %v5798
        %6134 = vmatpush.bf16.msra.mxu0 %v5794
        %6135 = vmatpush.bf16.msra.mxu0 %v5790
        %6136 = vmatpush.bf16.msra.mxu0 %v5786
        %6137 = vmatpush.bf16.msra.mxu0 %v5782
        %6138 = vmatpush.bf16.msra.mxu0 %v5778
        %6139 = vmatpush.bf16.msra.mxu0 %v5774
        %6140 = vmatmul.bf16.gmra.mxu0 %v5253
        %v6141 = vpop.f32.mrf.mxu0
        %v6142 = vadd.f32 0.0, %v6141
        %v6143 = vpop.f32.mrf.mxu0
        %6144 = vdwg.mxu0
        %6145 = vmatpush.bf16.msra.mxu0 %v5834
        %6146 = vmatpush.bf16.msra.mxu0 %v5830
        %6147 = vmatpush.bf16.msra.mxu0 %v5826
        %6148 = vmatpush.bf16.msra.mxu0 %v5822
        %6149 = vmatpush.bf16.msra.mxu0 %v5818
        %6150 = vmatpush.bf16.msra.mxu0 %v5814
        %6151 = vmatpush.bf16.msra.mxu0 %v5810
        %6152 = vmatpush.bf16.msra.mxu0 %v5806
        %6153 = vmatmul.bf16.gmra.mxu0 %v5254
        %v6154 = vpop.f32.mrf.mxu0
        %v6155 = vadd.f32 %v6142, %v6154
        %v6156 = vpop.f32.mrf.mxu0
        %6157 = vdwg.mxu0
        %6158 = vmatpush.bf16.msra.mxu0 %v5866
        %6159 = vmatpush.bf16.msra.mxu0 %v5862
        %6160 = vmatpush.bf16.msra.mxu0 %v5858
        %6161 = vmatpush.bf16.msra.mxu0 %v5854
        %6162 = vmatpush.bf16.msra.mxu0 %v5850
        %6163 = vmatpush.bf16.msra.mxu0 %v5846
        %6164 = vmatpush.bf16.msra.mxu0 %v5842
        %6165 = vmatpush.bf16.msra.mxu0 %v5838
        %6166 = vmatmul.bf16.gmra.mxu0 %v5255
        %v6167 = vpop.f32.mrf.mxu0
        %v6168 = vadd.f32 %v6155, %v6167
        %v6169 = vpop.f32.mrf.mxu0
        %6170 = vdwg.mxu0
        %6171 = vmatpush.bf16.msra.mxu0 %v5898
        %6172 = vmatpush.bf16.msra.mxu0 %v5894
        %6173 = vmatpush.bf16.msra.mxu0 %v5890
        %6174 = vmatpush.bf16.msra.mxu0 %v5886
        %6175 = vmatpush.bf16.msra.mxu0 %v5882
        %6176 = vmatpush.bf16.msra.mxu0 %v5878
        %6177 = vmatpush.bf16.msra.mxu0 %v5874
        %6178 = vmatpush.bf16.msra.mxu0 %v5870
        %6179 = vmatmul.bf16.gmra.mxu0 %v5256
        %v6180 = vpop.f32.mrf.mxu0
        %v6181 = vadd.f32 %v6168, %v6180
        %v6182 = vpop.f32.mrf.mxu0
        %6183 = vdwg.mxu0
        %6184 = vmatpush.bf16.msra.mxu0 %v5803
        %6185 = vmatpush.bf16.msra.mxu0 %v5799
        %6186 = vmatpush.bf16.msra.mxu0 %v5795
        %6187 = vmatpush.bf16.msra.mxu0 %v5791
        %6188 = vmatpush.bf16.msra.mxu0 %v5787
        %6189 = vmatpush.bf16.msra.mxu0 %v5783
        %6190 = vmatpush.bf16.msra.mxu0 %v5779
        %6191 = vmatpush.bf16.msra.mxu0 %v5775
        %6192 = vmatmul.bf16.gmra.mxu0 %v5253
        %v6193 = vpop.f32.mrf.mxu0
        %v6194 = vadd.f32 0.0, %v6193
        %v6195 = vpop.f32.mrf.mxu0
        %6196 = vdwg.mxu0
        %6197 = vmatpush.bf16.msra.mxu0 %v5835
        %6198 = vmatpush.bf16.msra.mxu0 %v5831
        %6199 = vmatpush.bf16.msra.mxu0 %v5827
        %6200 = vmatpush.bf16.msra.mxu0 %v5823
        %6201 = vmatpush.bf16.msra.mxu0 %v5819
        %6202 = vmatpush.bf16.msra.mxu0 %v5815
        %6203 = vmatpush.bf16.msra.mxu0 %v5811
        %6204 = vmatpush.bf16.msra.mxu0 %v5807
        %6205 = vmatmul.bf16.gmra.mxu0 %v5254
        %v6206 = vpop.f32.mrf.mxu0
        %v6207 = vadd.f32 %v6194, %v6206
        %v6208 = vpop.f32.mrf.mxu0
        %6209 = vdwg.mxu0
        %6210 = vmatpush.bf16.msra.mxu0 %v5867
        %6211 = vmatpush.bf16.msra.mxu0 %v5863
        %6212 = vmatpush.bf16.msra.mxu0 %v5859
        %6213 = vmatpush.bf16.msra.mxu0 %v5855
        %6214 = vmatpush.bf16.msra.mxu0 %v5851
        %6215 = vmatpush.bf16.msra.mxu0 %v5847
        %6216 = vmatpush.bf16.msra.mxu0 %v5843
        %6217 = vmatpush.bf16.msra.mxu0 %v5839
        %6218 = vmatmul.bf16.gmra.mxu0 %v5255
        %v6219 = vpop.f32.mrf.mxu0
        %v6220 = vadd.f32 %v6207, %v6219
        %v6221 = vpop.f32.mrf.mxu0
        %6222 = vdwg.mxu0
        %6223 = vmatpush.bf16.msra.mxu0 %v5899
        %6224 = vmatpush.bf16.msra.mxu0 %v5895
        %6225 = vmatpush.bf16.msra.mxu0 %v5891
        %6226 = vmatpush.bf16.msra.mxu0 %v5887
        %6227 = vmatpush.bf16.msra.mxu0 %v5883
        %6228 = vmatpush.bf16.msra.mxu0 %v5879
        %6229 = vmatpush.bf16.msra.mxu0 %v5875
        %6230 = vmatpush.bf16.msra.mxu0 %v5871
        %6231 = vmatmul.bf16.gmra.mxu0 %v5256
        %v6232 = vpop.f32.mrf.mxu0
        %v6233 = vadd.f32 %v6220, %v6232
        %v6234 = vpop.f32.mrf.mxu0
        %6235 = vdwg.mxu0
        %v6236 = vadd.f32 %v4102, %v6077
        %v6237 = vadd.f32 %v4154, %v6129
        %v6238 = vadd.f32 %v4206, %v6181
        %v6239 = vadd.f32 %v4258, %v6233
        %s6240 = scalar_lea.vmem [#allocation5], 48
        %v6241 = vld [vmem:[%s6240] sm:$0xff]
        %v6242 = vld [vmem:[%s6240 + $0x8] sm:$0xff]
        %v6243 = vld [vmem:[%s6240 + $0x40] sm:$0xff]
        %v6244 = vld [vmem:[%s6240 + $0x48] sm:$0xff]
        %v6245 = vld [vmem:[%s6240 + $0x80] sm:$0xff]
        %v6246 = vld [vmem:[%s6240 + $0x88] sm:$0xff]
        %v6247 = vld [vmem:[%s6240 + $0xc0] sm:$0xff]
        %v6248 = vld [vmem:[%s6240 + $0xc8] sm:$0xff]
        %v6249 = vld [vmem:[%s6240 + $0x100] sm:$0xff]
        %v6250 = vld [vmem:[%s6240 + $0x108] sm:$0xff]
        %v6251 = vld [vmem:[%s6240 + $0x140] sm:$0xff]
        %v6252 = vld [vmem:[%s6240 + $0x148] sm:$0xff]
        %v6253 = vld [vmem:[%s6240 + $0x180] sm:$0xff]
        %v6254 = vld [vmem:[%s6240 + $0x188] sm:$0xff]
        %v6255 = vld [vmem:[%s6240 + $0x1c0] sm:$0xff]
        %v6256 = vld [vmem:[%s6240 + $0x1c8] sm:$0xff]
        %v6257 = vld [vmem:[%s6240 + $0x200] sm:$0xff]
        %v6258 = vld [vmem:[%s6240 + $0x208] sm:$0xff]
        %v6259 = vld [vmem:[%s6240 + $0x240] sm:$0xff]
        %v6260 = vld [vmem:[%s6240 + $0x248] sm:$0xff]
        %v6261 = vld [vmem:[%s6240 + $0x280] sm:$0xff]
        %v6262 = vld [vmem:[%s6240 + $0x288] sm:$0xff]
        %v6263 = vld [vmem:[%s6240 + $0x2c0] sm:$0xff]
        %v6264 = vld [vmem:[%s6240 + $0x2c8] sm:$0xff]
        %v6265 = vld [vmem:[%s6240 + $0x300] sm:$0xff]
        %v6266 = vld [vmem:[%s6240 + $0x308] sm:$0xff]
        %v6267 = vld [vmem:[%s6240 + $0x340] sm:$0xff]
        %v6268 = vld [vmem:[%s6240 + $0x348] sm:$0xff]
        %v6269 = vld [vmem:[%s6240 + $0x380] sm:$0xff]
        %v6270 = vld [vmem:[%s6240 + $0x388] sm:$0xff]
        %v6271 = vld [vmem:[%s6240 + $0x3c0] sm:$0xff]
        %v6272 = vld [vmem:[%s6240 + $0x3c8] sm:$0xff]
        %v6273 = vld [vmem:[%s6240 + $0x400] sm:$0xff]
        %v6274 = vld [vmem:[%s6240 + $0x408] sm:$0xff]
        %v6275 = vld [vmem:[%s6240 + $0x440] sm:$0xff]
        %v6276 = vld [vmem:[%s6240 + $0x448] sm:$0xff]
        %v6277 = vld [vmem:[%s6240 + $0x480] sm:$0xff]
        %v6278 = vld [vmem:[%s6240 + $0x488] sm:$0xff]
        %v6279 = vld [vmem:[%s6240 + $0x4c0] sm:$0xff]
        %v6280 = vld [vmem:[%s6240 + $0x4c8] sm:$0xff]
        %v6281 = vld [vmem:[%s6240 + $0x500] sm:$0xff]
        %v6282 = vld [vmem:[%s6240 + $0x508] sm:$0xff]
        %v6283 = vld [vmem:[%s6240 + $0x540] sm:$0xff]
        %v6284 = vld [vmem:[%s6240 + $0x548] sm:$0xff]
        %v6285 = vld [vmem:[%s6240 + $0x580] sm:$0xff]
        %v6286 = vld [vmem:[%s6240 + $0x588] sm:$0xff]
        %v6287 = vld [vmem:[%s6240 + $0x5c0] sm:$0xff]
        %v6288 = vld [vmem:[%s6240 + $0x5c8] sm:$0xff]
        %v6289 = vld [vmem:[%s6240 + $0x600] sm:$0xff]
        %v6290 = vld [vmem:[%s6240 + $0x608] sm:$0xff]
        %v6291 = vld [vmem:[%s6240 + $0x640] sm:$0xff]
        %v6292 = vld [vmem:[%s6240 + $0x648] sm:$0xff]
        %v6293 = vld [vmem:[%s6240 + $0x680] sm:$0xff]
        %v6294 = vld [vmem:[%s6240 + $0x688] sm:$0xff]
        %v6295 = vld [vmem:[%s6240 + $0x6c0] sm:$0xff]
        %v6296 = vld [vmem:[%s6240 + $0x6c8] sm:$0xff]
        %v6297 = vld [vmem:[%s6240 + $0x700] sm:$0xff]
        %v6298 = vld [vmem:[%s6240 + $0x708] sm:$0xff]
        %v6299 = vld [vmem:[%s6240 + $0x740] sm:$0xff]
        %v6300 = vld [vmem:[%s6240 + $0x748] sm:$0xff]
        %v6301 = vld [vmem:[%s6240 + $0x780] sm:$0xff]
        %v6302 = vld [vmem:[%s6240 + $0x788] sm:$0xff]
        %v6303 = vld [vmem:[%s6240 + $0x7c0] sm:$0xff]
        %v6304 = vld [vmem:[%s6240 + $0x7c8] sm:$0xff]
        %v6305 = vld [vmem:[%s6240 + $0x800] sm:$0xff]
        %v6306 = vld [vmem:[%s6240 + $0x808] sm:$0xff]
        %v6307 = vld [vmem:[%s6240 + $0x840] sm:$0xff]
        %v6308 = vld [vmem:[%s6240 + $0x848] sm:$0xff]
        %v6309 = vld [vmem:[%s6240 + $0x880] sm:$0xff]
        %v6310 = vld [vmem:[%s6240 + $0x888] sm:$0xff]
        %v6311 = vld [vmem:[%s6240 + $0x8c0] sm:$0xff]
        %v6312 = vld [vmem:[%s6240 + $0x8c8] sm:$0xff]
        %v6313 = vld [vmem:[%s6240 + $0x900] sm:$0xff]
        %v6314 = vld [vmem:[%s6240 + $0x908] sm:$0xff]
        %v6315 = vld [vmem:[%s6240 + $0x940] sm:$0xff]
        %v6316 = vld [vmem:[%s6240 + $0x948] sm:$0xff]
        %v6317 = vld [vmem:[%s6240 + $0x980] sm:$0xff]
        %v6318 = vld [vmem:[%s6240 + $0x988] sm:$0xff]
        %v6319 = vld [vmem:[%s6240 + $0x9c0] sm:$0xff]
        %v6320 = vld [vmem:[%s6240 + $0x9c8] sm:$0xff]
        %v6321 = vld [vmem:[%s6240 + $0xa00] sm:$0xff]
        %v6322 = vld [vmem:[%s6240 + $0xa08] sm:$0xff]
        %v6323 = vld [vmem:[%s6240 + $0xa40] sm:$0xff]
        %v6324 = vld [vmem:[%s6240 + $0xa48] sm:$0xff]
        %v6325 = vld [vmem:[%s6240 + $0xa80] sm:$0xff]
        %v6326 = vld [vmem:[%s6240 + $0xa88] sm:$0xff]
        %v6327 = vld [vmem:[%s6240 + $0xac0] sm:$0xff]
        %v6328 = vld [vmem:[%s6240 + $0xac8] sm:$0xff]
        %v6329 = vld [vmem:[%s6240 + $0xb00] sm:$0xff]
        %v6330 = vld [vmem:[%s6240 + $0xb08] sm:$0xff]
        %v6331 = vld [vmem:[%s6240 + $0xb40] sm:$0xff]
        %v6332 = vld [vmem:[%s6240 + $0xb48] sm:$0xff]
        %v6333 = vld [vmem:[%s6240 + $0xb80] sm:$0xff]
        %v6334 = vld [vmem:[%s6240 + $0xb88] sm:$0xff]
        %v6335 = vld [vmem:[%s6240 + $0xbc0] sm:$0xff]
        %v6336 = vld [vmem:[%s6240 + $0xbc8] sm:$0xff]
        %v6337 = vld [vmem:[%s6240 + $0xc00] sm:$0xff]
        %v6338 = vld [vmem:[%s6240 + $0xc08] sm:$0xff]
        %v6339 = vld [vmem:[%s6240 + $0xc40] sm:$0xff]
        %v6340 = vld [vmem:[%s6240 + $0xc48] sm:$0xff]
        %v6341 = vld [vmem:[%s6240 + $0xc80] sm:$0xff]
        %v6342 = vld [vmem:[%s6240 + $0xc88] sm:$0xff]
        %v6343 = vld [vmem:[%s6240 + $0xcc0] sm:$0xff]
        %v6344 = vld [vmem:[%s6240 + $0xcc8] sm:$0xff]
        %v6345 = vld [vmem:[%s6240 + $0xd00] sm:$0xff]
        %v6346 = vld [vmem:[%s6240 + $0xd08] sm:$0xff]
        %v6347 = vld [vmem:[%s6240 + $0xd40] sm:$0xff]
        %v6348 = vld [vmem:[%s6240 + $0xd48] sm:$0xff]
        %v6349 = vld [vmem:[%s6240 + $0xd80] sm:$0xff]
        %v6350 = vld [vmem:[%s6240 + $0xd88] sm:$0xff]
        %v6351 = vld [vmem:[%s6240 + $0xdc0] sm:$0xff]
        %v6352 = vld [vmem:[%s6240 + $0xdc8] sm:$0xff]
        %v6353 = vld [vmem:[%s6240 + $0xe00] sm:$0xff]
        %v6354 = vld [vmem:[%s6240 + $0xe08] sm:$0xff]
        %v6355 = vld [vmem:[%s6240 + $0xe40] sm:$0xff]
        %v6356 = vld [vmem:[%s6240 + $0xe48] sm:$0xff]
        %v6357 = vld [vmem:[%s6240 + $0xe80] sm:$0xff]
        %v6358 = vld [vmem:[%s6240 + $0xe88] sm:$0xff]
        %v6359 = vld [vmem:[%s6240 + $0xec0] sm:$0xff]
        %v6360 = vld [vmem:[%s6240 + $0xec8] sm:$0xff]
        %v6361 = vld [vmem:[%s6240 + $0xf00] sm:$0xff]
        %v6362 = vld [vmem:[%s6240 + $0xf08] sm:$0xff]
        %v6363 = vld [vmem:[%s6240 + $0xf40] sm:$0xff]
        %v6364 = vld [vmem:[%s6240 + $0xf48] sm:$0xff]
        %v6365 = vld [vmem:[%s6240 + $0xf80] sm:$0xff]
        %v6366 = vld [vmem:[%s6240 + $0xf88] sm:$0xff]
        %v6367 = vld [vmem:[%s6240 + $0xfc0] sm:$0xff]
        %v6368 = vld [vmem:[%s6240 + $0xfc8] sm:$0xff]
        %s6369 = scalar_lea.vmem [#allocation7], 12
        %v6370 = vld [vmem:[%s6369] sm:$0xf]
        %v6372 = vperm.slane %v6370, 0
        %v6373 = vperm.slane %v6370, 1
        %v6374 = vperm.slane %v6370, 2
        %v6375 = vperm.slane %v6370, 3
        %v6508 = vunpack.c.l.b16 %v6241
        %v6509 = vunpack.c.h.b16 %v6241
        %v6510 = vunpack.c.l.b16 %v6242
        %v6511 = vunpack.c.h.b16 %v6242
        %v6512 = vunpack.c.l.b16 %v6243
        %v6513 = vunpack.c.h.b16 %v6243
        %v6514 = vunpack.c.l.b16 %v6244
        %v6515 = vunpack.c.h.b16 %v6244
        %v6516 = vunpack.c.l.b16 %v6245
        %v6517 = vunpack.c.h.b16 %v6245
        %v6518 = vunpack.c.l.b16 %v6246
        %v6519 = vunpack.c.h.b16 %v6246
        %v6520 = vunpack.c.l.b16 %v6247
        %v6521 = vunpack.c.h.b16 %v6247
        %v6522 = vunpack.c.l.b16 %v6248
        %v6523 = vunpack.c.h.b16 %v6248
        %v6524 = vunpack.c.l.b16 %v6249
        %v6525 = vunpack.c.h.b16 %v6249
        %v6526 = vunpack.c.l.b16 %v6250
        %v6527 = vunpack.c.h.b16 %v6250
        %v6528 = vunpack.c.l.b16 %v6251
        %v6529 = vunpack.c.h.b16 %v6251
        %v6530 = vunpack.c.l.b16 %v6252
        %v6531 = vunpack.c.h.b16 %v6252
        %v6532 = vunpack.c.l.b16 %v6253
        %v6533 = vunpack.c.h.b16 %v6253
        %v6534 = vunpack.c.l.b16 %v6254
        %v6535 = vunpack.c.h.b16 %v6254
        %v6536 = vunpack.c.l.b16 %v6255
        %v6537 = vunpack.c.h.b16 %v6255
        %v6538 = vunpack.c.l.b16 %v6256
        %v6539 = vunpack.c.h.b16 %v6256
        %v6540 = vunpack.c.l.b16 %v6257
        %v6541 = vunpack.c.h.b16 %v6257
        %v6542 = vunpack.c.l.b16 %v6258
        %v6543 = vunpack.c.h.b16 %v6258
        %v6544 = vunpack.c.l.b16 %v6259
        %v6545 = vunpack.c.h.b16 %v6259
        %v6546 = vunpack.c.l.b16 %v6260
        %v6547 = vunpack.c.h.b16 %v6260
        %v6548 = vunpack.c.l.b16 %v6261
        %v6549 = vunpack.c.h.b16 %v6261
        %v6550 = vunpack.c.l.b16 %v6262
        %v6551 = vunpack.c.h.b16 %v6262
        %v6552 = vunpack.c.l.b16 %v6263
        %v6553 = vunpack.c.h.b16 %v6263
        %v6554 = vunpack.c.l.b16 %v6264
        %v6555 = vunpack.c.h.b16 %v6264
        %v6556 = vunpack.c.l.b16 %v6265
        %v6557 = vunpack.c.h.b16 %v6265
        %v6558 = vunpack.c.l.b16 %v6266
        %v6559 = vunpack.c.h.b16 %v6266
        %v6560 = vunpack.c.l.b16 %v6267
        %v6561 = vunpack.c.h.b16 %v6267
        %v6562 = vunpack.c.l.b16 %v6268
        %v6563 = vunpack.c.h.b16 %v6268
        %v6564 = vunpack.c.l.b16 %v6269
        %v6565 = vunpack.c.h.b16 %v6269
        %v6566 = vunpack.c.l.b16 %v6270
        %v6567 = vunpack.c.h.b16 %v6270
        %v6568 = vunpack.c.l.b16 %v6271
        %v6569 = vunpack.c.h.b16 %v6271
        %v6570 = vunpack.c.l.b16 %v6272
        %v6571 = vunpack.c.h.b16 %v6272
        %v6572 = vunpack.c.l.b16 %v6273
        %v6573 = vunpack.c.h.b16 %v6273
        %v6574 = vunpack.c.l.b16 %v6274
        %v6575 = vunpack.c.h.b16 %v6274
        %v6576 = vunpack.c.l.b16 %v6275
        %v6577 = vunpack.c.h.b16 %v6275
        %v6578 = vunpack.c.l.b16 %v6276
        %v6579 = vunpack.c.h.b16 %v6276
        %v6580 = vunpack.c.l.b16 %v6277
        %v6581 = vunpack.c.h.b16 %v6277
        %v6582 = vunpack.c.l.b16 %v6278
        %v6583 = vunpack.c.h.b16 %v6278
        %v6584 = vunpack.c.l.b16 %v6279
        %v6585 = vunpack.c.h.b16 %v6279
        %v6586 = vunpack.c.l.b16 %v6280
        %v6587 = vunpack.c.h.b16 %v6280
        %v6588 = vunpack.c.l.b16 %v6281
        %v6589 = vunpack.c.h.b16 %v6281
        %v6590 = vunpack.c.l.b16 %v6282
        %v6591 = vunpack.c.h.b16 %v6282
        %v6592 = vunpack.c.l.b16 %v6283
        %v6593 = vunpack.c.h.b16 %v6283
        %v6594 = vunpack.c.l.b16 %v6284
        %v6595 = vunpack.c.h.b16 %v6284
        %v6596 = vunpack.c.l.b16 %v6285
        %v6597 = vunpack.c.h.b16 %v6285
        %v6598 = vunpack.c.l.b16 %v6286
        %v6599 = vunpack.c.h.b16 %v6286
        %v6600 = vunpack.c.l.b16 %v6287
        %v6601 = vunpack.c.h.b16 %v6287
        %v6602 = vunpack.c.l.b16 %v6288
        %v6603 = vunpack.c.h.b16 %v6288
        %v6604 = vunpack.c.l.b16 %v6289
        %v6605 = vunpack.c.h.b16 %v6289
        %v6606 = vunpack.c.l.b16 %v6290
        %v6607 = vunpack.c.h.b16 %v6290
        %v6608 = vunpack.c.l.b16 %v6291
        %v6609 = vunpack.c.h.b16 %v6291
        %v6610 = vunpack.c.l.b16 %v6292
        %v6611 = vunpack.c.h.b16 %v6292
        %v6612 = vunpack.c.l.b16 %v6293
        %v6613 = vunpack.c.h.b16 %v6293
        %v6614 = vunpack.c.l.b16 %v6294
        %v6615 = vunpack.c.h.b16 %v6294
        %v6616 = vunpack.c.l.b16 %v6295
        %v6617 = vunpack.c.h.b16 %v6295
        %v6618 = vunpack.c.l.b16 %v6296
        %v6619 = vunpack.c.h.b16 %v6296
        %v6620 = vunpack.c.l.b16 %v6297
        %v6621 = vunpack.c.h.b16 %v6297
        %v6622 = vunpack.c.l.b16 %v6298
        %v6623 = vunpack.c.h.b16 %v6298
        %v6624 = vunpack.c.l.b16 %v6299
        %v6625 = vunpack.c.h.b16 %v6299
        %v6626 = vunpack.c.l.b16 %v6300
        %v6627 = vunpack.c.h.b16 %v6300
        %v6628 = vunpack.c.l.b16 %v6301
        %v6629 = vunpack.c.h.b16 %v6301
        %v6630 = vunpack.c.l.b16 %v6302
        %v6631 = vunpack.c.h.b16 %v6302
        %v6632 = vunpack.c.l.b16 %v6303
        %v6633 = vunpack.c.h.b16 %v6303
        %v6634 = vunpack.c.l.b16 %v6304
        %v6635 = vunpack.c.h.b16 %v6304
        %v6636 = vunpack.c.l.b16 %v6305
        %v6637 = vunpack.c.h.b16 %v6305
        %v6638 = vunpack.c.l.b16 %v6306
        %v6639 = vunpack.c.h.b16 %v6306
        %v6640 = vunpack.c.l.b16 %v6307
        %v6641 = vunpack.c.h.b16 %v6307
        %v6642 = vunpack.c.l.b16 %v6308
        %v6643 = vunpack.c.h.b16 %v6308
        %v6644 = vunpack.c.l.b16 %v6309
        %v6645 = vunpack.c.h.b16 %v6309
        %v6646 = vunpack.c.l.b16 %v6310
        %v6647 = vunpack.c.h.b16 %v6310
        %v6648 = vunpack.c.l.b16 %v6311
        %v6649 = vunpack.c.h.b16 %v6311
        %v6650 = vunpack.c.l.b16 %v6312
        %v6651 = vunpack.c.h.b16 %v6312
        %v6652 = vunpack.c.l.b16 %v6313
        %v6653 = vunpack.c.h.b16 %v6313
        %v6654 = vunpack.c.l.b16 %v6314
        %v6655 = vunpack.c.h.b16 %v6314
        %v6656 = vunpack.c.l.b16 %v6315
        %v6657 = vunpack.c.h.b16 %v6315
        %v6658 = vunpack.c.l.b16 %v6316
        %v6659 = vunpack.c.h.b16 %v6316
        %v6660 = vunpack.c.l.b16 %v6317
        %v6661 = vunpack.c.h.b16 %v6317
        %v6662 = vunpack.c.l.b16 %v6318
        %v6663 = vunpack.c.h.b16 %v6318
        %v6664 = vunpack.c.l.b16 %v6319
        %v6665 = vunpack.c.h.b16 %v6319
        %v6666 = vunpack.c.l.b16 %v6320
        %v6667 = vunpack.c.h.b16 %v6320
        %v6668 = vunpack.c.l.b16 %v6321
        %v6669 = vunpack.c.h.b16 %v6321
        %v6670 = vunpack.c.l.b16 %v6322
        %v6671 = vunpack.c.h.b16 %v6322
        %v6672 = vunpack.c.l.b16 %v6323
        %v6673 = vunpack.c.h.b16 %v6323
        %v6674 = vunpack.c.l.b16 %v6324
        %v6675 = vunpack.c.h.b16 %v6324
        %v6676 = vunpack.c.l.b16 %v6325
        %v6677 = vunpack.c.h.b16 %v6325
        %v6678 = vunpack.c.l.b16 %v6326
        %v6679 = vunpack.c.h.b16 %v6326
        %v6680 = vunpack.c.l.b16 %v6327
        %v6681 = vunpack.c.h.b16 %v6327
        %v6682 = vunpack.c.l.b16 %v6328
        %v6683 = vunpack.c.h.b16 %v6328
        %v6684 = vunpack.c.l.b16 %v6329
        %v6685 = vunpack.c.h.b16 %v6329
        %v6686 = vunpack.c.l.b16 %v6330
        %v6687 = vunpack.c.h.b16 %v6330
        %v6688 = vunpack.c.l.b16 %v6331
        %v6689 = vunpack.c.h.b16 %v6331
        %v6690 = vunpack.c.l.b16 %v6332
        %v6691 = vunpack.c.h.b16 %v6332
        %v6692 = vunpack.c.l.b16 %v6333
        %v6693 = vunpack.c.h.b16 %v6333
        %v6694 = vunpack.c.l.b16 %v6334
        %v6695 = vunpack.c.h.b16 %v6334
        %v6696 = vunpack.c.l.b16 %v6335
        %v6697 = vunpack.c.h.b16 %v6335
        %v6698 = vunpack.c.l.b16 %v6336
        %v6699 = vunpack.c.h.b16 %v6336
        %v6700 = vunpack.c.l.b16 %v6337
        %v6701 = vunpack.c.h.b16 %v6337
        %v6702 = vunpack.c.l.b16 %v6338
        %v6703 = vunpack.c.h.b16 %v6338
        %v6704 = vunpack.c.l.b16 %v6339
        %v6705 = vunpack.c.h.b16 %v6339
        %v6706 = vunpack.c.l.b16 %v6340
        %v6707 = vunpack.c.h.b16 %v6340
        %v6708 = vunpack.c.l.b16 %v6341
        %v6709 = vunpack.c.h.b16 %v6341
        %v6710 = vunpack.c.l.b16 %v6342
        %v6711 = vunpack.c.h.b16 %v6342
        %v6712 = vunpack.c.l.b16 %v6343
        %v6713 = vunpack.c.h.b16 %v6343
        %v6714 = vunpack.c.l.b16 %v6344
        %v6715 = vunpack.c.h.b16 %v6344
        %v6716 = vunpack.c.l.b16 %v6345
        %v6717 = vunpack.c.h.b16 %v6345
        %v6718 = vunpack.c.l.b16 %v6346
        %v6719 = vunpack.c.h.b16 %v6346
        %v6720 = vunpack.c.l.b16 %v6347
        %v6721 = vunpack.c.h.b16 %v6347
        %v6722 = vunpack.c.l.b16 %v6348
        %v6723 = vunpack.c.h.b16 %v6348
        %v6724 = vunpack.c.l.b16 %v6349
        %v6725 = vunpack.c.h.b16 %v6349
        %v6726 = vunpack.c.l.b16 %v6350
        %v6727 = vunpack.c.h.b16 %v6350
        %v6728 = vunpack.c.l.b16 %v6351
        %v6729 = vunpack.c.h.b16 %v6351
        %v6730 = vunpack.c.l.b16 %v6352
        %v6731 = vunpack.c.h.b16 %v6352
        %v6732 = vunpack.c.l.b16 %v6353
        %v6733 = vunpack.c.h.b16 %v6353
        %v6734 = vunpack.c.l.b16 %v6354
        %v6735 = vunpack.c.h.b16 %v6354
        %v6736 = vunpack.c.l.b16 %v6355
        %v6737 = vunpack.c.h.b16 %v6355
        %v6738 = vunpack.c.l.b16 %v6356
        %v6739 = vunpack.c.h.b16 %v6356
        %v6740 = vunpack.c.l.b16 %v6357
        %v6741 = vunpack.c.h.b16 %v6357
        %v6742 = vunpack.c.l.b16 %v6358
        %v6743 = vunpack.c.h.b16 %v6358
        %v6744 = vunpack.c.l.b16 %v6359
        %v6745 = vunpack.c.h.b16 %v6359
        %v6746 = vunpack.c.l.b16 %v6360
        %v6747 = vunpack.c.h.b16 %v6360
        %v6748 = vunpack.c.l.b16 %v6361
        %v6749 = vunpack.c.h.b16 %v6361
        %v6750 = vunpack.c.l.b16 %v6362
        %v6751 = vunpack.c.h.b16 %v6362
        %v6752 = vunpack.c.l.b16 %v6363
        %v6753 = vunpack.c.h.b16 %v6363
        %v6754 = vunpack.c.l.b16 %v6364
        %v6755 = vunpack.c.h.b16 %v6364
        %v6756 = vunpack.c.l.b16 %v6365
        %v6757 = vunpack.c.h.b16 %v6365
        %v6758 = vunpack.c.l.b16 %v6366
        %v6759 = vunpack.c.h.b16 %v6366
        %v6760 = vunpack.c.l.b16 %v6367
        %v6761 = vunpack.c.h.b16 %v6367
        %v6762 = vunpack.c.l.b16 %v6368
        %v6763 = vunpack.c.h.b16 %v6368
        %v6764 = vpack.c.b16 %v6512, %v6508
        %v6765 = vpack.c.b16 %v6513, %v6509
        %v6766 = vpack.c.b16 %v6514, %v6510
        %v6767 = vpack.c.b16 %v6515, %v6511
        %v6768 = vpack.c.b16 %v6520, %v6516
        %v6769 = vpack.c.b16 %v6521, %v6517
        %v6770 = vpack.c.b16 %v6522, %v6518
        %v6771 = vpack.c.b16 %v6523, %v6519
        %v6772 = vpack.c.b16 %v6528, %v6524
        %v6773 = vpack.c.b16 %v6529, %v6525
        %v6774 = vpack.c.b16 %v6530, %v6526
        %v6775 = vpack.c.b16 %v6531, %v6527
        %v6776 = vpack.c.b16 %v6536, %v6532
        %v6777 = vpack.c.b16 %v6537, %v6533
        %v6778 = vpack.c.b16 %v6538, %v6534
        %v6779 = vpack.c.b16 %v6539, %v6535
        %v6780 = vpack.c.b16 %v6544, %v6540
        %v6781 = vpack.c.b16 %v6545, %v6541
        %v6782 = vpack.c.b16 %v6546, %v6542
        %v6783 = vpack.c.b16 %v6547, %v6543
        %v6784 = vpack.c.b16 %v6552, %v6548
        %v6785 = vpack.c.b16 %v6553, %v6549
        %v6786 = vpack.c.b16 %v6554, %v6550
        %v6787 = vpack.c.b16 %v6555, %v6551
        %v6788 = vpack.c.b16 %v6560, %v6556
        %v6789 = vpack.c.b16 %v6561, %v6557
        %v6790 = vpack.c.b16 %v6562, %v6558
        %v6791 = vpack.c.b16 %v6563, %v6559
        %v6792 = vpack.c.b16 %v6568, %v6564
        %v6793 = vpack.c.b16 %v6569, %v6565
        %v6794 = vpack.c.b16 %v6570, %v6566
        %v6795 = vpack.c.b16 %v6571, %v6567
        %v6796 = vpack.c.b16 %v6576, %v6572
        %v6797 = vpack.c.b16 %v6577, %v6573
        %v6798 = vpack.c.b16 %v6578, %v6574
        %v6799 = vpack.c.b16 %v6579, %v6575
        %v6800 = vpack.c.b16 %v6584, %v6580
        %v6801 = vpack.c.b16 %v6585, %v6581
        %v6802 = vpack.c.b16 %v6586, %v6582
        %v6803 = vpack.c.b16 %v6587, %v6583
        %v6804 = vpack.c.b16 %v6592, %v6588
        %v6805 = vpack.c.b16 %v6593, %v6589
        %v6806 = vpack.c.b16 %v6594, %v6590
        %v6807 = vpack.c.b16 %v6595, %v6591
        %v6808 = vpack.c.b16 %v6600, %v6596
        %v6809 = vpack.c.b16 %v6601, %v6597
        %v6810 = vpack.c.b16 %v6602, %v6598
        %v6811 = vpack.c.b16 %v6603, %v6599
        %v6812 = vpack.c.b16 %v6608, %v6604
        %v6813 = vpack.c.b16 %v6609, %v6605
        %v6814 = vpack.c.b16 %v6610, %v6606
        %v6815 = vpack.c.b16 %v6611, %v6607
        %v6816 = vpack.c.b16 %v6616, %v6612
        %v6817 = vpack.c.b16 %v6617, %v6613
        %v6818 = vpack.c.b16 %v6618, %v6614
        %v6819 = vpack.c.b16 %v6619, %v6615
        %v6820 = vpack.c.b16 %v6624, %v6620
        %v6821 = vpack.c.b16 %v6625, %v6621
        %v6822 = vpack.c.b16 %v6626, %v6622
        %v6823 = vpack.c.b16 %v6627, %v6623
        %v6824 = vpack.c.b16 %v6632, %v6628
        %v6825 = vpack.c.b16 %v6633, %v6629
        %v6826 = vpack.c.b16 %v6634, %v6630
        %v6827 = vpack.c.b16 %v6635, %v6631
        %v6828 = vpack.c.b16 %v6640, %v6636
        %v6829 = vpack.c.b16 %v6641, %v6637
        %v6830 = vpack.c.b16 %v6642, %v6638
        %v6831 = vpack.c.b16 %v6643, %v6639
        %v6832 = vpack.c.b16 %v6648, %v6644
        %v6833 = vpack.c.b16 %v6649, %v6645
        %v6834 = vpack.c.b16 %v6650, %v6646
        %v6835 = vpack.c.b16 %v6651, %v6647
        %v6836 = vpack.c.b16 %v6656, %v6652
        %v6837 = vpack.c.b16 %v6657, %v6653
        %v6838 = vpack.c.b16 %v6658, %v6654
        %v6839 = vpack.c.b16 %v6659, %v6655
        %v6840 = vpack.c.b16 %v6664, %v6660
        %v6841 = vpack.c.b16 %v6665, %v6661
        %v6842 = vpack.c.b16 %v6666, %v6662
        %v6843 = vpack.c.b16 %v6667, %v6663
        %v6844 = vpack.c.b16 %v6672, %v6668
        %v6845 = vpack.c.b16 %v6673, %v6669
        %v6846 = vpack.c.b16 %v6674, %v6670
        %v6847 = vpack.c.b16 %v6675, %v6671
        %v6848 = vpack.c.b16 %v6680, %v6676
        %v6849 = vpack.c.b16 %v6681, %v6677
        %v6850 = vpack.c.b16 %v6682, %v6678
        %v6851 = vpack.c.b16 %v6683, %v6679
        %v6852 = vpack.c.b16 %v6688, %v6684
        %v6853 = vpack.c.b16 %v6689, %v6685
        %v6854 = vpack.c.b16 %v6690, %v6686
        %v6855 = vpack.c.b16 %v6691, %v6687
        %v6856 = vpack.c.b16 %v6696, %v6692
        %v6857 = vpack.c.b16 %v6697, %v6693
        %v6858 = vpack.c.b16 %v6698, %v6694
        %v6859 = vpack.c.b16 %v6699, %v6695
        %v6860 = vpack.c.b16 %v6704, %v6700
        %v6861 = vpack.c.b16 %v6705, %v6701
        %v6862 = vpack.c.b16 %v6706, %v6702
        %v6863 = vpack.c.b16 %v6707, %v6703
        %v6864 = vpack.c.b16 %v6712, %v6708
        %v6865 = vpack.c.b16 %v6713, %v6709
        %v6866 = vpack.c.b16 %v6714, %v6710
        %v6867 = vpack.c.b16 %v6715, %v6711
        %v6868 = vpack.c.b16 %v6720, %v6716
        %v6869 = vpack.c.b16 %v6721, %v6717
        %v6870 = vpack.c.b16 %v6722, %v6718
        %v6871 = vpack.c.b16 %v6723, %v6719
        %v6872 = vpack.c.b16 %v6728, %v6724
        %v6873 = vpack.c.b16 %v6729, %v6725
        %v6874 = vpack.c.b16 %v6730, %v6726
        %v6875 = vpack.c.b16 %v6731, %v6727
        %v6876 = vpack.c.b16 %v6736, %v6732
        %v6877 = vpack.c.b16 %v6737, %v6733
        %v6878 = vpack.c.b16 %v6738, %v6734
        %v6879 = vpack.c.b16 %v6739, %v6735
        %v6880 = vpack.c.b16 %v6744, %v6740
        %v6881 = vpack.c.b16 %v6745, %v6741
        %v6882 = vpack.c.b16 %v6746, %v6742
        %v6883 = vpack.c.b16 %v6747, %v6743
        %v6884 = vpack.c.b16 %v6752, %v6748
        %v6885 = vpack.c.b16 %v6753, %v6749
        %v6886 = vpack.c.b16 %v6754, %v6750
        %v6887 = vpack.c.b16 %v6755, %v6751
        %v6888 = vpack.c.b16 %v6760, %v6756
        %v6889 = vpack.c.b16 %v6761, %v6757
        %v6890 = vpack.c.b16 %v6762, %v6758
        %v6891 = vpack.c.b16 %v6763, %v6759
        %7020 = vmatpush.bf16.msra.mxu0 %v6792
        %7021 = vmatpush.bf16.msra.mxu0 %v6788
        %7022 = vmatpush.bf16.msra.mxu0 %v6784
        %7023 = vmatpush.bf16.msra.mxu0 %v6780
        %7024 = vmatpush.bf16.msra.mxu0 %v6776
        %7025 = vmatpush.bf16.msra.mxu0 %v6772
        %7026 = vmatpush.bf16.msra.mxu0 %v6768
        %7027 = vmatpush.bf16.msra.mxu0 %v6764
        %7028 = vmatmul.bf16.gmra.mxu0 %v309
        %v7029 = vpop.f32.mrf.mxu0
        %v7030 = vadd.f32 %v6372, %v7029
        %v7031 = vpop.f32.mrf.mxu0
        %7032 = vdwg.mxu0
        %7033 = vmatpush.bf16.msra.mxu0 %v6824
        %7034 = vmatpush.bf16.msra.mxu0 %v6820
        %7035 = vmatpush.bf16.msra.mxu0 %v6816
        %7036 = vmatpush.bf16.msra.mxu0 %v6812
        %7037 = vmatpush.bf16.msra.mxu0 %v6808
        %7038 = vmatpush.bf16.msra.mxu0 %v6804
        %7039 = vmatpush.bf16.msra.mxu0 %v6800
        %7040 = vmatpush.bf16.msra.mxu0 %v6796
        %7041 = vmatmul.bf16.gmra.mxu0 %v310
        %v7042 = vpop.f32.mrf.mxu0
        %v7043 = vadd.f32 %v7030, %v7042
        %v7044 = vpop.f32.mrf.mxu0
        %7045 = vdwg.mxu0
        %7046 = vmatpush.bf16.msra.mxu0 %v6856
        %7047 = vmatpush.bf16.msra.mxu0 %v6852
        %7048 = vmatpush.bf16.msra.mxu0 %v6848
        %7049 = vmatpush.bf16.msra.mxu0 %v6844
        %7050 = vmatpush.bf16.msra.mxu0 %v6840
        %7051 = vmatpush.bf16.msra.mxu0 %v6836
        %7052 = vmatpush.bf16.msra.mxu0 %v6832
        %7053 = vmatpush.bf16.msra.mxu0 %v6828
        %7054 = vmatmul.bf16.gmra.mxu0 %v311
        %v7055 = vpop.f32.mrf.mxu0
        %v7056 = vadd.f32 %v7043, %v7055
        %v7057 = vpop.f32.mrf.mxu0
        %7058 = vdwg.mxu0
        %7059 = vmatpush.bf16.msra.mxu0 %v6888
        %7060 = vmatpush.bf16.msra.mxu0 %v6884
        %7061 = vmatpush.bf16.msra.mxu0 %v6880
        %7062 = vmatpush.bf16.msra.mxu0 %v6876
        %7063 = vmatpush.bf16.msra.mxu0 %v6872
        %7064 = vmatpush.bf16.msra.mxu0 %v6868
        %7065 = vmatpush.bf16.msra.mxu0 %v6864
        %7066 = vmatpush.bf16.msra.mxu0 %v6860
        %7067 = vmatmul.bf16.gmra.mxu0 %v312
        %v7068 = vpop.f32.mrf.mxu0
        %v7069 = vadd.f32 %v7056, %v7068
        %v7070 = vpop.f32.mrf.mxu0
        %7071 = vdwg.mxu0
        %7072 = vmatpush.bf16.msra.mxu0 %v6793
        %7073 = vmatpush.bf16.msra.mxu0 %v6789
        %7074 = vmatpush.bf16.msra.mxu0 %v6785
        %7075 = vmatpush.bf16.msra.mxu0 %v6781
        %7076 = vmatpush.bf16.msra.mxu0 %v6777
        %7077 = vmatpush.bf16.msra.mxu0 %v6773
        %7078 = vmatpush.bf16.msra.mxu0 %v6769
        %7079 = vmatpush.bf16.msra.mxu0 %v6765
        %7080 = vmatmul.bf16.gmra.mxu0 %v309
        %v7081 = vpop.f32.mrf.mxu0
        %v7082 = vadd.f32 %v6373, %v7081
        %v7083 = vpop.f32.mrf.mxu0
        %7084 = vdwg.mxu0
        %7085 = vmatpush.bf16.msra.mxu0 %v6825
        %7086 = vmatpush.bf16.msra.mxu0 %v6821
        %7087 = vmatpush.bf16.msra.mxu0 %v6817
        %7088 = vmatpush.bf16.msra.mxu0 %v6813
        %7089 = vmatpush.bf16.msra.mxu0 %v6809
        %7090 = vmatpush.bf16.msra.mxu0 %v6805
        %7091 = vmatpush.bf16.msra.mxu0 %v6801
        %7092 = vmatpush.bf16.msra.mxu0 %v6797
        %7093 = vmatmul.bf16.gmra.mxu0 %v310
        %v7094 = vpop.f32.mrf.mxu0
        %v7095 = vadd.f32 %v7082, %v7094
        %v7096 = vpop.f32.mrf.mxu0
        %7097 = vdwg.mxu0
        %7098 = vmatpush.bf16.msra.mxu0 %v6857
        %7099 = vmatpush.bf16.msra.mxu0 %v6853
        %7100 = vmatpush.bf16.msra.mxu0 %v6849
        %7101 = vmatpush.bf16.msra.mxu0 %v6845
        %7102 = vmatpush.bf16.msra.mxu0 %v6841
        %7103 = vmatpush.bf16.msra.mxu0 %v6837
        %7104 = vmatpush.bf16.msra.mxu0 %v6833
        %7105 = vmatpush.bf16.msra.mxu0 %v6829
        %7106 = vmatmul.bf16.gmra.mxu0 %v311
        %v7107 = vpop.f32.mrf.mxu0
        %v7108 = vadd.f32 %v7095, %v7107
        %v7109 = vpop.f32.mrf.mxu0
        %7110 = vdwg.mxu0
        %7111 = vmatpush.bf16.msra.mxu0 %v6889
        %7112 = vmatpush.bf16.msra.mxu0 %v6885
        %7113 = vmatpush.bf16.msra.mxu0 %v6881
        %7114 = vmatpush.bf16.msra.mxu0 %v6877
        %7115 = vmatpush.bf16.msra.mxu0 %v6873
        %7116 = vmatpush.bf16.msra.mxu0 %v6869
        %7117 = vmatpush.bf16.msra.mxu0 %v6865
        %7118 = vmatpush.bf16.msra.mxu0 %v6861
        %7119 = vmatmul.bf16.gmra.mxu0 %v312
        %v7120 = vpop.f32.mrf.mxu0
        %v7121 = vadd.f32 %v7108, %v7120
        %v7122 = vpop.f32.mrf.mxu0
        %7123 = vdwg.mxu0
        %7124 = vmatpush.bf16.msra.mxu0 %v6794
        %7125 = vmatpush.bf16.msra.mxu0 %v6790
        %7126 = vmatpush.bf16.msra.mxu0 %v6786
        %7127 = vmatpush.bf16.msra.mxu0 %v6782
        %7128 = vmatpush.bf16.msra.mxu0 %v6778
        %7129 = vmatpush.bf16.msra.mxu0 %v6774
        %7130 = vmatpush.bf16.msra.mxu0 %v6770
        %7131 = vmatpush.bf16.msra.mxu0 %v6766
        %7132 = vmatmul.bf16.gmra.mxu0 %v309
        %v7133 = vpop.f32.mrf.mxu0
        %v7134 = vadd.f32 %v6374, %v7133
        %v7135 = vpop.f32.mrf.mxu0
        %7136 = vdwg.mxu0
        %7137 = vmatpush.bf16.msra.mxu0 %v6826
        %7138 = vmatpush.bf16.msra.mxu0 %v6822
        %7139 = vmatpush.bf16.msra.mxu0 %v6818
        %7140 = vmatpush.bf16.msra.mxu0 %v6814
        %7141 = vmatpush.bf16.msra.mxu0 %v6810
        %7142 = vmatpush.bf16.msra.mxu0 %v6806
        %7143 = vmatpush.bf16.msra.mxu0 %v6802
        %7144 = vmatpush.bf16.msra.mxu0 %v6798
        %7145 = vmatmul.bf16.gmra.mxu0 %v310
        %v7146 = vpop.f32.mrf.mxu0
        %v7147 = vadd.f32 %v7134, %v7146
        %v7148 = vpop.f32.mrf.mxu0
        %7149 = vdwg.mxu0
        %7150 = vmatpush.bf16.msra.mxu0 %v6858
        %7151 = vmatpush.bf16.msra.mxu0 %v6854
        %7152 = vmatpush.bf16.msra.mxu0 %v6850
        %7153 = vmatpush.bf16.msra.mxu0 %v6846
        %7154 = vmatpush.bf16.msra.mxu0 %v6842
        %7155 = vmatpush.bf16.msra.mxu0 %v6838
        %7156 = vmatpush.bf16.msra.mxu0 %v6834
        %7157 = vmatpush.bf16.msra.mxu0 %v6830
        %7158 = vmatmul.bf16.gmra.mxu0 %v311
        %v7159 = vpop.f32.mrf.mxu0
        %v7160 = vadd.f32 %v7147, %v7159
        %v7161 = vpop.f32.mrf.mxu0
        %7162 = vdwg.mxu0
        %7163 = vmatpush.bf16.msra.mxu0 %v6890
        %7164 = vmatpush.bf16.msra.mxu0 %v6886
        %7165 = vmatpush.bf16.msra.mxu0 %v6882
        %7166 = vmatpush.bf16.msra.mxu0 %v6878
        %7167 = vmatpush.bf16.msra.mxu0 %v6874
        %7168 = vmatpush.bf16.msra.mxu0 %v6870
        %7169 = vmatpush.bf16.msra.mxu0 %v6866
        %7170 = vmatpush.bf16.msra.mxu0 %v6862
        %7171 = vmatmul.bf16.gmra.mxu0 %v312
        %v7172 = vpop.f32.mrf.mxu0
        %v7173 = vadd.f32 %v7160, %v7172
        %v7174 = vpop.f32.mrf.mxu0
        %7175 = vdwg.mxu0
        %7176 = vmatpush.bf16.msra.mxu0 %v6795
        %7177 = vmatpush.bf16.msra.mxu0 %v6791
        %7178 = vmatpush.bf16.msra.mxu0 %v6787
        %7179 = vmatpush.bf16.msra.mxu0 %v6783
        %7180 = vmatpush.bf16.msra.mxu0 %v6779
        %7181 = vmatpush.bf16.msra.mxu0 %v6775
        %7182 = vmatpush.bf16.msra.mxu0 %v6771
        %7183 = vmatpush.bf16.msra.mxu0 %v6767
        %7184 = vmatmul.bf16.gmra.mxu0 %v309
        %v7185 = vpop.f32.mrf.mxu0
        %v7186 = vadd.f32 %v6375, %v7185
        %v7187 = vpop.f32.mrf.mxu0
        %7188 = vdwg.mxu0
        %7189 = vmatpush.bf16.msra.mxu0 %v6827
        %7190 = vmatpush.bf16.msra.mxu0 %v6823
        %7191 = vmatpush.bf16.msra.mxu0 %v6819
        %7192 = vmatpush.bf16.msra.mxu0 %v6815
        %7193 = vmatpush.bf16.msra.mxu0 %v6811
        %7194 = vmatpush.bf16.msra.mxu0 %v6807
        %7195 = vmatpush.bf16.msra.mxu0 %v6803
        %7196 = vmatpush.bf16.msra.mxu0 %v6799
        %7197 = vmatmul.bf16.gmra.mxu0 %v310
        %v7198 = vpop.f32.mrf.mxu0
        %v7199 = vadd.f32 %v7186, %v7198
        %v7200 = vpop.f32.mrf.mxu0
        %7201 = vdwg.mxu0
        %7202 = vmatpush.bf16.msra.mxu0 %v6859
        %7203 = vmatpush.bf16.msra.mxu0 %v6855
        %7204 = vmatpush.bf16.msra.mxu0 %v6851
        %7205 = vmatpush.bf16.msra.mxu0 %v6847
        %7206 = vmatpush.bf16.msra.mxu0 %v6843
        %7207 = vmatpush.bf16.msra.mxu0 %v6839
        %7208 = vmatpush.bf16.msra.mxu0 %v6835
        %7209 = vmatpush.bf16.msra.mxu0 %v6831
        %7210 = vmatmul.bf16.gmra.mxu0 %v311
        %v7211 = vpop.f32.mrf.mxu0
        %v7212 = vadd.f32 %v7199, %v7211
        %v7213 = vpop.f32.mrf.mxu0
        %7214 = vdwg.mxu0
        %7215 = vmatpush.bf16.msra.mxu0 %v6891
        %7216 = vmatpush.bf16.msra.mxu0 %v6887
        %7217 = vmatpush.bf16.msra.mxu0 %v6883
        %7218 = vmatpush.bf16.msra.mxu0 %v6879
        %7219 = vmatpush.bf16.msra.mxu0 %v6875
        %7220 = vmatpush.bf16.msra.mxu0 %v6871
        %7221 = vmatpush.bf16.msra.mxu0 %v6867
        %7222 = vmatpush.bf16.msra.mxu0 %v6863
        %7223 = vmatmul.bf16.gmra.mxu0 %v312
        %v7224 = vpop.f32.mrf.mxu0
        %v7225 = vadd.f32 %v7212, %v7224
        %v7226 = vpop.f32.mrf.mxu0
        %7227 = vdwg.mxu0
        %v7228 = vmax.f32 %v7069, 0.0
        %v7229 = vmax.f32 %v7121, 0.0
        %v7230 = vmax.f32 %v7173, 0.0
        %v7231 = vmax.f32 %v7225, 0.0
        %v7232 = vpack.c.bf16 %v7228, %v7228
        %v7233 = vpack.c.bf16 %v7229, %v7229
        %v7234 = vpack.c.bf16 %v7230, %v7230
        %v7235 = vpack.c.bf16 %v7231, %v7231
        %s7236 = smul.u32 192, 4
        %s7237 = smul.addr %s7236, 4
        %s7238 = scalar_lea.vmem [#allocation8], %s7237
        %v7239 = vld [vmem:[%s7238] sm:$0xff]
        %v7240 = vld [vmem:[%s7238 + $0x8] sm:$0xff]
        %v7241 = vld [vmem:[%s7238 + $0x10] sm:$0xff]
        %v7242 = vld [vmem:[%s7238 + $0x18] sm:$0xff]
        %v7243 = vld [vmem:[%s7238 + $0x20] sm:$0xff]
        %v7244 = vld [vmem:[%s7238 + $0x28] sm:$0xff]
        %v7245 = vld [vmem:[%s7238 + $0x30] sm:$0xff]
        %v7246 = vld [vmem:[%s7238 + $0x38] sm:$0xff]
        %v7247 = vld [vmem:[%s7238 + $0x40] sm:$0xff]
        %v7248 = vld [vmem:[%s7238 + $0x48] sm:$0xff]
        %v7249 = vld [vmem:[%s7238 + $0x50] sm:$0xff]
        %v7250 = vld [vmem:[%s7238 + $0x58] sm:$0xff]
        %v7251 = vld [vmem:[%s7238 + $0x60] sm:$0xff]
        %v7252 = vld [vmem:[%s7238 + $0x68] sm:$0xff]
        %v7253 = vld [vmem:[%s7238 + $0x70] sm:$0xff]
        %v7254 = vld [vmem:[%s7238 + $0x78] sm:$0xff]
        %v7255 = vld [vmem:[%s7238 + $0x80] sm:$0xff]
        %v7256 = vld [vmem:[%s7238 + $0x88] sm:$0xff]
        %v7257 = vld [vmem:[%s7238 + $0x90] sm:$0xff]
        %v7258 = vld [vmem:[%s7238 + $0x98] sm:$0xff]
        %v7259 = vld [vmem:[%s7238 + $0xa0] sm:$0xff]
        %v7260 = vld [vmem:[%s7238 + $0xa8] sm:$0xff]
        %v7261 = vld [vmem:[%s7238 + $0xb0] sm:$0xff]
        %v7262 = vld [vmem:[%s7238 + $0xb8] sm:$0xff]
        %v7263 = vld [vmem:[%s7238 + $0xc0] sm:$0xff]
        %v7264 = vld [vmem:[%s7238 + $0xc8] sm:$0xff]
        %v7265 = vld [vmem:[%s7238 + $0xd0] sm:$0xff]
        %v7266 = vld [vmem:[%s7238 + $0xd8] sm:$0xff]
        %v7267 = vld [vmem:[%s7238 + $0xe0] sm:$0xff]
        %v7268 = vld [vmem:[%s7238 + $0xe8] sm:$0xff]
        %v7269 = vld [vmem:[%s7238 + $0xf0] sm:$0xff]
        %v7270 = vld [vmem:[%s7238 + $0xf8] sm:$0xff]
        %v7271 = vld [vmem:[%s7238 + $0x100] sm:$0xff]
        %v7272 = vld [vmem:[%s7238 + $0x108] sm:$0xff]
        %v7273 = vld [vmem:[%s7238 + $0x110] sm:$0xff]
        %v7274 = vld [vmem:[%s7238 + $0x118] sm:$0xff]
        %v7275 = vld [vmem:[%s7238 + $0x120] sm:$0xff]
        %v7276 = vld [vmem:[%s7238 + $0x128] sm:$0xff]
        %v7277 = vld [vmem:[%s7238 + $0x130] sm:$0xff]
        %v7278 = vld [vmem:[%s7238 + $0x138] sm:$0xff]
        %v7279 = vld [vmem:[%s7238 + $0x140] sm:$0xff]
        %v7280 = vld [vmem:[%s7238 + $0x148] sm:$0xff]
        %v7281 = vld [vmem:[%s7238 + $0x150] sm:$0xff]
        %v7282 = vld [vmem:[%s7238 + $0x158] sm:$0xff]
        %v7283 = vld [vmem:[%s7238 + $0x160] sm:$0xff]
        %v7284 = vld [vmem:[%s7238 + $0x168] sm:$0xff]
        %v7285 = vld [vmem:[%s7238 + $0x170] sm:$0xff]
        %v7286 = vld [vmem:[%s7238 + $0x178] sm:$0xff]
        %v7287 = vld [vmem:[%s7238 + $0x180] sm:$0xff]
        %v7288 = vld [vmem:[%s7238 + $0x188] sm:$0xff]
        %v7289 = vld [vmem:[%s7238 + $0x190] sm:$0xff]
        %v7290 = vld [vmem:[%s7238 + $0x198] sm:$0xff]
        %v7291 = vld [vmem:[%s7238 + $0x1a0] sm:$0xff]
        %v7292 = vld [vmem:[%s7238 + $0x1a8] sm:$0xff]
        %v7293 = vld [vmem:[%s7238 + $0x1b0] sm:$0xff]
        %v7294 = vld [vmem:[%s7238 + $0x1b8] sm:$0xff]
        %v7295 = vld [vmem:[%s7238 + $0x1c0] sm:$0xff]
        %v7296 = vld [vmem:[%s7238 + $0x1c8] sm:$0xff]
        %v7297 = vld [vmem:[%s7238 + $0x1d0] sm:$0xff]
        %v7298 = vld [vmem:[%s7238 + $0x1d8] sm:$0xff]
        %v7299 = vld [vmem:[%s7238 + $0x1e0] sm:$0xff]
        %v7300 = vld [vmem:[%s7238 + $0x1e8] sm:$0xff]
        %v7301 = vld [vmem:[%s7238 + $0x1f0] sm:$0xff]
        %v7302 = vld [vmem:[%s7238 + $0x1f8] sm:$0xff]
        %v7303 = vld [vmem:[%s7238 + $0x200] sm:$0xff]
        %v7304 = vld [vmem:[%s7238 + $0x208] sm:$0xff]
        %v7305 = vld [vmem:[%s7238 + $0x210] sm:$0xff]
        %v7306 = vld [vmem:[%s7238 + $0x218] sm:$0xff]
        %v7307 = vld [vmem:[%s7238 + $0x220] sm:$0xff]
        %v7308 = vld [vmem:[%s7238 + $0x228] sm:$0xff]
        %v7309 = vld [vmem:[%s7238 + $0x230] sm:$0xff]
        %v7310 = vld [vmem:[%s7238 + $0x238] sm:$0xff]
        %v7311 = vld [vmem:[%s7238 + $0x240] sm:$0xff]
        %v7312 = vld [vmem:[%s7238 + $0x248] sm:$0xff]
        %v7313 = vld [vmem:[%s7238 + $0x250] sm:$0xff]
        %v7314 = vld [vmem:[%s7238 + $0x258] sm:$0xff]
        %v7315 = vld [vmem:[%s7238 + $0x260] sm:$0xff]
        %v7316 = vld [vmem:[%s7238 + $0x268] sm:$0xff]
        %v7317 = vld [vmem:[%s7238 + $0x270] sm:$0xff]
        %v7318 = vld [vmem:[%s7238 + $0x278] sm:$0xff]
        %v7319 = vld [vmem:[%s7238 + $0x280] sm:$0xff]
        %v7320 = vld [vmem:[%s7238 + $0x288] sm:$0xff]
        %v7321 = vld [vmem:[%s7238 + $0x290] sm:$0xff]
        %v7322 = vld [vmem:[%s7238 + $0x298] sm:$0xff]
        %v7323 = vld [vmem:[%s7238 + $0x2a0] sm:$0xff]
        %v7324 = vld [vmem:[%s7238 + $0x2a8] sm:$0xff]
        %v7325 = vld [vmem:[%s7238 + $0x2b0] sm:$0xff]
        %v7326 = vld [vmem:[%s7238 + $0x2b8] sm:$0xff]
        %v7327 = vld [vmem:[%s7238 + $0x2c0] sm:$0xff]
        %v7328 = vld [vmem:[%s7238 + $0x2c8] sm:$0xff]
        %v7329 = vld [vmem:[%s7238 + $0x2d0] sm:$0xff]
        %v7330 = vld [vmem:[%s7238 + $0x2d8] sm:$0xff]
        %v7331 = vld [vmem:[%s7238 + $0x2e0] sm:$0xff]
        %v7332 = vld [vmem:[%s7238 + $0x2e8] sm:$0xff]
        %v7333 = vld [vmem:[%s7238 + $0x2f0] sm:$0xff]
        %v7334 = vld [vmem:[%s7238 + $0x2f8] sm:$0xff]
        %v7335 = vld [vmem:[%s7238 + $0x300] sm:$0xff]
        %v7336 = vld [vmem:[%s7238 + $0x308] sm:$0xff]
        %v7337 = vld [vmem:[%s7238 + $0x310] sm:$0xff]
        %v7338 = vld [vmem:[%s7238 + $0x318] sm:$0xff]
        %v7339 = vld [vmem:[%s7238 + $0x320] sm:$0xff]
        %v7340 = vld [vmem:[%s7238 + $0x328] sm:$0xff]
        %v7341 = vld [vmem:[%s7238 + $0x330] sm:$0xff]
        %v7342 = vld [vmem:[%s7238 + $0x338] sm:$0xff]
        %v7343 = vld [vmem:[%s7238 + $0x340] sm:$0xff]
        %v7344 = vld [vmem:[%s7238 + $0x348] sm:$0xff]
        %v7345 = vld [vmem:[%s7238 + $0x350] sm:$0xff]
        %v7346 = vld [vmem:[%s7238 + $0x358] sm:$0xff]
        %v7347 = vld [vmem:[%s7238 + $0x360] sm:$0xff]
        %v7348 = vld [vmem:[%s7238 + $0x368] sm:$0xff]
        %v7349 = vld [vmem:[%s7238 + $0x370] sm:$0xff]
        %v7350 = vld [vmem:[%s7238 + $0x378] sm:$0xff]
        %v7351 = vld [vmem:[%s7238 + $0x380] sm:$0xff]
        %v7352 = vld [vmem:[%s7238 + $0x388] sm:$0xff]
        %v7353 = vld [vmem:[%s7238 + $0x390] sm:$0xff]
        %v7354 = vld [vmem:[%s7238 + $0x398] sm:$0xff]
        %v7355 = vld [vmem:[%s7238 + $0x3a0] sm:$0xff]
        %v7356 = vld [vmem:[%s7238 + $0x3a8] sm:$0xff]
        %v7357 = vld [vmem:[%s7238 + $0x3b0] sm:$0xff]
        %v7358 = vld [vmem:[%s7238 + $0x3b8] sm:$0xff]
        %v7359 = vld [vmem:[%s7238 + $0x3c0] sm:$0xff]
        %v7360 = vld [vmem:[%s7238 + $0x3c8] sm:$0xff]
        %v7361 = vld [vmem:[%s7238 + $0x3d0] sm:$0xff]
        %v7362 = vld [vmem:[%s7238 + $0x3d8] sm:$0xff]
        %v7363 = vld [vmem:[%s7238 + $0x3e0] sm:$0xff]
        %v7364 = vld [vmem:[%s7238 + $0x3e8] sm:$0xff]
        %v7365 = vld [vmem:[%s7238 + $0x3f0] sm:$0xff]
        %v7366 = vld [vmem:[%s7238 + $0x3f8] sm:$0xff]
        %v7495 = vunpack.c.l.b16 %v7239
        %v7496 = vunpack.c.h.b16 %v7239
        %v7497 = vunpack.c.l.b16 %v7240
        %v7498 = vunpack.c.h.b16 %v7240
        %v7499 = vunpack.c.l.b16 %v7241
        %v7500 = vunpack.c.h.b16 %v7241
        %v7501 = vunpack.c.l.b16 %v7242
        %v7502 = vunpack.c.h.b16 %v7242
        %v7503 = vunpack.c.l.b16 %v7243
        %v7504 = vunpack.c.h.b16 %v7243
        %v7505 = vunpack.c.l.b16 %v7244
        %v7506 = vunpack.c.h.b16 %v7244
        %v7507 = vunpack.c.l.b16 %v7245
        %v7508 = vunpack.c.h.b16 %v7245
        %v7509 = vunpack.c.l.b16 %v7246
        %v7510 = vunpack.c.h.b16 %v7246
        %v7511 = vunpack.c.l.b16 %v7247
        %v7512 = vunpack.c.h.b16 %v7247
        %v7513 = vunpack.c.l.b16 %v7248
        %v7514 = vunpack.c.h.b16 %v7248
        %v7515 = vunpack.c.l.b16 %v7249
        %v7516 = vunpack.c.h.b16 %v7249
        %v7517 = vunpack.c.l.b16 %v7250
        %v7518 = vunpack.c.h.b16 %v7250
        %v7519 = vunpack.c.l.b16 %v7251
        %v7520 = vunpack.c.h.b16 %v7251
        %v7521 = vunpack.c.l.b16 %v7252
        %v7522 = vunpack.c.h.b16 %v7252
        %v7523 = vunpack.c.l.b16 %v7253
        %v7524 = vunpack.c.h.b16 %v7253
        %v7525 = vunpack.c.l.b16 %v7254
        %v7526 = vunpack.c.h.b16 %v7254
        %v7527 = vunpack.c.l.b16 %v7255
        %v7528 = vunpack.c.h.b16 %v7255
        %v7529 = vunpack.c.l.b16 %v7256
        %v7530 = vunpack.c.h.b16 %v7256
        %v7531 = vunpack.c.l.b16 %v7257
        %v7532 = vunpack.c.h.b16 %v7257
        %v7533 = vunpack.c.l.b16 %v7258
        %v7534 = vunpack.c.h.b16 %v7258
        %v7535 = vunpack.c.l.b16 %v7259
        %v7536 = vunpack.c.h.b16 %v7259
        %v7537 = vunpack.c.l.b16 %v7260
        %v7538 = vunpack.c.h.b16 %v7260
        %v7539 = vunpack.c.l.b16 %v7261
        %v7540 = vunpack.c.h.b16 %v7261
        %v7541 = vunpack.c.l.b16 %v7262
        %v7542 = vunpack.c.h.b16 %v7262
        %v7543 = vunpack.c.l.b16 %v7263
        %v7544 = vunpack.c.h.b16 %v7263
        %v7545 = vunpack.c.l.b16 %v7264
        %v7546 = vunpack.c.h.b16 %v7264
        %v7547 = vunpack.c.l.b16 %v7265
        %v7548 = vunpack.c.h.b16 %v7265
        %v7549 = vunpack.c.l.b16 %v7266
        %v7550 = vunpack.c.h.b16 %v7266
        %v7551 = vunpack.c.l.b16 %v7267
        %v7552 = vunpack.c.h.b16 %v7267
        %v7553 = vunpack.c.l.b16 %v7268
        %v7554 = vunpack.c.h.b16 %v7268
        %v7555 = vunpack.c.l.b16 %v7269
        %v7556 = vunpack.c.h.b16 %v7269
        %v7557 = vunpack.c.l.b16 %v7270
        %v7558 = vunpack.c.h.b16 %v7270
        %v7559 = vunpack.c.l.b16 %v7271
        %v7560 = vunpack.c.h.b16 %v7271
        %v7561 = vunpack.c.l.b16 %v7272
        %v7562 = vunpack.c.h.b16 %v7272
        %v7563 = vunpack.c.l.b16 %v7273
        %v7564 = vunpack.c.h.b16 %v7273
        %v7565 = vunpack.c.l.b16 %v7274
        %v7566 = vunpack.c.h.b16 %v7274
        %v7567 = vunpack.c.l.b16 %v7275
        %v7568 = vunpack.c.h.b16 %v7275
        %v7569 = vunpack.c.l.b16 %v7276
        %v7570 = vunpack.c.h.b16 %v7276
        %v7571 = vunpack.c.l.b16 %v7277
        %v7572 = vunpack.c.h.b16 %v7277
        %v7573 = vunpack.c.l.b16 %v7278
        %v7574 = vunpack.c.h.b16 %v7278
        %v7575 = vunpack.c.l.b16 %v7279
        %v7576 = vunpack.c.h.b16 %v7279
        %v7577 = vunpack.c.l.b16 %v7280
        %v7578 = vunpack.c.h.b16 %v7280
        %v7579 = vunpack.c.l.b16 %v7281
        %v7580 = vunpack.c.h.b16 %v7281
        %v7581 = vunpack.c.l.b16 %v7282
        %v7582 = vunpack.c.h.b16 %v7282
        %v7583 = vunpack.c.l.b16 %v7283
        %v7584 = vunpack.c.h.b16 %v7283
        %v7585 = vunpack.c.l.b16 %v7284
        %v7586 = vunpack.c.h.b16 %v7284
        %v7587 = vunpack.c.l.b16 %v7285
        %v7588 = vunpack.c.h.b16 %v7285
        %v7589 = vunpack.c.l.b16 %v7286
        %v7590 = vunpack.c.h.b16 %v7286
        %v7591 = vunpack.c.l.b16 %v7287
        %v7592 = vunpack.c.h.b16 %v7287
        %v7593 = vunpack.c.l.b16 %v7288
        %v7594 = vunpack.c.h.b16 %v7288
        %v7595 = vunpack.c.l.b16 %v7289
        %v7596 = vunpack.c.h.b16 %v7289
        %v7597 = vunpack.c.l.b16 %v7290
        %v7598 = vunpack.c.h.b16 %v7290
        %v7599 = vunpack.c.l.b16 %v7291
        %v7600 = vunpack.c.h.b16 %v7291
        %v7601 = vunpack.c.l.b16 %v7292
        %v7602 = vunpack.c.h.b16 %v7292
        %v7603 = vunpack.c.l.b16 %v7293
        %v7604 = vunpack.c.h.b16 %v7293
        %v7605 = vunpack.c.l.b16 %v7294
        %v7606 = vunpack.c.h.b16 %v7294
        %v7607 = vunpack.c.l.b16 %v7295
        %v7608 = vunpack.c.h.b16 %v7295
        %v7609 = vunpack.c.l.b16 %v7296
        %v7610 = vunpack.c.h.b16 %v7296
        %v7611 = vunpack.c.l.b16 %v7297
        %v7612 = vunpack.c.h.b16 %v7297
        %v7613 = vunpack.c.l.b16 %v7298
        %v7614 = vunpack.c.h.b16 %v7298
        %v7615 = vunpack.c.l.b16 %v7299
        %v7616 = vunpack.c.h.b16 %v7299
        %v7617 = vunpack.c.l.b16 %v7300
        %v7618 = vunpack.c.h.b16 %v7300
        %v7619 = vunpack.c.l.b16 %v7301
        %v7620 = vunpack.c.h.b16 %v7301
        %v7621 = vunpack.c.l.b16 %v7302
        %v7622 = vunpack.c.h.b16 %v7302
        %v7623 = vunpack.c.l.b16 %v7303
        %v7624 = vunpack.c.h.b16 %v7303
        %v7625 = vunpack.c.l.b16 %v7304
        %v7626 = vunpack.c.h.b16 %v7304
        %v7627 = vunpack.c.l.b16 %v7305
        %v7628 = vunpack.c.h.b16 %v7305
        %v7629 = vunpack.c.l.b16 %v7306
        %v7630 = vunpack.c.h.b16 %v7306
        %v7631 = vunpack.c.l.b16 %v7307
        %v7632 = vunpack.c.h.b16 %v7307
        %v7633 = vunpack.c.l.b16 %v7308
        %v7634 = vunpack.c.h.b16 %v7308
        %v7635 = vunpack.c.l.b16 %v7309
        %v7636 = vunpack.c.h.b16 %v7309
        %v7637 = vunpack.c.l.b16 %v7310
        %v7638 = vunpack.c.h.b16 %v7310
        %v7639 = vunpack.c.l.b16 %v7311
        %v7640 = vunpack.c.h.b16 %v7311
        %v7641 = vunpack.c.l.b16 %v7312
        %v7642 = vunpack.c.h.b16 %v7312
        %v7643 = vunpack.c.l.b16 %v7313
        %v7644 = vunpack.c.h.b16 %v7313
        %v7645 = vunpack.c.l.b16 %v7314
        %v7646 = vunpack.c.h.b16 %v7314
        %v7647 = vunpack.c.l.b16 %v7315
        %v7648 = vunpack.c.h.b16 %v7315
        %v7649 = vunpack.c.l.b16 %v7316
        %v7650 = vunpack.c.h.b16 %v7316
        %v7651 = vunpack.c.l.b16 %v7317
        %v7652 = vunpack.c.h.b16 %v7317
        %v7653 = vunpack.c.l.b16 %v7318
        %v7654 = vunpack.c.h.b16 %v7318
        %v7655 = vunpack.c.l.b16 %v7319
        %v7656 = vunpack.c.h.b16 %v7319
        %v7657 = vunpack.c.l.b16 %v7320
        %v7658 = vunpack.c.h.b16 %v7320
        %v7659 = vunpack.c.l.b16 %v7321
        %v7660 = vunpack.c.h.b16 %v7321
        %v7661 = vunpack.c.l.b16 %v7322
        %v7662 = vunpack.c.h.b16 %v7322
        %v7663 = vunpack.c.l.b16 %v7323
        %v7664 = vunpack.c.h.b16 %v7323
        %v7665 = vunpack.c.l.b16 %v7324
        %v7666 = vunpack.c.h.b16 %v7324
        %v7667 = vunpack.c.l.b16 %v7325
        %v7668 = vunpack.c.h.b16 %v7325
        %v7669 = vunpack.c.l.b16 %v7326
        %v7670 = vunpack.c.h.b16 %v7326
        %v7671 = vunpack.c.l.b16 %v7327
        %v7672 = vunpack.c.h.b16 %v7327
        %v7673 = vunpack.c.l.b16 %v7328
        %v7674 = vunpack.c.h.b16 %v7328
        %v7675 = vunpack.c.l.b16 %v7329
        %v7676 = vunpack.c.h.b16 %v7329
        %v7677 = vunpack.c.l.b16 %v7330
        %v7678 = vunpack.c.h.b16 %v7330
        %v7679 = vunpack.c.l.b16 %v7331
        %v7680 = vunpack.c.h.b16 %v7331
        %v7681 = vunpack.c.l.b16 %v7332
        %v7682 = vunpack.c.h.b16 %v7332
        %v7683 = vunpack.c.l.b16 %v7333
        %v7684 = vunpack.c.h.b16 %v7333
        %v7685 = vunpack.c.l.b16 %v7334
        %v7686 = vunpack.c.h.b16 %v7334
        %v7687 = vunpack.c.l.b16 %v7335
        %v7688 = vunpack.c.h.b16 %v7335
        %v7689 = vunpack.c.l.b16 %v7336
        %v7690 = vunpack.c.h.b16 %v7336
        %v7691 = vunpack.c.l.b16 %v7337
        %v7692 = vunpack.c.h.b16 %v7337
        %v7693 = vunpack.c.l.b16 %v7338
        %v7694 = vunpack.c.h.b16 %v7338
        %v7695 = vunpack.c.l.b16 %v7339
        %v7696 = vunpack.c.h.b16 %v7339
        %v7697 = vunpack.c.l.b16 %v7340
        %v7698 = vunpack.c.h.b16 %v7340
        %v7699 = vunpack.c.l.b16 %v7341
        %v7700 = vunpack.c.h.b16 %v7341
        %v7701 = vunpack.c.l.b16 %v7342
        %v7702 = vunpack.c.h.b16 %v7342
        %v7703 = vunpack.c.l.b16 %v7343
        %v7704 = vunpack.c.h.b16 %v7343
        %v7705 = vunpack.c.l.b16 %v7344
        %v7706 = vunpack.c.h.b16 %v7344
        %v7707 = vunpack.c.l.b16 %v7345
        %v7708 = vunpack.c.h.b16 %v7345
        %v7709 = vunpack.c.l.b16 %v7346
        %v7710 = vunpack.c.h.b16 %v7346
        %v7711 = vunpack.c.l.b16 %v7347
        %v7712 = vunpack.c.h.b16 %v7347
        %v7713 = vunpack.c.l.b16 %v7348
        %v7714 = vunpack.c.h.b16 %v7348
        %v7715 = vunpack.c.l.b16 %v7349
        %v7716 = vunpack.c.h.b16 %v7349
        %v7717 = vunpack.c.l.b16 %v7350
        %v7718 = vunpack.c.h.b16 %v7350
        %v7719 = vunpack.c.l.b16 %v7351
        %v7720 = vunpack.c.h.b16 %v7351
        %v7721 = vunpack.c.l.b16 %v7352
        %v7722 = vunpack.c.h.b16 %v7352
        %v7723 = vunpack.c.l.b16 %v7353
        %v7724 = vunpack.c.h.b16 %v7353
        %v7725 = vunpack.c.l.b16 %v7354
        %v7726 = vunpack.c.h.b16 %v7354
        %v7727 = vunpack.c.l.b16 %v7355
        %v7728 = vunpack.c.h.b16 %v7355
        %v7729 = vunpack.c.l.b16 %v7356
        %v7730 = vunpack.c.h.b16 %v7356
        %v7731 = vunpack.c.l.b16 %v7357
        %v7732 = vunpack.c.h.b16 %v7357
        %v7733 = vunpack.c.l.b16 %v7358
        %v7734 = vunpack.c.h.b16 %v7358
        %v7735 = vunpack.c.l.b16 %v7359
        %v7736 = vunpack.c.h.b16 %v7359
        %v7737 = vunpack.c.l.b16 %v7360
        %v7738 = vunpack.c.h.b16 %v7360
        %v7739 = vunpack.c.l.b16 %v7361
        %v7740 = vunpack.c.h.b16 %v7361
        %v7741 = vunpack.c.l.b16 %v7362
        %v7742 = vunpack.c.h.b16 %v7362
        %v7743 = vunpack.c.l.b16 %v7363
        %v7744 = vunpack.c.h.b16 %v7363
        %v7745 = vunpack.c.l.b16 %v7364
        %v7746 = vunpack.c.h.b16 %v7364
        %v7747 = vunpack.c.l.b16 %v7365
        %v7748 = vunpack.c.h.b16 %v7365
        %v7749 = vunpack.c.l.b16 %v7366
        %v7750 = vunpack.c.h.b16 %v7366
        %v7751 = vpack.c.b16 %v7499, %v7495
        %v7752 = vpack.c.b16 %v7500, %v7496
        %v7753 = vpack.c.b16 %v7501, %v7497
        %v7754 = vpack.c.b16 %v7502, %v7498
        %v7755 = vpack.c.b16 %v7507, %v7503
        %v7756 = vpack.c.b16 %v7508, %v7504
        %v7757 = vpack.c.b16 %v7509, %v7505
        %v7758 = vpack.c.b16 %v7510, %v7506
        %v7759 = vpack.c.b16 %v7515, %v7511
        %v7760 = vpack.c.b16 %v7516, %v7512
        %v7761 = vpack.c.b16 %v7517, %v7513
        %v7762 = vpack.c.b16 %v7518, %v7514
        %v7763 = vpack.c.b16 %v7523, %v7519
        %v7764 = vpack.c.b16 %v7524, %v7520
        %v7765 = vpack.c.b16 %v7525, %v7521
        %v7766 = vpack.c.b16 %v7526, %v7522
        %v7767 = vpack.c.b16 %v7531, %v7527
        %v7768 = vpack.c.b16 %v7532, %v7528
        %v7769 = vpack.c.b16 %v7533, %v7529
        %v7770 = vpack.c.b16 %v7534, %v7530
        %v7771 = vpack.c.b16 %v7539, %v7535
        %v7772 = vpack.c.b16 %v7540, %v7536
        %v7773 = vpack.c.b16 %v7541, %v7537
        %v7774 = vpack.c.b16 %v7542, %v7538
        %v7775 = vpack.c.b16 %v7547, %v7543
        %v7776 = vpack.c.b16 %v7548, %v7544
        %v7777 = vpack.c.b16 %v7549, %v7545
        %v7778 = vpack.c.b16 %v7550, %v7546
        %v7779 = vpack.c.b16 %v7555, %v7551
        %v7780 = vpack.c.b16 %v7556, %v7552
        %v7781 = vpack.c.b16 %v7557, %v7553
        %v7782 = vpack.c.b16 %v7558, %v7554
        %v7783 = vpack.c.b16 %v7563, %v7559
        %v7784 = vpack.c.b16 %v7564, %v7560
        %v7785 = vpack.c.b16 %v7565, %v7561
        %v7786 = vpack.c.b16 %v7566, %v7562
        %v7787 = vpack.c.b16 %v7571, %v7567
        %v7788 = vpack.c.b16 %v7572, %v7568
        %v7789 = vpack.c.b16 %v7573, %v7569
        %v7790 = vpack.c.b16 %v7574, %v7570
        %v7791 = vpack.c.b16 %v7579, %v7575
        %v7792 = vpack.c.b16 %v7580, %v7576
        %v7793 = vpack.c.b16 %v7581, %v7577
        %v7794 = vpack.c.b16 %v7582, %v7578
        %v7795 = vpack.c.b16 %v7587, %v7583
        %v7796 = vpack.c.b16 %v7588, %v7584
        %v7797 = vpack.c.b16 %v7589, %v7585
        %v7798 = vpack.c.b16 %v7590, %v7586
        %v7799 = vpack.c.b16 %v7595, %v7591
        %v7800 = vpack.c.b16 %v7596, %v7592
        %v7801 = vpack.c.b16 %v7597, %v7593
        %v7802 = vpack.c.b16 %v7598, %v7594
        %v7803 = vpack.c.b16 %v7603, %v7599
        %v7804 = vpack.c.b16 %v7604, %v7600
        %v7805 = vpack.c.b16 %v7605, %v7601
        %v7806 = vpack.c.b16 %v7606, %v7602
        %v7807 = vpack.c.b16 %v7611, %v7607
        %v7808 = vpack.c.b16 %v7612, %v7608
        %v7809 = vpack.c.b16 %v7613, %v7609
        %v7810 = vpack.c.b16 %v7614, %v7610
        %v7811 = vpack.c.b16 %v7619, %v7615
        %v7812 = vpack.c.b16 %v7620, %v7616
        %v7813 = vpack.c.b16 %v7621, %v7617
        %v7814 = vpack.c.b16 %v7622, %v7618
        %v7815 = vpack.c.b16 %v7627, %v7623
        %v7816 = vpack.c.b16 %v7628, %v7624
        %v7817 = vpack.c.b16 %v7629, %v7625
        %v7818 = vpack.c.b16 %v7630, %v7626
        %v7819 = vpack.c.b16 %v7635, %v7631
        %v7820 = vpack.c.b16 %v7636, %v7632
        %v7821 = vpack.c.b16 %v7637, %v7633
        %v7822 = vpack.c.b16 %v7638, %v7634
        %v7823 = vpack.c.b16 %v7643, %v7639
        %v7824 = vpack.c.b16 %v7644, %v7640
        %v7825 = vpack.c.b16 %v7645, %v7641
        %v7826 = vpack.c.b16 %v7646, %v7642
        %v7827 = vpack.c.b16 %v7651, %v7647
        %v7828 = vpack.c.b16 %v7652, %v7648
        %v7829 = vpack.c.b16 %v7653, %v7649
        %v7830 = vpack.c.b16 %v7654, %v7650
        %v7831 = vpack.c.b16 %v7659, %v7655
        %v7832 = vpack.c.b16 %v7660, %v7656
        %v7833 = vpack.c.b16 %v7661, %v7657
        %v7834 = vpack.c.b16 %v7662, %v7658
        %v7835 = vpack.c.b16 %v7667, %v7663
        %v7836 = vpack.c.b16 %v7668, %v7664
        %v7837 = vpack.c.b16 %v7669, %v7665
        %v7838 = vpack.c.b16 %v7670, %v7666
        %v7839 = vpack.c.b16 %v7675, %v7671
        %v7840 = vpack.c.b16 %v7676, %v7672
        %v7841 = vpack.c.b16 %v7677, %v7673
        %v7842 = vpack.c.b16 %v7678, %v7674
        %v7843 = vpack.c.b16 %v7683, %v7679
        %v7844 = vpack.c.b16 %v7684, %v7680
        %v7845 = vpack.c.b16 %v7685, %v7681
        %v7846 = vpack.c.b16 %v7686, %v7682
        %v7847 = vpack.c.b16 %v7691, %v7687
        %v7848 = vpack.c.b16 %v7692, %v7688
        %v7849 = vpack.c.b16 %v7693, %v7689
        %v7850 = vpack.c.b16 %v7694, %v7690
        %v7851 = vpack.c.b16 %v7699, %v7695
        %v7852 = vpack.c.b16 %v7700, %v7696
        %v7853 = vpack.c.b16 %v7701, %v7697
        %v7854 = vpack.c.b16 %v7702, %v7698
        %v7855 = vpack.c.b16 %v7707, %v7703
        %v7856 = vpack.c.b16 %v7708, %v7704
        %v7857 = vpack.c.b16 %v7709, %v7705
        %v7858 = vpack.c.b16 %v7710, %v7706
        %v7859 = vpack.c.b16 %v7715, %v7711
        %v7860 = vpack.c.b16 %v7716, %v7712
        %v7861 = vpack.c.b16 %v7717, %v7713
        %v7862 = vpack.c.b16 %v7718, %v7714
        %v7863 = vpack.c.b16 %v7723, %v7719
        %v7864 = vpack.c.b16 %v7724, %v7720
        %v7865 = vpack.c.b16 %v7725, %v7721
        %v7866 = vpack.c.b16 %v7726, %v7722
        %v7867 = vpack.c.b16 %v7731, %v7727
        %v7868 = vpack.c.b16 %v7732, %v7728
        %v7869 = vpack.c.b16 %v7733, %v7729
        %v7870 = vpack.c.b16 %v7734, %v7730
        %v7871 = vpack.c.b16 %v7739, %v7735
        %v7872 = vpack.c.b16 %v7740, %v7736
        %v7873 = vpack.c.b16 %v7741, %v7737
        %v7874 = vpack.c.b16 %v7742, %v7738
        %v7875 = vpack.c.b16 %v7747, %v7743
        %v7876 = vpack.c.b16 %v7748, %v7744
        %v7877 = vpack.c.b16 %v7749, %v7745
        %v7878 = vpack.c.b16 %v7750, %v7746
        %8007 = vmatpush.bf16.msra.mxu0 %v7779
        %8008 = vmatpush.bf16.msra.mxu0 %v7775
        %8009 = vmatpush.bf16.msra.mxu0 %v7771
        %8010 = vmatpush.bf16.msra.mxu0 %v7767
        %8011 = vmatpush.bf16.msra.mxu0 %v7763
        %8012 = vmatpush.bf16.msra.mxu0 %v7759
        %8013 = vmatpush.bf16.msra.mxu0 %v7755
        %8014 = vmatpush.bf16.msra.mxu0 %v7751
        %8015 = vmatmul.bf16.gmra.mxu0 %v7232
        %v8016 = vpop.f32.mrf.mxu0
        %v8017 = vadd.f32 0.0, %v8016
        %v8018 = vpop.f32.mrf.mxu0
        %8019 = vdwg.mxu0
        %8020 = vmatpush.bf16.msra.mxu0 %v7811
        %8021 = vmatpush.bf16.msra.mxu0 %v7807
        %8022 = vmatpush.bf16.msra.mxu0 %v7803
        %8023 = vmatpush.bf16.msra.mxu0 %v7799
        %8024 = vmatpush.bf16.msra.mxu0 %v7795
        %8025 = vmatpush.bf16.msra.mxu0 %v7791
        %8026 = vmatpush.bf16.msra.mxu0 %v7787
        %8027 = vmatpush.bf16.msra.mxu0 %v7783
        %8028 = vmatmul.bf16.gmra.mxu0 %v7233
        %v8029 = vpop.f32.mrf.mxu0
        %v8030 = vadd.f32 %v8017, %v8029
        %v8031 = vpop.f32.mrf.mxu0
        %8032 = vdwg.mxu0
        %8033 = vmatpush.bf16.msra.mxu0 %v7843
        %8034 = vmatpush.bf16.msra.mxu0 %v7839
        %8035 = vmatpush.bf16.msra.mxu0 %v7835
        %8036 = vmatpush.bf16.msra.mxu0 %v7831
        %8037 = vmatpush.bf16.msra.mxu0 %v7827
        %8038 = vmatpush.bf16.msra.mxu0 %v7823
        %8039 = vmatpush.bf16.msra.mxu0 %v7819
        %8040 = vmatpush.bf16.msra.mxu0 %v7815
        %8041 = vmatmul.bf16.gmra.mxu0 %v7234
        %v8042 = vpop.f32.mrf.mxu0
        %v8043 = vadd.f32 %v8030, %v8042
        %v8044 = vpop.f32.mrf.mxu0
        %8045 = vdwg.mxu0
        %8046 = vmatpush.bf16.msra.mxu0 %v7875
        %8047 = vmatpush.bf16.msra.mxu0 %v7871
        %8048 = vmatpush.bf16.msra.mxu0 %v7867
        %8049 = vmatpush.bf16.msra.mxu0 %v7863
        %8050 = vmatpush.bf16.msra.mxu0 %v7859
        %8051 = vmatpush.bf16.msra.mxu0 %v7855
        %8052 = vmatpush.bf16.msra.mxu0 %v7851
        %8053 = vmatpush.bf16.msra.mxu0 %v7847
        %8054 = vmatmul.bf16.gmra.mxu0 %v7235
        %v8055 = vpop.f32.mrf.mxu0
        %v8056 = vadd.f32 %v8043, %v8055
        %v8057 = vpop.f32.mrf.mxu0
        %8058 = vdwg.mxu0
        %8059 = vmatpush.bf16.msra.mxu0 %v7780
        %8060 = vmatpush.bf16.msra.mxu0 %v7776
        %8061 = vmatpush.bf16.msra.mxu0 %v7772
        %8062 = vmatpush.bf16.msra.mxu0 %v7768
        %8063 = vmatpush.bf16.msra.mxu0 %v7764
        %8064 = vmatpush.bf16.msra.mxu0 %v7760
        %8065 = vmatpush.bf16.msra.mxu0 %v7756
        %8066 = vmatpush.bf16.msra.mxu0 %v7752
        %8067 = vmatmul.bf16.gmra.mxu0 %v7232
        %v8068 = vpop.f32.mrf.mxu0
        %v8069 = vadd.f32 0.0, %v8068
        %v8070 = vpop.f32.mrf.mxu0
        %8071 = vdwg.mxu0
        %8072 = vmatpush.bf16.msra.mxu0 %v7812
        %8073 = vmatpush.bf16.msra.mxu0 %v7808
        %8074 = vmatpush.bf16.msra.mxu0 %v7804
        %8075 = vmatpush.bf16.msra.mxu0 %v7800
        %8076 = vmatpush.bf16.msra.mxu0 %v7796
        %8077 = vmatpush.bf16.msra.mxu0 %v7792
        %8078 = vmatpush.bf16.msra.mxu0 %v7788
        %8079 = vmatpush.bf16.msra.mxu0 %v7784
        %8080 = vmatmul.bf16.gmra.mxu0 %v7233
        %v8081 = vpop.f32.mrf.mxu0
        %v8082 = vadd.f32 %v8069, %v8081
        %v8083 = vpop.f32.mrf.mxu0
        %8084 = vdwg.mxu0
        %8085 = vmatpush.bf16.msra.mxu0 %v7844
        %8086 = vmatpush.bf16.msra.mxu0 %v7840
        %8087 = vmatpush.bf16.msra.mxu0 %v7836
        %8088 = vmatpush.bf16.msra.mxu0 %v7832
        %8089 = vmatpush.bf16.msra.mxu0 %v7828
        %8090 = vmatpush.bf16.msra.mxu0 %v7824
        %8091 = vmatpush.bf16.msra.mxu0 %v7820
        %8092 = vmatpush.bf16.msra.mxu0 %v7816
        %8093 = vmatmul.bf16.gmra.mxu0 %v7234
        %v8094 = vpop.f32.mrf.mxu0
        %v8095 = vadd.f32 %v8082, %v8094
        %v8096 = vpop.f32.mrf.mxu0
        %8097 = vdwg.mxu0
        %8098 = vmatpush.bf16.msra.mxu0 %v7876
        %8099 = vmatpush.bf16.msra.mxu0 %v7872
        %8100 = vmatpush.bf16.msra.mxu0 %v7868
        %8101 = vmatpush.bf16.msra.mxu0 %v7864
        %8102 = vmatpush.bf16.msra.mxu0 %v7860
        %8103 = vmatpush.bf16.msra.mxu0 %v7856
        %8104 = vmatpush.bf16.msra.mxu0 %v7852
        %8105 = vmatpush.bf16.msra.mxu0 %v7848
        %8106 = vmatmul.bf16.gmra.mxu0 %v7235
        %v8107 = vpop.f32.mrf.mxu0
        %v8108 = vadd.f32 %v8095, %v8107
        %v8109 = vpop.f32.mrf.mxu0
        %8110 = vdwg.mxu0
        %8111 = vmatpush.bf16.msra.mxu0 %v7781
        %8112 = vmatpush.bf16.msra.mxu0 %v7777
        %8113 = vmatpush.bf16.msra.mxu0 %v7773
        %8114 = vmatpush.bf16.msra.mxu0 %v7769
        %8115 = vmatpush.bf16.msra.mxu0 %v7765
        %8116 = vmatpush.bf16.msra.mxu0 %v7761
        %8117 = vmatpush.bf16.msra.mxu0 %v7757
        %8118 = vmatpush.bf16.msra.mxu0 %v7753
        %8119 = vmatmul.bf16.gmra.mxu0 %v7232
        %v8120 = vpop.f32.mrf.mxu0
        %v8121 = vadd.f32 0.0, %v8120
        %v8122 = vpop.f32.mrf.mxu0
        %8123 = vdwg.mxu0
        %8124 = vmatpush.bf16.msra.mxu0 %v7813
        %8125 = vmatpush.bf16.msra.mxu0 %v7809
        %8126 = vmatpush.bf16.msra.mxu0 %v7805
        %8127 = vmatpush.bf16.msra.mxu0 %v7801
        %8128 = vmatpush.bf16.msra.mxu0 %v7797
        %8129 = vmatpush.bf16.msra.mxu0 %v7793
        %8130 = vmatpush.bf16.msra.mxu0 %v7789
        %8131 = vmatpush.bf16.msra.mxu0 %v7785
        %8132 = vmatmul.bf16.gmra.mxu0 %v7233
        %v8133 = vpop.f32.mrf.mxu0
        %v8134 = vadd.f32 %v8121, %v8133
        %v8135 = vpop.f32.mrf.mxu0
        %8136 = vdwg.mxu0
        %8137 = vmatpush.bf16.msra.mxu0 %v7845
        %8138 = vmatpush.bf16.msra.mxu0 %v7841
        %8139 = vmatpush.bf16.msra.mxu0 %v7837
        %8140 = vmatpush.bf16.msra.mxu0 %v7833
        %8141 = vmatpush.bf16.msra.mxu0 %v7829
        %8142 = vmatpush.bf16.msra.mxu0 %v7825
        %8143 = vmatpush.bf16.msra.mxu0 %v7821
        %8144 = vmatpush.bf16.msra.mxu0 %v7817
        %8145 = vmatmul.bf16.gmra.mxu0 %v7234
        %v8146 = vpop.f32.mrf.mxu0
        %v8147 = vadd.f32 %v8134, %v8146
        %v8148 = vpop.f32.mrf.mxu0
        %8149 = vdwg.mxu0
        %8150 = vmatpush.bf16.msra.mxu0 %v7877
        %8151 = vmatpush.bf16.msra.mxu0 %v7873
        %8152 = vmatpush.bf16.msra.mxu0 %v7869
        %8153 = vmatpush.bf16.msra.mxu0 %v7865
        %8154 = vmatpush.bf16.msra.mxu0 %v7861
        %8155 = vmatpush.bf16.msra.mxu0 %v7857
        %8156 = vmatpush.bf16.msra.mxu0 %v7853
        %8157 = vmatpush.bf16.msra.mxu0 %v7849
        %8158 = vmatmul.bf16.gmra.mxu0 %v7235
        %v8159 = vpop.f32.mrf.mxu0
        %v8160 = vadd.f32 %v8147, %v8159
        %v8161 = vpop.f32.mrf.mxu0
        %8162 = vdwg.mxu0
        %8163 = vmatpush.bf16.msra.mxu0 %v7782
        %8164 = vmatpush.bf16.msra.mxu0 %v7778
        %8165 = vmatpush.bf16.msra.mxu0 %v7774
        %8166 = vmatpush.bf16.msra.mxu0 %v7770
        %8167 = vmatpush.bf16.msra.mxu0 %v7766
        %8168 = vmatpush.bf16.msra.mxu0 %v7762
        %8169 = vmatpush.bf16.msra.mxu0 %v7758
        %8170 = vmatpush.bf16.msra.mxu0 %v7754
        %8171 = vmatmul.bf16.gmra.mxu0 %v7232
        %v8172 = vpop.f32.mrf.mxu0
        %v8173 = vadd.f32 0.0, %v8172
        %v8174 = vpop.f32.mrf.mxu0
        %8175 = vdwg.mxu0
        %8176 = vmatpush.bf16.msra.mxu0 %v7814
        %8177 = vmatpush.bf16.msra.mxu0 %v7810
        %8178 = vmatpush.bf16.msra.mxu0 %v7806
        %8179 = vmatpush.bf16.msra.mxu0 %v7802
        %8180 = vmatpush.bf16.msra.mxu0 %v7798
        %8181 = vmatpush.bf16.msra.mxu0 %v7794
        %8182 = vmatpush.bf16.msra.mxu0 %v7790
        %8183 = vmatpush.bf16.msra.mxu0 %v7786
        %8184 = vmatmul.bf16.gmra.mxu0 %v7233
        %v8185 = vpop.f32.mrf.mxu0
        %v8186 = vadd.f32 %v8173, %v8185
        %v8187 = vpop.f32.mrf.mxu0
        %8188 = vdwg.mxu0
        %8189 = vmatpush.bf16.msra.mxu0 %v7846
        %8190 = vmatpush.bf16.msra.mxu0 %v7842
        %8191 = vmatpush.bf16.msra.mxu0 %v7838
        %8192 = vmatpush.bf16.msra.mxu0 %v7834
        %8193 = vmatpush.bf16.msra.mxu0 %v7830
        %8194 = vmatpush.bf16.msra.mxu0 %v7826
        %8195 = vmatpush.bf16.msra.mxu0 %v7822
        %8196 = vmatpush.bf16.msra.mxu0 %v7818
        %8197 = vmatmul.bf16.gmra.mxu0 %v7234
        %v8198 = vpop.f32.mrf.mxu0
        %v8199 = vadd.f32 %v8186, %v8198
        %v8200 = vpop.f32.mrf.mxu0
        %8201 = vdwg.mxu0
        %8202 = vmatpush.bf16.msra.mxu0 %v7878
        %8203 = vmatpush.bf16.msra.mxu0 %v7874
        %8204 = vmatpush.bf16.msra.mxu0 %v7870
        %8205 = vmatpush.bf16.msra.mxu0 %v7866
        %8206 = vmatpush.bf16.msra.mxu0 %v7862
        %8207 = vmatpush.bf16.msra.mxu0 %v7858
        %8208 = vmatpush.bf16.msra.mxu0 %v7854
        %8209 = vmatpush.bf16.msra.mxu0 %v7850
        %8210 = vmatmul.bf16.gmra.mxu0 %v7235
        %v8211 = vpop.f32.mrf.mxu0
        %v8212 = vadd.f32 %v8199, %v8211
        %v8213 = vpop.f32.mrf.mxu0
        %8214 = vdwg.mxu0
        %v8215 = vadd.f32 %v6236, %v8056
        %v8216 = vadd.f32 %v6237, %v8108
        %v8217 = vadd.f32 %v6238, %v8160
        %v8218 = vadd.f32 %v6239, %v8212
        %v8219 = vld [vmem:[#allocation10] sm:$0xf]
        %v8221 = vperm.slane %v8219, 0
        %v8222 = vperm.slane %v8219, 1
        %v8223 = vperm.slane %v8219, 2
        %v8224 = vperm.slane %v8219, 3
        %v8229 = vadd.f32 %v8215, %v8221
        %v8230 = vadd.f32 %v8216, %v8222
        %v8231 = vadd.f32 %v8217, %v8223
        %v8232 = vadd.f32 %v8218, %v8224
        %8233 = vst [vmem:[%s304] sm:$0xff] %v8229
        %8234 = vst [vmem:[%s304 + $0x8] sm:$0xff] %v8230
        %8235 = vst [vmem:[%s304 + $0x10] sm:$0xff] %v8231
        %8236 = vst [vmem:[%s304 + $0x18] sm:$0xff] %v8232
        %s8237 = sand.u32 %s142, 1
        %s8238 = scalar_lea.sflag [#allocation4], %s8237
        %s8239 = sand.u32 %s142, 1
        %s8240 = smul.addr %s8239, 32
        %s8241 = scalar_lea.vmem [#allocation11], %s8240
        // Predicated region
        $region61: #{tpu_custom_call.1} parent=39 // pred_check
          %p8242 = pneg %p152
        $region62: #{tpu_custom_call.1} parent=39 // pred_check_branch
          %8244 = sbr.rel (%p8242) target = $region64
        $region63: #{tpu_custom_call.1} parent=39 // pred_region
          %8246 = vsyncadd %s8238, 0
          %s8247 = smul.addr %s24, 4
          %s8248 = smul.addr %s8247, 8
          %s8249 = scalar_lea.hbm %s5, %s8248
          %s8251 = sshll.u32 %s8241, 4
          %s8252 = int_to_ptr.vmem [resolvable:$true] %s8251
          %s8253 = sshll.u32 %s8249, 4
          %s8254 = int_to_ptr.hbm [resolvable:$true] %s8253
          %8256 = dma.vmem_to_hbm [thread:$0]  %s8252, 512, %s8254, %s8238
        $region64: #{tpu_custom_call.1} parent=39 // pred_fallthru
          _
      $region40: #{tpu_custom_call.1} parent=5 // pred_fallthru
        _
      %p8257 = scmp.le.s32.totalorder 2, %s19
      // Predicated region
      $region65: #{tpu_custom_call.1} parent=5 // pred_check
        %p8258 = pneg %p8257
      $region66: #{tpu_custom_call.1} parent=5 // pred_check_branch
        %8260 = sbr.rel (%p8258) target = $region68
      $region67: #{tpu_custom_call.1} parent=5 // pred_region
        %s8261 = ssub.s32 %s19, 2
        // Predicated region
        $region69: #{tpu_custom_call.1} parent=67 // pred_check
          %p8262 = pneg %p158
        $region70: #{tpu_custom_call.1} parent=67 // pred_check_branch
          %8264 = sbr.rel (%p8262) target = $region72
        $region71: #{tpu_custom_call.1} parent=67 // pred_region
          %s8265 = sand.u32 %s143, 1
          %s8266 = scalar_lea.sflag [#allocation4], %s8265
          %s8267 = sand.u32 %s143, 1
          %s8268 = smul.addr %s8267, 32
          %s8269 = scalar_lea.vmem [#allocation11], %s8268
          %8271 = dma.done %s8266, 512
        $region72: #{tpu_custom_call.1} parent=67 // pred_fallthru
          _
      $region68: #{tpu_custom_call.1} parent=5 // pred_fallthru
        _
    $region6: #{tpu_custom_call.1} parent=1 // loop_footer
      %s23 = sadd.s32 1, %s19
    $region7: #{tpu_custom_call.1} parent=1 // loop_footer_branch
      %18 = sbr.rel target = $region3
    $region8: #{tpu_custom_call.1} parent=1 // loop_exit
      _
    %8272 = vsyncpa [#allocation3], 1
    %s8273 = scalar_lea.sflag [#allocation3], 1
    %8274 = vsyncpa %s8273, 1
    %8275 = vsyncpa [#allocation6], 1
    %8276 = vsyncpa [#allocation9], 1
    %8277 = vsyncpa [#allocation4], 1
    %s8278 = scalar_lea.sflag [#allocation4], 1
    %8279 = vsyncpa %s8278, 1

</llo_original>
